<compile_context>
chip_gen: v7x
topology: tpu7x:2x2x1
jax: 0.10.0
libtpu: 0.0.40
codegen_flags: <defaults>
</compile_context>

<pallas_src>
import functools

import numpy as np
import jax
import jax.numpy as jnp
from jax import lax
from jax.experimental import pallas as pl
from jax.experimental.pallas import tpu as pltpu


# ----------------------------- kernel helpers ------------------------------


def _mm(a, b):
    # Single-pass MXU matmul, f32 accumulation, default precision.
    return lax.dot_general(
        a, b, (((1,), (0,)), ((), ())),
        preferred_element_type=jnp.float32,
    )


def _elu(x):
    # nn.ELU(alpha=1.0). Clamp exp argument so the untaken branch never overflows.
    return jnp.where(x > 0, x, jnp.exp(jnp.minimum(x, 0.0)) - 1.0)


# --------------------------------- kernel ----------------------------------


def _ode_ae_kernel(
    S,
    T,
    # inputs
    x_ref,        # (S*B, D_obs)  VMEM  time-major flattened observations
    eps_ref,      # (B, L)        VMEM
    dt_ref,       # (T-1,)        SMEM  t[i+1]-t[i]
    dt3_ref,      # (T-1,)        SMEM  dt/3
    dt8_ref,      # (T-1,)        SMEM  dt*0.125
    w_ih_x_ref,   # (D_obs, Hr)   RecognitionRNN.i2h weight, obs part
    w_ih_h_ref,   # (Hr, Hr)      RecognitionRNN.i2h weight, hidden part
    b_ih_ref,     # (1, Hr)
    w_ho_ref,     # (Hr, 2L)      RecognitionRNN.h2o weight (mean | logvar cols)
    b_ho_ref,     # (1, 2L)
    wf1_ref, bf1_ref,         # LatentODEfunc.fc1  (L, Hf), (1, Hf)
    wf2_ref, bf2_ref,         # LatentODEfunc.fc2  (Hf, Hf), (1, Hf)
    wf3_ref, bf3_ref,         # LatentODEfunc.fc3  (Hf, L), (1, L)
    wd1_ref, bd1_ref,         # Decoder.fc1        (L, Hd), (1, Hd)
    wd2_ref, bd2_ref,         # Decoder.fc2        (Hd, D_obs), (1, D_obs)
    # output
    out_ref,      # (T*B, D_obs)  VMEM  time-major flattened predictions
):
    B = eps_ref.shape[0]
    L = eps_ref.shape[1]
    Hr = w_ih_h_ref.shape[0]
    Hf = wf1_ref.shape[1]
    Hd = wd1_ref.shape[1]

    # ---------------- RecognitionRNN encoder (reverse time) ----------------
    # Hoisted observation projection: one (S*B, D) @ (D, Hr) matmul; only the
    # hidden-state matmul remains on the serial recurrence.
    xs_proj = _mm(x_ref[...], w_ih_x_ref[...]) + b_ih_ref[...]   # (S*B, Hr)
    w_ih_h = w_ih_h_ref[...]
    h = jnp.zeros((B, Hr), jnp.float32)
    for t_idx in reversed(range(S)):
        h = jnp.tanh(xs_proj[t_idx * B:(t_idx + 1) * B, :] + _mm(h, w_ih_h))

    # h2o: single (B, Hr) @ (Hr, 2L) matmul; split mean/logvar with a static
    # in-vreg lane slice (both column blocks live in one vreg).
    out_enc = _mm(h, w_ho_ref[...]) + b_ho_ref[...]               # (B, 2L)
    qz0_mean = out_enc[:, :L]
    qz0_logvar = out_enc[:, L:2 * L]
    # sample_z0: z0 = eps * exp(0.5*logvar) + mean
    z0 = eps_ref[...] * jnp.exp(0.5 * qz0_logvar) + qz0_mean

    # ------------------------- latent ODE function -------------------------
    wf1 = wf1_ref[...]
    wf1_rows = [wf1[k:k + 1, :] for k in range(L)]   # (1, Hf) rows, hoisted
    wf2, wf3 = wf2_ref[...], wf3_ref[...]
    bf1 = jnp.broadcast_to(bf1_ref[...], (B, Hf))
    bf2 = jnp.broadcast_to(bf2_ref[...], (B, Hf))
    bf3 = jnp.broadcast_to(bf3_ref[...], (B, L))

    def odefunc(z):
        # fc1 has contraction depth K = L = 4: do it as VPU broadcast-MACs
        # (4 mul+add pairs, exact f32) instead of a tiny MXU roundtrip.
        h1 = bf1
        for k in range(L):
            h1 = h1 + z[:, k:k + 1] * wf1_rows[k]
        h1 = _elu(h1)
        h2 = _elu(_mm(h1, wf2) + bf2)
        return _mm(h2, wf3) + bf3

    # odeint(..., method='rk4'): torchdiffeq fixed-step RK4 (3/8 rule) on the
    # grid t with y(t[0]) = z0. Each z is <1 vreg, so all T latent states stay
    # in registers; one concatenate feeds the batched decoder afterwards.
    z = z0
    z_list = [z]
    for i in range(T - 1):
        dt = dt_ref[i]
        dt3 = dt3_ref[i]
        dt8 = dt8_ref[i]
        k1 = odefunc(z)
        k2 = odefunc(z + dt3 * k1)
        k3 = odefunc(z + dt * k2 - dt3 * k1)
        k4 = odefunc(z + dt * (k1 - k2 + k3))
        z = z + dt8 * (k1 + 3.0 * (k2 + k3) + k4)
        z_list.append(z)

    z_all = jnp.concatenate(z_list, axis=0)                       # (T*B, L)

    # ------------------------ batched ReLU decoder --------------------------
    # fc1 is another K=4 contraction -> VPU broadcast-MACs; fc2 stays MXU.
    wd1 = wd1_ref[...]
    hd = jnp.broadcast_to(bd1_ref[...], (T * B, Hd))
    for k in range(L):
        hd = hd + z_all[:, k:k + 1] * wd1[k:k + 1, :]
    hd = jnp.maximum(hd, 0.0)
    out_ref[...] = _mm(hd, wd2_ref[...]) + bd2_ref[...]           # one bulk store


# -------------------------------- wrapper -----------------------------------


def ode_autoencoder_forward(x, t, eps, p):
    """pred_x = ODEAutoEncoder.forward(x, t) with epsilon supplied explicitly."""
    B, S, D = x.shape
    T = int(t.shape[0])
    L = p["wf1"].shape[0]
    Hr = p["w_ih_h"].shape[0]
    Hf = p["wf1"].shape[1]
    Hd = p["wd1"].shape[1]

    dt = (t[1:] - t[:-1]).astype(jnp.float32)
    dt3 = dt * (1.0 / 3.0)
    dt8 = dt * 0.125

    # Time-major flattened observations: row s*B + b  <->  x[b, s, :].
    x_tb = jnp.transpose(x.astype(jnp.float32), (1, 0, 2)).reshape(S * B, D)

    args = (
        x_tb, eps.astype(jnp.float32), dt, dt3, dt8,
        p["w_ih_x"], p["w_ih_h"], p["b_ih"],
        p["w_ho"], p["b_ho"],
        p["wf1"], p["bf1"], p["wf2"], p["bf2"], p["wf3"], p["bf3"],
        p["wd1"], p["bd1"], p["wd2"], p["bd2"],
    )

    vmem = pl.BlockSpec(memory_space=pltpu.MemorySpace.VMEM)
    smem = pl.BlockSpec(memory_space=pltpu.MemorySpace.SMEM)
    smem_positions = {2, 3, 4}  # dt, dt/3, dt*0.125
    in_specs = [smem if i in smem_positions else vmem for i in range(len(args))]

    # Advisory cost estimate for XLA's scheduler.
    n_evals = 4 * (T - 1)
    flops = int(
        2 * S * B * D * Hr                                   # hoisted input proj
        + 2 * S * B * Hr * Hr                                # recurrence
        + 2 * B * Hr * 2 * L                                 # h2o (mean+logvar)
        + n_evals * 2 * B * (L * Hf + Hf * Hf + Hf * L)      # latent ODE func
        + 2 * T * B * (L * Hd + Hd * D)                      # batched decoder
    )
    transcendentals = int(S * B * Hr + B * L + n_evals * 2 * B * Hf)
    param_bytes = 4 * sum(int(np.prod(v.shape)) for v in p.values())
    bytes_accessed = int(
        4 * (S * B * D + B * L + 3 * (T - 1) + T * B * D) + param_bytes)

    kernel = functools.partial(_ode_ae_kernel, S, T)
    out_tb = pl.pallas_call(
        kernel,
        out_shape=jax.ShapeDtypeStruct((T * B, D), jnp.float32),
        in_specs=in_specs,
        out_specs=vmem,
        cost_estimate=pl.CostEstimate(
            flops=flops,
            transcendentals=transcendentals,
            bytes_accessed=bytes_accessed,
        ),
    )(*args)

    # (T*B, D) time-major -> (B, T, D), matching pred_z.permute(1,0,2) + decode.
    return jnp.transpose(out_tb.reshape(T, B, D), (1, 0, 2))


# --------------------------- params + reference -----------------------------


def init_params(key, latent_dim, obs_dim, hidden_dim, rnn_hidden_dim):
    """Deterministic PyTorch-Linear-style init (U(-1/sqrt(fan_in), 1/sqrt(fan_in)))."""

    def linear(k, fan_in, fan_out):
        k1, k2 = jax.random.split(k)
        bound = 1.0 / np.sqrt(fan_in)
        w = jax.random.uniform(k1, (fan_in, fan_out), jnp.float32, -bound, bound)
        b = jax.random.uniform(k2, (1, fan_out), jnp.float32, -bound, bound)
        return w, b

    keys = jax.random.split(key, 7)
    w_i2h, b_ih = linear(keys[0], obs_dim + rnn_hidden_dim, rnn_hidden_dim)
    w_ho, b_ho = linear(keys[1], rnn_hidden_dim, 2 * latent_dim)
    wf1, bf1 = linear(keys[2], latent_dim, hidden_dim)
    wf2, bf2 = linear(keys[3], hidden_dim, hidden_dim)
    wf3, bf3 = linear(keys[4], hidden_dim, latent_dim)
    wd1, bd1 = linear(keys[5], latent_dim, hidden_dim)
    wd2, bd2 = linear(keys[6], hidden_dim, obs_dim)
    return dict(
        w_ih_x=w_i2h[:obs_dim], w_ih_h=w_i2h[obs_dim:], b_ih=b_ih,
        w_ho=w_ho, b_ho=b_ho,
        wf1=wf1, bf1=bf1, wf2=wf2, bf2=bf2, wf3=wf3, bf3=bf3,
        wd1=wd1, bd1=bd1, wd2=wd2, bd2=bd2,
    )


def reference_forward(x, t, eps, p):
    """Pure-JAX reference with identical math (for a sanity check)."""
    B, S, D = x.shape
    T = t.shape[0]
    Hr = p["w_ih_h"].shape[0]
    L = p["wf1"].shape[0]

    def mm(a, b):
        return jnp.dot(a, b, precision=lax.Precision.HIGHEST)

    def elu(v):
        return jnp.where(v > 0, v, jnp.exp(v) - 1.0)

    h = jnp.zeros((B, Hr), jnp.float32)
    for ti in reversed(range(S)):
        h = jnp.tanh(mm(x[:, ti, :], p["w_ih_x"]) + mm(h, p["w_ih_h"]) + p["b_ih"])
    out = mm(h, p["w_ho"]) + p["b_ho"]
    z0 = eps * jnp.exp(0.5 * out[:, L:]) + out[:, :L]

    def f(z):
        h1 = elu(mm(z, p["wf1"]) + p["bf1"])
        h2 = elu(mm(h1, p["wf2"]) + p["bf2"])
        return mm(h2, p["wf3"]) + p["bf3"]

    def dec(z):
        hd = jnp.maximum(mm(z, p["wd1"]) + p["bd1"], 0.0)
        return mm(hd, p["wd2"]) + p["bd2"]

    z = z0
    outs = [dec(z)]
    for i in range(T - 1):
        dt = t[i + 1] - t[i]
        k1 = f(z)
        k2 = f(z + dt * k1 / 3.0)
        k3 = f(z + dt * (k2 - k1 / 3.0))
        k4 = f(z + dt * (k1 - k2 + k3))
        z = z + dt * 0.125 * (k1 + 3.0 * (k2 + k3) + k4)
        outs.append(dec(z))
    return jnp.stack(outs, axis=1)  # (B, T, D_obs)


# ---------------------------------- main -------------------------------------


if __name__ == "__main__":
    # Small shapes consistent with the module defaults. B kept a multiple of 8
    # so the xs_proj row slices stay sublane-aligned.
    B, S, T = 8, 8, 8
    latent_dim, obs_dim, hidden_dim, rnn_hidden_dim = 4, 4, 32, 32

    key = jax.random.PRNGKey(0)
    kx, keps, kp = jax.random.split(key, 3)

    x = jax.random.normal(kx, (B, S, obs_dim), jnp.float32)      # observations
    t = jnp.linspace(0.0, 1.0, T).astype(jnp.float32)            # time grid
    eps = jax.random.normal(keps, (B, latent_dim), jnp.float32)  # torch.randn epsilon
    params = init_params(kp, latent_dim, obs_dim, hidden_dim, rnn_hidden_dim)

    pred_x = ode_autoencoder_forward(x, t, eps, params)
    pred_x = jax.block_until_ready(pred_x)

    ref = reference_forward(x, t, eps, params)
    # Loose tolerance: default-precision MXU matmuls vs XLA HIGHEST reference
    # (the K=4 layers are exact f32 via VPU MACs, which tightens the error a bit).
    np.testing.assert_allclose(np.asarray(pred_x), np.asarray(ref), rtol=2e-2, atol=2e-2)
    assert pred_x.shape == (B, T, obs_dim)
    assert bool(jnp.all(jnp.isfinite(pred_x)))

    print("KERNEL_OK")
</pallas_src>

<mosaic_0001>
module attributes {stable_mosaic.version = 11 : i64} {
  func.func @_ode_ae_kernel(%arg0: memref<64x4xf32, #tpu.memory_space<vmem>>, %arg1: memref<8x4xf32, #tpu.memory_space<vmem>>, %arg2: memref<7xf32, #tpu.memory_space<smem>>, %arg3: memref<7xf32, #tpu.memory_space<smem>>, %arg4: memref<7xf32, #tpu.memory_space<smem>>, %arg5: memref<4x32xf32, #tpu.memory_space<vmem>>, %arg6: memref<32x32xf32, #tpu.memory_space<vmem>>, %arg7: memref<1x32xf32, #tpu.memory_space<vmem>>, %arg8: memref<32x8xf32, #tpu.memory_space<vmem>>, %arg9: memref<1x8xf32, #tpu.memory_space<vmem>>, %arg10: memref<4x32xf32, #tpu.memory_space<vmem>>, %arg11: memref<1x32xf32, #tpu.memory_space<vmem>>, %arg12: memref<32x32xf32, #tpu.memory_space<vmem>>, %arg13: memref<1x32xf32, #tpu.memory_space<vmem>>, %arg14: memref<32x4xf32, #tpu.memory_space<vmem>>, %arg15: memref<1x4xf32, #tpu.memory_space<vmem>>, %arg16: memref<4x32xf32, #tpu.memory_space<vmem>>, %arg17: memref<1x32xf32, #tpu.memory_space<vmem>>, %arg18: memref<32x4xf32, #tpu.memory_space<vmem>>, %arg19: memref<1x4xf32, #tpu.memory_space<vmem>>, %arg20: memref<64x4xf32, #tpu.memory_space<vmem>>) attributes {dimension_semantics = [], scalar_prefetch = 0 : i64, scratch_operands = 0 : i64, tpu.core_type = #tpu.core_type<tc>} {
    %c0 = arith.constant 0 : index
    %c0_0 = arith.constant 0 : index
    %0 = vector.load %arg0[%c0, %c0_0] : memref<64x4xf32, #tpu.memory_space<vmem>>, vector<64x4xf32>
    %c0_1 = arith.constant 0 : index
    %c0_2 = arith.constant 0 : index
    %1 = vector.load %arg5[%c0_1, %c0_2] : memref<4x32xf32, #tpu.memory_space<vmem>>, vector<4x32xf32>
    %cst = arith.constant dense<0.000000e+00> : vector<64x32xf32>
    %2 = tpu.matmul %0, %1, %cst {dimension_numbers = #tpu.dot_dimension_numbers<[1], [0], [0], [1], [0, 0, 1, 1], [], []>} : vector<64x4xf32>, vector<4x32xf32>, vector<64x32xf32> -> vector<64x32xf32>
    %c0_3 = arith.constant 0 : index
    %c0_4 = arith.constant 0 : index
    %3 = vector.load %arg7[%c0_3, %c0_4] : memref<1x32xf32, #tpu.memory_space<vmem>>, vector<1x32xf32>
    %4 = vector.broadcast %3 : vector<1x32xf32> to vector<64x32xf32>
    %5 = arith.addf %2, %4 : vector<64x32xf32>
    %c0_5 = arith.constant 0 : index
    %c0_6 = arith.constant 0 : index
    %6 = vector.load %arg6[%c0_5, %c0_6] : memref<32x32xf32, #tpu.memory_space<vmem>>, vector<32x32xf32>
    %cst_7 = arith.constant 0.000000e+00 : f32
    %7 = vector.broadcast %cst_7 : f32 to vector<8x32xf32>
    %8 = vector.extract_strided_slice %5 {offsets = [56, 0], sizes = [8, 32], strides = [1, 1]} : vector<64x32xf32> to vector<8x32xf32>
    %cst_8 = arith.constant dense<0.000000e+00> : vector<8x32xf32>
    %9 = tpu.matmul %7, %6, %cst_8 {dimension_numbers = #tpu.dot_dimension_numbers<[1], [0], [0], [1], [0, 0, 1, 1], [], []>} : vector<8x32xf32>, vector<32x32xf32>, vector<8x32xf32> -> vector<8x32xf32>
    %10 = arith.addf %8, %9 : vector<8x32xf32>
    %11 = math.tanh %10 : vector<8x32xf32>
    %12 = vector.extract_strided_slice %5 {offsets = [48, 0], sizes = [8, 32], strides = [1, 1]} : vector<64x32xf32> to vector<8x32xf32>
    %cst_9 = arith.constant dense<0.000000e+00> : vector<8x32xf32>
    %13 = tpu.matmul %11, %6, %cst_9 {dimension_numbers = #tpu.dot_dimension_numbers<[1], [0], [0], [1], [0, 0, 1, 1], [], []>} : vector<8x32xf32>, vector<32x32xf32>, vector<8x32xf32> -> vector<8x32xf32>
    %14 = arith.addf %12, %13 : vector<8x32xf32>
    %15 = math.tanh %14 : vector<8x32xf32>
    %16 = vector.extract_strided_slice %5 {offsets = [40, 0], sizes = [8, 32], strides = [1, 1]} : vector<64x32xf32> to vector<8x32xf32>
    %cst_10 = arith.constant dense<0.000000e+00> : vector<8x32xf32>
    %17 = tpu.matmul %15, %6, %cst_10 {dimension_numbers = #tpu.dot_dimension_numbers<[1], [0], [0], [1], [0, 0, 1, 1], [], []>} : vector<8x32xf32>, vector<32x32xf32>, vector<8x32xf32> -> vector<8x32xf32>
    %18 = arith.addf %16, %17 : vector<8x32xf32>
    %19 = math.tanh %18 : vector<8x32xf32>
    %20 = vector.extract_strided_slice %5 {offsets = [32, 0], sizes = [8, 32], strides = [1, 1]} : vector<64x32xf32> to vector<8x32xf32>
    %cst_11 = arith.constant dense<0.000000e+00> : vector<8x32xf32>
    %21 = tpu.matmul %19, %6, %cst_11 {dimension_numbers = #tpu.dot_dimension_numbers<[1], [0], [0], [1], [0, 0, 1, 1], [], []>} : vector<8x32xf32>, vector<32x32xf32>, vector<8x32xf32> -> vector<8x32xf32>
    %22 = arith.addf %20, %21 : vector<8x32xf32>
    %23 = math.tanh %22 : vector<8x32xf32>
    %24 = vector.extract_strided_slice %5 {offsets = [24, 0], sizes = [8, 32], strides = [1, 1]} : vector<64x32xf32> to vector<8x32xf32>
    %cst_12 = arith.constant dense<0.000000e+00> : vector<8x32xf32>
    %25 = tpu.matmul %23, %6, %cst_12 {dimension_numbers = #tpu.dot_dimension_numbers<[1], [0], [0], [1], [0, 0, 1, 1], [], []>} : vector<8x32xf32>, vector<32x32xf32>, vector<8x32xf32> -> vector<8x32xf32>
    %26 = arith.addf %24, %25 : vector<8x32xf32>
    %27 = math.tanh %26 : vector<8x32xf32>
    %28 = vector.extract_strided_slice %5 {offsets = [16, 0], sizes = [8, 32], strides = [1, 1]} : vector<64x32xf32> to vector<8x32xf32>
    %cst_13 = arith.constant dense<0.000000e+00> : vector<8x32xf32>
    %29 = tpu.matmul %27, %6, %cst_13 {dimension_numbers = #tpu.dot_dimension_numbers<[1], [0], [0], [1], [0, 0, 1, 1], [], []>} : vector<8x32xf32>, vector<32x32xf32>, vector<8x32xf32> -> vector<8x32xf32>
    %30 = arith.addf %28, %29 : vector<8x32xf32>
    %31 = math.tanh %30 : vector<8x32xf32>
    %32 = vector.extract_strided_slice %5 {offsets = [8, 0], sizes = [8, 32], strides = [1, 1]} : vector<64x32xf32> to vector<8x32xf32>
    %cst_14 = arith.constant dense<0.000000e+00> : vector<8x32xf32>
    %33 = tpu.matmul %31, %6, %cst_14 {dimension_numbers = #tpu.dot_dimension_numbers<[1], [0], [0], [1], [0, 0, 1, 1], [], []>} : vector<8x32xf32>, vector<32x32xf32>, vector<8x32xf32> -> vector<8x32xf32>
    %34 = arith.addf %32, %33 : vector<8x32xf32>
    %35 = math.tanh %34 : vector<8x32xf32>
    %36 = vector.extract_strided_slice %5 {offsets = [0, 0], sizes = [8, 32], strides = [1, 1]} : vector<64x32xf32> to vector<8x32xf32>
    %cst_15 = arith.constant dense<0.000000e+00> : vector<8x32xf32>
    %37 = tpu.matmul %35, %6, %cst_15 {dimension_numbers = #tpu.dot_dimension_numbers<[1], [0], [0], [1], [0, 0, 1, 1], [], []>} : vector<8x32xf32>, vector<32x32xf32>, vector<8x32xf32> -> vector<8x32xf32>
    %38 = arith.addf %36, %37 : vector<8x32xf32>
    %39 = math.tanh %38 : vector<8x32xf32>
    %c0_16 = arith.constant 0 : index
    %c0_17 = arith.constant 0 : index
    %40 = vector.load %arg8[%c0_16, %c0_17] : memref<32x8xf32, #tpu.memory_space<vmem>>, vector<32x8xf32>
    %cst_18 = arith.constant dense<0.000000e+00> : vector<8x8xf32>
    %41 = tpu.matmul %39, %40, %cst_18 {dimension_numbers = #tpu.dot_dimension_numbers<[1], [0], [0], [1], [0, 0, 1, 1], [], []>} : vector<8x32xf32>, vector<32x8xf32>, vector<8x8xf32> -> vector<8x8xf32>
    %c0_19 = arith.constant 0 : index
    %c0_20 = arith.constant 0 : index
    %42 = vector.load %arg9[%c0_19, %c0_20] : memref<1x8xf32, #tpu.memory_space<vmem>>, vector<1x8xf32>
    %43 = vector.broadcast %42 : vector<1x8xf32> to vector<8x8xf32>
    %44 = arith.addf %41, %43 : vector<8x8xf32>
    %45 = vector.extract_strided_slice %44 {offsets = [0, 0], sizes = [8, 4], strides = [1, 1]} : vector<8x8xf32> to vector<8x4xf32>
    %46 = vector.extract_strided_slice %44 {offsets = [0, 4], sizes = [8, 4], strides = [1, 1]} : vector<8x8xf32> to vector<8x4xf32>
    %c0_21 = arith.constant 0 : index
    %c0_22 = arith.constant 0 : index
    %47 = vector.load %arg1[%c0_21, %c0_22] : memref<8x4xf32, #tpu.memory_space<vmem>>, vector<8x4xf32>
    %cst_23 = arith.constant 5.000000e-01 : f32
    %48 = vector.broadcast %cst_23 : f32 to vector<8x4xf32>
    %49 = arith.mulf %48, %46 : vector<8x4xf32>
    %50 = math.exp %49 : vector<8x4xf32>
    %51 = arith.mulf %47, %50 : vector<8x4xf32>
    %52 = arith.addf %51, %45 : vector<8x4xf32>
    %c0_24 = arith.constant 0 : index
    %c0_25 = arith.constant 0 : index
    %53 = vector.load %arg10[%c0_24, %c0_25] : memref<4x32xf32, #tpu.memory_space<vmem>>, vector<4x32xf32>
    %54 = vector.extract_strided_slice %53 {offsets = [0, 0], sizes = [1, 32], strides = [1, 1]} : vector<4x32xf32> to vector<1x32xf32>
    %55 = vector.extract_strided_slice %53 {offsets = [1, 0], sizes = [1, 32], strides = [1, 1]} : vector<4x32xf32> to vector<1x32xf32>
    %56 = vector.extract_strided_slice %53 {offsets = [2, 0], sizes = [1, 32], strides = [1, 1]} : vector<4x32xf32> to vector<1x32xf32>
    %57 = vector.extract_strided_slice %53 {offsets = [3, 0], sizes = [1, 32], strides = [1, 1]} : vector<4x32xf32> to vector<1x32xf32>
    %c0_26 = arith.constant 0 : index
    %c0_27 = arith.constant 0 : index
    %58 = vector.load %arg12[%c0_26, %c0_27] : memref<32x32xf32, #tpu.memory_space<vmem>>, vector<32x32xf32>
    %c0_28 = arith.constant 0 : index
    %c0_29 = arith.constant 0 : index
    %59 = vector.load %arg14[%c0_28, %c0_29] : memref<32x4xf32, #tpu.memory_space<vmem>>, vector<32x4xf32>
    %c0_30 = arith.constant 0 : index
    %c0_31 = arith.constant 0 : index
    %60 = vector.load %arg11[%c0_30, %c0_31] : memref<1x32xf32, #tpu.memory_space<vmem>>, vector<1x32xf32>
    %61 = vector.shape_cast %60 : vector<1x32xf32> to vector<1x32xf32>
    %62 = vector.broadcast %61 : vector<1x32xf32> to vector<8x32xf32>
    %c0_32 = arith.constant 0 : index
    %c0_33 = arith.constant 0 : index
    %63 = vector.load %arg13[%c0_32, %c0_33] : memref<1x32xf32, #tpu.memory_space<vmem>>, vector<1x32xf32>
    %64 = vector.shape_cast %63 : vector<1x32xf32> to vector<1x32xf32>
    %65 = vector.broadcast %64 : vector<1x32xf32> to vector<8x32xf32>
    %c0_34 = arith.constant 0 : index
    %c0_35 = arith.constant 0 : index
    %66 = vector.load %arg15[%c0_34, %c0_35] : memref<1x4xf32, #tpu.memory_space<vmem>>, vector<1x4xf32>
    %67 = vector.shape_cast %66 : vector<1x4xf32> to vector<1x4xf32>
    %68 = vector.broadcast %67 : vector<1x4xf32> to vector<8x4xf32>
    %c0_36 = arith.constant 0 : index
    %69 = memref.load %arg2[%c0_36] : memref<7xf32, #tpu.memory_space<smem>>
    %c0_37 = arith.constant 0 : index
    %70 = memref.load %arg3[%c0_37] : memref<7xf32, #tpu.memory_space<smem>>
    %c0_38 = arith.constant 0 : index
    %71 = memref.load %arg4[%c0_38] : memref<7xf32, #tpu.memory_space<smem>>
    %72 = vector.extract_strided_slice %52 {offsets = [0, 0], sizes = [8, 1], strides = [1, 1]} : vector<8x4xf32> to vector<8x1xf32>
    %73 = vector.broadcast %72 : vector<8x1xf32> to vector<8x32xf32>
    %74 = vector.broadcast %54 : vector<1x32xf32> to vector<8x32xf32>
    %75 = arith.mulf %73, %74 : vector<8x32xf32>
    %76 = arith.addf %62, %75 : vector<8x32xf32>
    %77 = vector.extract_strided_slice %52 {offsets = [0, 1], sizes = [8, 1], strides = [1, 1]} : vector<8x4xf32> to vector<8x1xf32>
    %78 = vector.broadcast %77 : vector<8x1xf32> to vector<8x32xf32>
    %79 = vector.broadcast %55 : vector<1x32xf32> to vector<8x32xf32>
    %80 = arith.mulf %78, %79 : vector<8x32xf32>
    %81 = arith.addf %76, %80 : vector<8x32xf32>
    %82 = vector.extract_strided_slice %52 {offsets = [0, 2], sizes = [8, 1], strides = [1, 1]} : vector<8x4xf32> to vector<8x1xf32>
    %83 = vector.broadcast %82 : vector<8x1xf32> to vector<8x32xf32>
    %84 = vector.broadcast %56 : vector<1x32xf32> to vector<8x32xf32>
    %85 = arith.mulf %83, %84 : vector<8x32xf32>
    %86 = arith.addf %81, %85 : vector<8x32xf32>
    %87 = vector.extract_strided_slice %52 {offsets = [0, 3], sizes = [8, 1], strides = [1, 1]} : vector<8x4xf32> to vector<8x1xf32>
    %88 = vector.broadcast %87 : vector<8x1xf32> to vector<8x32xf32>
    %89 = vector.broadcast %57 : vector<1x32xf32> to vector<8x32xf32>
    %90 = arith.mulf %88, %89 : vector<8x32xf32>
    %91 = arith.addf %86, %90 : vector<8x32xf32>
    %cst_39 = arith.constant 0.000000e+00 : f32
    %92 = vector.broadcast %cst_39 : f32 to vector<8x32xf32>
    %93 = arith.cmpf ogt, %91, %92 : vector<8x32xf32>
    %cst_40 = arith.constant 0.000000e+00 : f32
    %94 = vector.broadcast %cst_40 : f32 to vector<8x32xf32>
    %95 = arith.minimumf %91, %94 : vector<8x32xf32>
    %96 = math.exp %95 : vector<8x32xf32>
    %cst_41 = arith.constant 1.000000e+00 : f32
    %97 = vector.broadcast %cst_41 : f32 to vector<8x32xf32>
    %98 = arith.subf %96, %97 : vector<8x32xf32>
    %99 = arith.select %93, %91, %98 : vector<8x32xi1>, vector<8x32xf32>
    %cst_42 = arith.constant dense<0.000000e+00> : vector<8x32xf32>
    %100 = tpu.matmul %99, %58, %cst_42 {dimension_numbers = #tpu.dot_dimension_numbers<[1], [0], [0], [1], [0, 0, 1, 1], [], []>} : vector<8x32xf32>, vector<32x32xf32>, vector<8x32xf32> -> vector<8x32xf32>
    %101 = arith.addf %100, %65 : vector<8x32xf32>
    %cst_43 = arith.constant 0.000000e+00 : f32
    %102 = vector.broadcast %cst_43 : f32 to vector<8x32xf32>
    %103 = arith.cmpf ogt, %101, %102 : vector<8x32xf32>
    %cst_44 = arith.constant 0.000000e+00 : f32
    %104 = vector.broadcast %cst_44 : f32 to vector<8x32xf32>
    %105 = arith.minimumf %101, %104 : vector<8x32xf32>
    %106 = math.exp %105 : vector<8x32xf32>
    %cst_45 = arith.constant 1.000000e+00 : f32
    %107 = vector.broadcast %cst_45 : f32 to vector<8x32xf32>
    %108 = arith.subf %106, %107 : vector<8x32xf32>
    %109 = arith.select %103, %101, %108 : vector<8x32xi1>, vector<8x32xf32>
    %cst_46 = arith.constant dense<0.000000e+00> : vector<8x4xf32>
    %110 = tpu.matmul %109, %59, %cst_46 {dimension_numbers = #tpu.dot_dimension_numbers<[1], [0], [0], [1], [0, 0, 1, 1], [], []>} : vector<8x32xf32>, vector<32x4xf32>, vector<8x4xf32> -> vector<8x4xf32>
    %111 = arith.addf %110, %68 : vector<8x4xf32>
    %112 = vector.broadcast %70 : f32 to vector<8x4xf32>
    %113 = arith.mulf %112, %111 : vector<8x4xf32>
    %114 = arith.addf %52, %113 : vector<8x4xf32>
    %115 = vector.extract_strided_slice %114 {offsets = [0, 0], sizes = [8, 1], strides = [1, 1]} : vector<8x4xf32> to vector<8x1xf32>
    %116 = vector.broadcast %115 : vector<8x1xf32> to vector<8x32xf32>
    %117 = vector.broadcast %54 : vector<1x32xf32> to vector<8x32xf32>
    %118 = arith.mulf %116, %117 : vector<8x32xf32>
    %119 = arith.addf %62, %118 : vector<8x32xf32>
    %120 = vector.extract_strided_slice %114 {offsets = [0, 1], sizes = [8, 1], strides = [1, 1]} : vector<8x4xf32> to vector<8x1xf32>
    %121 = vector.broadcast %120 : vector<8x1xf32> to vector<8x32xf32>
    %122 = vector.broadcast %55 : vector<1x32xf32> to vector<8x32xf32>
    %123 = arith.mulf %121, %122 : vector<8x32xf32>
    %124 = arith.addf %119, %123 : vector<8x32xf32>
    %125 = vector.extract_strided_slice %114 {offsets = [0, 2], sizes = [8, 1], strides = [1, 1]} : vector<8x4xf32> to vector<8x1xf32>
    %126 = vector.broadcast %125 : vector<8x1xf32> to vector<8x32xf32>
    %127 = vector.broadcast %56 : vector<1x32xf32> to vector<8x32xf32>
    %128 = arith.mulf %126, %127 : vector<8x32xf32>
    %129 = arith.addf %124, %128 : vector<8x32xf32>
    %130 = vector.extract_strided_slice %114 {offsets = [0, 3], sizes = [8, 1], strides = [1, 1]} : vector<8x4xf32> to vector<8x1xf32>
    %131 = vector.broadcast %130 : vector<8x1xf32> to vector<8x32xf32>
    %132 = vector.broadcast %57 : vector<1x32xf32> to vector<8x32xf32>
    %133 = arith.mulf %131, %132 : vector<8x32xf32>
    %134 = arith.addf %129, %133 : vector<8x32xf32>
    %cst_47 = arith.constant 0.000000e+00 : f32
    %135 = vector.broadcast %cst_47 : f32 to vector<8x32xf32>
    %136 = arith.cmpf ogt, %134, %135 : vector<8x32xf32>
    %cst_48 = arith.constant 0.000000e+00 : f32
    %137 = vector.broadcast %cst_48 : f32 to vector<8x32xf32>
    %138 = arith.minimumf %134, %137 : vector<8x32xf32>
    %139 = math.exp %138 : vector<8x32xf32>
    %cst_49 = arith.constant 1.000000e+00 : f32
    %140 = vector.broadcast %cst_49 : f32 to vector<8x32xf32>
    %141 = arith.subf %139, %140 : vector<8x32xf32>
    %142 = arith.select %136, %134, %141 : vector<8x32xi1>, vector<8x32xf32>
    %cst_50 = arith.constant dense<0.000000e+00> : vector<8x32xf32>
    %143 = tpu.matmul %142, %58, %cst_50 {dimension_numbers = #tpu.dot_dimension_numbers<[1], [0], [0], [1], [0, 0, 1, 1], [], []>} : vector<8x32xf32>, vector<32x32xf32>, vector<8x32xf32> -> vector<8x32xf32>
    %144 = arith.addf %143, %65 : vector<8x32xf32>
    %cst_51 = arith.constant 0.000000e+00 : f32
    %145 = vector.broadcast %cst_51 : f32 to vector<8x32xf32>
    %146 = arith.cmpf ogt, %144, %145 : vector<8x32xf32>
    %cst_52 = arith.constant 0.000000e+00 : f32
    %147 = vector.broadcast %cst_52 : f32 to vector<8x32xf32>
    %148 = arith.minimumf %144, %147 : vector<8x32xf32>
    %149 = math.exp %148 : vector<8x32xf32>
    %cst_53 = arith.constant 1.000000e+00 : f32
    %150 = vector.broadcast %cst_53 : f32 to vector<8x32xf32>
    %151 = arith.subf %149, %150 : vector<8x32xf32>
    %152 = arith.select %146, %144, %151 : vector<8x32xi1>, vector<8x32xf32>
    %cst_54 = arith.constant dense<0.000000e+00> : vector<8x4xf32>
    %153 = tpu.matmul %152, %59, %cst_54 {dimension_numbers = #tpu.dot_dimension_numbers<[1], [0], [0], [1], [0, 0, 1, 1], [], []>} : vector<8x32xf32>, vector<32x4xf32>, vector<8x4xf32> -> vector<8x4xf32>
    %154 = arith.addf %153, %68 : vector<8x4xf32>
    %155 = vector.broadcast %69 : f32 to vector<8x4xf32>
    %156 = arith.mulf %155, %154 : vector<8x4xf32>
    %157 = arith.addf %52, %156 : vector<8x4xf32>
    %158 = vector.broadcast %70 : f32 to vector<8x4xf32>
    %159 = arith.mulf %158, %111 : vector<8x4xf32>
    %160 = arith.subf %157, %159 : vector<8x4xf32>
    %161 = vector.extract_strided_slice %160 {offsets = [0, 0], sizes = [8, 1], strides = [1, 1]} : vector<8x4xf32> to vector<8x1xf32>
    %162 = vector.broadcast %161 : vector<8x1xf32> to vector<8x32xf32>
    %163 = vector.broadcast %54 : vector<1x32xf32> to vector<8x32xf32>
    %164 = arith.mulf %162, %163 : vector<8x32xf32>
    %165 = arith.addf %62, %164 : vector<8x32xf32>
    %166 = vector.extract_strided_slice %160 {offsets = [0, 1], sizes = [8, 1], strides = [1, 1]} : vector<8x4xf32> to vector<8x1xf32>
    %167 = vector.broadcast %166 : vector<8x1xf32> to vector<8x32xf32>
    %168 = vector.broadcast %55 : vector<1x32xf32> to vector<8x32xf32>
    %169 = arith.mulf %167, %168 : vector<8x32xf32>
    %170 = arith.addf %165, %169 : vector<8x32xf32>
    %171 = vector.extract_strided_slice %160 {offsets = [0, 2], sizes = [8, 1], strides = [1, 1]} : vector<8x4xf32> to vector<8x1xf32>
    %172 = vector.broadcast %171 : vector<8x1xf32> to vector<8x32xf32>
    %173 = vector.broadcast %56 : vector<1x32xf32> to vector<8x32xf32>
    %174 = arith.mulf %172, %173 : vector<8x32xf32>
    %175 = arith.addf %170, %174 : vector<8x32xf32>
    %176 = vector.extract_strided_slice %160 {offsets = [0, 3], sizes = [8, 1], strides = [1, 1]} : vector<8x4xf32> to vector<8x1xf32>
    %177 = vector.broadcast %176 : vector<8x1xf32> to vector<8x32xf32>
    %178 = vector.broadcast %57 : vector<1x32xf32> to vector<8x32xf32>
    %179 = arith.mulf %177, %178 : vector<8x32xf32>
    %180 = arith.addf %175, %179 : vector<8x32xf32>
    %cst_55 = arith.constant 0.000000e+00 : f32
    %181 = vector.broadcast %cst_55 : f32 to vector<8x32xf32>
    %182 = arith.cmpf ogt, %180, %181 : vector<8x32xf32>
    %cst_56 = arith.constant 0.000000e+00 : f32
    %183 = vector.broadcast %cst_56 : f32 to vector<8x32xf32>
    %184 = arith.minimumf %180, %183 : vector<8x32xf32>
    %185 = math.exp %184 : vector<8x32xf32>
    %cst_57 = arith.constant 1.000000e+00 : f32
    %186 = vector.broadcast %cst_57 : f32 to vector<8x32xf32>
    %187 = arith.subf %185, %186 : vector<8x32xf32>
    %188 = arith.select %182, %180, %187 : vector<8x32xi1>, vector<8x32xf32>
    %cst_58 = arith.constant dense<0.000000e+00> : vector<8x32xf32>
    %189 = tpu.matmul %188, %58, %cst_58 {dimension_numbers = #tpu.dot_dimension_numbers<[1], [0], [0], [1], [0, 0, 1, 1], [], []>} : vector<8x32xf32>, vector<32x32xf32>, vector<8x32xf32> -> vector<8x32xf32>
    %190 = arith.addf %189, %65 : vector<8x32xf32>
    %cst_59 = arith.constant 0.000000e+00 : f32
    %191 = vector.broadcast %cst_59 : f32 to vector<8x32xf32>
    %192 = arith.cmpf ogt, %190, %191 : vector<8x32xf32>
    %cst_60 = arith.constant 0.000000e+00 : f32
    %193 = vector.broadcast %cst_60 : f32 to vector<8x32xf32>
    %194 = arith.minimumf %190, %193 : vector<8x32xf32>
    %195 = math.exp %194 : vector<8x32xf32>
    %cst_61 = arith.constant 1.000000e+00 : f32
    %196 = vector.broadcast %cst_61 : f32 to vector<8x32xf32>
    %197 = arith.subf %195, %196 : vector<8x32xf32>
    %198 = arith.select %192, %190, %197 : vector<8x32xi1>, vector<8x32xf32>
    %cst_62 = arith.constant dense<0.000000e+00> : vector<8x4xf32>
    %199 = tpu.matmul %198, %59, %cst_62 {dimension_numbers = #tpu.dot_dimension_numbers<[1], [0], [0], [1], [0, 0, 1, 1], [], []>} : vector<8x32xf32>, vector<32x4xf32>, vector<8x4xf32> -> vector<8x4xf32>
    %200 = arith.addf %199, %68 : vector<8x4xf32>
    %201 = arith.subf %111, %154 : vector<8x4xf32>
    %202 = arith.addf %201, %200 : vector<8x4xf32>
    %203 = vector.broadcast %69 : f32 to vector<8x4xf32>
    %204 = arith.mulf %203, %202 : vector<8x4xf32>
    %205 = arith.addf %52, %204 : vector<8x4xf32>
    %206 = vector.extract_strided_slice %205 {offsets = [0, 0], sizes = [8, 1], strides = [1, 1]} : vector<8x4xf32> to vector<8x1xf32>
    %207 = vector.broadcast %206 : vector<8x1xf32> to vector<8x32xf32>
    %208 = vector.broadcast %54 : vector<1x32xf32> to vector<8x32xf32>
    %209 = arith.mulf %207, %208 : vector<8x32xf32>
    %210 = arith.addf %62, %209 : vector<8x32xf32>
    %211 = vector.extract_strided_slice %205 {offsets = [0, 1], sizes = [8, 1], strides = [1, 1]} : vector<8x4xf32> to vector<8x1xf32>
    %212 = vector.broadcast %211 : vector<8x1xf32> to vector<8x32xf32>
    %213 = vector.broadcast %55 : vector<1x32xf32> to vector<8x32xf32>
    %214 = arith.mulf %212, %213 : vector<8x32xf32>
    %215 = arith.addf %210, %214 : vector<8x32xf32>
    %216 = vector.extract_strided_slice %205 {offsets = [0, 2], sizes = [8, 1], strides = [1, 1]} : vector<8x4xf32> to vector<8x1xf32>
    %217 = vector.broadcast %216 : vector<8x1xf32> to vector<8x32xf32>
    %218 = vector.broadcast %56 : vector<1x32xf32> to vector<8x32xf32>
    %219 = arith.mulf %217, %218 : vector<8x32xf32>
    %220 = arith.addf %215, %219 : vector<8x32xf32>
    %221 = vector.extract_strided_slice %205 {offsets = [0, 3], sizes = [8, 1], strides = [1, 1]} : vector<8x4xf32> to vector<8x1xf32>
    %222 = vector.broadcast %221 : vector<8x1xf32> to vector<8x32xf32>
    %223 = vector.broadcast %57 : vector<1x32xf32> to vector<8x32xf32>
    %224 = arith.mulf %222, %223 : vector<8x32xf32>
    %225 = arith.addf %220, %224 : vector<8x32xf32>
    %cst_63 = arith.constant 0.000000e+00 : f32
    %226 = vector.broadcast %cst_63 : f32 to vector<8x32xf32>
    %227 = arith.cmpf ogt, %225, %226 : vector<8x32xf32>
    %cst_64 = arith.constant 0.000000e+00 : f32
    %228 = vector.broadcast %cst_64 : f32 to vector<8x32xf32>
    %229 = arith.minimumf %225, %228 : vector<8x32xf32>
    %230 = math.exp %229 : vector<8x32xf32>
    %cst_65 = arith.constant 1.000000e+00 : f32
    %231 = vector.broadcast %cst_65 : f32 to vector<8x32xf32>
    %232 = arith.subf %230, %231 : vector<8x32xf32>
    %233 = arith.select %227, %225, %232 : vector<8x32xi1>, vector<8x32xf32>
    %cst_66 = arith.constant dense<0.000000e+00> : vector<8x32xf32>
    %234 = tpu.matmul %233, %58, %cst_66 {dimension_numbers = #tpu.dot_dimension_numbers<[1], [0], [0], [1], [0, 0, 1, 1], [], []>} : vector<8x32xf32>, vector<32x32xf32>, vector<8x32xf32> -> vector<8x32xf32>
    %235 = arith.addf %234, %65 : vector<8x32xf32>
    %cst_67 = arith.constant 0.000000e+00 : f32
    %236 = vector.broadcast %cst_67 : f32 to vector<8x32xf32>
    %237 = arith.cmpf ogt, %235, %236 : vector<8x32xf32>
    %cst_68 = arith.constant 0.000000e+00 : f32
    %238 = vector.broadcast %cst_68 : f32 to vector<8x32xf32>
    %239 = arith.minimumf %235, %238 : vector<8x32xf32>
    %240 = math.exp %239 : vector<8x32xf32>
    %cst_69 = arith.constant 1.000000e+00 : f32
    %241 = vector.broadcast %cst_69 : f32 to vector<8x32xf32>
    %242 = arith.subf %240, %241 : vector<8x32xf32>
    %243 = arith.select %237, %235, %242 : vector<8x32xi1>, vector<8x32xf32>
    %cst_70 = arith.constant dense<0.000000e+00> : vector<8x4xf32>
    %244 = tpu.matmul %243, %59, %cst_70 {dimension_numbers = #tpu.dot_dimension_numbers<[1], [0], [0], [1], [0, 0, 1, 1], [], []>} : vector<8x32xf32>, vector<32x4xf32>, vector<8x4xf32> -> vector<8x4xf32>
    %245 = arith.addf %244, %68 : vector<8x4xf32>
    %246 = arith.addf %154, %200 : vector<8x4xf32>
    %cst_71 = arith.constant 3.000000e+00 : f32
    %247 = vector.broadcast %cst_71 : f32 to vector<8x4xf32>
    %248 = arith.mulf %247, %246 : vector<8x4xf32>
    %249 = arith.addf %111, %248 : vector<8x4xf32>
    %250 = arith.addf %249, %245 : vector<8x4xf32>
    %251 = vector.broadcast %71 : f32 to vector<8x4xf32>
    %252 = arith.mulf %251, %250 : vector<8x4xf32>
    %253 = arith.addf %52, %252 : vector<8x4xf32>
    %c1 = arith.constant 1 : index
    %254 = memref.load %arg2[%c1] : memref<7xf32, #tpu.memory_space<smem>>
    %c1_72 = arith.constant 1 : index
    %255 = memref.load %arg3[%c1_72] : memref<7xf32, #tpu.memory_space<smem>>
    %c1_73 = arith.constant 1 : index
    %256 = memref.load %arg4[%c1_73] : memref<7xf32, #tpu.memory_space<smem>>
    %257 = vector.extract_strided_slice %253 {offsets = [0, 0], sizes = [8, 1], strides = [1, 1]} : vector<8x4xf32> to vector<8x1xf32>
    %258 = vector.broadcast %257 : vector<8x1xf32> to vector<8x32xf32>
    %259 = vector.broadcast %54 : vector<1x32xf32> to vector<8x32xf32>
    %260 = arith.mulf %258, %259 : vector<8x32xf32>
    %261 = arith.addf %62, %260 : vector<8x32xf32>
    %262 = vector.extract_strided_slice %253 {offsets = [0, 1], sizes = [8, 1], strides = [1, 1]} : vector<8x4xf32> to vector<8x1xf32>
    %263 = vector.broadcast %262 : vector<8x1xf32> to vector<8x32xf32>
    %264 = vector.broadcast %55 : vector<1x32xf32> to vector<8x32xf32>
    %265 = arith.mulf %263, %264 : vector<8x32xf32>
    %266 = arith.addf %261, %265 : vector<8x32xf32>
    %267 = vector.extract_strided_slice %253 {offsets = [0, 2], sizes = [8, 1], strides = [1, 1]} : vector<8x4xf32> to vector<8x1xf32>
    %268 = vector.broadcast %267 : vector<8x1xf32> to vector<8x32xf32>
    %269 = vector.broadcast %56 : vector<1x32xf32> to vector<8x32xf32>
    %270 = arith.mulf %268, %269 : vector<8x32xf32>
    %271 = arith.addf %266, %270 : vector<8x32xf32>
    %272 = vector.extract_strided_slice %253 {offsets = [0, 3], sizes = [8, 1], strides = [1, 1]} : vector<8x4xf32> to vector<8x1xf32>
    %273 = vector.broadcast %272 : vector<8x1xf32> to vector<8x32xf32>
    %274 = vector.broadcast %57 : vector<1x32xf32> to vector<8x32xf32>
    %275 = arith.mulf %273, %274 : vector<8x32xf32>
    %276 = arith.addf %271, %275 : vector<8x32xf32>
    %cst_74 = arith.constant 0.000000e+00 : f32
    %277 = vector.broadcast %cst_74 : f32 to vector<8x32xf32>
    %278 = arith.cmpf ogt, %276, %277 : vector<8x32xf32>
    %cst_75 = arith.constant 0.000000e+00 : f32
    %279 = vector.broadcast %cst_75 : f32 to vector<8x32xf32>
    %280 = arith.minimumf %276, %279 : vector<8x32xf32>
    %281 = math.exp %280 : vector<8x32xf32>
    %cst_76 = arith.constant 1.000000e+00 : f32
    %282 = vector.broadcast %cst_76 : f32 to vector<8x32xf32>
    %283 = arith.subf %281, %282 : vector<8x32xf32>
    %284 = arith.select %278, %276, %283 : vector<8x32xi1>, vector<8x32xf32>
    %cst_77 = arith.constant dense<0.000000e+00> : vector<8x32xf32>
    %285 = tpu.matmul %284, %58, %cst_77 {dimension_numbers = #tpu.dot_dimension_numbers<[1], [0], [0], [1], [0, 0, 1, 1], [], []>} : vector<8x32xf32>, vector<32x32xf32>, vector<8x32xf32> -> vector<8x32xf32>
    %286 = arith.addf %285, %65 : vector<8x32xf32>
    %cst_78 = arith.constant 0.000000e+00 : f32
    %287 = vector.broadcast %cst_78 : f32 to vector<8x32xf32>
    %288 = arith.cmpf ogt, %286, %287 : vector<8x32xf32>
    %cst_79 = arith.constant 0.000000e+00 : f32
    %289 = vector.broadcast %cst_79 : f32 to vector<8x32xf32>
    %290 = arith.minimumf %286, %289 : vector<8x32xf32>
    %291 = math.exp %290 : vector<8x32xf32>
    %cst_80 = arith.constant 1.000000e+00 : f32
    %292 = vector.broadcast %cst_80 : f32 to vector<8x32xf32>
    %293 = arith.subf %291, %292 : vector<8x32xf32>
    %294 = arith.select %288, %286, %293 : vector<8x32xi1>, vector<8x32xf32>
    %cst_81 = arith.constant dense<0.000000e+00> : vector<8x4xf32>
    %295 = tpu.matmul %294, %59, %cst_81 {dimension_numbers = #tpu.dot_dimension_numbers<[1], [0], [0], [1], [0, 0, 1, 1], [], []>} : vector<8x32xf32>, vector<32x4xf32>, vector<8x4xf32> -> vector<8x4xf32>
    %296 = arith.addf %295, %68 : vector<8x4xf32>
    %297 = vector.broadcast %255 : f32 to vector<8x4xf32>
    %298 = arith.mulf %297, %296 : vector<8x4xf32>
    %299 = arith.addf %253, %298 : vector<8x4xf32>
    %300 = vector.extract_strided_slice %299 {offsets = [0, 0], sizes = [8, 1], strides = [1, 1]} : vector<8x4xf32> to vector<8x1xf32>
    %301 = vector.broadcast %300 : vector<8x1xf32> to vector<8x32xf32>
    %302 = vector.broadcast %54 : vector<1x32xf32> to vector<8x32xf32>
    %303 = arith.mulf %301, %302 : vector<8x32xf32>
    %304 = arith.addf %62, %303 : vector<8x32xf32>
    %305 = vector.extract_strided_slice %299 {offsets = [0, 1], sizes = [8, 1], strides = [1, 1]} : vector<8x4xf32> to vector<8x1xf32>
    %306 = vector.broadcast %305 : vector<8x1xf32> to vector<8x32xf32>
    %307 = vector.broadcast %55 : vector<1x32xf32> to vector<8x32xf32>
    %308 = arith.mulf %306, %307 : vector<8x32xf32>
    %309 = arith.addf %304, %308 : vector<8x32xf32>
    %310 = vector.extract_strided_slice %299 {offsets = [0, 2], sizes = [8, 1], strides = [1, 1]} : vector<8x4xf32> to vector<8x1xf32>
    %311 = vector.broadcast %310 : vector<8x1xf32> to vector<8x32xf32>
    %312 = vector.broadcast %56 : vector<1x32xf32> to vector<8x32xf32>
    %313 = arith.mulf %311, %312 : vector<8x32xf32>
    %314 = arith.addf %309, %313 : vector<8x32xf32>
    %315 = vector.extract_strided_slice %299 {offsets = [0, 3], sizes = [8, 1], strides = [1, 1]} : vector<8x4xf32> to vector<8x1xf32>
    %316 = vector.broadcast %315 : vector<8x1xf32> to vector<8x32xf32>
    %317 = vector.broadcast %57 : vector<1x32xf32> to vector<8x32xf32>
    %318 = arith.mulf %316, %317 : vector<8x32xf32>
    %319 = arith.addf %314, %318 : vector<8x32xf32>
    %cst_82 = arith.constant 0.000000e+00 : f32
    %320 = vector.broadcast %cst_82 : f32 to vector<8x32xf32>
    %321 = arith.cmpf ogt, %319, %320 : vector<8x32xf32>
    %cst_83 = arith.constant 0.000000e+00 : f32
    %322 = vector.broadcast %cst_83 : f32 to vector<8x32xf32>
    %323 = arith.minimumf %319, %322 : vector<8x32xf32>
    %324 = math.exp %323 : vector<8x32xf32>
    %cst_84 = arith.constant 1.000000e+00 : f32
    %325 = vector.broadcast %cst_84 : f32 to vector<8x32xf32>
    %326 = arith.subf %324, %325 : vector<8x32xf32>
    %327 = arith.select %321, %319, %326 : vector<8x32xi1>, vector<8x32xf32>
    %cst_85 = arith.constant dense<0.000000e+00> : vector<8x32xf32>
    %328 = tpu.matmul %327, %58, %cst_85 {dimension_numbers = #tpu.dot_dimension_numbers<[1], [0], [0], [1], [0, 0, 1, 1], [], []>} : vector<8x32xf32>, vector<32x32xf32>, vector<8x32xf32> -> vector<8x32xf32>
    %329 = arith.addf %328, %65 : vector<8x32xf32>
    %cst_86 = arith.constant 0.000000e+00 : f32
    %330 = vector.broadcast %cst_86 : f32 to vector<8x32xf32>
    %331 = arith.cmpf ogt, %329, %330 : vector<8x32xf32>
    %cst_87 = arith.constant 0.000000e+00 : f32
    %332 = vector.broadcast %cst_87 : f32 to vector<8x32xf32>
    %333 = arith.minimumf %329, %332 : vector<8x32xf32>
    %334 = math.exp %333 : vector<8x32xf32>
    %cst_88 = arith.constant 1.000000e+00 : f32
    %335 = vector.broadcast %cst_88 : f32 to vector<8x32xf32>
    %336 = arith.subf %334, %335 : vector<8x32xf32>
    %337 = arith.select %331, %329, %336 : vector<8x32xi1>, vector<8x32xf32>
    %cst_89 = arith.constant dense<0.000000e+00> : vector<8x4xf32>
    %338 = tpu.matmul %337, %59, %cst_89 {dimension_numbers = #tpu.dot_dimension_numbers<[1], [0], [0], [1], [0, 0, 1, 1], [], []>} : vector<8x32xf32>, vector<32x4xf32>, vector<8x4xf32> -> vector<8x4xf32>
    %339 = arith.addf %338, %68 : vector<8x4xf32>
    %340 = vector.broadcast %254 : f32 to vector<8x4xf32>
    %341 = arith.mulf %340, %339 : vector<8x4xf32>
    %342 = arith.addf %253, %341 : vector<8x4xf32>
    %343 = vector.broadcast %255 : f32 to vector<8x4xf32>
    %344 = arith.mulf %343, %296 : vector<8x4xf32>
    %345 = arith.subf %342, %344 : vector<8x4xf32>
    %346 = vector.extract_strided_slice %345 {offsets = [0, 0], sizes = [8, 1], strides = [1, 1]} : vector<8x4xf32> to vector<8x1xf32>
    %347 = vector.broadcast %346 : vector<8x1xf32> to vector<8x32xf32>
    %348 = vector.broadcast %54 : vector<1x32xf32> to vector<8x32xf32>
    %349 = arith.mulf %347, %348 : vector<8x32xf32>
    %350 = arith.addf %62, %349 : vector<8x32xf32>
    %351 = vector.extract_strided_slice %345 {offsets = [0, 1], sizes = [8, 1], strides = [1, 1]} : vector<8x4xf32> to vector<8x1xf32>
    %352 = vector.broadcast %351 : vector<8x1xf32> to vector<8x32xf32>
    %353 = vector.broadcast %55 : vector<1x32xf32> to vector<8x32xf32>
    %354 = arith.mulf %352, %353 : vector<8x32xf32>
    %355 = arith.addf %350, %354 : vector<8x32xf32>
    %356 = vector.extract_strided_slice %345 {offsets = [0, 2], sizes = [8, 1], strides = [1, 1]} : vector<8x4xf32> to vector<8x1xf32>
    %357 = vector.broadcast %356 : vector<8x1xf32> to vector<8x32xf32>
    %358 = vector.broadcast %56 : vector<1x32xf32> to vector<8x32xf32>
    %359 = arith.mulf %357, %358 : vector<8x32xf32>
    %360 = arith.addf %355, %359 : vector<8x32xf32>
    %361 = vector.extract_strided_slice %345 {offsets = [0, 3], sizes = [8, 1], strides = [1, 1]} : vector<8x4xf32> to vector<8x1xf32>
    %362 = vector.broadcast %361 : vector<8x1xf32> to vector<8x32xf32>
    %363 = vector.broadcast %57 : vector<1x32xf32> to vector<8x32xf32>
    %364 = arith.mulf %362, %363 : vector<8x32xf32>
    %365 = arith.addf %360, %364 : vector<8x32xf32>
    %cst_90 = arith.constant 0.000000e+00 : f32
    %366 = vector.broadcast %cst_90 : f32 to vector<8x32xf32>
    %367 = arith.cmpf ogt, %365, %366 : vector<8x32xf32>
    %cst_91 = arith.constant 0.000000e+00 : f32
    %368 = vector.broadcast %cst_91 : f32 to vector<8x32xf32>
    %369 = arith.minimumf %365, %368 : vector<8x32xf32>
    %370 = math.exp %369 : vector<8x32xf32>
    %cst_92 = arith.constant 1.000000e+00 : f32
    %371 = vector.broadcast %cst_92 : f32 to vector<8x32xf32>
    %372 = arith.subf %370, %371 : vector<8x32xf32>
    %373 = arith.select %367, %365, %372 : vector<8x32xi1>, vector<8x32xf32>
    %cst_93 = arith.constant dense<0.000000e+00> : vector<8x32xf32>
    %374 = tpu.matmul %373, %58, %cst_93 {dimension_numbers = #tpu.dot_dimension_numbers<[1], [0], [0], [1], [0, 0, 1, 1], [], []>} : vector<8x32xf32>, vector<32x32xf32>, vector<8x32xf32> -> vector<8x32xf32>
    %375 = arith.addf %374, %65 : vector<8x32xf32>
    %cst_94 = arith.constant 0.000000e+00 : f32
    %376 = vector.broadcast %cst_94 : f32 to vector<8x32xf32>
    %377 = arith.cmpf ogt, %375, %376 : vector<8x32xf32>
    %cst_95 = arith.constant 0.000000e+00 : f32
    %378 = vector.broadcast %cst_95 : f32 to vector<8x32xf32>
    %379 = arith.minimumf %375, %378 : vector<8x32xf32>
    %380 = math.exp %379 : vector<8x32xf32>
    %cst_96 = arith.constant 1.000000e+00 : f32
    %381 = vector.broadcast %cst_96 : f32 to vector<8x32xf32>
    %382 = arith.subf %380, %381 : vector<8x32xf32>
    %383 = arith.select %377, %375, %382 : vector<8x32xi1>, vector<8x32xf32>
    %cst_97 = arith.constant dense<0.000000e+00> : vector<8x4xf32>
    %384 = tpu.matmul %383, %59, %cst_97 {dimension_numbers = #tpu.dot_dimension_numbers<[1], [0], [0], [1], [0, 0, 1, 1], [], []>} : vector<8x32xf32>, vector<32x4xf32>, vector<8x4xf32> -> vector<8x4xf32>
    %385 = arith.addf %384, %68 : vector<8x4xf32>
    %386 = arith.subf %296, %339 : vector<8x4xf32>
    %387 = arith.addf %386, %385 : vector<8x4xf32>
    %388 = vector.broadcast %254 : f32 to vector<8x4xf32>
    %389 = arith.mulf %388, %387 : vector<8x4xf32>
    %390 = arith.addf %253, %389 : vector<8x4xf32>
    %391 = vector.extract_strided_slice %390 {offsets = [0, 0], sizes = [8, 1], strides = [1, 1]} : vector<8x4xf32> to vector<8x1xf32>
    %392 = vector.broadcast %391 : vector<8x1xf32> to vector<8x32xf32>
    %393 = vector.broadcast %54 : vector<1x32xf32> to vector<8x32xf32>
    %394 = arith.mulf %392, %393 : vector<8x32xf32>
    %395 = arith.addf %62, %394 : vector<8x32xf32>
    %396 = vector.extract_strided_slice %390 {offsets = [0, 1], sizes = [8, 1], strides = [1, 1]} : vector<8x4xf32> to vector<8x1xf32>
    %397 = vector.broadcast %396 : vector<8x1xf32> to vector<8x32xf32>
    %398 = vector.broadcast %55 : vector<1x32xf32> to vector<8x32xf32>
    %399 = arith.mulf %397, %398 : vector<8x32xf32>
    %400 = arith.addf %395, %399 : vector<8x32xf32>
    %401 = vector.extract_strided_slice %390 {offsets = [0, 2], sizes = [8, 1], strides = [1, 1]} : vector<8x4xf32> to vector<8x1xf32>
    %402 = vector.broadcast %401 : vector<8x1xf32> to vector<8x32xf32>
    %403 = vector.broadcast %56 : vector<1x32xf32> to vector<8x32xf32>
    %404 = arith.mulf %402, %403 : vector<8x32xf32>
    %405 = arith.addf %400, %404 : vector<8x32xf32>
    %406 = vector.extract_strided_slice %390 {offsets = [0, 3], sizes = [8, 1], strides = [1, 1]} : vector<8x4xf32> to vector<8x1xf32>
    %407 = vector.broadcast %406 : vector<8x1xf32> to vector<8x32xf32>
    %408 = vector.broadcast %57 : vector<1x32xf32> to vector<8x32xf32>
    %409 = arith.mulf %407, %408 : vector<8x32xf32>
    %410 = arith.addf %405, %409 : vector<8x32xf32>
    %cst_98 = arith.constant 0.000000e+00 : f32
    %411 = vector.broadcast %cst_98 : f32 to vector<8x32xf32>
    %412 = arith.cmpf ogt, %410, %411 : vector<8x32xf32>
    %cst_99 = arith.constant 0.000000e+00 : f32
    %413 = vector.broadcast %cst_99 : f32 to vector<8x32xf32>
    %414 = arith.minimumf %410, %413 : vector<8x32xf32>
    %415 = math.exp %414 : vector<8x32xf32>
    %cst_100 = arith.constant 1.000000e+00 : f32
    %416 = vector.broadcast %cst_100 : f32 to vector<8x32xf32>
    %417 = arith.subf %415, %416 : vector<8x32xf32>
    %418 = arith.select %412, %410, %417 : vector<8x32xi1>, vector<8x32xf32>
    %cst_101 = arith.constant dense<0.000000e+00> : vector<8x32xf32>
    %419 = tpu.matmul %418, %58, %cst_101 {dimension_numbers = #tpu.dot_dimension_numbers<[1], [0], [0], [1], [0, 0, 1, 1], [], []>} : vector<8x32xf32>, vector<32x32xf32>, vector<8x32xf32> -> vector<8x32xf32>
    %420 = arith.addf %419, %65 : vector<8x32xf32>
    %cst_102 = arith.constant 0.000000e+00 : f32
    %421 = vector.broadcast %cst_102 : f32 to vector<8x32xf32>
    %422 = arith.cmpf ogt, %420, %421 : vector<8x32xf32>
    %cst_103 = arith.constant 0.000000e+00 : f32
    %423 = vector.broadcast %cst_103 : f32 to vector<8x32xf32>
    %424 = arith.minimumf %420, %423 : vector<8x32xf32>
    %425 = math.exp %424 : vector<8x32xf32>
    %cst_104 = arith.constant 1.000000e+00 : f32
    %426 = vector.broadcast %cst_104 : f32 to vector<8x32xf32>
    %427 = arith.subf %425, %426 : vector<8x32xf32>
    %428 = arith.select %422, %420, %427 : vector<8x32xi1>, vector<8x32xf32>
    %cst_105 = arith.constant dense<0.000000e+00> : vector<8x4xf32>
    %429 = tpu.matmul %428, %59, %cst_105 {dimension_numbers = #tpu.dot_dimension_numbers<[1], [0], [0], [1], [0, 0, 1, 1], [], []>} : vector<8x32xf32>, vector<32x4xf32>, vector<8x4xf32> -> vector<8x4xf32>
    %430 = arith.addf %429, %68 : vector<8x4xf32>
    %431 = arith.addf %339, %385 : vector<8x4xf32>
    %cst_106 = arith.constant 3.000000e+00 : f32
    %432 = vector.broadcast %cst_106 : f32 to vector<8x4xf32>
    %433 = arith.mulf %432, %431 : vector<8x4xf32>
    %434 = arith.addf %296, %433 : vector<8x4xf32>
    %435 = arith.addf %434, %430 : vector<8x4xf32>
    %436 = vector.broadcast %256 : f32 to vector<8x4xf32>
    %437 = arith.mulf %436, %435 : vector<8x4xf32>
    %438 = arith.addf %253, %437 : vector<8x4xf32>
    %c2 = arith.constant 2 : index
    %439 = memref.load %arg2[%c2] : memref<7xf32, #tpu.memory_space<smem>>
    %c2_107 = arith.constant 2 : index
    %440 = memref.load %arg3[%c2_107] : memref<7xf32, #tpu.memory_space<smem>>
    %c2_108 = arith.constant 2 : index
    %441 = memref.load %arg4[%c2_108] : memref<7xf32, #tpu.memory_space<smem>>
    %442 = vector.extract_strided_slice %438 {offsets = [0, 0], sizes = [8, 1], strides = [1, 1]} : vector<8x4xf32> to vector<8x1xf32>
    %443 = vector.broadcast %442 : vector<8x1xf32> to vector<8x32xf32>
    %444 = vector.broadcast %54 : vector<1x32xf32> to vector<8x32xf32>
    %445 = arith.mulf %443, %444 : vector<8x32xf32>
    %446 = arith.addf %62, %445 : vector<8x32xf32>
    %447 = vector.extract_strided_slice %438 {offsets = [0, 1], sizes = [8, 1], strides = [1, 1]} : vector<8x4xf32> to vector<8x1xf32>
    %448 = vector.broadcast %447 : vector<8x1xf32> to vector<8x32xf32>
    %449 = vector.broadcast %55 : vector<1x32xf32> to vector<8x32xf32>
    %450 = arith.mulf %448, %449 : vector<8x32xf32>
    %451 = arith.addf %446, %450 : vector<8x32xf32>
    %452 = vector.extract_strided_slice %438 {offsets = [0, 2], sizes = [8, 1], strides = [1, 1]} : vector<8x4xf32> to vector<8x1xf32>
    %453 = vector.broadcast %452 : vector<8x1xf32> to vector<8x32xf32>
    %454 = vector.broadcast %56 : vector<1x32xf32> to vector<8x32xf32>
    %455 = arith.mulf %453, %454 : vector<8x32xf32>
    %456 = arith.addf %451, %455 : vector<8x32xf32>
    %457 = vector.extract_strided_slice %438 {offsets = [0, 3], sizes = [8, 1], strides = [1, 1]} : vector<8x4xf32> to vector<8x1xf32>
    %458 = vector.broadcast %457 : vector<8x1xf32> to vector<8x32xf32>
    %459 = vector.broadcast %57 : vector<1x32xf32> to vector<8x32xf32>
    %460 = arith.mulf %458, %459 : vector<8x32xf32>
    %461 = arith.addf %456, %460 : vector<8x32xf32>
    %cst_109 = arith.constant 0.000000e+00 : f32
    %462 = vector.broadcast %cst_109 : f32 to vector<8x32xf32>
    %463 = arith.cmpf ogt, %461, %462 : vector<8x32xf32>
    %cst_110 = arith.constant 0.000000e+00 : f32
    %464 = vector.broadcast %cst_110 : f32 to vector<8x32xf32>
    %465 = arith.minimumf %461, %464 : vector<8x32xf32>
    %466 = math.exp %465 : vector<8x32xf32>
    %cst_111 = arith.constant 1.000000e+00 : f32
    %467 = vector.broadcast %cst_111 : f32 to vector<8x32xf32>
    %468 = arith.subf %466, %467 : vector<8x32xf32>
    %469 = arith.select %463, %461, %468 : vector<8x32xi1>, vector<8x32xf32>
    %cst_112 = arith.constant dense<0.000000e+00> : vector<8x32xf32>
    %470 = tpu.matmul %469, %58, %cst_112 {dimension_numbers = #tpu.dot_dimension_numbers<[1], [0], [0], [1], [0, 0, 1, 1], [], []>} : vector<8x32xf32>, vector<32x32xf32>, vector<8x32xf32> -> vector<8x32xf32>
    %471 = arith.addf %470, %65 : vector<8x32xf32>
    %cst_113 = arith.constant 0.000000e+00 : f32
    %472 = vector.broadcast %cst_113 : f32 to vector<8x32xf32>
    %473 = arith.cmpf ogt, %471, %472 : vector<8x32xf32>
    %cst_114 = arith.constant 0.000000e+00 : f32
    %474 = vector.broadcast %cst_114 : f32 to vector<8x32xf32>
    %475 = arith.minimumf %471, %474 : vector<8x32xf32>
    %476 = math.exp %475 : vector<8x32xf32>
    %cst_115 = arith.constant 1.000000e+00 : f32
    %477 = vector.broadcast %cst_115 : f32 to vector<8x32xf32>
    %478 = arith.subf %476, %477 : vector<8x32xf32>
    %479 = arith.select %473, %471, %478 : vector<8x32xi1>, vector<8x32xf32>
    %cst_116 = arith.constant dense<0.000000e+00> : vector<8x4xf32>
    %480 = tpu.matmul %479, %59, %cst_116 {dimension_numbers = #tpu.dot_dimension_numbers<[1], [0], [0], [1], [0, 0, 1, 1], [], []>} : vector<8x32xf32>, vector<32x4xf32>, vector<8x4xf32> -> vector<8x4xf32>
    %481 = arith.addf %480, %68 : vector<8x4xf32>
    %482 = vector.broadcast %440 : f32 to vector<8x4xf32>
    %483 = arith.mulf %482, %481 : vector<8x4xf32>
    %484 = arith.addf %438, %483 : vector<8x4xf32>
    %485 = vector.extract_strided_slice %484 {offsets = [0, 0], sizes = [8, 1], strides = [1, 1]} : vector<8x4xf32> to vector<8x1xf32>
    %486 = vector.broadcast %485 : vector<8x1xf32> to vector<8x32xf32>
    %487 = vector.broadcast %54 : vector<1x32xf32> to vector<8x32xf32>
    %488 = arith.mulf %486, %487 : vector<8x32xf32>
    %489 = arith.addf %62, %488 : vector<8x32xf32>
    %490 = vector.extract_strided_slice %484 {offsets = [0, 1], sizes = [8, 1], strides = [1, 1]} : vector<8x4xf32> to vector<8x1xf32>
    %491 = vector.broadcast %490 : vector<8x1xf32> to vector<8x32xf32>
    %492 = vector.broadcast %55 : vector<1x32xf32> to vector<8x32xf32>
    %493 = arith.mulf %491, %492 : vector<8x32xf32>
    %494 = arith.addf %489, %493 : vector<8x32xf32>
    %495 = vector.extract_strided_slice %484 {offsets = [0, 2], sizes = [8, 1], strides = [1, 1]} : vector<8x4xf32> to vector<8x1xf32>
    %496 = vector.broadcast %495 : vector<8x1xf32> to vector<8x32xf32>
    %497 = vector.broadcast %56 : vector<1x32xf32> to vector<8x32xf32>
    %498 = arith.mulf %496, %497 : vector<8x32xf32>
    %499 = arith.addf %494, %498 : vector<8x32xf32>
    %500 = vector.extract_strided_slice %484 {offsets = [0, 3], sizes = [8, 1], strides = [1, 1]} : vector<8x4xf32> to vector<8x1xf32>
    %501 = vector.broadcast %500 : vector<8x1xf32> to vector<8x32xf32>
    %502 = vector.broadcast %57 : vector<1x32xf32> to vector<8x32xf32>
    %503 = arith.mulf %501, %502 : vector<8x32xf32>
    %504 = arith.addf %499, %503 : vector<8x32xf32>
    %cst_117 = arith.constant 0.000000e+00 : f32
    %505 = vector.broadcast %cst_117 : f32 to vector<8x32xf32>
    %506 = arith.cmpf ogt, %504, %505 : vector<8x32xf32>
    %cst_118 = arith.constant 0.000000e+00 : f32
    %507 = vector.broadcast %cst_118 : f32 to vector<8x32xf32>
    %508 = arith.minimumf %504, %507 : vector<8x32xf32>
    %509 = math.exp %508 : vector<8x32xf32>
    %cst_119 = arith.constant 1.000000e+00 : f32
    %510 = vector.broadcast %cst_119 : f32 to vector<8x32xf32>
    %511 = arith.subf %509, %510 : vector<8x32xf32>
    %512 = arith.select %506, %504, %511 : vector<8x32xi1>, vector<8x32xf32>
    %cst_120 = arith.constant dense<0.000000e+00> : vector<8x32xf32>
    %513 = tpu.matmul %512, %58, %cst_120 {dimension_numbers = #tpu.dot_dimension_numbers<[1], [0], [0], [1], [0, 0, 1, 1], [], []>} : vector<8x32xf32>, vector<32x32xf32>, vector<8x32xf32> -> vector<8x32xf32>
    %514 = arith.addf %513, %65 : vector<8x32xf32>
    %cst_121 = arith.constant 0.000000e+00 : f32
    %515 = vector.broadcast %cst_121 : f32 to vector<8x32xf32>
    %516 = arith.cmpf ogt, %514, %515 : vector<8x32xf32>
    %cst_122 = arith.constant 0.000000e+00 : f32
    %517 = vector.broadcast %cst_122 : f32 to vector<8x32xf32>
    %518 = arith.minimumf %514, %517 : vector<8x32xf32>
    %519 = math.exp %518 : vector<8x32xf32>
    %cst_123 = arith.constant 1.000000e+00 : f32
    %520 = vector.broadcast %cst_123 : f32 to vector<8x32xf32>
    %521 = arith.subf %519, %520 : vector<8x32xf32>
    %522 = arith.select %516, %514, %521 : vector<8x32xi1>, vector<8x32xf32>
    %cst_124 = arith.constant dense<0.000000e+00> : vector<8x4xf32>
    %523 = tpu.matmul %522, %59, %cst_124 {dimension_numbers = #tpu.dot_dimension_numbers<[1], [0], [0], [1], [0, 0, 1, 1], [], []>} : vector<8x32xf32>, vector<32x4xf32>, vector<8x4xf32> -> vector<8x4xf32>
    %524 = arith.addf %523, %68 : vector<8x4xf32>
    %525 = vector.broadcast %439 : f32 to vector<8x4xf32>
    %526 = arith.mulf %525, %524 : vector<8x4xf32>
    %527 = arith.addf %438, %526 : vector<8x4xf32>
    %528 = vector.broadcast %440 : f32 to vector<8x4xf32>
    %529 = arith.mulf %528, %481 : vector<8x4xf32>
    %530 = arith.subf %527, %529 : vector<8x4xf32>
    %531 = vector.extract_strided_slice %530 {offsets = [0, 0], sizes = [8, 1], strides = [1, 1]} : vector<8x4xf32> to vector<8x1xf32>
    %532 = vector.broadcast %531 : vector<8x1xf32> to vector<8x32xf32>
    %533 = vector.broadcast %54 : vector<1x32xf32> to vector<8x32xf32>
    %534 = arith.mulf %532, %533 : vector<8x32xf32>
    %535 = arith.addf %62, %534 : vector<8x32xf32>
    %536 = vector.extract_strided_slice %530 {offsets = [0, 1], sizes = [8, 1], strides = [1, 1]} : vector<8x4xf32> to vector<8x1xf32>
    %537 = vector.broadcast %536 : vector<8x1xf32> to vector<8x32xf32>
    %538 = vector.broadcast %55 : vector<1x32xf32> to vector<8x32xf32>
    %539 = arith.mulf %537, %538 : vector<8x32xf32>
    %540 = arith.addf %535, %539 : vector<8x32xf32>
    %541 = vector.extract_strided_slice %530 {offsets = [0, 2], sizes = [8, 1], strides = [1, 1]} : vector<8x4xf32> to vector<8x1xf32>
    %542 = vector.broadcast %541 : vector<8x1xf32> to vector<8x32xf32>
    %543 = vector.broadcast %56 : vector<1x32xf32> to vector<8x32xf32>
    %544 = arith.mulf %542, %543 : vector<8x32xf32>
    %545 = arith.addf %540, %544 : vector<8x32xf32>
    %546 = vector.extract_strided_slice %530 {offsets = [0, 3], sizes = [8, 1], strides = [1, 1]} : vector<8x4xf32> to vector<8x1xf32>
    %547 = vector.broadcast %546 : vector<8x1xf32> to vector<8x32xf32>
    %548 = vector.broadcast %57 : vector<1x32xf32> to vector<8x32xf32>
    %549 = arith.mulf %547, %548 : vector<8x32xf32>
    %550 = arith.addf %545, %549 : vector<8x32xf32>
    %cst_125 = arith.constant 0.000000e+00 : f32
    %551 = vector.broadcast %cst_125 : f32 to vector<8x32xf32>
    %552 = arith.cmpf ogt, %550, %551 : vector<8x32xf32>
    %cst_126 = arith.constant 0.000000e+00 : f32
    %553 = vector.broadcast %cst_126 : f32 to vector<8x32xf32>
    %554 = arith.minimumf %550, %553 : vector<8x32xf32>
    %555 = math.exp %554 : vector<8x32xf32>
    %cst_127 = arith.constant 1.000000e+00 : f32
    %556 = vector.broadcast %cst_127 : f32 to vector<8x32xf32>
    %557 = arith.subf %555, %556 : vector<8x32xf32>
    %558 = arith.select %552, %550, %557 : vector<8x32xi1>, vector<8x32xf32>
    %cst_128 = arith.constant dense<0.000000e+00> : vector<8x32xf32>
    %559 = tpu.matmul %558, %58, %cst_128 {dimension_numbers = #tpu.dot_dimension_numbers<[1], [0], [0], [1], [0, 0, 1, 1], [], []>} : vector<8x32xf32>, vector<32x32xf32>, vector<8x32xf32> -> vector<8x32xf32>
    %560 = arith.addf %559, %65 : vector<8x32xf32>
    %cst_129 = arith.constant 0.000000e+00 : f32
    %561 = vector.broadcast %cst_129 : f32 to vector<8x32xf32>
    %562 = arith.cmpf ogt, %560, %561 : vector<8x32xf32>
    %cst_130 = arith.constant 0.000000e+00 : f32
    %563 = vector.broadcast %cst_130 : f32 to vector<8x32xf32>
    %564 = arith.minimumf %560, %563 : vector<8x32xf32>
    %565 = math.exp %564 : vector<8x32xf32>
    %cst_131 = arith.constant 1.000000e+00 : f32
    %566 = vector.broadcast %cst_131 : f32 to vector<8x32xf32>
    %567 = arith.subf %565, %566 : vector<8x32xf32>
    %568 = arith.select %562, %560, %567 : vector<8x32xi1>, vector<8x32xf32>
    %cst_132 = arith.constant dense<0.000000e+00> : vector<8x4xf32>
    %569 = tpu.matmul %568, %59, %cst_132 {dimension_numbers = #tpu.dot_dimension_numbers<[1], [0], [0], [1], [0, 0, 1, 1], [], []>} : vector<8x32xf32>, vector<32x4xf32>, vector<8x4xf32> -> vector<8x4xf32>
    %570 = arith.addf %569, %68 : vector<8x4xf32>
    %571 = arith.subf %481, %524 : vector<8x4xf32>
    %572 = arith.addf %571, %570 : vector<8x4xf32>
    %573 = vector.broadcast %439 : f32 to vector<8x4xf32>
    %574 = arith.mulf %573, %572 : vector<8x4xf32>
    %575 = arith.addf %438, %574 : vector<8x4xf32>
    %576 = vector.extract_strided_slice %575 {offsets = [0, 0], sizes = [8, 1], strides = [1, 1]} : vector<8x4xf32> to vector<8x1xf32>
    %577 = vector.broadcast %576 : vector<8x1xf32> to vector<8x32xf32>
    %578 = vector.broadcast %54 : vector<1x32xf32> to vector<8x32xf32>
    %579 = arith.mulf %577, %578 : vector<8x32xf32>
    %580 = arith.addf %62, %579 : vector<8x32xf32>
    %581 = vector.extract_strided_slice %575 {offsets = [0, 1], sizes = [8, 1], strides = [1, 1]} : vector<8x4xf32> to vector<8x1xf32>
    %582 = vector.broadcast %581 : vector<8x1xf32> to vector<8x32xf32>
    %583 = vector.broadcast %55 : vector<1x32xf32> to vector<8x32xf32>
    %584 = arith.mulf %582, %583 : vector<8x32xf32>
    %585 = arith.addf %580, %584 : vector<8x32xf32>
    %586 = vector.extract_strided_slice %575 {offsets = [0, 2], sizes = [8, 1], strides = [1, 1]} : vector<8x4xf32> to vector<8x1xf32>
    %587 = vector.broadcast %586 : vector<8x1xf32> to vector<8x32xf32>
    %588 = vector.broadcast %56 : vector<1x32xf32> to vector<8x32xf32>
    %589 = arith.mulf %587, %588 : vector<8x32xf32>
    %590 = arith.addf %585, %589 : vector<8x32xf32>
    %591 = vector.extract_strided_slice %575 {offsets = [0, 3], sizes = [8, 1], strides = [1, 1]} : vector<8x4xf32> to vector<8x1xf32>
    %592 = vector.broadcast %591 : vector<8x1xf32> to vector<8x32xf32>
    %593 = vector.broadcast %57 : vector<1x32xf32> to vector<8x32xf32>
    %594 = arith.mulf %592, %593 : vector<8x32xf32>
    %595 = arith.addf %590, %594 : vector<8x32xf32>
    %cst_133 = arith.constant 0.000000e+00 : f32
    %596 = vector.broadcast %cst_133 : f32 to vector<8x32xf32>
    %597 = arith.cmpf ogt, %595, %596 : vector<8x32xf32>
    %cst_134 = arith.constant 0.000000e+00 : f32
    %598 = vector.broadcast %cst_134 : f32 to vector<8x32xf32>
    %599 = arith.minimumf %595, %598 : vector<8x32xf32>
    %600 = math.exp %599 : vector<8x32xf32>
    %cst_135 = arith.constant 1.000000e+00 : f32
    %601 = vector.broadcast %cst_135 : f32 to vector<8x32xf32>
    %602 = arith.subf %600, %601 : vector<8x32xf32>
    %603 = arith.select %597, %595, %602 : vector<8x32xi1>, vector<8x32xf32>
    %cst_136 = arith.constant dense<0.000000e+00> : vector<8x32xf32>
    %604 = tpu.matmul %603, %58, %cst_136 {dimension_numbers = #tpu.dot_dimension_numbers<[1], [0], [0], [1], [0, 0, 1, 1], [], []>} : vector<8x32xf32>, vector<32x32xf32>, vector<8x32xf32> -> vector<8x32xf32>
    %605 = arith.addf %604, %65 : vector<8x32xf32>
    %cst_137 = arith.constant 0.000000e+00 : f32
    %606 = vector.broadcast %cst_137 : f32 to vector<8x32xf32>
    %607 = arith.cmpf ogt, %605, %606 : vector<8x32xf32>
    %cst_138 = arith.constant 0.000000e+00 : f32
    %608 = vector.broadcast %cst_138 : f32 to vector<8x32xf32>
    %609 = arith.minimumf %605, %608 : vector<8x32xf32>
    %610 = math.exp %609 : vector<8x32xf32>
    %cst_139 = arith.constant 1.000000e+00 : f32
    %611 = vector.broadcast %cst_139 : f32 to vector<8x32xf32>
    %612 = arith.subf %610, %611 : vector<8x32xf32>
    %613 = arith.select %607, %605, %612 : vector<8x32xi1>, vector<8x32xf32>
    %cst_140 = arith.constant dense<0.000000e+00> : vector<8x4xf32>
    %614 = tpu.matmul %613, %59, %cst_140 {dimension_numbers = #tpu.dot_dimension_numbers<[1], [0], [0], [1], [0, 0, 1, 1], [], []>} : vector<8x32xf32>, vector<32x4xf32>, vector<8x4xf32> -> vector<8x4xf32>
    %615 = arith.addf %614, %68 : vector<8x4xf32>
    %616 = arith.addf %524, %570 : vector<8x4xf32>
    %cst_141 = arith.constant 3.000000e+00 : f32
    %617 = vector.broadcast %cst_141 : f32 to vector<8x4xf32>
    %618 = arith.mulf %617, %616 : vector<8x4xf32>
    %619 = arith.addf %481, %618 : vector<8x4xf32>
    %620 = arith.addf %619, %615 : vector<8x4xf32>
    %621 = vector.broadcast %441 : f32 to vector<8x4xf32>
    %622 = arith.mulf %621, %620 : vector<8x4xf32>
    %623 = arith.addf %438, %622 : vector<8x4xf32>
    %c3 = arith.constant 3 : index
    %624 = memref.load %arg2[%c3] : memref<7xf32, #tpu.memory_space<smem>>
    %c3_142 = arith.constant 3 : index
    %625 = memref.load %arg3[%c3_142] : memref<7xf32, #tpu.memory_space<smem>>
    %c3_143 = arith.constant 3 : index
    %626 = memref.load %arg4[%c3_143] : memref<7xf32, #tpu.memory_space<smem>>
    %627 = vector.extract_strided_slice %623 {offsets = [0, 0], sizes = [8, 1], strides = [1, 1]} : vector<8x4xf32> to vector<8x1xf32>
    %628 = vector.broadcast %627 : vector<8x1xf32> to vector<8x32xf32>
    %629 = vector.broadcast %54 : vector<1x32xf32> to vector<8x32xf32>
    %630 = arith.mulf %628, %629 : vector<8x32xf32>
    %631 = arith.addf %62, %630 : vector<8x32xf32>
    %632 = vector.extract_strided_slice %623 {offsets = [0, 1], sizes = [8, 1], strides = [1, 1]} : vector<8x4xf32> to vector<8x1xf32>
    %633 = vector.broadcast %632 : vector<8x1xf32> to vector<8x32xf32>
    %634 = vector.broadcast %55 : vector<1x32xf32> to vector<8x32xf32>
    %635 = arith.mulf %633, %634 : vector<8x32xf32>
    %636 = arith.addf %631, %635 : vector<8x32xf32>
    %637 = vector.extract_strided_slice %623 {offsets = [0, 2], sizes = [8, 1], strides = [1, 1]} : vector<8x4xf32> to vector<8x1xf32>
    %638 = vector.broadcast %637 : vector<8x1xf32> to vector<8x32xf32>
    %639 = vector.broadcast %56 : vector<1x32xf32> to vector<8x32xf32>
    %640 = arith.mulf %638, %639 : vector<8x32xf32>
    %641 = arith.addf %636, %640 : vector<8x32xf32>
    %642 = vector.extract_strided_slice %623 {offsets = [0, 3], sizes = [8, 1], strides = [1, 1]} : vector<8x4xf32> to vector<8x1xf32>
    %643 = vector.broadcast %642 : vector<8x1xf32> to vector<8x32xf32>
    %644 = vector.broadcast %57 : vector<1x32xf32> to vector<8x32xf32>
    %645 = arith.mulf %643, %644 : vector<8x32xf32>
    %646 = arith.addf %641, %645 : vector<8x32xf32>
    %cst_144 = arith.constant 0.000000e+00 : f32
    %647 = vector.broadcast %cst_144 : f32 to vector<8x32xf32>
    %648 = arith.cmpf ogt, %646, %647 : vector<8x32xf32>
    %cst_145 = arith.constant 0.000000e+00 : f32
    %649 = vector.broadcast %cst_145 : f32 to vector<8x32xf32>
    %650 = arith.minimumf %646, %649 : vector<8x32xf32>
    %651 = math.exp %650 : vector<8x32xf32>
    %cst_146 = arith.constant 1.000000e+00 : f32
    %652 = vector.broadcast %cst_146 : f32 to vector<8x32xf32>
    %653 = arith.subf %651, %652 : vector<8x32xf32>
    %654 = arith.select %648, %646, %653 : vector<8x32xi1>, vector<8x32xf32>
    %cst_147 = arith.constant dense<0.000000e+00> : vector<8x32xf32>
    %655 = tpu.matmul %654, %58, %cst_147 {dimension_numbers = #tpu.dot_dimension_numbers<[1], [0], [0], [1], [0, 0, 1, 1], [], []>} : vector<8x32xf32>, vector<32x32xf32>, vector<8x32xf32> -> vector<8x32xf32>
    %656 = arith.addf %655, %65 : vector<8x32xf32>
    %cst_148 = arith.constant 0.000000e+00 : f32
    %657 = vector.broadcast %cst_148 : f32 to vector<8x32xf32>
    %658 = arith.cmpf ogt, %656, %657 : vector<8x32xf32>
    %cst_149 = arith.constant 0.000000e+00 : f32
    %659 = vector.broadcast %cst_149 : f32 to vector<8x32xf32>
    %660 = arith.minimumf %656, %659 : vector<8x32xf32>
    %661 = math.exp %660 : vector<8x32xf32>
    %cst_150 = arith.constant 1.000000e+00 : f32
    %662 = vector.broadcast %cst_150 : f32 to vector<8x32xf32>
    %663 = arith.subf %661, %662 : vector<8x32xf32>
    %664 = arith.select %658, %656, %663 : vector<8x32xi1>, vector<8x32xf32>
    %cst_151 = arith.constant dense<0.000000e+00> : vector<8x4xf32>
    %665 = tpu.matmul %664, %59, %cst_151 {dimension_numbers = #tpu.dot_dimension_numbers<[1], [0], [0], [1], [0, 0, 1, 1], [], []>} : vector<8x32xf32>, vector<32x4xf32>, vector<8x4xf32> -> vector<8x4xf32>
    %666 = arith.addf %665, %68 : vector<8x4xf32>
    %667 = vector.broadcast %625 : f32 to vector<8x4xf32>
    %668 = arith.mulf %667, %666 : vector<8x4xf32>
    %669 = arith.addf %623, %668 : vector<8x4xf32>
    %670 = vector.extract_strided_slice %669 {offsets = [0, 0], sizes = [8, 1], strides = [1, 1]} : vector<8x4xf32> to vector<8x1xf32>
    %671 = vector.broadcast %670 : vector<8x1xf32> to vector<8x32xf32>
    %672 = vector.broadcast %54 : vector<1x32xf32> to vector<8x32xf32>
    %673 = arith.mulf %671, %672 : vector<8x32xf32>
    %674 = arith.addf %62, %673 : vector<8x32xf32>
    %675 = vector.extract_strided_slice %669 {offsets = [0, 1], sizes = [8, 1], strides = [1, 1]} : vector<8x4xf32> to vector<8x1xf32>
    %676 = vector.broadcast %675 : vector<8x1xf32> to vector<8x32xf32>
    %677 = vector.broadcast %55 : vector<1x32xf32> to vector<8x32xf32>
    %678 = arith.mulf %676, %677 : vector<8x32xf32>
    %679 = arith.addf %674, %678 : vector<8x32xf32>
    %680 = vector.extract_strided_slice %669 {offsets = [0, 2], sizes = [8, 1], strides = [1, 1]} : vector<8x4xf32> to vector<8x1xf32>
    %681 = vector.broadcast %680 : vector<8x1xf32> to vector<8x32xf32>
    %682 = vector.broadcast %56 : vector<1x32xf32> to vector<8x32xf32>
    %683 = arith.mulf %681, %682 : vector<8x32xf32>
    %684 = arith.addf %679, %683 : vector<8x32xf32>
    %685 = vector.extract_strided_slice %669 {offsets = [0, 3], sizes = [8, 1], strides = [1, 1]} : vector<8x4xf32> to vector<8x1xf32>
    %686 = vector.broadcast %685 : vector<8x1xf32> to vector<8x32xf32>
    %687 = vector.broadcast %57 : vector<1x32xf32> to vector<8x32xf32>
    %688 = arith.mulf %686, %687 : vector<8x32xf32>
    %689 = arith.addf %684, %688 : vector<8x32xf32>
    %cst_152 = arith.constant 0.000000e+00 : f32
    %690 = vector.broadcast %cst_152 : f32 to vector<8x32xf32>
    %691 = arith.cmpf ogt, %689, %690 : vector<8x32xf32>
    %cst_153 = arith.constant 0.000000e+00 : f32
    %692 = vector.broadcast %cst_153 : f32 to vector<8x32xf32>
    %693 = arith.minimumf %689, %692 : vector<8x32xf32>
    %694 = math.exp %693 : vector<8x32xf32>
    %cst_154 = arith.constant 1.000000e+00 : f32
    %695 = vector.broadcast %cst_154 : f32 to vector<8x32xf32>
    %696 = arith.subf %694, %695 : vector<8x32xf32>
    %697 = arith.select %691, %689, %696 : vector<8x32xi1>, vector<8x32xf32>
    %cst_155 = arith.constant dense<0.000000e+00> : vector<8x32xf32>
    %698 = tpu.matmul %697, %58, %cst_155 {dimension_numbers = #tpu.dot_dimension_numbers<[1], [0], [0], [1], [0, 0, 1, 1], [], []>} : vector<8x32xf32>, vector<32x32xf32>, vector<8x32xf32> -> vector<8x32xf32>
    %699 = arith.addf %698, %65 : vector<8x32xf32>
    %cst_156 = arith.constant 0.000000e+00 : f32
    %700 = vector.broadcast %cst_156 : f32 to vector<8x32xf32>
    %701 = arith.cmpf ogt, %699, %700 : vector<8x32xf32>
    %cst_157 = arith.constant 0.000000e+00 : f32
    %702 = vector.broadcast %cst_157 : f32 to vector<8x32xf32>
    %703 = arith.minimumf %699, %702 : vector<8x32xf32>
    %704 = math.exp %703 : vector<8x32xf32>
    %cst_158 = arith.constant 1.000000e+00 : f32
    %705 = vector.broadcast %cst_158 : f32 to vector<8x32xf32>
    %706 = arith.subf %704, %705 : vector<8x32xf32>
    %707 = arith.select %701, %699, %706 : vector<8x32xi1>, vector<8x32xf32>
    %cst_159 = arith.constant dense<0.000000e+00> : vector<8x4xf32>
    %708 = tpu.matmul %707, %59, %cst_159 {dimension_numbers = #tpu.dot_dimension_numbers<[1], [0], [0], [1], [0, 0, 1, 1], [], []>} : vector<8x32xf32>, vector<32x4xf32>, vector<8x4xf32> -> vector<8x4xf32>
    %709 = arith.addf %708, %68 : vector<8x4xf32>
    %710 = vector.broadcast %624 : f32 to vector<8x4xf32>
    %711 = arith.mulf %710, %709 : vector<8x4xf32>
    %712 = arith.addf %623, %711 : vector<8x4xf32>
    %713 = vector.broadcast %625 : f32 to vector<8x4xf32>
    %714 = arith.mulf %713, %666 : vector<8x4xf32>
    %715 = arith.subf %712, %714 : vector<8x4xf32>
    %716 = vector.extract_strided_slice %715 {offsets = [0, 0], sizes = [8, 1], strides = [1, 1]} : vector<8x4xf32> to vector<8x1xf32>
    %717 = vector.broadcast %716 : vector<8x1xf32> to vector<8x32xf32>
    %718 = vector.broadcast %54 : vector<1x32xf32> to vector<8x32xf32>
    %719 = arith.mulf %717, %718 : vector<8x32xf32>
    %720 = arith.addf %62, %719 : vector<8x32xf32>
    %721 = vector.extract_strided_slice %715 {offsets = [0, 1], sizes = [8, 1], strides = [1, 1]} : vector<8x4xf32> to vector<8x1xf32>
    %722 = vector.broadcast %721 : vector<8x1xf32> to vector<8x32xf32>
    %723 = vector.broadcast %55 : vector<1x32xf32> to vector<8x32xf32>
    %724 = arith.mulf %722, %723 : vector<8x32xf32>
    %725 = arith.addf %720, %724 : vector<8x32xf32>
    %726 = vector.extract_strided_slice %715 {offsets = [0, 2], sizes = [8, 1], strides = [1, 1]} : vector<8x4xf32> to vector<8x1xf32>
    %727 = vector.broadcast %726 : vector<8x1xf32> to vector<8x32xf32>
    %728 = vector.broadcast %56 : vector<1x32xf32> to vector<8x32xf32>
    %729 = arith.mulf %727, %728 : vector<8x32xf32>
    %730 = arith.addf %725, %729 : vector<8x32xf32>
    %731 = vector.extract_strided_slice %715 {offsets = [0, 3], sizes = [8, 1], strides = [1, 1]} : vector<8x4xf32> to vector<8x1xf32>
    %732 = vector.broadcast %731 : vector<8x1xf32> to vector<8x32xf32>
    %733 = vector.broadcast %57 : vector<1x32xf32> to vector<8x32xf32>
    %734 = arith.mulf %732, %733 : vector<8x32xf32>
    %735 = arith.addf %730, %734 : vector<8x32xf32>
    %cst_160 = arith.constant 0.000000e+00 : f32
    %736 = vector.broadcast %cst_160 : f32 to vector<8x32xf32>
    %737 = arith.cmpf ogt, %735, %736 : vector<8x32xf32>
    %cst_161 = arith.constant 0.000000e+00 : f32
    %738 = vector.broadcast %cst_161 : f32 to vector<8x32xf32>
    %739 = arith.minimumf %735, %738 : vector<8x32xf32>
    %740 = math.exp %739 : vector<8x32xf32>
    %cst_162 = arith.constant 1.000000e+00 : f32
    %741 = vector.broadcast %cst_162 : f32 to vector<8x32xf32>
    %742 = arith.subf %740, %741 : vector<8x32xf32>
    %743 = arith.select %737, %735, %742 : vector<8x32xi1>, vector<8x32xf32>
    %cst_163 = arith.constant dense<0.000000e+00> : vector<8x32xf32>
    %744 = tpu.matmul %743, %58, %cst_163 {dimension_numbers = #tpu.dot_dimension_numbers<[1], [0], [0], [1], [0, 0, 1, 1], [], []>} : vector<8x32xf32>, vector<32x32xf32>, vector<8x32xf32> -> vector<8x32xf32>
    %745 = arith.addf %744, %65 : vector<8x32xf32>
    %cst_164 = arith.constant 0.000000e+00 : f32
    %746 = vector.broadcast %cst_164 : f32 to vector<8x32xf32>
    %747 = arith.cmpf ogt, %745, %746 : vector<8x32xf32>
    %cst_165 = arith.constant 0.000000e+00 : f32
    %748 = vector.broadcast %cst_165 : f32 to vector<8x32xf32>
    %749 = arith.minimumf %745, %748 : vector<8x32xf32>
    %750 = math.exp %749 : vector<8x32xf32>
    %cst_166 = arith.constant 1.000000e+00 : f32
    %751 = vector.broadcast %cst_166 : f32 to vector<8x32xf32>
    %752 = arith.subf %750, %751 : vector<8x32xf32>
    %753 = arith.select %747, %745, %752 : vector<8x32xi1>, vector<8x32xf32>
    %cst_167 = arith.constant dense<0.000000e+00> : vector<8x4xf32>
    %754 = tpu.matmul %753, %59, %cst_167 {dimension_numbers = #tpu.dot_dimension_numbers<[1], [0], [0], [1], [0, 0, 1, 1], [], []>} : vector<8x32xf32>, vector<32x4xf32>, vector<8x4xf32> -> vector<8x4xf32>
    %755 = arith.addf %754, %68 : vector<8x4xf32>
    %756 = arith.subf %666, %709 : vector<8x4xf32>
    %757 = arith.addf %756, %755 : vector<8x4xf32>
    %758 = vector.broadcast %624 : f32 to vector<8x4xf32>
    %759 = arith.mulf %758, %757 : vector<8x4xf32>
    %760 = arith.addf %623, %759 : vector<8x4xf32>
    %761 = vector.extract_strided_slice %760 {offsets = [0, 0], sizes = [8, 1], strides = [1, 1]} : vector<8x4xf32> to vector<8x1xf32>
    %762 = vector.broadcast %761 : vector<8x1xf32> to vector<8x32xf32>
    %763 = vector.broadcast %54 : vector<1x32xf32> to vector<8x32xf32>
    %764 = arith.mulf %762, %763 : vector<8x32xf32>
    %765 = arith.addf %62, %764 : vector<8x32xf32>
    %766 = vector.extract_strided_slice %760 {offsets = [0, 1], sizes = [8, 1], strides = [1, 1]} : vector<8x4xf32> to vector<8x1xf32>
    %767 = vector.broadcast %766 : vector<8x1xf32> to vector<8x32xf32>
    %768 = vector.broadcast %55 : vector<1x32xf32> to vector<8x32xf32>
    %769 = arith.mulf %767, %768 : vector<8x32xf32>
    %770 = arith.addf %765, %769 : vector<8x32xf32>
    %771 = vector.extract_strided_slice %760 {offsets = [0, 2], sizes = [8, 1], strides = [1, 1]} : vector<8x4xf32> to vector<8x1xf32>
    %772 = vector.broadcast %771 : vector<8x1xf32> to vector<8x32xf32>
    %773 = vector.broadcast %56 : vector<1x32xf32> to vector<8x32xf32>
    %774 = arith.mulf %772, %773 : vector<8x32xf32>
    %775 = arith.addf %770, %774 : vector<8x32xf32>
    %776 = vector.extract_strided_slice %760 {offsets = [0, 3], sizes = [8, 1], strides = [1, 1]} : vector<8x4xf32> to vector<8x1xf32>
    %777 = vector.broadcast %776 : vector<8x1xf32> to vector<8x32xf32>
    %778 = vector.broadcast %57 : vector<1x32xf32> to vector<8x32xf32>
    %779 = arith.mulf %777, %778 : vector<8x32xf32>
    %780 = arith.addf %775, %779 : vector<8x32xf32>
    %cst_168 = arith.constant 0.000000e+00 : f32
    %781 = vector.broadcast %cst_168 : f32 to vector<8x32xf32>
    %782 = arith.cmpf ogt, %780, %781 : vector<8x32xf32>
    %cst_169 = arith.constant 0.000000e+00 : f32
    %783 = vector.broadcast %cst_169 : f32 to vector<8x32xf32>
    %784 = arith.minimumf %780, %783 : vector<8x32xf32>
    %785 = math.exp %784 : vector<8x32xf32>
    %cst_170 = arith.constant 1.000000e+00 : f32
    %786 = vector.broadcast %cst_170 : f32 to vector<8x32xf32>
    %787 = arith.subf %785, %786 : vector<8x32xf32>
    %788 = arith.select %782, %780, %787 : vector<8x32xi1>, vector<8x32xf32>
    %cst_171 = arith.constant dense<0.000000e+00> : vector<8x32xf32>
    %789 = tpu.matmul %788, %58, %cst_171 {dimension_numbers = #tpu.dot_dimension_numbers<[1], [0], [0], [1], [0, 0, 1, 1], [], []>} : vector<8x32xf32>, vector<32x32xf32>, vector<8x32xf32> -> vector<8x32xf32>
    %790 = arith.addf %789, %65 : vector<8x32xf32>
    %cst_172 = arith.constant 0.000000e+00 : f32
    %791 = vector.broadcast %cst_172 : f32 to vector<8x32xf32>
    %792 = arith.cmpf ogt, %790, %791 : vector<8x32xf32>
    %cst_173 = arith.constant 0.000000e+00 : f32
    %793 = vector.broadcast %cst_173 : f32 to vector<8x32xf32>
    %794 = arith.minimumf %790, %793 : vector<8x32xf32>
    %795 = math.exp %794 : vector<8x32xf32>
    %cst_174 = arith.constant 1.000000e+00 : f32
    %796 = vector.broadcast %cst_174 : f32 to vector<8x32xf32>
    %797 = arith.subf %795, %796 : vector<8x32xf32>
    %798 = arith.select %792, %790, %797 : vector<8x32xi1>, vector<8x32xf32>
    %cst_175 = arith.constant dense<0.000000e+00> : vector<8x4xf32>
    %799 = tpu.matmul %798, %59, %cst_175 {dimension_numbers = #tpu.dot_dimension_numbers<[1], [0], [0], [1], [0, 0, 1, 1], [], []>} : vector<8x32xf32>, vector<32x4xf32>, vector<8x4xf32> -> vector<8x4xf32>
    %800 = arith.addf %799, %68 : vector<8x4xf32>
    %801 = arith.addf %709, %755 : vector<8x4xf32>
    %cst_176 = arith.constant 3.000000e+00 : f32
    %802 = vector.broadcast %cst_176 : f32 to vector<8x4xf32>
    %803 = arith.mulf %802, %801 : vector<8x4xf32>
    %804 = arith.addf %666, %803 : vector<8x4xf32>
    %805 = arith.addf %804, %800 : vector<8x4xf32>
    %806 = vector.broadcast %626 : f32 to vector<8x4xf32>
    %807 = arith.mulf %806, %805 : vector<8x4xf32>
    %808 = arith.addf %623, %807 : vector<8x4xf32>
    %c4 = arith.constant 4 : index
    %809 = memref.load %arg2[%c4] : memref<7xf32, #tpu.memory_space<smem>>
    %c4_177 = arith.constant 4 : index
    %810 = memref.load %arg3[%c4_177] : memref<7xf32, #tpu.memory_space<smem>>
    %c4_178 = arith.constant 4 : index
    %811 = memref.load %arg4[%c4_178] : memref<7xf32, #tpu.memory_space<smem>>
    %812 = vector.extract_strided_slice %808 {offsets = [0, 0], sizes = [8, 1], strides = [1, 1]} : vector<8x4xf32> to vector<8x1xf32>
    %813 = vector.broadcast %812 : vector<8x1xf32> to vector<8x32xf32>
    %814 = vector.broadcast %54 : vector<1x32xf32> to vector<8x32xf32>
    %815 = arith.mulf %813, %814 : vector<8x32xf32>
    %816 = arith.addf %62, %815 : vector<8x32xf32>
    %817 = vector.extract_strided_slice %808 {offsets = [0, 1], sizes = [8, 1], strides = [1, 1]} : vector<8x4xf32> to vector<8x1xf32>
    %818 = vector.broadcast %817 : vector<8x1xf32> to vector<8x32xf32>
    %819 = vector.broadcast %55 : vector<1x32xf32> to vector<8x32xf32>
    %820 = arith.mulf %818, %819 : vector<8x32xf32>
    %821 = arith.addf %816, %820 : vector<8x32xf32>
    %822 = vector.extract_strided_slice %808 {offsets = [0, 2], sizes = [8, 1], strides = [1, 1]} : vector<8x4xf32> to vector<8x1xf32>
    %823 = vector.broadcast %822 : vector<8x1xf32> to vector<8x32xf32>
    %824 = vector.broadcast %56 : vector<1x32xf32> to vector<8x32xf32>
    %825 = arith.mulf %823, %824 : vector<8x32xf32>
    %826 = arith.addf %821, %825 : vector<8x32xf32>
    %827 = vector.extract_strided_slice %808 {offsets = [0, 3], sizes = [8, 1], strides = [1, 1]} : vector<8x4xf32> to vector<8x1xf32>
    %828 = vector.broadcast %827 : vector<8x1xf32> to vector<8x32xf32>
    %829 = vector.broadcast %57 : vector<1x32xf32> to vector<8x32xf32>
    %830 = arith.mulf %828, %829 : vector<8x32xf32>
    %831 = arith.addf %826, %830 : vector<8x32xf32>
    %cst_179 = arith.constant 0.000000e+00 : f32
    %832 = vector.broadcast %cst_179 : f32 to vector<8x32xf32>
    %833 = arith.cmpf ogt, %831, %832 : vector<8x32xf32>
    %cst_180 = arith.constant 0.000000e+00 : f32
    %834 = vector.broadcast %cst_180 : f32 to vector<8x32xf32>
    %835 = arith.minimumf %831, %834 : vector<8x32xf32>
    %836 = math.exp %835 : vector<8x32xf32>
    %cst_181 = arith.constant 1.000000e+00 : f32
    %837 = vector.broadcast %cst_181 : f32 to vector<8x32xf32>
    %838 = arith.subf %836, %837 : vector<8x32xf32>
    %839 = arith.select %833, %831, %838 : vector<8x32xi1>, vector<8x32xf32>
    %cst_182 = arith.constant dense<0.000000e+00> : vector<8x32xf32>
    %840 = tpu.matmul %839, %58, %cst_182 {dimension_numbers = #tpu.dot_dimension_numbers<[1], [0], [0], [1], [0, 0, 1, 1], [], []>} : vector<8x32xf32>, vector<32x32xf32>, vector<8x32xf32> -> vector<8x32xf32>
    %841 = arith.addf %840, %65 : vector<8x32xf32>
    %cst_183 = arith.constant 0.000000e+00 : f32
    %842 = vector.broadcast %cst_183 : f32 to vector<8x32xf32>
    %843 = arith.cmpf ogt, %841, %842 : vector<8x32xf32>
    %cst_184 = arith.constant 0.000000e+00 : f32
    %844 = vector.broadcast %cst_184 : f32 to vector<8x32xf32>
    %845 = arith.minimumf %841, %844 : vector<8x32xf32>
    %846 = math.exp %845 : vector<8x32xf32>
    %cst_185 = arith.constant 1.000000e+00 : f32
    %847 = vector.broadcast %cst_185 : f32 to vector<8x32xf32>
    %848 = arith.subf %846, %847 : vector<8x32xf32>
    %849 = arith.select %843, %841, %848 : vector<8x32xi1>, vector<8x32xf32>
    %cst_186 = arith.constant dense<0.000000e+00> : vector<8x4xf32>
    %850 = tpu.matmul %849, %59, %cst_186 {dimension_numbers = #tpu.dot_dimension_numbers<[1], [0], [0], [1], [0, 0, 1, 1], [], []>} : vector<8x32xf32>, vector<32x4xf32>, vector<8x4xf32> -> vector<8x4xf32>
    %851 = arith.addf %850, %68 : vector<8x4xf32>
    %852 = vector.broadcast %810 : f32 to vector<8x4xf32>
    %853 = arith.mulf %852, %851 : vector<8x4xf32>
    %854 = arith.addf %808, %853 : vector<8x4xf32>
    %855 = vector.extract_strided_slice %854 {offsets = [0, 0], sizes = [8, 1], strides = [1, 1]} : vector<8x4xf32> to vector<8x1xf32>
    %856 = vector.broadcast %855 : vector<8x1xf32> to vector<8x32xf32>
    %857 = vector.broadcast %54 : vector<1x32xf32> to vector<8x32xf32>
    %858 = arith.mulf %856, %857 : vector<8x32xf32>
    %859 = arith.addf %62, %858 : vector<8x32xf32>
    %860 = vector.extract_strided_slice %854 {offsets = [0, 1], sizes = [8, 1], strides = [1, 1]} : vector<8x4xf32> to vector<8x1xf32>
    %861 = vector.broadcast %860 : vector<8x1xf32> to vector<8x32xf32>
    %862 = vector.broadcast %55 : vector<1x32xf32> to vector<8x32xf32>
    %863 = arith.mulf %861, %862 : vector<8x32xf32>
    %864 = arith.addf %859, %863 : vector<8x32xf32>
    %865 = vector.extract_strided_slice %854 {offsets = [0, 2], sizes = [8, 1], strides = [1, 1]} : vector<8x4xf32> to vector<8x1xf32>
    %866 = vector.broadcast %865 : vector<8x1xf32> to vector<8x32xf32>
    %867 = vector.broadcast %56 : vector<1x32xf32> to vector<8x32xf32>
    %868 = arith.mulf %866, %867 : vector<8x32xf32>
    %869 = arith.addf %864, %868 : vector<8x32xf32>
    %870 = vector.extract_strided_slice %854 {offsets = [0, 3], sizes = [8, 1], strides = [1, 1]} : vector<8x4xf32> to vector<8x1xf32>
    %871 = vector.broadcast %870 : vector<8x1xf32> to vector<8x32xf32>
    %872 = vector.broadcast %57 : vector<1x32xf32> to vector<8x32xf32>
    %873 = arith.mulf %871, %872 : vector<8x32xf32>
    %874 = arith.addf %869, %873 : vector<8x32xf32>
    %cst_187 = arith.constant 0.000000e+00 : f32
    %875 = vector.broadcast %cst_187 : f32 to vector<8x32xf32>
    %876 = arith.cmpf ogt, %874, %875 : vector<8x32xf32>
    %cst_188 = arith.constant 0.000000e+00 : f32
    %877 = vector.broadcast %cst_188 : f32 to vector<8x32xf32>
    %878 = arith.minimumf %874, %877 : vector<8x32xf32>
    %879 = math.exp %878 : vector<8x32xf32>
    %cst_189 = arith.constant 1.000000e+00 : f32
    %880 = vector.broadcast %cst_189 : f32 to vector<8x32xf32>
    %881 = arith.subf %879, %880 : vector<8x32xf32>
    %882 = arith.select %876, %874, %881 : vector<8x32xi1>, vector<8x32xf32>
    %cst_190 = arith.constant dense<0.000000e+00> : vector<8x32xf32>
    %883 = tpu.matmul %882, %58, %cst_190 {dimension_numbers = #tpu.dot_dimension_numbers<[1], [0], [0], [1], [0, 0, 1, 1], [], []>} : vector<8x32xf32>, vector<32x32xf32>, vector<8x32xf32> -> vector<8x32xf32>
    %884 = arith.addf %883, %65 : vector<8x32xf32>
    %cst_191 = arith.constant 0.000000e+00 : f32
    %885 = vector.broadcast %cst_191 : f32 to vector<8x32xf32>
    %886 = arith.cmpf ogt, %884, %885 : vector<8x32xf32>
    %cst_192 = arith.constant 0.000000e+00 : f32
    %887 = vector.broadcast %cst_192 : f32 to vector<8x32xf32>
    %888 = arith.minimumf %884, %887 : vector<8x32xf32>
    %889 = math.exp %888 : vector<8x32xf32>
    %cst_193 = arith.constant 1.000000e+00 : f32
    %890 = vector.broadcast %cst_193 : f32 to vector<8x32xf32>
    %891 = arith.subf %889, %890 : vector<8x32xf32>
    %892 = arith.select %886, %884, %891 : vector<8x32xi1>, vector<8x32xf32>
    %cst_194 = arith.constant dense<0.000000e+00> : vector<8x4xf32>
    %893 = tpu.matmul %892, %59, %cst_194 {dimension_numbers = #tpu.dot_dimension_numbers<[1], [0], [0], [1], [0, 0, 1, 1], [], []>} : vector<8x32xf32>, vector<32x4xf32>, vector<8x4xf32> -> vector<8x4xf32>
    %894 = arith.addf %893, %68 : vector<8x4xf32>
    %895 = vector.broadcast %809 : f32 to vector<8x4xf32>
    %896 = arith.mulf %895, %894 : vector<8x4xf32>
    %897 = arith.addf %808, %896 : vector<8x4xf32>
    %898 = vector.broadcast %810 : f32 to vector<8x4xf32>
    %899 = arith.mulf %898, %851 : vector<8x4xf32>
    %900 = arith.subf %897, %899 : vector<8x4xf32>
    %901 = vector.extract_strided_slice %900 {offsets = [0, 0], sizes = [8, 1], strides = [1, 1]} : vector<8x4xf32> to vector<8x1xf32>
    %902 = vector.broadcast %901 : vector<8x1xf32> to vector<8x32xf32>
    %903 = vector.broadcast %54 : vector<1x32xf32> to vector<8x32xf32>
    %904 = arith.mulf %902, %903 : vector<8x32xf32>
    %905 = arith.addf %62, %904 : vector<8x32xf32>
    %906 = vector.extract_strided_slice %900 {offsets = [0, 1], sizes = [8, 1], strides = [1, 1]} : vector<8x4xf32> to vector<8x1xf32>
    %907 = vector.broadcast %906 : vector<8x1xf32> to vector<8x32xf32>
    %908 = vector.broadcast %55 : vector<1x32xf32> to vector<8x32xf32>
    %909 = arith.mulf %907, %908 : vector<8x32xf32>
    %910 = arith.addf %905, %909 : vector<8x32xf32>
    %911 = vector.extract_strided_slice %900 {offsets = [0, 2], sizes = [8, 1], strides = [1, 1]} : vector<8x4xf32> to vector<8x1xf32>
    %912 = vector.broadcast %911 : vector<8x1xf32> to vector<8x32xf32>
    %913 = vector.broadcast %56 : vector<1x32xf32> to vector<8x32xf32>
    %914 = arith.mulf %912, %913 : vector<8x32xf32>
    %915 = arith.addf %910, %914 : vector<8x32xf32>
    %916 = vector.extract_strided_slice %900 {offsets = [0, 3], sizes = [8, 1], strides = [1, 1]} : vector<8x4xf32> to vector<8x1xf32>
    %917 = vector.broadcast %916 : vector<8x1xf32> to vector<8x32xf32>
    %918 = vector.broadcast %57 : vector<1x32xf32> to vector<8x32xf32>
    %919 = arith.mulf %917, %918 : vector<8x32xf32>
    %920 = arith.addf %915, %919 : vector<8x32xf32>
    %cst_195 = arith.constant 0.000000e+00 : f32
    %921 = vector.broadcast %cst_195 : f32 to vector<8x32xf32>
    %922 = arith.cmpf ogt, %920, %921 : vector<8x32xf32>
    %cst_196 = arith.constant 0.000000e+00 : f32
    %923 = vector.broadcast %cst_196 : f32 to vector<8x32xf32>
    %924 = arith.minimumf %920, %923 : vector<8x32xf32>
    %925 = math.exp %924 : vector<8x32xf32>
    %cst_197 = arith.constant 1.000000e+00 : f32
    %926 = vector.broadcast %cst_197 : f32 to vector<8x32xf32>
    %927 = arith.subf %925, %926 : vector<8x32xf32>
    %928 = arith.select %922, %920, %927 : vector<8x32xi1>, vector<8x32xf32>
    %cst_198 = arith.constant dense<0.000000e+00> : vector<8x32xf32>
    %929 = tpu.matmul %928, %58, %cst_198 {dimension_numbers = #tpu.dot_dimension_numbers<[1], [0], [0], [1], [0, 0, 1, 1], [], []>} : vector<8x32xf32>, vector<32x32xf32>, vector<8x32xf32> -> vector<8x32xf32>
    %930 = arith.addf %929, %65 : vector<8x32xf32>
    %cst_199 = arith.constant 0.000000e+00 : f32
    %931 = vector.broadcast %cst_199 : f32 to vector<8x32xf32>
    %932 = arith.cmpf ogt, %930, %931 : vector<8x32xf32>
    %cst_200 = arith.constant 0.000000e+00 : f32
    %933 = vector.broadcast %cst_200 : f32 to vector<8x32xf32>
    %934 = arith.minimumf %930, %933 : vector<8x32xf32>
    %935 = math.exp %934 : vector<8x32xf32>
    %cst_201 = arith.constant 1.000000e+00 : f32
    %936 = vector.broadcast %cst_201 : f32 to vector<8x32xf32>
    %937 = arith.subf %935, %936 : vector<8x32xf32>
    %938 = arith.select %932, %930, %937 : vector<8x32xi1>, vector<8x32xf32>
    %cst_202 = arith.constant dense<0.000000e+00> : vector<8x4xf32>
    %939 = tpu.matmul %938, %59, %cst_202 {dimension_numbers = #tpu.dot_dimension_numbers<[1], [0], [0], [1], [0, 0, 1, 1], [], []>} : vector<8x32xf32>, vector<32x4xf32>, vector<8x4xf32> -> vector<8x4xf32>
    %940 = arith.addf %939, %68 : vector<8x4xf32>
    %941 = arith.subf %851, %894 : vector<8x4xf32>
    %942 = arith.addf %941, %940 : vector<8x4xf32>
    %943 = vector.broadcast %809 : f32 to vector<8x4xf32>
    %944 = arith.mulf %943, %942 : vector<8x4xf32>
    %945 = arith.addf %808, %944 : vector<8x4xf32>
    %946 = vector.extract_strided_slice %945 {offsets = [0, 0], sizes = [8, 1], strides = [1, 1]} : vector<8x4xf32> to vector<8x1xf32>
    %947 = vector.broadcast %946 : vector<8x1xf32> to vector<8x32xf32>
    %948 = vector.broadcast %54 : vector<1x32xf32> to vector<8x32xf32>
    %949 = arith.mulf %947, %948 : vector<8x32xf32>
    %950 = arith.addf %62, %949 : vector<8x32xf32>
    %951 = vector.extract_strided_slice %945 {offsets = [0, 1], sizes = [8, 1], strides = [1, 1]} : vector<8x4xf32> to vector<8x1xf32>
    %952 = vector.broadcast %951 : vector<8x1xf32> to vector<8x32xf32>
    %953 = vector.broadcast %55 : vector<1x32xf32> to vector<8x32xf32>
    %954 = arith.mulf %952, %953 : vector<8x32xf32>
    %955 = arith.addf %950, %954 : vector<8x32xf32>
    %956 = vector.extract_strided_slice %945 {offsets = [0, 2], sizes = [8, 1], strides = [1, 1]} : vector<8x4xf32> to vector<8x1xf32>
    %957 = vector.broadcast %956 : vector<8x1xf32> to vector<8x32xf32>
    %958 = vector.broadcast %56 : vector<1x32xf32> to vector<8x32xf32>
    %959 = arith.mulf %957, %958 : vector<8x32xf32>
    %960 = arith.addf %955, %959 : vector<8x32xf32>
    %961 = vector.extract_strided_slice %945 {offsets = [0, 3], sizes = [8, 1], strides = [1, 1]} : vector<8x4xf32> to vector<8x1xf32>
    %962 = vector.broadcast %961 : vector<8x1xf32> to vector<8x32xf32>
    %963 = vector.broadcast %57 : vector<1x32xf32> to vector<8x32xf32>
    %964 = arith.mulf %962, %963 : vector<8x32xf32>
    %965 = arith.addf %960, %964 : vector<8x32xf32>
    %cst_203 = arith.constant 0.000000e+00 : f32
    %966 = vector.broadcast %cst_203 : f32 to vector<8x32xf32>
    %967 = arith.cmpf ogt, %965, %966 : vector<8x32xf32>
    %cst_204 = arith.constant 0.000000e+00 : f32
    %968 = vector.broadcast %cst_204 : f32 to vector<8x32xf32>
    %969 = arith.minimumf %965, %968 : vector<8x32xf32>
    %970 = math.exp %969 : vector<8x32xf32>
    %cst_205 = arith.constant 1.000000e+00 : f32
    %971 = vector.broadcast %cst_205 : f32 to vector<8x32xf32>
    %972 = arith.subf %970, %971 : vector<8x32xf32>
    %973 = arith.select %967, %965, %972 : vector<8x32xi1>, vector<8x32xf32>
    %cst_206 = arith.constant dense<0.000000e+00> : vector<8x32xf32>
    %974 = tpu.matmul %973, %58, %cst_206 {dimension_numbers = #tpu.dot_dimension_numbers<[1], [0], [0], [1], [0, 0, 1, 1], [], []>} : vector<8x32xf32>, vector<32x32xf32>, vector<8x32xf32> -> vector<8x32xf32>
    %975 = arith.addf %974, %65 : vector<8x32xf32>
    %cst_207 = arith.constant 0.000000e+00 : f32
    %976 = vector.broadcast %cst_207 : f32 to vector<8x32xf32>
    %977 = arith.cmpf ogt, %975, %976 : vector<8x32xf32>
    %cst_208 = arith.constant 0.000000e+00 : f32
    %978 = vector.broadcast %cst_208 : f32 to vector<8x32xf32>
    %979 = arith.minimumf %975, %978 : vector<8x32xf32>
    %980 = math.exp %979 : vector<8x32xf32>
    %cst_209 = arith.constant 1.000000e+00 : f32
    %981 = vector.broadcast %cst_209 : f32 to vector<8x32xf32>
    %982 = arith.subf %980, %981 : vector<8x32xf32>
    %983 = arith.select %977, %975, %982 : vector<8x32xi1>, vector<8x32xf32>
    %cst_210 = arith.constant dense<0.000000e+00> : vector<8x4xf32>
    %984 = tpu.matmul %983, %59, %cst_210 {dimension_numbers = #tpu.dot_dimension_numbers<[1], [0], [0], [1], [0, 0, 1, 1], [], []>} : vector<8x32xf32>, vector<32x4xf32>, vector<8x4xf32> -> vector<8x4xf32>
    %985 = arith.addf %984, %68 : vector<8x4xf32>
    %986 = arith.addf %894, %940 : vector<8x4xf32>
    %cst_211 = arith.constant 3.000000e+00 : f32
    %987 = vector.broadcast %cst_211 : f32 to vector<8x4xf32>
    %988 = arith.mulf %987, %986 : vector<8x4xf32>
    %989 = arith.addf %851, %988 : vector<8x4xf32>
    %990 = arith.addf %989, %985 : vector<8x4xf32>
    %991 = vector.broadcast %811 : f32 to vector<8x4xf32>
    %992 = arith.mulf %991, %990 : vector<8x4xf32>
    %993 = arith.addf %808, %992 : vector<8x4xf32>
    %c5 = arith.constant 5 : index
    %994 = memref.load %arg2[%c5] : memref<7xf32, #tpu.memory_space<smem>>
    %c5_212 = arith.constant 5 : index
    %995 = memref.load %arg3[%c5_212] : memref<7xf32, #tpu.memory_space<smem>>
    %c5_213 = arith.constant 5 : index
    %996 = memref.load %arg4[%c5_213] : memref<7xf32, #tpu.memory_space<smem>>
    %997 = vector.extract_strided_slice %993 {offsets = [0, 0], sizes = [8, 1], strides = [1, 1]} : vector<8x4xf32> to vector<8x1xf32>
    %998 = vector.broadcast %997 : vector<8x1xf32> to vector<8x32xf32>
    %999 = vector.broadcast %54 : vector<1x32xf32> to vector<8x32xf32>
    %1000 = arith.mulf %998, %999 : vector<8x32xf32>
    %1001 = arith.addf %62, %1000 : vector<8x32xf32>
    %1002 = vector.extract_strided_slice %993 {offsets = [0, 1], sizes = [8, 1], strides = [1, 1]} : vector<8x4xf32> to vector<8x1xf32>
    %1003 = vector.broadcast %1002 : vector<8x1xf32> to vector<8x32xf32>
    %1004 = vector.broadcast %55 : vector<1x32xf32> to vector<8x32xf32>
    %1005 = arith.mulf %1003, %1004 : vector<8x32xf32>
    %1006 = arith.addf %1001, %1005 : vector<8x32xf32>
    %1007 = vector.extract_strided_slice %993 {offsets = [0, 2], sizes = [8, 1], strides = [1, 1]} : vector<8x4xf32> to vector<8x1xf32>
    %1008 = vector.broadcast %1007 : vector<8x1xf32> to vector<8x32xf32>
    %1009 = vector.broadcast %56 : vector<1x32xf32> to vector<8x32xf32>
    %1010 = arith.mulf %1008, %1009 : vector<8x32xf32>
    %1011 = arith.addf %1006, %1010 : vector<8x32xf32>
    %1012 = vector.extract_strided_slice %993 {offsets = [0, 3], sizes = [8, 1], strides = [1, 1]} : vector<8x4xf32> to vector<8x1xf32>
    %1013 = vector.broadcast %1012 : vector<8x1xf32> to vector<8x32xf32>
    %1014 = vector.broadcast %57 : vector<1x32xf32> to vector<8x32xf32>
    %1015 = arith.mulf %1013, %1014 : vector<8x32xf32>
    %1016 = arith.addf %1011, %1015 : vector<8x32xf32>
    %cst_214 = arith.constant 0.000000e+00 : f32
    %1017 = vector.broadcast %cst_214 : f32 to vector<8x32xf32>
    %1018 = arith.cmpf ogt, %1016, %1017 : vector<8x32xf32>
    %cst_215 = arith.constant 0.000000e+00 : f32
    %1019 = vector.broadcast %cst_215 : f32 to vector<8x32xf32>
    %1020 = arith.minimumf %1016, %1019 : vector<8x32xf32>
    %1021 = math.exp %1020 : vector<8x32xf32>
    %cst_216 = arith.constant 1.000000e+00 : f32
    %1022 = vector.broadcast %cst_216 : f32 to vector<8x32xf32>
    %1023 = arith.subf %1021, %1022 : vector<8x32xf32>
    %1024 = arith.select %1018, %1016, %1023 : vector<8x32xi1>, vector<8x32xf32>
    %cst_217 = arith.constant dense<0.000000e+00> : vector<8x32xf32>
    %1025 = tpu.matmul %1024, %58, %cst_217 {dimension_numbers = #tpu.dot_dimension_numbers<[1], [0], [0], [1], [0, 0, 1, 1], [], []>} : vector<8x32xf32>, vector<32x32xf32>, vector<8x32xf32> -> vector<8x32xf32>
    %1026 = arith.addf %1025, %65 : vector<8x32xf32>
    %cst_218 = arith.constant 0.000000e+00 : f32
    %1027 = vector.broadcast %cst_218 : f32 to vector<8x32xf32>
    %1028 = arith.cmpf ogt, %1026, %1027 : vector<8x32xf32>
    %cst_219 = arith.constant 0.000000e+00 : f32
    %1029 = vector.broadcast %cst_219 : f32 to vector<8x32xf32>
    %1030 = arith.minimumf %1026, %1029 : vector<8x32xf32>
    %1031 = math.exp %1030 : vector<8x32xf32>
    %cst_220 = arith.constant 1.000000e+00 : f32
    %1032 = vector.broadcast %cst_220 : f32 to vector<8x32xf32>
    %1033 = arith.subf %1031, %1032 : vector<8x32xf32>
    %1034 = arith.select %1028, %1026, %1033 : vector<8x32xi1>, vector<8x32xf32>
    %cst_221 = arith.constant dense<0.000000e+00> : vector<8x4xf32>
    %1035 = tpu.matmul %1034, %59, %cst_221 {dimension_numbers = #tpu.dot_dimension_numbers<[1], [0], [0], [1], [0, 0, 1, 1], [], []>} : vector<8x32xf32>, vector<32x4xf32>, vector<8x4xf32> -> vector<8x4xf32>
    %1036 = arith.addf %1035, %68 : vector<8x4xf32>
    %1037 = vector.broadcast %995 : f32 to vector<8x4xf32>
    %1038 = arith.mulf %1037, %1036 : vector<8x4xf32>
    %1039 = arith.addf %993, %1038 : vector<8x4xf32>
    %1040 = vector.extract_strided_slice %1039 {offsets = [0, 0], sizes = [8, 1], strides = [1, 1]} : vector<8x4xf32> to vector<8x1xf32>
    %1041 = vector.broadcast %1040 : vector<8x1xf32> to vector<8x32xf32>
    %1042 = vector.broadcast %54 : vector<1x32xf32> to vector<8x32xf32>
    %1043 = arith.mulf %1041, %1042 : vector<8x32xf32>
    %1044 = arith.addf %62, %1043 : vector<8x32xf32>
    %1045 = vector.extract_strided_slice %1039 {offsets = [0, 1], sizes = [8, 1], strides = [1, 1]} : vector<8x4xf32> to vector<8x1xf32>
    %1046 = vector.broadcast %1045 : vector<8x1xf32> to vector<8x32xf32>
    %1047 = vector.broadcast %55 : vector<1x32xf32> to vector<8x32xf32>
    %1048 = arith.mulf %1046, %1047 : vector<8x32xf32>
    %1049 = arith.addf %1044, %1048 : vector<8x32xf32>
    %1050 = vector.extract_strided_slice %1039 {offsets = [0, 2], sizes = [8, 1], strides = [1, 1]} : vector<8x4xf32> to vector<8x1xf32>
    %1051 = vector.broadcast %1050 : vector<8x1xf32> to vector<8x32xf32>
    %1052 = vector.broadcast %56 : vector<1x32xf32> to vector<8x32xf32>
    %1053 = arith.mulf %1051, %1052 : vector<8x32xf32>
    %1054 = arith.addf %1049, %1053 : vector<8x32xf32>
    %1055 = vector.extract_strided_slice %1039 {offsets = [0, 3], sizes = [8, 1], strides = [1, 1]} : vector<8x4xf32> to vector<8x1xf32>
    %1056 = vector.broadcast %1055 : vector<8x1xf32> to vector<8x32xf32>
    %1057 = vector.broadcast %57 : vector<1x32xf32> to vector<8x32xf32>
    %1058 = arith.mulf %1056, %1057 : vector<8x32xf32>
    %1059 = arith.addf %1054, %1058 : vector<8x32xf32>
    %cst_222 = arith.constant 0.000000e+00 : f32
    %1060 = vector.broadcast %cst_222 : f32 to vector<8x32xf32>
    %1061 = arith.cmpf ogt, %1059, %1060 : vector<8x32xf32>
    %cst_223 = arith.constant 0.000000e+00 : f32
    %1062 = vector.broadcast %cst_223 : f32 to vector<8x32xf32>
    %1063 = arith.minimumf %1059, %1062 : vector<8x32xf32>
    %1064 = math.exp %1063 : vector<8x32xf32>
    %cst_224 = arith.constant 1.000000e+00 : f32
    %1065 = vector.broadcast %cst_224 : f32 to vector<8x32xf32>
    %1066 = arith.subf %1064, %1065 : vector<8x32xf32>
    %1067 = arith.select %1061, %1059, %1066 : vector<8x32xi1>, vector<8x32xf32>
    %cst_225 = arith.constant dense<0.000000e+00> : vector<8x32xf32>
    %1068 = tpu.matmul %1067, %58, %cst_225 {dimension_numbers = #tpu.dot_dimension_numbers<[1], [0], [0], [1], [0, 0, 1, 1], [], []>} : vector<8x32xf32>, vector<32x32xf32>, vector<8x32xf32> -> vector<8x32xf32>
    %1069 = arith.addf %1068, %65 : vector<8x32xf32>
    %cst_226 = arith.constant 0.000000e+00 : f32
    %1070 = vector.broadcast %cst_226 : f32 to vector<8x32xf32>
    %1071 = arith.cmpf ogt, %1069, %1070 : vector<8x32xf32>
    %cst_227 = arith.constant 0.000000e+00 : f32
    %1072 = vector.broadcast %cst_227 : f32 to vector<8x32xf32>
    %1073 = arith.minimumf %1069, %1072 : vector<8x32xf32>
    %1074 = math.exp %1073 : vector<8x32xf32>
    %cst_228 = arith.constant 1.000000e+00 : f32
    %1075 = vector.broadcast %cst_228 : f32 to vector<8x32xf32>
    %1076 = arith.subf %1074, %1075 : vector<8x32xf32>
    %1077 = arith.select %1071, %1069, %1076 : vector<8x32xi1>, vector<8x32xf32>
    %cst_229 = arith.constant dense<0.000000e+00> : vector<8x4xf32>
    %1078 = tpu.matmul %1077, %59, %cst_229 {dimension_numbers = #tpu.dot_dimension_numbers<[1], [0], [0], [1], [0, 0, 1, 1], [], []>} : vector<8x32xf32>, vector<32x4xf32>, vector<8x4xf32> -> vector<8x4xf32>
    %1079 = arith.addf %1078, %68 : vector<8x4xf32>
    %1080 = vector.broadcast %994 : f32 to vector<8x4xf32>
    %1081 = arith.mulf %1080, %1079 : vector<8x4xf32>
    %1082 = arith.addf %993, %1081 : vector<8x4xf32>
    %1083 = vector.broadcast %995 : f32 to vector<8x4xf32>
    %1084 = arith.mulf %1083, %1036 : vector<8x4xf32>
    %1085 = arith.subf %1082, %1084 : vector<8x4xf32>
    %1086 = vector.extract_strided_slice %1085 {offsets = [0, 0], sizes = [8, 1], strides = [1, 1]} : vector<8x4xf32> to vector<8x1xf32>
    %1087 = vector.broadcast %1086 : vector<8x1xf32> to vector<8x32xf32>
    %1088 = vector.broadcast %54 : vector<1x32xf32> to vector<8x32xf32>
    %1089 = arith.mulf %1087, %1088 : vector<8x32xf32>
    %1090 = arith.addf %62, %1089 : vector<8x32xf32>
    %1091 = vector.extract_strided_slice %1085 {offsets = [0, 1], sizes = [8, 1], strides = [1, 1]} : vector<8x4xf32> to vector<8x1xf32>
    %1092 = vector.broadcast %1091 : vector<8x1xf32> to vector<8x32xf32>
    %1093 = vector.broadcast %55 : vector<1x32xf32> to vector<8x32xf32>
    %1094 = arith.mulf %1092, %1093 : vector<8x32xf32>
    %1095 = arith.addf %1090, %1094 : vector<8x32xf32>
    %1096 = vector.extract_strided_slice %1085 {offsets = [0, 2], sizes = [8, 1], strides = [1, 1]} : vector<8x4xf32> to vector<8x1xf32>
    %1097 = vector.broadcast %1096 : vector<8x1xf32> to vector<8x32xf32>
    %1098 = vector.broadcast %56 : vector<1x32xf32> to vector<8x32xf32>
    %1099 = arith.mulf %1097, %1098 : vector<8x32xf32>
    %1100 = arith.addf %1095, %1099 : vector<8x32xf32>
    %1101 = vector.extract_strided_slice %1085 {offsets = [0, 3], sizes = [8, 1], strides = [1, 1]} : vector<8x4xf32> to vector<8x1xf32>
    %1102 = vector.broadcast %1101 : vector<8x1xf32> to vector<8x32xf32>
    %1103 = vector.broadcast %57 : vector<1x32xf32> to vector<8x32xf32>
    %1104 = arith.mulf %1102, %1103 : vector<8x32xf32>
    %1105 = arith.addf %1100, %1104 : vector<8x32xf32>
    %cst_230 = arith.constant 0.000000e+00 : f32
    %1106 = vector.broadcast %cst_230 : f32 to vector<8x32xf32>
    %1107 = arith.cmpf ogt, %1105, %1106 : vector<8x32xf32>
    %cst_231 = arith.constant 0.000000e+00 : f32
    %1108 = vector.broadcast %cst_231 : f32 to vector<8x32xf32>
    %1109 = arith.minimumf %1105, %1108 : vector<8x32xf32>
    %1110 = math.exp %1109 : vector<8x32xf32>
    %cst_232 = arith.constant 1.000000e+00 : f32
    %1111 = vector.broadcast %cst_232 : f32 to vector<8x32xf32>
    %1112 = arith.subf %1110, %1111 : vector<8x32xf32>
    %1113 = arith.select %1107, %1105, %1112 : vector<8x32xi1>, vector<8x32xf32>
    %cst_233 = arith.constant dense<0.000000e+00> : vector<8x32xf32>
    %1114 = tpu.matmul %1113, %58, %cst_233 {dimension_numbers = #tpu.dot_dimension_numbers<[1], [0], [0], [1], [0, 0, 1, 1], [], []>} : vector<8x32xf32>, vector<32x32xf32>, vector<8x32xf32> -> vector<8x32xf32>
    %1115 = arith.addf %1114, %65 : vector<8x32xf32>
    %cst_234 = arith.constant 0.000000e+00 : f32
    %1116 = vector.broadcast %cst_234 : f32 to vector<8x32xf32>
    %1117 = arith.cmpf ogt, %1115, %1116 : vector<8x32xf32>
    %cst_235 = arith.constant 0.000000e+00 : f32
    %1118 = vector.broadcast %cst_235 : f32 to vector<8x32xf32>
    %1119 = arith.minimumf %1115, %1118 : vector<8x32xf32>
    %1120 = math.exp %1119 : vector<8x32xf32>
    %cst_236 = arith.constant 1.000000e+00 : f32
    %1121 = vector.broadcast %cst_236 : f32 to vector<8x32xf32>
    %1122 = arith.subf %1120, %1121 : vector<8x32xf32>
    %1123 = arith.select %1117, %1115, %1122 : vector<8x32xi1>, vector<8x32xf32>
    %cst_237 = arith.constant dense<0.000000e+00> : vector<8x4xf32>
    %1124 = tpu.matmul %1123, %59, %cst_237 {dimension_numbers = #tpu.dot_dimension_numbers<[1], [0], [0], [1], [0, 0, 1, 1], [], []>} : vector<8x32xf32>, vector<32x4xf32>, vector<8x4xf32> -> vector<8x4xf32>
    %1125 = arith.addf %1124, %68 : vector<8x4xf32>
    %1126 = arith.subf %1036, %1079 : vector<8x4xf32>
    %1127 = arith.addf %1126, %1125 : vector<8x4xf32>
    %1128 = vector.broadcast %994 : f32 to vector<8x4xf32>
    %1129 = arith.mulf %1128, %1127 : vector<8x4xf32>
    %1130 = arith.addf %993, %1129 : vector<8x4xf32>
    %1131 = vector.extract_strided_slice %1130 {offsets = [0, 0], sizes = [8, 1], strides = [1, 1]} : vector<8x4xf32> to vector<8x1xf32>
    %1132 = vector.broadcast %1131 : vector<8x1xf32> to vector<8x32xf32>
    %1133 = vector.broadcast %54 : vector<1x32xf32> to vector<8x32xf32>
    %1134 = arith.mulf %1132, %1133 : vector<8x32xf32>
    %1135 = arith.addf %62, %1134 : vector<8x32xf32>
    %1136 = vector.extract_strided_slice %1130 {offsets = [0, 1], sizes = [8, 1], strides = [1, 1]} : vector<8x4xf32> to vector<8x1xf32>
    %1137 = vector.broadcast %1136 : vector<8x1xf32> to vector<8x32xf32>
    %1138 = vector.broadcast %55 : vector<1x32xf32> to vector<8x32xf32>
    %1139 = arith.mulf %1137, %1138 : vector<8x32xf32>
    %1140 = arith.addf %1135, %1139 : vector<8x32xf32>
    %1141 = vector.extract_strided_slice %1130 {offsets = [0, 2], sizes = [8, 1], strides = [1, 1]} : vector<8x4xf32> to vector<8x1xf32>
    %1142 = vector.broadcast %1141 : vector<8x1xf32> to vector<8x32xf32>
    %1143 = vector.broadcast %56 : vector<1x32xf32> to vector<8x32xf32>
    %1144 = arith.mulf %1142, %1143 : vector<8x32xf32>
    %1145 = arith.addf %1140, %1144 : vector<8x32xf32>
    %1146 = vector.extract_strided_slice %1130 {offsets = [0, 3], sizes = [8, 1], strides = [1, 1]} : vector<8x4xf32> to vector<8x1xf32>
    %1147 = vector.broadcast %1146 : vector<8x1xf32> to vector<8x32xf32>
    %1148 = vector.broadcast %57 : vector<1x32xf32> to vector<8x32xf32>
    %1149 = arith.mulf %1147, %1148 : vector<8x32xf32>
    %1150 = arith.addf %1145, %1149 : vector<8x32xf32>
    %cst_238 = arith.constant 0.000000e+00 : f32
    %1151 = vector.broadcast %cst_238 : f32 to vector<8x32xf32>
    %1152 = arith.cmpf ogt, %1150, %1151 : vector<8x32xf32>
    %cst_239 = arith.constant 0.000000e+00 : f32
    %1153 = vector.broadcast %cst_239 : f32 to vector<8x32xf32>
    %1154 = arith.minimumf %1150, %1153 : vector<8x32xf32>
    %1155 = math.exp %1154 : vector<8x32xf32>
    %cst_240 = arith.constant 1.000000e+00 : f32
    %1156 = vector.broadcast %cst_240 : f32 to vector<8x32xf32>
    %1157 = arith.subf %1155, %1156 : vector<8x32xf32>
    %1158 = arith.select %1152, %1150, %1157 : vector<8x32xi1>, vector<8x32xf32>
    %cst_241 = arith.constant dense<0.000000e+00> : vector<8x32xf32>
    %1159 = tpu.matmul %1158, %58, %cst_241 {dimension_numbers = #tpu.dot_dimension_numbers<[1], [0], [0], [1], [0, 0, 1, 1], [], []>} : vector<8x32xf32>, vector<32x32xf32>, vector<8x32xf32> -> vector<8x32xf32>
    %1160 = arith.addf %1159, %65 : vector<8x32xf32>
    %cst_242 = arith.constant 0.000000e+00 : f32
    %1161 = vector.broadcast %cst_242 : f32 to vector<8x32xf32>
    %1162 = arith.cmpf ogt, %1160, %1161 : vector<8x32xf32>
    %cst_243 = arith.constant 0.000000e+00 : f32
    %1163 = vector.broadcast %cst_243 : f32 to vector<8x32xf32>
    %1164 = arith.minimumf %1160, %1163 : vector<8x32xf32>
    %1165 = math.exp %1164 : vector<8x32xf32>
    %cst_244 = arith.constant 1.000000e+00 : f32
    %1166 = vector.broadcast %cst_244 : f32 to vector<8x32xf32>
    %1167 = arith.subf %1165, %1166 : vector<8x32xf32>
    %1168 = arith.select %1162, %1160, %1167 : vector<8x32xi1>, vector<8x32xf32>
    %cst_245 = arith.constant dense<0.000000e+00> : vector<8x4xf32>
    %1169 = tpu.matmul %1168, %59, %cst_245 {dimension_numbers = #tpu.dot_dimension_numbers<[1], [0], [0], [1], [0, 0, 1, 1], [], []>} : vector<8x32xf32>, vector<32x4xf32>, vector<8x4xf32> -> vector<8x4xf32>
    %1170 = arith.addf %1169, %68 : vector<8x4xf32>
    %1171 = arith.addf %1079, %1125 : vector<8x4xf32>
    %cst_246 = arith.constant 3.000000e+00 : f32
    %1172 = vector.broadcast %cst_246 : f32 to vector<8x4xf32>
    %1173 = arith.mulf %1172, %1171 : vector<8x4xf32>
    %1174 = arith.addf %1036, %1173 : vector<8x4xf32>
    %1175 = arith.addf %1174, %1170 : vector<8x4xf32>
    %1176 = vector.broadcast %996 : f32 to vector<8x4xf32>
    %1177 = arith.mulf %1176, %1175 : vector<8x4xf32>
    %1178 = arith.addf %993, %1177 : vector<8x4xf32>
    %c6 = arith.constant 6 : index
    %1179 = memref.load %arg2[%c6] : memref<7xf32, #tpu.memory_space<smem>>
    %c6_247 = arith.constant 6 : index
    %1180 = memref.load %arg3[%c6_247] : memref<7xf32, #tpu.memory_space<smem>>
    %c6_248 = arith.constant 6 : index
    %1181 = memref.load %arg4[%c6_248] : memref<7xf32, #tpu.memory_space<smem>>
    %1182 = vector.extract_strided_slice %1178 {offsets = [0, 0], sizes = [8, 1], strides = [1, 1]} : vector<8x4xf32> to vector<8x1xf32>
    %1183 = vector.broadcast %1182 : vector<8x1xf32> to vector<8x32xf32>
    %1184 = vector.broadcast %54 : vector<1x32xf32> to vector<8x32xf32>
    %1185 = arith.mulf %1183, %1184 : vector<8x32xf32>
    %1186 = arith.addf %62, %1185 : vector<8x32xf32>
    %1187 = vector.extract_strided_slice %1178 {offsets = [0, 1], sizes = [8, 1], strides = [1, 1]} : vector<8x4xf32> to vector<8x1xf32>
    %1188 = vector.broadcast %1187 : vector<8x1xf32> to vector<8x32xf32>
    %1189 = vector.broadcast %55 : vector<1x32xf32> to vector<8x32xf32>
    %1190 = arith.mulf %1188, %1189 : vector<8x32xf32>
    %1191 = arith.addf %1186, %1190 : vector<8x32xf32>
    %1192 = vector.extract_strided_slice %1178 {offsets = [0, 2], sizes = [8, 1], strides = [1, 1]} : vector<8x4xf32> to vector<8x1xf32>
    %1193 = vector.broadcast %1192 : vector<8x1xf32> to vector<8x32xf32>
    %1194 = vector.broadcast %56 : vector<1x32xf32> to vector<8x32xf32>
    %1195 = arith.mulf %1193, %1194 : vector<8x32xf32>
    %1196 = arith.addf %1191, %1195 : vector<8x32xf32>
    %1197 = vector.extract_strided_slice %1178 {offsets = [0, 3], sizes = [8, 1], strides = [1, 1]} : vector<8x4xf32> to vector<8x1xf32>
    %1198 = vector.broadcast %1197 : vector<8x1xf32> to vector<8x32xf32>
    %1199 = vector.broadcast %57 : vector<1x32xf32> to vector<8x32xf32>
    %1200 = arith.mulf %1198, %1199 : vector<8x32xf32>
    %1201 = arith.addf %1196, %1200 : vector<8x32xf32>
    %cst_249 = arith.constant 0.000000e+00 : f32
    %1202 = vector.broadcast %cst_249 : f32 to vector<8x32xf32>
    %1203 = arith.cmpf ogt, %1201, %1202 : vector<8x32xf32>
    %cst_250 = arith.constant 0.000000e+00 : f32
    %1204 = vector.broadcast %cst_250 : f32 to vector<8x32xf32>
    %1205 = arith.minimumf %1201, %1204 : vector<8x32xf32>
    %1206 = math.exp %1205 : vector<8x32xf32>
    %cst_251 = arith.constant 1.000000e+00 : f32
    %1207 = vector.broadcast %cst_251 : f32 to vector<8x32xf32>
    %1208 = arith.subf %1206, %1207 : vector<8x32xf32>
    %1209 = arith.select %1203, %1201, %1208 : vector<8x32xi1>, vector<8x32xf32>
    %cst_252 = arith.constant dense<0.000000e+00> : vector<8x32xf32>
    %1210 = tpu.matmul %1209, %58, %cst_252 {dimension_numbers = #tpu.dot_dimension_numbers<[1], [0], [0], [1], [0, 0, 1, 1], [], []>} : vector<8x32xf32>, vector<32x32xf32>, vector<8x32xf32> -> vector<8x32xf32>
    %1211 = arith.addf %1210, %65 : vector<8x32xf32>
    %cst_253 = arith.constant 0.000000e+00 : f32
    %1212 = vector.broadcast %cst_253 : f32 to vector<8x32xf32>
    %1213 = arith.cmpf ogt, %1211, %1212 : vector<8x32xf32>
    %cst_254 = arith.constant 0.000000e+00 : f32
    %1214 = vector.broadcast %cst_254 : f32 to vector<8x32xf32>
    %1215 = arith.minimumf %1211, %1214 : vector<8x32xf32>
    %1216 = math.exp %1215 : vector<8x32xf32>
    %cst_255 = arith.constant 1.000000e+00 : f32
    %1217 = vector.broadcast %cst_255 : f32 to vector<8x32xf32>
    %1218 = arith.subf %1216, %1217 : vector<8x32xf32>
    %1219 = arith.select %1213, %1211, %1218 : vector<8x32xi1>, vector<8x32xf32>
    %cst_256 = arith.constant dense<0.000000e+00> : vector<8x4xf32>
    %1220 = tpu.matmul %1219, %59, %cst_256 {dimension_numbers = #tpu.dot_dimension_numbers<[1], [0], [0], [1], [0, 0, 1, 1], [], []>} : vector<8x32xf32>, vector<32x4xf32>, vector<8x4xf32> -> vector<8x4xf32>
    %1221 = arith.addf %1220, %68 : vector<8x4xf32>
    %1222 = vector.broadcast %1180 : f32 to vector<8x4xf32>
    %1223 = arith.mulf %1222, %1221 : vector<8x4xf32>
    %1224 = arith.addf %1178, %1223 : vector<8x4xf32>
    %1225 = vector.extract_strided_slice %1224 {offsets = [0, 0], sizes = [8, 1], strides = [1, 1]} : vector<8x4xf32> to vector<8x1xf32>
    %1226 = vector.broadcast %1225 : vector<8x1xf32> to vector<8x32xf32>
    %1227 = vector.broadcast %54 : vector<1x32xf32> to vector<8x32xf32>
    %1228 = arith.mulf %1226, %1227 : vector<8x32xf32>
    %1229 = arith.addf %62, %1228 : vector<8x32xf32>
    %1230 = vector.extract_strided_slice %1224 {offsets = [0, 1], sizes = [8, 1], strides = [1, 1]} : vector<8x4xf32> to vector<8x1xf32>
    %1231 = vector.broadcast %1230 : vector<8x1xf32> to vector<8x32xf32>
    %1232 = vector.broadcast %55 : vector<1x32xf32> to vector<8x32xf32>
    %1233 = arith.mulf %1231, %1232 : vector<8x32xf32>
    %1234 = arith.addf %1229, %1233 : vector<8x32xf32>
    %1235 = vector.extract_strided_slice %1224 {offsets = [0, 2], sizes = [8, 1], strides = [1, 1]} : vector<8x4xf32> to vector<8x1xf32>
    %1236 = vector.broadcast %1235 : vector<8x1xf32> to vector<8x32xf32>
    %1237 = vector.broadcast %56 : vector<1x32xf32> to vector<8x32xf32>
    %1238 = arith.mulf %1236, %1237 : vector<8x32xf32>
    %1239 = arith.addf %1234, %1238 : vector<8x32xf32>
    %1240 = vector.extract_strided_slice %1224 {offsets = [0, 3], sizes = [8, 1], strides = [1, 1]} : vector<8x4xf32> to vector<8x1xf32>
    %1241 = vector.broadcast %1240 : vector<8x1xf32> to vector<8x32xf32>
    %1242 = vector.broadcast %57 : vector<1x32xf32> to vector<8x32xf32>
    %1243 = arith.mulf %1241, %1242 : vector<8x32xf32>
    %1244 = arith.addf %1239, %1243 : vector<8x32xf32>
    %cst_257 = arith.constant 0.000000e+00 : f32
    %1245 = vector.broadcast %cst_257 : f32 to vector<8x32xf32>
    %1246 = arith.cmpf ogt, %1244, %1245 : vector<8x32xf32>
    %cst_258 = arith.constant 0.000000e+00 : f32
    %1247 = vector.broadcast %cst_258 : f32 to vector<8x32xf32>
    %1248 = arith.minimumf %1244, %1247 : vector<8x32xf32>
    %1249 = math.exp %1248 : vector<8x32xf32>
    %cst_259 = arith.constant 1.000000e+00 : f32
    %1250 = vector.broadcast %cst_259 : f32 to vector<8x32xf32>
    %1251 = arith.subf %1249, %1250 : vector<8x32xf32>
    %1252 = arith.select %1246, %1244, %1251 : vector<8x32xi1>, vector<8x32xf32>
    %cst_260 = arith.constant dense<0.000000e+00> : vector<8x32xf32>
    %1253 = tpu.matmul %1252, %58, %cst_260 {dimension_numbers = #tpu.dot_dimension_numbers<[1], [0], [0], [1], [0, 0, 1, 1], [], []>} : vector<8x32xf32>, vector<32x32xf32>, vector<8x32xf32> -> vector<8x32xf32>
    %1254 = arith.addf %1253, %65 : vector<8x32xf32>
    %cst_261 = arith.constant 0.000000e+00 : f32
    %1255 = vector.broadcast %cst_261 : f32 to vector<8x32xf32>
    %1256 = arith.cmpf ogt, %1254, %1255 : vector<8x32xf32>
    %cst_262 = arith.constant 0.000000e+00 : f32
    %1257 = vector.broadcast %cst_262 : f32 to vector<8x32xf32>
    %1258 = arith.minimumf %1254, %1257 : vector<8x32xf32>
    %1259 = math.exp %1258 : vector<8x32xf32>
    %cst_263 = arith.constant 1.000000e+00 : f32
    %1260 = vector.broadcast %cst_263 : f32 to vector<8x32xf32>
    %1261 = arith.subf %1259, %1260 : vector<8x32xf32>
    %1262 = arith.select %1256, %1254, %1261 : vector<8x32xi1>, vector<8x32xf32>
    %cst_264 = arith.constant dense<0.000000e+00> : vector<8x4xf32>
    %1263 = tpu.matmul %1262, %59, %cst_264 {dimension_numbers = #tpu.dot_dimension_numbers<[1], [0], [0], [1], [0, 0, 1, 1], [], []>} : vector<8x32xf32>, vector<32x4xf32>, vector<8x4xf32> -> vector<8x4xf32>
    %1264 = arith.addf %1263, %68 : vector<8x4xf32>
    %1265 = vector.broadcast %1179 : f32 to vector<8x4xf32>
    %1266 = arith.mulf %1265, %1264 : vector<8x4xf32>
    %1267 = arith.addf %1178, %1266 : vector<8x4xf32>
    %1268 = vector.broadcast %1180 : f32 to vector<8x4xf32>
    %1269 = arith.mulf %1268, %1221 : vector<8x4xf32>
    %1270 = arith.subf %1267, %1269 : vector<8x4xf32>
    %1271 = vector.extract_strided_slice %1270 {offsets = [0, 0], sizes = [8, 1], strides = [1, 1]} : vector<8x4xf32> to vector<8x1xf32>
    %1272 = vector.broadcast %1271 : vector<8x1xf32> to vector<8x32xf32>
    %1273 = vector.broadcast %54 : vector<1x32xf32> to vector<8x32xf32>
    %1274 = arith.mulf %1272, %1273 : vector<8x32xf32>
    %1275 = arith.addf %62, %1274 : vector<8x32xf32>
    %1276 = vector.extract_strided_slice %1270 {offsets = [0, 1], sizes = [8, 1], strides = [1, 1]} : vector<8x4xf32> to vector<8x1xf32>
    %1277 = vector.broadcast %1276 : vector<8x1xf32> to vector<8x32xf32>
    %1278 = vector.broadcast %55 : vector<1x32xf32> to vector<8x32xf32>
    %1279 = arith.mulf %1277, %1278 : vector<8x32xf32>
    %1280 = arith.addf %1275, %1279 : vector<8x32xf32>
    %1281 = vector.extract_strided_slice %1270 {offsets = [0, 2], sizes = [8, 1], strides = [1, 1]} : vector<8x4xf32> to vector<8x1xf32>
    %1282 = vector.broadcast %1281 : vector<8x1xf32> to vector<8x32xf32>
    %1283 = vector.broadcast %56 : vector<1x32xf32> to vector<8x32xf32>
    %1284 = arith.mulf %1282, %1283 : vector<8x32xf32>
    %1285 = arith.addf %1280, %1284 : vector<8x32xf32>
    %1286 = vector.extract_strided_slice %1270 {offsets = [0, 3], sizes = [8, 1], strides = [1, 1]} : vector<8x4xf32> to vector<8x1xf32>
    %1287 = vector.broadcast %1286 : vector<8x1xf32> to vector<8x32xf32>
    %1288 = vector.broadcast %57 : vector<1x32xf32> to vector<8x32xf32>
    %1289 = arith.mulf %1287, %1288 : vector<8x32xf32>
    %1290 = arith.addf %1285, %1289 : vector<8x32xf32>
    %cst_265 = arith.constant 0.000000e+00 : f32
    %1291 = vector.broadcast %cst_265 : f32 to vector<8x32xf32>
    %1292 = arith.cmpf ogt, %1290, %1291 : vector<8x32xf32>
    %cst_266 = arith.constant 0.000000e+00 : f32
    %1293 = vector.broadcast %cst_266 : f32 to vector<8x32xf32>
    %1294 = arith.minimumf %1290, %1293 : vector<8x32xf32>
    %1295 = math.exp %1294 : vector<8x32xf32>
    %cst_267 = arith.constant 1.000000e+00 : f32
    %1296 = vector.broadcast %cst_267 : f32 to vector<8x32xf32>
    %1297 = arith.subf %1295, %1296 : vector<8x32xf32>
    %1298 = arith.select %1292, %1290, %1297 : vector<8x32xi1>, vector<8x32xf32>
    %cst_268 = arith.constant dense<0.000000e+00> : vector<8x32xf32>
    %1299 = tpu.matmul %1298, %58, %cst_268 {dimension_numbers = #tpu.dot_dimension_numbers<[1], [0], [0], [1], [0, 0, 1, 1], [], []>} : vector<8x32xf32>, vector<32x32xf32>, vector<8x32xf32> -> vector<8x32xf32>
    %1300 = arith.addf %1299, %65 : vector<8x32xf32>
    %cst_269 = arith.constant 0.000000e+00 : f32
    %1301 = vector.broadcast %cst_269 : f32 to vector<8x32xf32>
    %1302 = arith.cmpf ogt, %1300, %1301 : vector<8x32xf32>
    %cst_270 = arith.constant 0.000000e+00 : f32
    %1303 = vector.broadcast %cst_270 : f32 to vector<8x32xf32>
    %1304 = arith.minimumf %1300, %1303 : vector<8x32xf32>
    %1305 = math.exp %1304 : vector<8x32xf32>
    %cst_271 = arith.constant 1.000000e+00 : f32
    %1306 = vector.broadcast %cst_271 : f32 to vector<8x32xf32>
    %1307 = arith.subf %1305, %1306 : vector<8x32xf32>
    %1308 = arith.select %1302, %1300, %1307 : vector<8x32xi1>, vector<8x32xf32>
    %cst_272 = arith.constant dense<0.000000e+00> : vector<8x4xf32>
    %1309 = tpu.matmul %1308, %59, %cst_272 {dimension_numbers = #tpu.dot_dimension_numbers<[1], [0], [0], [1], [0, 0, 1, 1], [], []>} : vector<8x32xf32>, vector<32x4xf32>, vector<8x4xf32> -> vector<8x4xf32>
    %1310 = arith.addf %1309, %68 : vector<8x4xf32>
    %1311 = arith.subf %1221, %1264 : vector<8x4xf32>
    %1312 = arith.addf %1311, %1310 : vector<8x4xf32>
    %1313 = vector.broadcast %1179 : f32 to vector<8x4xf32>
    %1314 = arith.mulf %1313, %1312 : vector<8x4xf32>
    %1315 = arith.addf %1178, %1314 : vector<8x4xf32>
    %1316 = vector.extract_strided_slice %1315 {offsets = [0, 0], sizes = [8, 1], strides = [1, 1]} : vector<8x4xf32> to vector<8x1xf32>
    %1317 = vector.broadcast %1316 : vector<8x1xf32> to vector<8x32xf32>
    %1318 = vector.broadcast %54 : vector<1x32xf32> to vector<8x32xf32>
    %1319 = arith.mulf %1317, %1318 : vector<8x32xf32>
    %1320 = arith.addf %62, %1319 : vector<8x32xf32>
    %1321 = vector.extract_strided_slice %1315 {offsets = [0, 1], sizes = [8, 1], strides = [1, 1]} : vector<8x4xf32> to vector<8x1xf32>
    %1322 = vector.broadcast %1321 : vector<8x1xf32> to vector<8x32xf32>
    %1323 = vector.broadcast %55 : vector<1x32xf32> to vector<8x32xf32>
    %1324 = arith.mulf %1322, %1323 : vector<8x32xf32>
    %1325 = arith.addf %1320, %1324 : vector<8x32xf32>
    %1326 = vector.extract_strided_slice %1315 {offsets = [0, 2], sizes = [8, 1], strides = [1, 1]} : vector<8x4xf32> to vector<8x1xf32>
    %1327 = vector.broadcast %1326 : vector<8x1xf32> to vector<8x32xf32>
    %1328 = vector.broadcast %56 : vector<1x32xf32> to vector<8x32xf32>
    %1329 = arith.mulf %1327, %1328 : vector<8x32xf32>
    %1330 = arith.addf %1325, %1329 : vector<8x32xf32>
    %1331 = vector.extract_strided_slice %1315 {offsets = [0, 3], sizes = [8, 1], strides = [1, 1]} : vector<8x4xf32> to vector<8x1xf32>
    %1332 = vector.broadcast %1331 : vector<8x1xf32> to vector<8x32xf32>
    %1333 = vector.broadcast %57 : vector<1x32xf32> to vector<8x32xf32>
    %1334 = arith.mulf %1332, %1333 : vector<8x32xf32>
    %1335 = arith.addf %1330, %1334 : vector<8x32xf32>
    %cst_273 = arith.constant 0.000000e+00 : f32
    %1336 = vector.broadcast %cst_273 : f32 to vector<8x32xf32>
    %1337 = arith.cmpf ogt, %1335, %1336 : vector<8x32xf32>
    %cst_274 = arith.constant 0.000000e+00 : f32
    %1338 = vector.broadcast %cst_274 : f32 to vector<8x32xf32>
    %1339 = arith.minimumf %1335, %1338 : vector<8x32xf32>
    %1340 = math.exp %1339 : vector<8x32xf32>
    %cst_275 = arith.constant 1.000000e+00 : f32
    %1341 = vector.broadcast %cst_275 : f32 to vector<8x32xf32>
    %1342 = arith.subf %1340, %1341 : vector<8x32xf32>
    %1343 = arith.select %1337, %1335, %1342 : vector<8x32xi1>, vector<8x32xf32>
    %cst_276 = arith.constant dense<0.000000e+00> : vector<8x32xf32>
    %1344 = tpu.matmul %1343, %58, %cst_276 {dimension_numbers = #tpu.dot_dimension_numbers<[1], [0], [0], [1], [0, 0, 1, 1], [], []>} : vector<8x32xf32>, vector<32x32xf32>, vector<8x32xf32> -> vector<8x32xf32>
    %1345 = arith.addf %1344, %65 : vector<8x32xf32>
    %cst_277 = arith.constant 0.000000e+00 : f32
    %1346 = vector.broadcast %cst_277 : f32 to vector<8x32xf32>
    %1347 = arith.cmpf ogt, %1345, %1346 : vector<8x32xf32>
    %cst_278 = arith.constant 0.000000e+00 : f32
    %1348 = vector.broadcast %cst_278 : f32 to vector<8x32xf32>
    %1349 = arith.minimumf %1345, %1348 : vector<8x32xf32>
    %1350 = math.exp %1349 : vector<8x32xf32>
    %cst_279 = arith.constant 1.000000e+00 : f32
    %1351 = vector.broadcast %cst_279 : f32 to vector<8x32xf32>
    %1352 = arith.subf %1350, %1351 : vector<8x32xf32>
    %1353 = arith.select %1347, %1345, %1352 : vector<8x32xi1>, vector<8x32xf32>
    %cst_280 = arith.constant dense<0.000000e+00> : vector<8x4xf32>
    %1354 = tpu.matmul %1353, %59, %cst_280 {dimension_numbers = #tpu.dot_dimension_numbers<[1], [0], [0], [1], [0, 0, 1, 1], [], []>} : vector<8x32xf32>, vector<32x4xf32>, vector<8x4xf32> -> vector<8x4xf32>
    %1355 = arith.addf %1354, %68 : vector<8x4xf32>
    %1356 = arith.addf %1264, %1310 : vector<8x4xf32>
    %cst_281 = arith.constant 3.000000e+00 : f32
    %1357 = vector.broadcast %cst_281 : f32 to vector<8x4xf32>
    %1358 = arith.mulf %1357, %1356 : vector<8x4xf32>
    %1359 = arith.addf %1221, %1358 : vector<8x4xf32>
    %1360 = arith.addf %1359, %1355 : vector<8x4xf32>
    %1361 = vector.broadcast %1181 : f32 to vector<8x4xf32>
    %1362 = arith.mulf %1361, %1360 : vector<8x4xf32>
    %1363 = arith.addf %1178, %1362 : vector<8x4xf32>
    %1364 = tpu.concatenate %52, %253, %438, %623, %808, %993, %1178, %1363 in 0 : vector<8x4xf32>, vector<8x4xf32>, vector<8x4xf32>, vector<8x4xf32>, vector<8x4xf32>, vector<8x4xf32>, vector<8x4xf32>, vector<8x4xf32> -> vector<64x4xf32>
    %c0_282 = arith.constant 0 : index
    %c0_283 = arith.constant 0 : index
    %1365 = vector.load %arg16[%c0_282, %c0_283] : memref<4x32xf32, #tpu.memory_space<vmem>>, vector<4x32xf32>
    %c0_284 = arith.constant 0 : index
    %c0_285 = arith.constant 0 : index
    %1366 = vector.load %arg17[%c0_284, %c0_285] : memref<1x32xf32, #tpu.memory_space<vmem>>, vector<1x32xf32>
    %1367 = vector.shape_cast %1366 : vector<1x32xf32> to vector<1x32xf32>
    %1368 = vector.broadcast %1367 : vector<1x32xf32> to vector<64x32xf32>
    %1369 = vector.extract_strided_slice %1364 {offsets = [0, 0], sizes = [64, 1], strides = [1, 1]} : vector<64x4xf32> to vector<64x1xf32>
    %1370 = vector.extract_strided_slice %1365 {offsets = [0, 0], sizes = [1, 32], strides = [1, 1]} : vector<4x32xf32> to vector<1x32xf32>
    %1371 = vector.broadcast %1369 : vector<64x1xf32> to vector<64x32xf32>
    %1372 = vector.broadcast %1370 : vector<1x32xf32> to vector<64x32xf32>
    %1373 = arith.mulf %1371, %1372 : vector<64x32xf32>
    %1374 = arith.addf %1368, %1373 : vector<64x32xf32>
    %1375 = vector.extract_strided_slice %1364 {offsets = [0, 1], sizes = [64, 1], strides = [1, 1]} : vector<64x4xf32> to vector<64x1xf32>
    %1376 = vector.extract_strided_slice %1365 {offsets = [1, 0], sizes = [1, 32], strides = [1, 1]} : vector<4x32xf32> to vector<1x32xf32>
    %1377 = vector.broadcast %1375 : vector<64x1xf32> to vector<64x32xf32>
    %1378 = vector.broadcast %1376 : vector<1x32xf32> to vector<64x32xf32>
    %1379 = arith.mulf %1377, %1378 : vector<64x32xf32>
    %1380 = arith.addf %1374, %1379 : vector<64x32xf32>
    %1381 = vector.extract_strided_slice %1364 {offsets = [0, 2], sizes = [64, 1], strides = [1, 1]} : vector<64x4xf32> to vector<64x1xf32>
    %1382 = vector.extract_strided_slice %1365 {offsets = [2, 0], sizes = [1, 32], strides = [1, 1]} : vector<4x32xf32> to vector<1x32xf32>
    %1383 = vector.broadcast %1381 : vector<64x1xf32> to vector<64x32xf32>
    %1384 = vector.broadcast %1382 : vector<1x32xf32> to vector<64x32xf32>
    %1385 = arith.mulf %1383, %1384 : vector<64x32xf32>
    %1386 = arith.addf %1380, %1385 : vector<64x32xf32>
    %1387 = vector.extract_strided_slice %1364 {offsets = [0, 3], sizes = [64, 1], strides = [1, 1]} : vector<64x4xf32> to vector<64x1xf32>
    %1388 = vector.extract_strided_slice %1365 {offsets = [3, 0], sizes = [1, 32], strides = [1, 1]} : vector<4x32xf32> to vector<1x32xf32>
    %1389 = vector.broadcast %1387 : vector<64x1xf32> to vector<64x32xf32>
    %1390 = vector.broadcast %1388 : vector<1x32xf32> to vector<64x32xf32>
    %1391 = arith.mulf %1389, %1390 : vector<64x32xf32>
    %1392 = arith.addf %1386, %1391 : vector<64x32xf32>
    %cst_286 = arith.constant 0.000000e+00 : f32
    %1393 = vector.broadcast %cst_286 : f32 to vector<64x32xf32>
    %1394 = arith.maximumf %1392, %1393 : vector<64x32xf32>
    %c0_287 = arith.constant 0 : index
    %c0_288 = arith.constant 0 : index
    %1395 = vector.load %arg18[%c0_287, %c0_288] : memref<32x4xf32, #tpu.memory_space<vmem>>, vector<32x4xf32>
    %cst_289 = arith.constant dense<0.000000e+00> : vector<64x4xf32>
    %1396 = tpu.matmul %1394, %1395, %cst_289 {dimension_numbers = #tpu.dot_dimension_numbers<[1], [0], [0], [1], [0, 0, 1, 1], [], []>} : vector<64x32xf32>, vector<32x4xf32>, vector<64x4xf32> -> vector<64x4xf32>
    %c0_290 = arith.constant 0 : index
    %c0_291 = arith.constant 0 : index
    %1397 = vector.load %arg19[%c0_290, %c0_291] : memref<1x4xf32, #tpu.memory_space<vmem>>, vector<1x4xf32>
    %1398 = vector.broadcast %1397 : vector<1x4xf32> to vector<64x4xf32>
    %1399 = arith.addf %1396, %1398 : vector<64x4xf32>
    %c0_292 = arith.constant 0 : index
    %c0_293 = arith.constant 0 : index
    %1400 = vector.load %arg20[%c0_292, %c0_293] : memref<64x4xf32, #tpu.memory_space<vmem>>, vector<64x4xf32>
    tpu.vector_store %arg20[%c0_292, %c0_293], %1399 {strides = array<i32>} : memref<64x4xf32, #tpu.memory_space<vmem>>, vector<64x4xf32>,
    return
  }
}

</mosaic_0001>

<llo_original>
// kernel: tpu_custom_call.1
$region0: #{tpu_custom_call.1}
  #allocation0 [shape = 'u32[]', space=smem, size = 0x4, offset = 0x4, fixed_abs, tag = 'smem constant byte address 0x4 - core index']
  #allocation1 [shape = 'u32[144,128]{1,0:T(1,128)}', space=vmem, size = 0x12000, scoped, tag = 'internal scratch']
  %s0 = inlined_call_operand.vmem [shape: f32[64,4], index: 0, kind: input, shape index: {}]
  %s1 = inlined_call_operand.vmem [shape: f32[8,4], index: 1, kind: input, shape index: {}]
  %s2 = inlined_call_operand.vmem [shape: f32[7], index: 2, kind: input, shape index: {}]
  %s3 = inlined_call_operand.vmem [shape: f32[7], index: 3, kind: input, shape index: {}]
  %s4 = inlined_call_operand.vmem [shape: f32[7], index: 4, kind: input, shape index: {}]
  %s5 = inlined_call_operand.vmem [shape: f32[4,32], index: 5, kind: input, shape index: {}]
  %s6 = inlined_call_operand.vmem [shape: f32[32,32], index: 6, kind: input, shape index: {}]
  %s7 = inlined_call_operand.vmem [shape: f32[1,32], index: 7, kind: input, shape index: {}]
  %s8 = inlined_call_operand.vmem [shape: f32[32,8], index: 8, kind: input, shape index: {}]
  %s9 = inlined_call_operand.vmem [shape: f32[1,8], index: 9, kind: input, shape index: {}]
  %s10 = inlined_call_operand.vmem [shape: f32[4,32], index: 10, kind: input, shape index: {}]
  %s11 = inlined_call_operand.vmem [shape: f32[1,32], index: 11, kind: input, shape index: {}]
  %s12 = inlined_call_operand.vmem [shape: f32[32,32], index: 12, kind: input, shape index: {}]
  %s13 = inlined_call_operand.vmem [shape: f32[1,32], index: 13, kind: input, shape index: {}]
  %s14 = inlined_call_operand.vmem [shape: f32[32,4], index: 14, kind: input, shape index: {}]
  %s15 = inlined_call_operand.vmem [shape: f32[1,4], index: 15, kind: input, shape index: {}]
  %s16 = inlined_call_operand.vmem [shape: f32[4,32], index: 16, kind: input, shape index: {}]
  %s17 = inlined_call_operand.vmem [shape: f32[1,32], index: 17, kind: input, shape index: {}]
  %s18 = inlined_call_operand.vmem [shape: f32[32,4], index: 18, kind: input, shape index: {}]
  %s19 = inlined_call_operand.vmem [shape: f32[1,4], index: 19, kind: input, shape index: {}]
  %s20 = inlined_call_operand.vmem [shape: f32[64,4], index: 20, kind: output, shape index: {}]
  %s21 = sld [smem:[#allocation0]]
  $region102: #{tpu_custom_call.1} parent=0
    _
  %s23 = ssub.s32 1, %s21
  %s24 = scalar_select 0, %s23, %s21
  $region1: #{tpu_custom_call.1} parent=0
    #allocation2 [shape = 'u8[512]{0}', space=smem, size = 0x200, scoped, tag = 'input window, operand 2, single buffered']
    #allocation3 [shape = 's32[1]{0}', space=sflag, size = 0x4, scoped, tag = 'scoped memory for tpu_custom_call.1']
    #allocation4 [shape = 'u8[512]{0}', space=smem, size = 0x200, scoped, tag = 'input window, operand 3, single buffered']
    #allocation5 [shape = 's32[1]{0}', space=sflag, size = 0x4, scoped, tag = 'scoped memory for tpu_custom_call.1']
    #allocation6 [shape = 'u8[512]{0}', space=smem, size = 0x200, scoped, tag = 'input window, operand 4, single buffered']
    %25 = vsyncpa [#allocation3], 0
    %26 = vsyncpa [#allocation5], 0
    // Predicated region
    $region2: #{tpu_custom_call.1} parent=1 // pred_check
      _
    $region3: #{tpu_custom_call.1} parent=1 // pred_check_branch
      %28 = sbr.rel (0) target = $region5
    $region4: #{tpu_custom_call.1} parent=1 // pred_region
      _
    $region5: #{tpu_custom_call.1} parent=1 // pred_fallthru
      _
    // Predicated region
    $region6: #{tpu_custom_call.1} parent=1 // pred_check
      _
    $region7: #{tpu_custom_call.1} parent=1 // pred_check_branch
      %30 = sbr.rel (0) target = $region9
    $region8: #{tpu_custom_call.1} parent=1 // pred_region
      _
    $region9: #{tpu_custom_call.1} parent=1 // pred_fallthru
      _
    // Predicated region
    $region10: #{tpu_custom_call.1} parent=1 // pred_check
      _
    $region11: #{tpu_custom_call.1} parent=1 // pred_check_branch
      %32 = sbr.rel (0) target = $region13
    $region12: #{tpu_custom_call.1} parent=1 // pred_region
      %s34 = ssub.s32 16, 16
      %35 = vsyncadd [#allocation3], %s34
      %s37 = sshll.u32 %s2, 4
      %s38 = int_to_ptr.vmem [resolvable:$true] %s37
      %40 = dma.vmem_to_smem %s38, 16, [#allocation2], [#allocation3]
    $region13: #{tpu_custom_call.1} parent=1 // pred_fallthru
      _
    // Predicated region
    $region14: #{tpu_custom_call.1} parent=1 // pred_check
      _
    $region15: #{tpu_custom_call.1} parent=1 // pred_check_branch
      %42 = sbr.rel (0) target = $region17
    $region16: #{tpu_custom_call.1} parent=1 // pred_region
      %s44 = ssub.s32 16, 16
      %45 = vsyncadd [#allocation5], %s44
      %s47 = sshll.u32 %s3, 4
      %s48 = int_to_ptr.vmem [resolvable:$true] %s47
      %50 = dma.vmem_to_smem %s48, 16, [#allocation4], [#allocation5]
    $region17: #{tpu_custom_call.1} parent=1 // pred_fallthru
      _
    // Predicated region
    $region18: #{tpu_custom_call.1} parent=1 // pred_check
      _
    $region19: #{tpu_custom_call.1} parent=1 // pred_check_branch
      %52 = sbr.rel (0) target = $region21
    $region20: #{tpu_custom_call.1} parent=1 // pred_region
      %s54 = ssub.s32 16, 16
      %55 = vsyncadd [#allocation5], %s54
      %s57 = sshll.u32 %s4, 4
      %s58 = int_to_ptr.vmem [resolvable:$true] %s57
      %60 = dma.vmem_to_smem %s58, 16, [#allocation6], [#allocation5]
    $region21: #{tpu_custom_call.1} parent=1 // pred_fallthru
      _
    // Predicated region
    $region22: #{tpu_custom_call.1} parent=1 // pred_check
      _
    $region23: #{tpu_custom_call.1} parent=1 // pred_check_branch
      %62 = sbr.rel (0) target = $region25
    $region24: #{tpu_custom_call.1} parent=1 // pred_region
      _
    $region25: #{tpu_custom_call.1} parent=1 // pred_fallthru
      _
    // Predicated region
    $region26: #{tpu_custom_call.1} parent=1 // pred_check
      _
    $region27: #{tpu_custom_call.1} parent=1 // pred_check_branch
      %64 = sbr.rel (0) target = $region29
    $region28: #{tpu_custom_call.1} parent=1 // pred_region
      _
    $region29: #{tpu_custom_call.1} parent=1 // pred_fallthru
      _
    // Predicated region
    $region30: #{tpu_custom_call.1} parent=1 // pred_check
      _
    $region31: #{tpu_custom_call.1} parent=1 // pred_check_branch
      %66 = sbr.rel (0) target = $region33
    $region32: #{tpu_custom_call.1} parent=1 // pred_region
      _
    $region33: #{tpu_custom_call.1} parent=1 // pred_fallthru
      _
    // Predicated region
    $region34: #{tpu_custom_call.1} parent=1 // pred_check
      _
    $region35: #{tpu_custom_call.1} parent=1 // pred_check_branch
      %68 = sbr.rel (0) target = $region37
    $region36: #{tpu_custom_call.1} parent=1 // pred_region
      _
    $region37: #{tpu_custom_call.1} parent=1 // pred_fallthru
      _
    // Predicated region
    $region38: #{tpu_custom_call.1} parent=1 // pred_check
      _
    $region39: #{tpu_custom_call.1} parent=1 // pred_check_branch
      %70 = sbr.rel (0) target = $region41
    $region40: #{tpu_custom_call.1} parent=1 // pred_region
      _
    $region41: #{tpu_custom_call.1} parent=1 // pred_fallthru
      _
    // Predicated region
    $region42: #{tpu_custom_call.1} parent=1 // pred_check
      _
    $region43: #{tpu_custom_call.1} parent=1 // pred_check_branch
      %72 = sbr.rel (0) target = $region45
    $region44: #{tpu_custom_call.1} parent=1 // pred_region
      _
    $region45: #{tpu_custom_call.1} parent=1 // pred_fallthru
      _
    // Predicated region
    $region46: #{tpu_custom_call.1} parent=1 // pred_check
      _
    $region47: #{tpu_custom_call.1} parent=1 // pred_check_branch
      %74 = sbr.rel (0) target = $region49
    $region48: #{tpu_custom_call.1} parent=1 // pred_region
      _
    $region49: #{tpu_custom_call.1} parent=1 // pred_fallthru
      _
    // Predicated region
    $region50: #{tpu_custom_call.1} parent=1 // pred_check
      _
    $region51: #{tpu_custom_call.1} parent=1 // pred_check_branch
      %76 = sbr.rel (0) target = $region53
    $region52: #{tpu_custom_call.1} parent=1 // pred_region
      _
    $region53: #{tpu_custom_call.1} parent=1 // pred_fallthru
      _
    // Predicated region
    $region54: #{tpu_custom_call.1} parent=1 // pred_check
      _
    $region55: #{tpu_custom_call.1} parent=1 // pred_check_branch
      %78 = sbr.rel (0) target = $region57
    $region56: #{tpu_custom_call.1} parent=1 // pred_region
      _
    $region57: #{tpu_custom_call.1} parent=1 // pred_fallthru
      _
    // Predicated region
    $region58: #{tpu_custom_call.1} parent=1 // pred_check
      _
    $region59: #{tpu_custom_call.1} parent=1 // pred_check_branch
      %80 = sbr.rel (0) target = $region61
    $region60: #{tpu_custom_call.1} parent=1 // pred_region
      _
    $region61: #{tpu_custom_call.1} parent=1 // pred_fallthru
      _
    // Predicated region
    $region62: #{tpu_custom_call.1} parent=1 // pred_check
      _
    $region63: #{tpu_custom_call.1} parent=1 // pred_check_branch
      %82 = sbr.rel (0) target = $region65
    $region64: #{tpu_custom_call.1} parent=1 // pred_region
      _
    $region65: #{tpu_custom_call.1} parent=1 // pred_fallthru
      _
    // Predicated region
    $region66: #{tpu_custom_call.1} parent=1 // pred_check
      _
    $region67: #{tpu_custom_call.1} parent=1 // pred_check_branch
      %84 = sbr.rel (0) target = $region69
    $region68: #{tpu_custom_call.1} parent=1 // pred_region
      _
    $region69: #{tpu_custom_call.1} parent=1 // pred_fallthru
      _
    // Predicated region
    $region70: #{tpu_custom_call.1} parent=1 // pred_check
      _
    $region71: #{tpu_custom_call.1} parent=1 // pred_check_branch
      %86 = sbr.rel (0) target = $region73
    $region72: #{tpu_custom_call.1} parent=1 // pred_region
      _
    $region73: #{tpu_custom_call.1} parent=1 // pred_fallthru
      _
    // Predicated region
    $region74: #{tpu_custom_call.1} parent=1 // pred_check
      _
    $region75: #{tpu_custom_call.1} parent=1 // pred_check_branch
      %88 = sbr.rel (0) target = $region77
    $region76: #{tpu_custom_call.1} parent=1 // pred_region
      _
    $region77: #{tpu_custom_call.1} parent=1 // pred_fallthru
      _
    // Predicated region
    $region78: #{tpu_custom_call.1} parent=1 // pred_check
      _
    $region79: #{tpu_custom_call.1} parent=1 // pred_check_branch
      %90 = sbr.rel (0) target = $region81
    $region80: #{tpu_custom_call.1} parent=1 // pred_region
      _
    $region81: #{tpu_custom_call.1} parent=1 // pred_fallthru
      _
    // Predicated region
    $region82: #{tpu_custom_call.1} parent=1 // pred_check
      _
    $region83: #{tpu_custom_call.1} parent=1 // pred_check_branch
      %92 = sbr.rel (0) target = $region85
    $region84: #{tpu_custom_call.1} parent=1 // pred_region
      %93 = dma.done [#allocation3], 16
    $region85: #{tpu_custom_call.1} parent=1 // pred_fallthru
      _
    // Predicated region
    $region86: #{tpu_custom_call.1} parent=1 // pred_check
      _
    $region87: #{tpu_custom_call.1} parent=1 // pred_check_branch
      %95 = sbr.rel (0) target = $region89
    $region88: #{tpu_custom_call.1} parent=1 // pred_region
      %96 = dma.done [#allocation5], 16
    $region89: #{tpu_custom_call.1} parent=1 // pred_fallthru
      _
    // Predicated region
    $region90: #{tpu_custom_call.1} parent=1 // pred_check
      _
    $region91: #{tpu_custom_call.1} parent=1 // pred_check_branch
      %98 = sbr.rel (0) target = $region93
    $region92: #{tpu_custom_call.1} parent=1 // pred_region
      %99 = dma.done [#allocation5], 16
    $region93: #{tpu_custom_call.1} parent=1 // pred_fallthru
      _
    %100 = sfence
    %v101 = vld [vmem:[%s0] sm:$0xff]
    %v102 = vld [vmem:[%s0 + $0x8] sm:$0xff]
    %v103 = vld [vmem:[%s0 + $0x10] sm:$0xff]
    %v104 = vld [vmem:[%s0 + $0x18] sm:$0xff]
    %v105 = vld [vmem:[%s0 + $0x20] sm:$0xff]
    %v106 = vld [vmem:[%s0 + $0x28] sm:$0xff]
    %v107 = vld [vmem:[%s0 + $0x30] sm:$0xff]
    %v108 = vld [vmem:[%s0 + $0x38] sm:$0xff]
    %v109 = vld [vmem:[%s5] sm:$0xf]
    %v110 = vld [vmem:[%s7] sm:$0x1]
    %v112 = vlaneseq
    %v113 = vshrl.u32 %v112, 7
    %v114 = vsub.s32 0, %v113
    %v115 = vrot.slane %v110, %v114
    %vm117 = vcmask 31744
    %v119 = vsel %vm117, %v101, 0
    %v122 = vsel %vm117, %v102, 0
    %v125 = vsel %vm117, %v103, 0
    %v128 = vsel %vm117, %v104, 0
    %v131 = vsel %vm117, %v105, 0
    %v134 = vsel %vm117, %v106, 0
    %v137 = vsel %vm117, %v107, 0
    %v140 = vsel %vm117, %v108, 0
    %vm142 = vcmask 1043456
    %v144 = vsel %vm142, %v109, 0
    %146 = vmatprep.subr.mxu0 0.0
    %147 = vmatpush1.msra.mxu0 %v144
    %148 = vmatprep.subr.mxu0 0.0
    %149 = vmatpush1.msra.mxu0 0.0
    %150 = vmatprep.subr.mxu0 0.0
    %151 = vmatpush1.msra.mxu0 0.0
    %152 = vmatprep.subr.mxu0 0.0
    %153 = vmatpush1.msra.mxu0 0.0
    %154 = vmatprep.subr.mxu0 0.0
    %155 = vmatpush1.msra.mxu0 0.0
    %156 = vmatprep.subr.mxu0 0.0
    %157 = vmatpush1.msra.mxu0 0.0
    %158 = vmatprep.subr.mxu0 0.0
    %159 = vmatpush1.msra.mxu0 0.0
    %160 = vmatprep.subr.mxu0 0.0
    %161 = vmatpush1.msra.mxu0 0.0
    %162 = vmatprep.subr.mxu0 0.0
    %163 = vmatpush1.msra.mxu0 0.0
    %164 = vmatprep.subr.mxu0 0.0
    %165 = vmatpush1.msra.mxu0 0.0
    %166 = vmatprep.subr.mxu0 0.0
    %167 = vmatpush1.msra.mxu0 0.0
    %168 = vmatprep.subr.mxu0 0.0
    %169 = vmatpush1.msra.mxu0 0.0
    %170 = vmatprep.subr.mxu0 0.0
    %171 = vmatpush1.msra.mxu0 0.0
    %172 = vmatprep.subr.mxu0 0.0
    %173 = vmatpush1.msra.mxu0 0.0
    %174 = vmatprep.subr.mxu0 0.0
    %175 = vmatpush1.msra.mxu0 0.0
    %176 = vmatprep.subr.mxu0 0.0
    %177 = vmatpush1.msra.mxu0 0.0
    %178 = vmatprep.subr.mxu0 0.0
    %179 = vmatpush1.msra.mxu0 0.0
    %180 = vmatprep.subr.mxu0 0.0
    %181 = vmatpush1.msra.mxu0 0.0
    %182 = vmatprep.subr.mxu0 0.0
    %183 = vmatpush1.msra.mxu0 0.0
    %184 = vmatprep.subr.mxu0 0.0
    %185 = vmatpush1.msra.mxu0 0.0
    %186 = vmatprep.subr.mxu0 0.0
    %187 = vmatpush1.msra.mxu0 0.0
    %188 = vmatprep.subr.mxu0 0.0
    %189 = vmatpush1.msra.mxu0 0.0
    %190 = vmatprep.subr.mxu0 0.0
    %191 = vmatpush1.msra.mxu0 0.0
    %192 = vmatprep.subr.mxu0 0.0
    %193 = vmatpush1.msra.mxu0 0.0
    %194 = vmatprep.subr.mxu0 0.0
    %195 = vmatpush1.msra.mxu0 0.0
    %196 = vmatprep.subr.mxu0 0.0
    %197 = vmatpush1.msra.mxu0 0.0
    %198 = vmatprep.subr.mxu0 0.0
    %199 = vmatpush1.msra.mxu0 0.0
    %200 = vmatprep.subr.mxu0 0.0
    %201 = vmatpush1.msra.mxu0 0.0
    %202 = vmatprep.subr.mxu0 0.0
    %203 = vmatpush1.msra.mxu0 0.0
    %204 = vmatprep.subr.mxu0 0.0
    %205 = vmatpush1.msra.mxu0 0.0
    %206 = vmatprep.subr.mxu0 0.0
    %207 = vmatpush1.msra.mxu0 0.0
    %208 = vmatprep.subr.mxu0 0.0
    %209 = vmatpush1.msra.mxu0 0.0
    %210 = vmatprep.mubr.f32.mxu0 0.0
    %211 = vmatmul.mubr.f32.gmra.mrb[0].mxu0 %v119
    %v212 = vpop.f32.mrb[0].mxu0
    %v213 = vadd.f32 %v115, %v212
    %v214 = vpop.f32.mrb[0].mxu0
    %215 = vmatprep.mubr.f32.mxu0 0.0
    %216 = vmatmul.mubr.f32.gmra.mrb[0].mxu0 %v122
    %v217 = vpop.f32.mrb[0].mxu0
    %v218 = vadd.f32 %v115, %v217
    %v219 = vpop.f32.mrb[0].mxu0
    %220 = vmatprep.mubr.f32.mxu0 0.0
    %221 = vmatmul.mubr.f32.gmra.mrb[0].mxu0 %v125
    %v222 = vpop.f32.mrb[0].mxu0
    %v223 = vadd.f32 %v115, %v222
    %v224 = vpop.f32.mrb[0].mxu0
    %225 = vmatprep.mubr.f32.mxu0 0.0
    %226 = vmatmul.mubr.f32.gmra.mrb[0].mxu0 %v128
    %v227 = vpop.f32.mrb[0].mxu0
    %v228 = vadd.f32 %v115, %v227
    %v229 = vpop.f32.mrb[0].mxu0
    %230 = vmatprep.mubr.f32.mxu0 0.0
    %231 = vmatmul.mubr.f32.gmra.mrb[0].mxu0 %v131
    %v232 = vpop.f32.mrb[0].mxu0
    %v233 = vadd.f32 %v115, %v232
    %v234 = vpop.f32.mrb[0].mxu0
    %235 = vmatprep.mubr.f32.mxu0 0.0
    %236 = vmatmul.mubr.f32.gmra.mrb[0].mxu0 %v134
    %v237 = vpop.f32.mrb[0].mxu0
    %v238 = vadd.f32 %v115, %v237
    %v239 = vpop.f32.mrb[0].mxu0
    %240 = vmatprep.mubr.f32.mxu0 0.0
    %241 = vmatmul.mubr.f32.gmra.mrb[0].mxu0 %v137
    %v242 = vpop.f32.mrb[0].mxu0
    %v243 = vadd.f32 %v115, %v242
    %v244 = vpop.f32.mrb[0].mxu0
    %245 = vmatprep.mubr.f32.mxu0 0.0
    %246 = vmatmul.mubr.f32.gmra.mrb[0].mxu0 %v140
    %v247 = vpop.f32.mrb[0].mxu0
    %v248 = vadd.f32 %v115, %v247
    %v249 = vpop.f32.mrb[0].mxu0
    %250 = vdwg.mxu0
    %v251 = vld [vmem:[%s6] sm:$0xff]
    %v252 = vld [vmem:[%s6 + $0x8] sm:$0xff]
    %v253 = vld [vmem:[%s6 + $0x10] sm:$0xff]
    %v254 = vld [vmem:[%s6 + $0x18] sm:$0xff]
    %vm255 = vcmask 261120
    %v257 = vsel %vm255, 0.0, 0
    %259 = vmatprep.subr.mxu0 0.0
    %260 = vmatpush1.msra.mxu0 %v251
    %261 = vmatprep.subr.mxu0 0.0
    %262 = vmatpush1.msra.mxu0 %v252
    %263 = vmatprep.subr.mxu0 0.0
    %264 = vmatpush1.msra.mxu0 %v253
    %265 = vmatprep.subr.mxu0 0.0
    %266 = vmatpush1.msra.mxu0 %v254
    %267 = vmatprep.subr.mxu0 0.0
    %268 = vmatpush1.msra.mxu0 0.0
    %269 = vmatprep.subr.mxu0 0.0
    %270 = vmatpush1.msra.mxu0 0.0
    %271 = vmatprep.subr.mxu0 0.0
    %272 = vmatpush1.msra.mxu0 0.0
    %273 = vmatprep.subr.mxu0 0.0
    %274 = vmatpush1.msra.mxu0 0.0
    %275 = vmatprep.subr.mxu0 0.0
    %276 = vmatpush1.msra.mxu0 0.0
    %277 = vmatprep.subr.mxu0 0.0
    %278 = vmatpush1.msra.mxu0 0.0
    %279 = vmatprep.subr.mxu0 0.0
    %280 = vmatpush1.msra.mxu0 0.0
    %281 = vmatprep.subr.mxu0 0.0
    %282 = vmatpush1.msra.mxu0 0.0
    %283 = vmatprep.subr.mxu0 0.0
    %284 = vmatpush1.msra.mxu0 0.0
    %285 = vmatprep.subr.mxu0 0.0
    %286 = vmatpush1.msra.mxu0 0.0
    %287 = vmatprep.subr.mxu0 0.0
    %288 = vmatpush1.msra.mxu0 0.0
    %289 = vmatprep.subr.mxu0 0.0
    %290 = vmatpush1.msra.mxu0 0.0
    %291 = vmatprep.subr.mxu0 0.0
    %292 = vmatpush1.msra.mxu0 0.0
    %293 = vmatprep.subr.mxu0 0.0
    %294 = vmatpush1.msra.mxu0 0.0
    %295 = vmatprep.subr.mxu0 0.0
    %296 = vmatpush1.msra.mxu0 0.0
    %297 = vmatprep.subr.mxu0 0.0
    %298 = vmatpush1.msra.mxu0 0.0
    %299 = vmatprep.subr.mxu0 0.0
    %300 = vmatpush1.msra.mxu0 0.0
    %301 = vmatprep.subr.mxu0 0.0
    %302 = vmatpush1.msra.mxu0 0.0
    %303 = vmatprep.subr.mxu0 0.0
    %304 = vmatpush1.msra.mxu0 0.0
    %305 = vmatprep.subr.mxu0 0.0
    %306 = vmatpush1.msra.mxu0 0.0
    %307 = vmatprep.subr.mxu0 0.0
    %308 = vmatpush1.msra.mxu0 0.0
    %309 = vmatprep.subr.mxu0 0.0
    %310 = vmatpush1.msra.mxu0 0.0
    %311 = vmatprep.subr.mxu0 0.0
    %312 = vmatpush1.msra.mxu0 0.0
    %313 = vmatprep.subr.mxu0 0.0
    %314 = vmatpush1.msra.mxu0 0.0
    %315 = vmatprep.subr.mxu0 0.0
    %316 = vmatpush1.msra.mxu0 0.0
    %317 = vmatprep.subr.mxu0 0.0
    %318 = vmatpush1.msra.mxu0 0.0
    %319 = vmatprep.subr.mxu0 0.0
    %320 = vmatpush1.msra.mxu0 0.0
    %321 = vmatprep.subr.mxu0 0.0
    %322 = vmatpush1.msra.mxu0 0.0
    %323 = vmatprep.mubr.f32.mxu0 0.0
    %324 = vmatmul.mubr.f32.gmra.mrb[0].mxu0 %v257
    %v325 = vpop.f32.mrb[0].mxu0
    %v326 = vadd.f32 0.0, %v325
    %v327 = vpop.f32.mrb[0].mxu0
    %328 = vdwg.mxu0
    %v329 = vadd.f32 %v248, %v326
    %v330 = vtanh.pop %v329
    %v332 = vsel %vm255, %v330, 0
    %334 = vmatprep.subr.mxu0 0.0
    %335 = vmatpush1.msra.mxu0 %v251
    %336 = vmatprep.subr.mxu0 0.0
    %337 = vmatpush1.msra.mxu0 %v252
    %338 = vmatprep.subr.mxu0 0.0
    %339 = vmatpush1.msra.mxu0 %v253
    %340 = vmatprep.subr.mxu0 0.0
    %341 = vmatpush1.msra.mxu0 %v254
    %342 = vmatprep.subr.mxu0 0.0
    %343 = vmatpush1.msra.mxu0 0.0
    %344 = vmatprep.subr.mxu0 0.0
    %345 = vmatpush1.msra.mxu0 0.0
    %346 = vmatprep.subr.mxu0 0.0
    %347 = vmatpush1.msra.mxu0 0.0
    %348 = vmatprep.subr.mxu0 0.0
    %349 = vmatpush1.msra.mxu0 0.0
    %350 = vmatprep.subr.mxu0 0.0
    %351 = vmatpush1.msra.mxu0 0.0
    %352 = vmatprep.subr.mxu0 0.0
    %353 = vmatpush1.msra.mxu0 0.0
    %354 = vmatprep.subr.mxu0 0.0
    %355 = vmatpush1.msra.mxu0 0.0
    %356 = vmatprep.subr.mxu0 0.0
    %357 = vmatpush1.msra.mxu0 0.0
    %358 = vmatprep.subr.mxu0 0.0
    %359 = vmatpush1.msra.mxu0 0.0
    %360 = vmatprep.subr.mxu0 0.0
    %361 = vmatpush1.msra.mxu0 0.0
    %362 = vmatprep.subr.mxu0 0.0
    %363 = vmatpush1.msra.mxu0 0.0
    %364 = vmatprep.subr.mxu0 0.0
    %365 = vmatpush1.msra.mxu0 0.0
    %366 = vmatprep.subr.mxu0 0.0
    %367 = vmatpush1.msra.mxu0 0.0
    %368 = vmatprep.subr.mxu0 0.0
    %369 = vmatpush1.msra.mxu0 0.0
    %370 = vmatprep.subr.mxu0 0.0
    %371 = vmatpush1.msra.mxu0 0.0
    %372 = vmatprep.subr.mxu0 0.0
    %373 = vmatpush1.msra.mxu0 0.0
    %374 = vmatprep.subr.mxu0 0.0
    %375 = vmatpush1.msra.mxu0 0.0
    %376 = vmatprep.subr.mxu0 0.0
    %377 = vmatpush1.msra.mxu0 0.0
    %378 = vmatprep.subr.mxu0 0.0
    %379 = vmatpush1.msra.mxu0 0.0
    %380 = vmatprep.subr.mxu0 0.0
    %381 = vmatpush1.msra.mxu0 0.0
    %382 = vmatprep.subr.mxu0 0.0
    %383 = vmatpush1.msra.mxu0 0.0
    %384 = vmatprep.subr.mxu0 0.0
    %385 = vmatpush1.msra.mxu0 0.0
    %386 = vmatprep.subr.mxu0 0.0
    %387 = vmatpush1.msra.mxu0 0.0
    %388 = vmatprep.subr.mxu0 0.0
    %389 = vmatpush1.msra.mxu0 0.0
    %390 = vmatprep.subr.mxu0 0.0
    %391 = vmatpush1.msra.mxu0 0.0
    %392 = vmatprep.subr.mxu0 0.0
    %393 = vmatpush1.msra.mxu0 0.0
    %394 = vmatprep.subr.mxu0 0.0
    %395 = vmatpush1.msra.mxu0 0.0
    %396 = vmatprep.subr.mxu0 0.0
    %397 = vmatpush1.msra.mxu0 0.0
    %398 = vmatprep.mubr.f32.mxu0 0.0
    %399 = vmatmul.mubr.f32.gmra.mrb[0].mxu0 %v332
    %v400 = vpop.f32.mrb[0].mxu0
    %v401 = vadd.f32 0.0, %v400
    %v402 = vpop.f32.mrb[0].mxu0
    %403 = vdwg.mxu0
    %v404 = vadd.f32 %v243, %v401
    %v405 = vtanh.pop %v404
    %v407 = vsel %vm255, %v405, 0
    %409 = vmatprep.subr.mxu0 0.0
    %410 = vmatpush1.msra.mxu0 %v251
    %411 = vmatprep.subr.mxu0 0.0
    %412 = vmatpush1.msra.mxu0 %v252
    %413 = vmatprep.subr.mxu0 0.0
    %414 = vmatpush1.msra.mxu0 %v253
    %415 = vmatprep.subr.mxu0 0.0
    %416 = vmatpush1.msra.mxu0 %v254
    %417 = vmatprep.subr.mxu0 0.0
    %418 = vmatpush1.msra.mxu0 0.0
    %419 = vmatprep.subr.mxu0 0.0
    %420 = vmatpush1.msra.mxu0 0.0
    %421 = vmatprep.subr.mxu0 0.0
    %422 = vmatpush1.msra.mxu0 0.0
    %423 = vmatprep.subr.mxu0 0.0
    %424 = vmatpush1.msra.mxu0 0.0
    %425 = vmatprep.subr.mxu0 0.0
    %426 = vmatpush1.msra.mxu0 0.0
    %427 = vmatprep.subr.mxu0 0.0
    %428 = vmatpush1.msra.mxu0 0.0
    %429 = vmatprep.subr.mxu0 0.0
    %430 = vmatpush1.msra.mxu0 0.0
    %431 = vmatprep.subr.mxu0 0.0
    %432 = vmatpush1.msra.mxu0 0.0
    %433 = vmatprep.subr.mxu0 0.0
    %434 = vmatpush1.msra.mxu0 0.0
    %435 = vmatprep.subr.mxu0 0.0
    %436 = vmatpush1.msra.mxu0 0.0
    %437 = vmatprep.subr.mxu0 0.0
    %438 = vmatpush1.msra.mxu0 0.0
    %439 = vmatprep.subr.mxu0 0.0
    %440 = vmatpush1.msra.mxu0 0.0
    %441 = vmatprep.subr.mxu0 0.0
    %442 = vmatpush1.msra.mxu0 0.0
    %443 = vmatprep.subr.mxu0 0.0
    %444 = vmatpush1.msra.mxu0 0.0
    %445 = vmatprep.subr.mxu0 0.0
    %446 = vmatpush1.msra.mxu0 0.0
    %447 = vmatprep.subr.mxu0 0.0
    %448 = vmatpush1.msra.mxu0 0.0
    %449 = vmatprep.subr.mxu0 0.0
    %450 = vmatpush1.msra.mxu0 0.0
    %451 = vmatprep.subr.mxu0 0.0
    %452 = vmatpush1.msra.mxu0 0.0
    %453 = vmatprep.subr.mxu0 0.0
    %454 = vmatpush1.msra.mxu0 0.0
    %455 = vmatprep.subr.mxu0 0.0
    %456 = vmatpush1.msra.mxu0 0.0
    %457 = vmatprep.subr.mxu0 0.0
    %458 = vmatpush1.msra.mxu0 0.0
    %459 = vmatprep.subr.mxu0 0.0
    %460 = vmatpush1.msra.mxu0 0.0
    %461 = vmatprep.subr.mxu0 0.0
    %462 = vmatpush1.msra.mxu0 0.0
    %463 = vmatprep.subr.mxu0 0.0
    %464 = vmatpush1.msra.mxu0 0.0
    %465 = vmatprep.subr.mxu0 0.0
    %466 = vmatpush1.msra.mxu0 0.0
    %467 = vmatprep.subr.mxu0 0.0
    %468 = vmatpush1.msra.mxu0 0.0
    %469 = vmatprep.subr.mxu0 0.0
    %470 = vmatpush1.msra.mxu0 0.0
    %471 = vmatprep.subr.mxu0 0.0
    %472 = vmatpush1.msra.mxu0 0.0
    %473 = vmatprep.mubr.f32.mxu0 0.0
    %474 = vmatmul.mubr.f32.gmra.mrb[0].mxu0 %v407
    %v475 = vpop.f32.mrb[0].mxu0
    %v476 = vadd.f32 0.0, %v475
    %v477 = vpop.f32.mrb[0].mxu0
    %478 = vdwg.mxu0
    %v479 = vadd.f32 %v238, %v476
    %v480 = vtanh.pop %v479
    %v482 = vsel %vm255, %v480, 0
    %484 = vmatprep.subr.mxu0 0.0
    %485 = vmatpush1.msra.mxu0 %v251
    %486 = vmatprep.subr.mxu0 0.0
    %487 = vmatpush1.msra.mxu0 %v252
    %488 = vmatprep.subr.mxu0 0.0
    %489 = vmatpush1.msra.mxu0 %v253
    %490 = vmatprep.subr.mxu0 0.0
    %491 = vmatpush1.msra.mxu0 %v254
    %492 = vmatprep.subr.mxu0 0.0
    %493 = vmatpush1.msra.mxu0 0.0
    %494 = vmatprep.subr.mxu0 0.0
    %495 = vmatpush1.msra.mxu0 0.0
    %496 = vmatprep.subr.mxu0 0.0
    %497 = vmatpush1.msra.mxu0 0.0
    %498 = vmatprep.subr.mxu0 0.0
    %499 = vmatpush1.msra.mxu0 0.0
    %500 = vmatprep.subr.mxu0 0.0
    %501 = vmatpush1.msra.mxu0 0.0
    %502 = vmatprep.subr.mxu0 0.0
    %503 = vmatpush1.msra.mxu0 0.0
    %504 = vmatprep.subr.mxu0 0.0
    %505 = vmatpush1.msra.mxu0 0.0
    %506 = vmatprep.subr.mxu0 0.0
    %507 = vmatpush1.msra.mxu0 0.0
    %508 = vmatprep.subr.mxu0 0.0
    %509 = vmatpush1.msra.mxu0 0.0
    %510 = vmatprep.subr.mxu0 0.0
    %511 = vmatpush1.msra.mxu0 0.0
    %512 = vmatprep.subr.mxu0 0.0
    %513 = vmatpush1.msra.mxu0 0.0
    %514 = vmatprep.subr.mxu0 0.0
    %515 = vmatpush1.msra.mxu0 0.0
    %516 = vmatprep.subr.mxu0 0.0
    %517 = vmatpush1.msra.mxu0 0.0
    %518 = vmatprep.subr.mxu0 0.0
    %519 = vmatpush1.msra.mxu0 0.0
    %520 = vmatprep.subr.mxu0 0.0
    %521 = vmatpush1.msra.mxu0 0.0
    %522 = vmatprep.subr.mxu0 0.0
    %523 = vmatpush1.msra.mxu0 0.0
    %524 = vmatprep.subr.mxu0 0.0
    %525 = vmatpush1.msra.mxu0 0.0
    %526 = vmatprep.subr.mxu0 0.0
    %527 = vmatpush1.msra.mxu0 0.0
    %528 = vmatprep.subr.mxu0 0.0
    %529 = vmatpush1.msra.mxu0 0.0
    %530 = vmatprep.subr.mxu0 0.0
    %531 = vmatpush1.msra.mxu0 0.0
    %532 = vmatprep.subr.mxu0 0.0
    %533 = vmatpush1.msra.mxu0 0.0
    %534 = vmatprep.subr.mxu0 0.0
    %535 = vmatpush1.msra.mxu0 0.0
    %536 = vmatprep.subr.mxu0 0.0
    %537 = vmatpush1.msra.mxu0 0.0
    %538 = vmatprep.subr.mxu0 0.0
    %539 = vmatpush1.msra.mxu0 0.0
    %540 = vmatprep.subr.mxu0 0.0
    %541 = vmatpush1.msra.mxu0 0.0
    %542 = vmatprep.subr.mxu0 0.0
    %543 = vmatpush1.msra.mxu0 0.0
    %544 = vmatprep.subr.mxu0 0.0
    %545 = vmatpush1.msra.mxu0 0.0
    %546 = vmatprep.subr.mxu0 0.0
    %547 = vmatpush1.msra.mxu0 0.0
    %548 = vmatprep.mubr.f32.mxu0 0.0
    %549 = vmatmul.mubr.f32.gmra.mrb[0].mxu0 %v482
    %v550 = vpop.f32.mrb[0].mxu0
    %v551 = vadd.f32 0.0, %v550
    %v552 = vpop.f32.mrb[0].mxu0
    %553 = vdwg.mxu0
    %v554 = vadd.f32 %v233, %v551
    %v555 = vtanh.pop %v554
    %v557 = vsel %vm255, %v555, 0
    %559 = vmatprep.subr.mxu0 0.0
    %560 = vmatpush1.msra.mxu0 %v251
    %561 = vmatprep.subr.mxu0 0.0
    %562 = vmatpush1.msra.mxu0 %v252
    %563 = vmatprep.subr.mxu0 0.0
    %564 = vmatpush1.msra.mxu0 %v253
    %565 = vmatprep.subr.mxu0 0.0
    %566 = vmatpush1.msra.mxu0 %v254
    %567 = vmatprep.subr.mxu0 0.0
    %568 = vmatpush1.msra.mxu0 0.0
    %569 = vmatprep.subr.mxu0 0.0
    %570 = vmatpush1.msra.mxu0 0.0
    %571 = vmatprep.subr.mxu0 0.0
    %572 = vmatpush1.msra.mxu0 0.0
    %573 = vmatprep.subr.mxu0 0.0
    %574 = vmatpush1.msra.mxu0 0.0
    %575 = vmatprep.subr.mxu0 0.0
    %576 = vmatpush1.msra.mxu0 0.0
    %577 = vmatprep.subr.mxu0 0.0
    %578 = vmatpush1.msra.mxu0 0.0
    %579 = vmatprep.subr.mxu0 0.0
    %580 = vmatpush1.msra.mxu0 0.0
    %581 = vmatprep.subr.mxu0 0.0
    %582 = vmatpush1.msra.mxu0 0.0
    %583 = vmatprep.subr.mxu0 0.0
    %584 = vmatpush1.msra.mxu0 0.0
    %585 = vmatprep.subr.mxu0 0.0
    %586 = vmatpush1.msra.mxu0 0.0
    %587 = vmatprep.subr.mxu0 0.0
    %588 = vmatpush1.msra.mxu0 0.0
    %589 = vmatprep.subr.mxu0 0.0
    %590 = vmatpush1.msra.mxu0 0.0
    %591 = vmatprep.subr.mxu0 0.0
    %592 = vmatpush1.msra.mxu0 0.0
    %593 = vmatprep.subr.mxu0 0.0
    %594 = vmatpush1.msra.mxu0 0.0
    %595 = vmatprep.subr.mxu0 0.0
    %596 = vmatpush1.msra.mxu0 0.0
    %597 = vmatprep.subr.mxu0 0.0
    %598 = vmatpush1.msra.mxu0 0.0
    %599 = vmatprep.subr.mxu0 0.0
    %600 = vmatpush1.msra.mxu0 0.0
    %601 = vmatprep.subr.mxu0 0.0
    %602 = vmatpush1.msra.mxu0 0.0
    %603 = vmatprep.subr.mxu0 0.0
    %604 = vmatpush1.msra.mxu0 0.0
    %605 = vmatprep.subr.mxu0 0.0
    %606 = vmatpush1.msra.mxu0 0.0
    %607 = vmatprep.subr.mxu0 0.0
    %608 = vmatpush1.msra.mxu0 0.0
    %609 = vmatprep.subr.mxu0 0.0
    %610 = vmatpush1.msra.mxu0 0.0
    %611 = vmatprep.subr.mxu0 0.0
    %612 = vmatpush1.msra.mxu0 0.0
    %613 = vmatprep.subr.mxu0 0.0
    %614 = vmatpush1.msra.mxu0 0.0
    %615 = vmatprep.subr.mxu0 0.0
    %616 = vmatpush1.msra.mxu0 0.0
    %617 = vmatprep.subr.mxu0 0.0
    %618 = vmatpush1.msra.mxu0 0.0
    %619 = vmatprep.subr.mxu0 0.0
    %620 = vmatpush1.msra.mxu0 0.0
    %621 = vmatprep.subr.mxu0 0.0
    %622 = vmatpush1.msra.mxu0 0.0
    %623 = vmatprep.mubr.f32.mxu0 0.0
    %624 = vmatmul.mubr.f32.gmra.mrb[0].mxu0 %v557
    %v625 = vpop.f32.mrb[0].mxu0
    %v626 = vadd.f32 0.0, %v625
    %v627 = vpop.f32.mrb[0].mxu0
    %628 = vdwg.mxu0
    %v629 = vadd.f32 %v228, %v626
    %v630 = vtanh.pop %v629
    %v632 = vsel %vm255, %v630, 0
    %634 = vmatprep.subr.mxu0 0.0
    %635 = vmatpush1.msra.mxu0 %v251
    %636 = vmatprep.subr.mxu0 0.0
    %637 = vmatpush1.msra.mxu0 %v252
    %638 = vmatprep.subr.mxu0 0.0
    %639 = vmatpush1.msra.mxu0 %v253
    %640 = vmatprep.subr.mxu0 0.0
    %641 = vmatpush1.msra.mxu0 %v254
    %642 = vmatprep.subr.mxu0 0.0
    %643 = vmatpush1.msra.mxu0 0.0
    %644 = vmatprep.subr.mxu0 0.0
    %645 = vmatpush1.msra.mxu0 0.0
    %646 = vmatprep.subr.mxu0 0.0
    %647 = vmatpush1.msra.mxu0 0.0
    %648 = vmatprep.subr.mxu0 0.0
    %649 = vmatpush1.msra.mxu0 0.0
    %650 = vmatprep.subr.mxu0 0.0
    %651 = vmatpush1.msra.mxu0 0.0
    %652 = vmatprep.subr.mxu0 0.0
    %653 = vmatpush1.msra.mxu0 0.0
    %654 = vmatprep.subr.mxu0 0.0
    %655 = vmatpush1.msra.mxu0 0.0
    %656 = vmatprep.subr.mxu0 0.0
    %657 = vmatpush1.msra.mxu0 0.0
    %658 = vmatprep.subr.mxu0 0.0
    %659 = vmatpush1.msra.mxu0 0.0
    %660 = vmatprep.subr.mxu0 0.0
    %661 = vmatpush1.msra.mxu0 0.0
    %662 = vmatprep.subr.mxu0 0.0
    %663 = vmatpush1.msra.mxu0 0.0
    %664 = vmatprep.subr.mxu0 0.0
    %665 = vmatpush1.msra.mxu0 0.0
    %666 = vmatprep.subr.mxu0 0.0
    %667 = vmatpush1.msra.mxu0 0.0
    %668 = vmatprep.subr.mxu0 0.0
    %669 = vmatpush1.msra.mxu0 0.0
    %670 = vmatprep.subr.mxu0 0.0
    %671 = vmatpush1.msra.mxu0 0.0
    %672 = vmatprep.subr.mxu0 0.0
    %673 = vmatpush1.msra.mxu0 0.0
    %674 = vmatprep.subr.mxu0 0.0
    %675 = vmatpush1.msra.mxu0 0.0
    %676 = vmatprep.subr.mxu0 0.0
    %677 = vmatpush1.msra.mxu0 0.0
    %678 = vmatprep.subr.mxu0 0.0
    %679 = vmatpush1.msra.mxu0 0.0
    %680 = vmatprep.subr.mxu0 0.0
    %681 = vmatpush1.msra.mxu0 0.0
    %682 = vmatprep.subr.mxu0 0.0
    %683 = vmatpush1.msra.mxu0 0.0
    %684 = vmatprep.subr.mxu0 0.0
    %685 = vmatpush1.msra.mxu0 0.0
    %686 = vmatprep.subr.mxu0 0.0
    %687 = vmatpush1.msra.mxu0 0.0
    %688 = vmatprep.subr.mxu0 0.0
    %689 = vmatpush1.msra.mxu0 0.0
    %690 = vmatprep.subr.mxu0 0.0
    %691 = vmatpush1.msra.mxu0 0.0
    %692 = vmatprep.subr.mxu0 0.0
    %693 = vmatpush1.msra.mxu0 0.0
    %694 = vmatprep.subr.mxu0 0.0
    %695 = vmatpush1.msra.mxu0 0.0
    %696 = vmatprep.subr.mxu0 0.0
    %697 = vmatpush1.msra.mxu0 0.0
    %698 = vmatprep.mubr.f32.mxu0 0.0
    %699 = vmatmul.mubr.f32.gmra.mrb[0].mxu0 %v632
    %v700 = vpop.f32.mrb[0].mxu0
    %v701 = vadd.f32 0.0, %v700
    %v702 = vpop.f32.mrb[0].mxu0
    %703 = vdwg.mxu0
    %v704 = vadd.f32 %v223, %v701
    %v705 = vtanh.pop %v704
    %v707 = vsel %vm255, %v705, 0
    %709 = vmatprep.subr.mxu0 0.0
    %710 = vmatpush1.msra.mxu0 %v251
    %711 = vmatprep.subr.mxu0 0.0
    %712 = vmatpush1.msra.mxu0 %v252
    %713 = vmatprep.subr.mxu0 0.0
    %714 = vmatpush1.msra.mxu0 %v253
    %715 = vmatprep.subr.mxu0 0.0
    %716 = vmatpush1.msra.mxu0 %v254
    %717 = vmatprep.subr.mxu0 0.0
    %718 = vmatpush1.msra.mxu0 0.0
    %719 = vmatprep.subr.mxu0 0.0
    %720 = vmatpush1.msra.mxu0 0.0
    %721 = vmatprep.subr.mxu0 0.0
    %722 = vmatpush1.msra.mxu0 0.0
    %723 = vmatprep.subr.mxu0 0.0
    %724 = vmatpush1.msra.mxu0 0.0
    %725 = vmatprep.subr.mxu0 0.0
    %726 = vmatpush1.msra.mxu0 0.0
    %727 = vmatprep.subr.mxu0 0.0
    %728 = vmatpush1.msra.mxu0 0.0
    %729 = vmatprep.subr.mxu0 0.0
    %730 = vmatpush1.msra.mxu0 0.0
    %731 = vmatprep.subr.mxu0 0.0
    %732 = vmatpush1.msra.mxu0 0.0
    %733 = vmatprep.subr.mxu0 0.0
    %734 = vmatpush1.msra.mxu0 0.0
    %735 = vmatprep.subr.mxu0 0.0
    %736 = vmatpush1.msra.mxu0 0.0
    %737 = vmatprep.subr.mxu0 0.0
    %738 = vmatpush1.msra.mxu0 0.0
    %739 = vmatprep.subr.mxu0 0.0
    %740 = vmatpush1.msra.mxu0 0.0
    %741 = vmatprep.subr.mxu0 0.0
    %742 = vmatpush1.msra.mxu0 0.0
    %743 = vmatprep.subr.mxu0 0.0
    %744 = vmatpush1.msra.mxu0 0.0
    %745 = vmatprep.subr.mxu0 0.0
    %746 = vmatpush1.msra.mxu0 0.0
    %747 = vmatprep.subr.mxu0 0.0
    %748 = vmatpush1.msra.mxu0 0.0
    %749 = vmatprep.subr.mxu0 0.0
    %750 = vmatpush1.msra.mxu0 0.0
    %751 = vmatprep.subr.mxu0 0.0
    %752 = vmatpush1.msra.mxu0 0.0
    %753 = vmatprep.subr.mxu0 0.0
    %754 = vmatpush1.msra.mxu0 0.0
    %755 = vmatprep.subr.mxu0 0.0
    %756 = vmatpush1.msra.mxu0 0.0
    %757 = vmatprep.subr.mxu0 0.0
    %758 = vmatpush1.msra.mxu0 0.0
    %759 = vmatprep.subr.mxu0 0.0
    %760 = vmatpush1.msra.mxu0 0.0
    %761 = vmatprep.subr.mxu0 0.0
    %762 = vmatpush1.msra.mxu0 0.0
    %763 = vmatprep.subr.mxu0 0.0
    %764 = vmatpush1.msra.mxu0 0.0
    %765 = vmatprep.subr.mxu0 0.0
    %766 = vmatpush1.msra.mxu0 0.0
    %767 = vmatprep.subr.mxu0 0.0
    %768 = vmatpush1.msra.mxu0 0.0
    %769 = vmatprep.subr.mxu0 0.0
    %770 = vmatpush1.msra.mxu0 0.0
    %771 = vmatprep.subr.mxu0 0.0
    %772 = vmatpush1.msra.mxu0 0.0
    %773 = vmatprep.mubr.f32.mxu0 0.0
    %774 = vmatmul.mubr.f32.gmra.mrb[0].mxu0 %v707
    %v775 = vpop.f32.mrb[0].mxu0
    %v776 = vadd.f32 0.0, %v775
    %v777 = vpop.f32.mrb[0].mxu0
    %778 = vdwg.mxu0
    %v779 = vadd.f32 %v218, %v776
    %v780 = vtanh.pop %v779
    %v782 = vsel %vm255, %v780, 0
    %784 = vmatprep.subr.mxu0 0.0
    %785 = vmatpush1.msra.mxu0 %v251
    %786 = vmatprep.subr.mxu0 0.0
    %787 = vmatpush1.msra.mxu0 %v252
    %788 = vmatprep.subr.mxu0 0.0
    %789 = vmatpush1.msra.mxu0 %v253
    %790 = vmatprep.subr.mxu0 0.0
    %791 = vmatpush1.msra.mxu0 %v254
    %792 = vmatprep.subr.mxu0 0.0
    %793 = vmatpush1.msra.mxu0 0.0
    %794 = vmatprep.subr.mxu0 0.0
    %795 = vmatpush1.msra.mxu0 0.0
    %796 = vmatprep.subr.mxu0 0.0
    %797 = vmatpush1.msra.mxu0 0.0
    %798 = vmatprep.subr.mxu0 0.0
    %799 = vmatpush1.msra.mxu0 0.0
    %800 = vmatprep.subr.mxu0 0.0
    %801 = vmatpush1.msra.mxu0 0.0
    %802 = vmatprep.subr.mxu0 0.0
    %803 = vmatpush1.msra.mxu0 0.0
    %804 = vmatprep.subr.mxu0 0.0
    %805 = vmatpush1.msra.mxu0 0.0
    %806 = vmatprep.subr.mxu0 0.0
    %807 = vmatpush1.msra.mxu0 0.0
    %808 = vmatprep.subr.mxu0 0.0
    %809 = vmatpush1.msra.mxu0 0.0
    %810 = vmatprep.subr.mxu0 0.0
    %811 = vmatpush1.msra.mxu0 0.0
    %812 = vmatprep.subr.mxu0 0.0
    %813 = vmatpush1.msra.mxu0 0.0
    %814 = vmatprep.subr.mxu0 0.0
    %815 = vmatpush1.msra.mxu0 0.0
    %816 = vmatprep.subr.mxu0 0.0
    %817 = vmatpush1.msra.mxu0 0.0
    %818 = vmatprep.subr.mxu0 0.0
    %819 = vmatpush1.msra.mxu0 0.0
    %820 = vmatprep.subr.mxu0 0.0
    %821 = vmatpush1.msra.mxu0 0.0
    %822 = vmatprep.subr.mxu0 0.0
    %823 = vmatpush1.msra.mxu0 0.0
    %824 = vmatprep.subr.mxu0 0.0
    %825 = vmatpush1.msra.mxu0 0.0
    %826 = vmatprep.subr.mxu0 0.0
    %827 = vmatpush1.msra.mxu0 0.0
    %828 = vmatprep.subr.mxu0 0.0
    %829 = vmatpush1.msra.mxu0 0.0
    %830 = vmatprep.subr.mxu0 0.0
    %831 = vmatpush1.msra.mxu0 0.0
    %832 = vmatprep.subr.mxu0 0.0
    %833 = vmatpush1.msra.mxu0 0.0
    %834 = vmatprep.subr.mxu0 0.0
    %835 = vmatpush1.msra.mxu0 0.0
    %836 = vmatprep.subr.mxu0 0.0
    %837 = vmatpush1.msra.mxu0 0.0
    %838 = vmatprep.subr.mxu0 0.0
    %839 = vmatpush1.msra.mxu0 0.0
    %840 = vmatprep.subr.mxu0 0.0
    %841 = vmatpush1.msra.mxu0 0.0
    %842 = vmatprep.subr.mxu0 0.0
    %843 = vmatpush1.msra.mxu0 0.0
    %844 = vmatprep.subr.mxu0 0.0
    %845 = vmatpush1.msra.mxu0 0.0
    %846 = vmatprep.subr.mxu0 0.0
    %847 = vmatpush1.msra.mxu0 0.0
    %848 = vmatprep.mubr.f32.mxu0 0.0
    %849 = vmatmul.mubr.f32.gmra.mrb[0].mxu0 %v782
    %v850 = vpop.f32.mrb[0].mxu0
    %v851 = vadd.f32 0.0, %v850
    %v852 = vpop.f32.mrb[0].mxu0
    %853 = vdwg.mxu0
    %v854 = vadd.f32 %v213, %v851
    %v855 = vtanh.pop %v854
    %v856 = vld [vmem:[%s8] sm:$0xff]
    %v857 = vld [vmem:[%s8 + $0x8] sm:$0xff]
    %v858 = vld [vmem:[%s8 + $0x10] sm:$0xff]
    %v859 = vld [vmem:[%s8 + $0x18] sm:$0xff]
    %v860 = vld [vmem:[%s9] sm:$0x1]
    %v862 = vlaneseq
    %v863 = vshrl.u32 %v862, 7
    %v864 = vsub.s32 0, %v863
    %v865 = vrot.slane %v860, %v864
    %v868 = vsel %vm255, %v855, 0
    %870 = vmatprep.subr.mxu0 0.0
    %871 = vmatpush1.msra.mxu0 %v856
    %872 = vmatprep.subr.mxu0 0.0
    %873 = vmatpush1.msra.mxu0 %v857
    %874 = vmatprep.subr.mxu0 0.0
    %875 = vmatpush1.msra.mxu0 %v858
    %876 = vmatprep.subr.mxu0 0.0
    %877 = vmatpush1.msra.mxu0 %v859
    %878 = vmatprep.subr.mxu0 0.0
    %879 = vmatpush1.msra.mxu0 0.0
    %880 = vmatprep.subr.mxu0 0.0
    %881 = vmatpush1.msra.mxu0 0.0
    %882 = vmatprep.subr.mxu0 0.0
    %883 = vmatpush1.msra.mxu0 0.0
    %884 = vmatprep.subr.mxu0 0.0
    %885 = vmatpush1.msra.mxu0 0.0
    %886 = vmatprep.subr.mxu0 0.0
    %887 = vmatpush1.msra.mxu0 0.0
    %888 = vmatprep.subr.mxu0 0.0
    %889 = vmatpush1.msra.mxu0 0.0
    %890 = vmatprep.subr.mxu0 0.0
    %891 = vmatpush1.msra.mxu0 0.0
    %892 = vmatprep.subr.mxu0 0.0
    %893 = vmatpush1.msra.mxu0 0.0
    %894 = vmatprep.subr.mxu0 0.0
    %895 = vmatpush1.msra.mxu0 0.0
    %896 = vmatprep.subr.mxu0 0.0
    %897 = vmatpush1.msra.mxu0 0.0
    %898 = vmatprep.subr.mxu0 0.0
    %899 = vmatpush1.msra.mxu0 0.0
    %900 = vmatprep.subr.mxu0 0.0
    %901 = vmatpush1.msra.mxu0 0.0
    %902 = vmatprep.subr.mxu0 0.0
    %903 = vmatpush1.msra.mxu0 0.0
    %904 = vmatprep.subr.mxu0 0.0
    %905 = vmatpush1.msra.mxu0 0.0
    %906 = vmatprep.subr.mxu0 0.0
    %907 = vmatpush1.msra.mxu0 0.0
    %908 = vmatprep.subr.mxu0 0.0
    %909 = vmatpush1.msra.mxu0 0.0
    %910 = vmatprep.subr.mxu0 0.0
    %911 = vmatpush1.msra.mxu0 0.0
    %912 = vmatprep.subr.mxu0 0.0
    %913 = vmatpush1.msra.mxu0 0.0
    %914 = vmatprep.subr.mxu0 0.0
    %915 = vmatpush1.msra.mxu0 0.0
    %916 = vmatprep.subr.mxu0 0.0
    %917 = vmatpush1.msra.mxu0 0.0
    %918 = vmatprep.subr.mxu0 0.0
    %919 = vmatpush1.msra.mxu0 0.0
    %920 = vmatprep.subr.mxu0 0.0
    %921 = vmatpush1.msra.mxu0 0.0
    %922 = vmatprep.subr.mxu0 0.0
    %923 = vmatpush1.msra.mxu0 0.0
    %924 = vmatprep.subr.mxu0 0.0
    %925 = vmatpush1.msra.mxu0 0.0
    %926 = vmatprep.subr.mxu0 0.0
    %927 = vmatpush1.msra.mxu0 0.0
    %928 = vmatprep.subr.mxu0 0.0
    %929 = vmatpush1.msra.mxu0 0.0
    %930 = vmatprep.subr.mxu0 0.0
    %931 = vmatpush1.msra.mxu0 0.0
    %932 = vmatprep.subr.mxu0 0.0
    %933 = vmatpush1.msra.mxu0 0.0
    %934 = vmatprep.mubr.f32.mxu0 0.0
    %935 = vmatmul.mubr.f32.gmra.mrb[0].mxu0 %v868
    %v936 = vpop.f32.mrb[0].mxu0
    %v937 = vadd.f32 %v865, %v936
    %v938 = vpop.f32.mrb[0].mxu0
    %939 = vdwg.mxu0
    %v940 = vld [vmem:[%s1] sm:$0xff]
    %v941 = vmul.f32 %v937, 0.5
    %v942 = vmul.f32 %v941, 1.442695
    %v943 = vpow.pop %v942
    %945 = vrot.lane.b32.xlu0 %v943, 124
    %v946 = vpop.permute.xlu0 %945
    %v948 = vmul.f32 %v940, %v946
    %v949 = vadd.f32 %v948, %v937
    %v950 = vld [vmem:[%s10] sm:$0xf]
    %v951 = vld [vmem:[%s12] sm:$0xff]
    %v952 = vld [vmem:[%s12 + $0x8] sm:$0xff]
    %v953 = vld [vmem:[%s12 + $0x10] sm:$0xff]
    %v954 = vld [vmem:[%s12 + $0x18] sm:$0xff]
    %v955 = vld [vmem:[%s14] sm:$0xff]
    %v956 = vld [vmem:[%s14 + $0x8] sm:$0xff]
    %v957 = vld [vmem:[%s14 + $0x10] sm:$0xff]
    %v958 = vld [vmem:[%s14 + $0x18] sm:$0xff]
    %v959 = vld [vmem:[%s11] sm:$0x1]
    %v961 = vlaneseq
    %v962 = vshrl.u32 %v961, 7
    %v963 = vsub.s32 0, %v962
    %v964 = vrot.slane %v959, %v963
    %v966 = vld [vmem:[%s13] sm:$0x1]
    %v968 = vlaneseq
    %v969 = vshrl.u32 %v968, 7
    %v970 = vsub.s32 0, %v969
    %v971 = vrot.slane %v966, %v970
    %v973 = vld [vmem:[%s15] sm:$0x1]
    %v975 = vlaneseq
    %v976 = vshrl.u32 %v975, 7
    %v977 = vsub.s32 0, %v976
    %v978 = vrot.slane %v973, %v977
    %s980 = sld [smem:[#allocation2]]
    %s981 = sld [smem:[#allocation4]]
    %s982 = sld [smem:[#allocation6]]
    %984 = vset.pattern.permute.xlu0 0
    %985 = vperm.xlu0 %984, %v949
    %v986 = vpop.permute.xlu0 %985
    %v988 = vlaneseq
    %v989 = vshrl.u32 %v988, 7
    %v990 = vsub.s32 0, %v989
    %v991 = vrot.slane %v950, %v990
    %v992 = vmul.f32 %v986, %v991
    %v993 = vadd.f32 %v964, %v992
    %994 = vset.pattern.permute.xlu0 1
    %995 = vperm.xlu0 %994, %v949
    %v996 = vpop.permute.xlu0 %995
    %v998 = vlaneseq
    %v999 = vshrl.u32 %v998, 7
    %v1000 = vsub.s32 1, %v999
    %v1001 = vrot.slane %v950, %v1000
    %v1002 = vmul.f32 %v996, %v1001
    %v1003 = vadd.f32 %v993, %v1002
    %1004 = vset.pattern.permute.xlu0 2
    %1005 = vperm.xlu0 %1004, %v949
    %v1006 = vpop.permute.xlu0 %1005
    %v1008 = vlaneseq
    %v1009 = vshrl.u32 %v1008, 7
    %v1010 = vsub.s32 2, %v1009
    %v1011 = vrot.slane %v950, %v1010
    %v1012 = vmul.f32 %v1006, %v1011
    %v1013 = vadd.f32 %v1003, %v1012
    %1014 = vset.pattern.permute.xlu0 3
    %1015 = vperm.xlu0 %1014, %v949
    %v1016 = vpop.permute.xlu0 %1015
    %v1018 = vlaneseq
    %v1019 = vshrl.u32 %v1018, 7
    %v1020 = vsub.s32 3, %v1019
    %v1021 = vrot.slane %v950, %v1020
    %v1022 = vmul.f32 %v1016, %v1021
    %v1023 = vadd.f32 %v1013, %v1022
    %vm1024 = vcmp.gt.f32.partialorder %v1023, 0.0
    %v1025 = vmin.f32 %v1023, 0.0
    %v1026 = vmul.f32 %v1025, 1.442695
    %v1027 = vpow.pop %v1026
    %v1028 = vsub.f32 %v1027, 1.0
    %v1029 = vsel %vm1024, %v1023, %v1028
    %v1031 = vsel %vm255, %v1029, 0
    %1033 = vmatprep.subr.mxu0 0.0
    %1034 = vmatpush1.msra.mxu0 %v951
    %1035 = vmatprep.subr.mxu0 0.0
    %1036 = vmatpush1.msra.mxu0 %v952
    %1037 = vmatprep.subr.mxu0 0.0
    %1038 = vmatpush1.msra.mxu0 %v953
    %1039 = vmatprep.subr.mxu0 0.0
    %1040 = vmatpush1.msra.mxu0 %v954
    %1041 = vmatprep.subr.mxu0 0.0
    %1042 = vmatpush1.msra.mxu0 0.0
    %1043 = vmatprep.subr.mxu0 0.0
    %1044 = vmatpush1.msra.mxu0 0.0
    %1045 = vmatprep.subr.mxu0 0.0
    %1046 = vmatpush1.msra.mxu0 0.0
    %1047 = vmatprep.subr.mxu0 0.0
    %1048 = vmatpush1.msra.mxu0 0.0
    %1049 = vmatprep.subr.mxu0 0.0
    %1050 = vmatpush1.msra.mxu0 0.0
    %1051 = vmatprep.subr.mxu0 0.0
    %1052 = vmatpush1.msra.mxu0 0.0
    %1053 = vmatprep.subr.mxu0 0.0
    %1054 = vmatpush1.msra.mxu0 0.0
    %1055 = vmatprep.subr.mxu0 0.0
    %1056 = vmatpush1.msra.mxu0 0.0
    %1057 = vmatprep.subr.mxu0 0.0
    %1058 = vmatpush1.msra.mxu0 0.0
    %1059 = vmatprep.subr.mxu0 0.0
    %1060 = vmatpush1.msra.mxu0 0.0
    %1061 = vmatprep.subr.mxu0 0.0
    %1062 = vmatpush1.msra.mxu0 0.0
    %1063 = vmatprep.subr.mxu0 0.0
    %1064 = vmatpush1.msra.mxu0 0.0
    %1065 = vmatprep.subr.mxu0 0.0
    %1066 = vmatpush1.msra.mxu0 0.0
    %1067 = vmatprep.subr.mxu0 0.0
    %1068 = vmatpush1.msra.mxu0 0.0
    %1069 = vmatprep.subr.mxu0 0.0
    %1070 = vmatpush1.msra.mxu0 0.0
    %1071 = vmatprep.subr.mxu0 0.0
    %1072 = vmatpush1.msra.mxu0 0.0
    %1073 = vmatprep.subr.mxu0 0.0
    %1074 = vmatpush1.msra.mxu0 0.0
    %1075 = vmatprep.subr.mxu0 0.0
    %1076 = vmatpush1.msra.mxu0 0.0
    %1077 = vmatprep.subr.mxu0 0.0
    %1078 = vmatpush1.msra.mxu0 0.0
    %1079 = vmatprep.subr.mxu0 0.0
    %1080 = vmatpush1.msra.mxu0 0.0
    %1081 = vmatprep.subr.mxu0 0.0
    %1082 = vmatpush1.msra.mxu0 0.0
    %1083 = vmatprep.subr.mxu0 0.0
    %1084 = vmatpush1.msra.mxu0 0.0
    %1085 = vmatprep.subr.mxu0 0.0
    %1086 = vmatpush1.msra.mxu0 0.0
    %1087 = vmatprep.subr.mxu0 0.0
    %1088 = vmatpush1.msra.mxu0 0.0
    %1089 = vmatprep.subr.mxu0 0.0
    %1090 = vmatpush1.msra.mxu0 0.0
    %1091 = vmatprep.subr.mxu0 0.0
    %1092 = vmatpush1.msra.mxu0 0.0
    %1093 = vmatprep.subr.mxu0 0.0
    %1094 = vmatpush1.msra.mxu0 0.0
    %1095 = vmatprep.subr.mxu0 0.0
    %1096 = vmatpush1.msra.mxu0 0.0
    %1097 = vmatprep.mubr.f32.mxu0 0.0
    %1098 = vmatmul.mubr.f32.gmra.mrb[0].mxu0 %v1031
    %v1099 = vpop.f32.mrb[0].mxu0
    %v1100 = vadd.f32 %v971, %v1099
    %v1101 = vpop.f32.mrb[0].mxu0
    %1102 = vdwg.mxu0
    %vm1103 = vcmp.gt.f32.partialorder %v1100, 0.0
    %v1104 = vmin.f32 %v1100, 0.0
    %v1105 = vmul.f32 %v1104, 1.442695
    %v1106 = vpow.pop %v1105
    %v1107 = vsub.f32 %v1106, 1.0
    %v1108 = vsel %vm1103, %v1100, %v1107
    %v1110 = vsel %vm255, %v1108, 0
    %1112 = vmatprep.subr.mxu0 0.0
    %1113 = vmatpush1.msra.mxu0 %v955
    %1114 = vmatprep.subr.mxu0 0.0
    %1115 = vmatpush1.msra.mxu0 %v956
    %1116 = vmatprep.subr.mxu0 0.0
    %1117 = vmatpush1.msra.mxu0 %v957
    %1118 = vmatprep.subr.mxu0 0.0
    %1119 = vmatpush1.msra.mxu0 %v958
    %1120 = vmatprep.subr.mxu0 0.0
    %1121 = vmatpush1.msra.mxu0 0.0
    %1122 = vmatprep.subr.mxu0 0.0
    %1123 = vmatpush1.msra.mxu0 0.0
    %1124 = vmatprep.subr.mxu0 0.0
    %1125 = vmatpush1.msra.mxu0 0.0
    %1126 = vmatprep.subr.mxu0 0.0
    %1127 = vmatpush1.msra.mxu0 0.0
    %1128 = vmatprep.subr.mxu0 0.0
    %1129 = vmatpush1.msra.mxu0 0.0
    %1130 = vmatprep.subr.mxu0 0.0
    %1131 = vmatpush1.msra.mxu0 0.0
    %1132 = vmatprep.subr.mxu0 0.0
    %1133 = vmatpush1.msra.mxu0 0.0
    %1134 = vmatprep.subr.mxu0 0.0
    %1135 = vmatpush1.msra.mxu0 0.0
    %1136 = vmatprep.subr.mxu0 0.0
    %1137 = vmatpush1.msra.mxu0 0.0
    %1138 = vmatprep.subr.mxu0 0.0
    %1139 = vmatpush1.msra.mxu0 0.0
    %1140 = vmatprep.subr.mxu0 0.0
    %1141 = vmatpush1.msra.mxu0 0.0
    %1142 = vmatprep.subr.mxu0 0.0
    %1143 = vmatpush1.msra.mxu0 0.0
    %1144 = vmatprep.subr.mxu0 0.0
    %1145 = vmatpush1.msra.mxu0 0.0
    %1146 = vmatprep.subr.mxu0 0.0
    %1147 = vmatpush1.msra.mxu0 0.0
    %1148 = vmatprep.subr.mxu0 0.0
    %1149 = vmatpush1.msra.mxu0 0.0
    %1150 = vmatprep.subr.mxu0 0.0
    %1151 = vmatpush1.msra.mxu0 0.0
    %1152 = vmatprep.subr.mxu0 0.0
    %1153 = vmatpush1.msra.mxu0 0.0
    %1154 = vmatprep.subr.mxu0 0.0
    %1155 = vmatpush1.msra.mxu0 0.0
    %1156 = vmatprep.subr.mxu0 0.0
    %1157 = vmatpush1.msra.mxu0 0.0
    %1158 = vmatprep.subr.mxu0 0.0
    %1159 = vmatpush1.msra.mxu0 0.0
    %1160 = vmatprep.subr.mxu0 0.0
    %1161 = vmatpush1.msra.mxu0 0.0
    %1162 = vmatprep.subr.mxu0 0.0
    %1163 = vmatpush1.msra.mxu0 0.0
    %1164 = vmatprep.subr.mxu0 0.0
    %1165 = vmatpush1.msra.mxu0 0.0
    %1166 = vmatprep.subr.mxu0 0.0
    %1167 = vmatpush1.msra.mxu0 0.0
    %1168 = vmatprep.subr.mxu0 0.0
    %1169 = vmatpush1.msra.mxu0 0.0
    %1170 = vmatprep.subr.mxu0 0.0
    %1171 = vmatpush1.msra.mxu0 0.0
    %1172 = vmatprep.subr.mxu0 0.0
    %1173 = vmatpush1.msra.mxu0 0.0
    %1174 = vmatprep.subr.mxu0 0.0
    %1175 = vmatpush1.msra.mxu0 0.0
    %1176 = vmatprep.mubr.f32.mxu0 0.0
    %1177 = vmatmul.mubr.f32.gmra.mrb[0].mxu0 %v1110
    %v1178 = vpop.f32.mrb[0].mxu0
    %v1179 = vadd.f32 %v978, %v1178
    %v1180 = vpop.f32.mrb[0].mxu0
    %1181 = vdwg.mxu0
    %v1182 = vstv %s981
    %v1183 = vmul.f32 %v1182, %v1179
    %v1184 = vadd.f32 %v949, %v1183
    %1186 = vset.pattern.permute.xlu0 0
    %1187 = vperm.xlu0 %1186, %v1184
    %v1188 = vpop.permute.xlu0 %1187
    %v1190 = vmul.f32 %v1188, %v991
    %v1191 = vadd.f32 %v964, %v1190
    %1192 = vset.pattern.permute.xlu0 1
    %1193 = vperm.xlu0 %1192, %v1184
    %v1194 = vpop.permute.xlu0 %1193
    %v1196 = vmul.f32 %v1194, %v1001
    %v1197 = vadd.f32 %v1191, %v1196
    %1198 = vset.pattern.permute.xlu0 2
    %1199 = vperm.xlu0 %1198, %v1184
    %v1200 = vpop.permute.xlu0 %1199
    %v1202 = vmul.f32 %v1200, %v1011
    %v1203 = vadd.f32 %v1197, %v1202
    %1204 = vset.pattern.permute.xlu0 3
    %1205 = vperm.xlu0 %1204, %v1184
    %v1206 = vpop.permute.xlu0 %1205
    %v1208 = vmul.f32 %v1206, %v1021
    %v1209 = vadd.f32 %v1203, %v1208
    %vm1210 = vcmp.gt.f32.partialorder %v1209, 0.0
    %v1211 = vmin.f32 %v1209, 0.0
    %v1212 = vmul.f32 %v1211, 1.442695
    %v1213 = vpow.pop %v1212
    %v1214 = vsub.f32 %v1213, 1.0
    %v1215 = vsel %vm1210, %v1209, %v1214
    %v1217 = vsel %vm255, %v1215, 0
    %1219 = vmatprep.subr.mxu0 0.0
    %1220 = vmatpush1.msra.mxu0 %v951
    %1221 = vmatprep.subr.mxu0 0.0
    %1222 = vmatpush1.msra.mxu0 %v952
    %1223 = vmatprep.subr.mxu0 0.0
    %1224 = vmatpush1.msra.mxu0 %v953
    %1225 = vmatprep.subr.mxu0 0.0
    %1226 = vmatpush1.msra.mxu0 %v954
    %1227 = vmatprep.subr.mxu0 0.0
    %1228 = vmatpush1.msra.mxu0 0.0
    %1229 = vmatprep.subr.mxu0 0.0
    %1230 = vmatpush1.msra.mxu0 0.0
    %1231 = vmatprep.subr.mxu0 0.0
    %1232 = vmatpush1.msra.mxu0 0.0
    %1233 = vmatprep.subr.mxu0 0.0
    %1234 = vmatpush1.msra.mxu0 0.0
    %1235 = vmatprep.subr.mxu0 0.0
    %1236 = vmatpush1.msra.mxu0 0.0
    %1237 = vmatprep.subr.mxu0 0.0
    %1238 = vmatpush1.msra.mxu0 0.0
    %1239 = vmatprep.subr.mxu0 0.0
    %1240 = vmatpush1.msra.mxu0 0.0
    %1241 = vmatprep.subr.mxu0 0.0
    %1242 = vmatpush1.msra.mxu0 0.0
    %1243 = vmatprep.subr.mxu0 0.0
    %1244 = vmatpush1.msra.mxu0 0.0
    %1245 = vmatprep.subr.mxu0 0.0
    %1246 = vmatpush1.msra.mxu0 0.0
    %1247 = vmatprep.subr.mxu0 0.0
    %1248 = vmatpush1.msra.mxu0 0.0
    %1249 = vmatprep.subr.mxu0 0.0
    %1250 = vmatpush1.msra.mxu0 0.0
    %1251 = vmatprep.subr.mxu0 0.0
    %1252 = vmatpush1.msra.mxu0 0.0
    %1253 = vmatprep.subr.mxu0 0.0
    %1254 = vmatpush1.msra.mxu0 0.0
    %1255 = vmatprep.subr.mxu0 0.0
    %1256 = vmatpush1.msra.mxu0 0.0
    %1257 = vmatprep.subr.mxu0 0.0
    %1258 = vmatpush1.msra.mxu0 0.0
    %1259 = vmatprep.subr.mxu0 0.0
    %1260 = vmatpush1.msra.mxu0 0.0
    %1261 = vmatprep.subr.mxu0 0.0
    %1262 = vmatpush1.msra.mxu0 0.0
    %1263 = vmatprep.subr.mxu0 0.0
    %1264 = vmatpush1.msra.mxu0 0.0
    %1265 = vmatprep.subr.mxu0 0.0
    %1266 = vmatpush1.msra.mxu0 0.0
    %1267 = vmatprep.subr.mxu0 0.0
    %1268 = vmatpush1.msra.mxu0 0.0
    %1269 = vmatprep.subr.mxu0 0.0
    %1270 = vmatpush1.msra.mxu0 0.0
    %1271 = vmatprep.subr.mxu0 0.0
    %1272 = vmatpush1.msra.mxu0 0.0
    %1273 = vmatprep.subr.mxu0 0.0
    %1274 = vmatpush1.msra.mxu0 0.0
    %1275 = vmatprep.subr.mxu0 0.0
    %1276 = vmatpush1.msra.mxu0 0.0
    %1277 = vmatprep.subr.mxu0 0.0
    %1278 = vmatpush1.msra.mxu0 0.0
    %1279 = vmatprep.subr.mxu0 0.0
    %1280 = vmatpush1.msra.mxu0 0.0
    %1281 = vmatprep.subr.mxu0 0.0
    %1282 = vmatpush1.msra.mxu0 0.0
    %1283 = vmatprep.mubr.f32.mxu0 0.0
    %1284 = vmatmul.mubr.f32.gmra.mrb[0].mxu0 %v1217
    %v1285 = vpop.f32.mrb[0].mxu0
    %v1286 = vadd.f32 %v971, %v1285
    %v1287 = vpop.f32.mrb[0].mxu0
    %1288 = vdwg.mxu0
    %vm1289 = vcmp.gt.f32.partialorder %v1286, 0.0
    %v1290 = vmin.f32 %v1286, 0.0
    %v1291 = vmul.f32 %v1290, 1.442695
    %v1292 = vpow.pop %v1291
    %v1293 = vsub.f32 %v1292, 1.0
    %v1294 = vsel %vm1289, %v1286, %v1293
    %v1296 = vsel %vm255, %v1294, 0
    %1298 = vmatprep.subr.mxu0 0.0
    %1299 = vmatpush1.msra.mxu0 %v955
    %1300 = vmatprep.subr.mxu0 0.0
    %1301 = vmatpush1.msra.mxu0 %v956
    %1302 = vmatprep.subr.mxu0 0.0
    %1303 = vmatpush1.msra.mxu0 %v957
    %1304 = vmatprep.subr.mxu0 0.0
    %1305 = vmatpush1.msra.mxu0 %v958
    %1306 = vmatprep.subr.mxu0 0.0
    %1307 = vmatpush1.msra.mxu0 0.0
    %1308 = vmatprep.subr.mxu0 0.0
    %1309 = vmatpush1.msra.mxu0 0.0
    %1310 = vmatprep.subr.mxu0 0.0
    %1311 = vmatpush1.msra.mxu0 0.0
    %1312 = vmatprep.subr.mxu0 0.0
    %1313 = vmatpush1.msra.mxu0 0.0
    %1314 = vmatprep.subr.mxu0 0.0
    %1315 = vmatpush1.msra.mxu0 0.0
    %1316 = vmatprep.subr.mxu0 0.0
    %1317 = vmatpush1.msra.mxu0 0.0
    %1318 = vmatprep.subr.mxu0 0.0
    %1319 = vmatpush1.msra.mxu0 0.0
    %1320 = vmatprep.subr.mxu0 0.0
    %1321 = vmatpush1.msra.mxu0 0.0
    %1322 = vmatprep.subr.mxu0 0.0
    %1323 = vmatpush1.msra.mxu0 0.0
    %1324 = vmatprep.subr.mxu0 0.0
    %1325 = vmatpush1.msra.mxu0 0.0
    %1326 = vmatprep.subr.mxu0 0.0
    %1327 = vmatpush1.msra.mxu0 0.0
    %1328 = vmatprep.subr.mxu0 0.0
    %1329 = vmatpush1.msra.mxu0 0.0
    %1330 = vmatprep.subr.mxu0 0.0
    %1331 = vmatpush1.msra.mxu0 0.0
    %1332 = vmatprep.subr.mxu0 0.0
    %1333 = vmatpush1.msra.mxu0 0.0
    %1334 = vmatprep.subr.mxu0 0.0
    %1335 = vmatpush1.msra.mxu0 0.0
    %1336 = vmatprep.subr.mxu0 0.0
    %1337 = vmatpush1.msra.mxu0 0.0
    %1338 = vmatprep.subr.mxu0 0.0
    %1339 = vmatpush1.msra.mxu0 0.0
    %1340 = vmatprep.subr.mxu0 0.0
    %1341 = vmatpush1.msra.mxu0 0.0
    %1342 = vmatprep.subr.mxu0 0.0
    %1343 = vmatpush1.msra.mxu0 0.0
    %1344 = vmatprep.subr.mxu0 0.0
    %1345 = vmatpush1.msra.mxu0 0.0
    %1346 = vmatprep.subr.mxu0 0.0
    %1347 = vmatpush1.msra.mxu0 0.0
    %1348 = vmatprep.subr.mxu0 0.0
    %1349 = vmatpush1.msra.mxu0 0.0
    %1350 = vmatprep.subr.mxu0 0.0
    %1351 = vmatpush1.msra.mxu0 0.0
    %1352 = vmatprep.subr.mxu0 0.0
    %1353 = vmatpush1.msra.mxu0 0.0
    %1354 = vmatprep.subr.mxu0 0.0
    %1355 = vmatpush1.msra.mxu0 0.0
    %1356 = vmatprep.subr.mxu0 0.0
    %1357 = vmatpush1.msra.mxu0 0.0
    %1358 = vmatprep.subr.mxu0 0.0
    %1359 = vmatpush1.msra.mxu0 0.0
    %1360 = vmatprep.subr.mxu0 0.0
    %1361 = vmatpush1.msra.mxu0 0.0
    %1362 = vmatprep.mubr.f32.mxu0 0.0
    %1363 = vmatmul.mubr.f32.gmra.mrb[0].mxu0 %v1296
    %v1364 = vpop.f32.mrb[0].mxu0
    %v1365 = vadd.f32 %v978, %v1364
    %v1366 = vpop.f32.mrb[0].mxu0
    %1367 = vdwg.mxu0
    %v1368 = vstv %s980
    %v1369 = vmul.f32 %v1368, %v1365
    %v1370 = vadd.f32 %v949, %v1369
    %v1371 = vsub.f32 %v1370, %v1183
    %1373 = vset.pattern.permute.xlu0 0
    %1374 = vperm.xlu0 %1373, %v1371
    %v1375 = vpop.permute.xlu0 %1374
    %v1377 = vmul.f32 %v1375, %v991
    %v1378 = vadd.f32 %v964, %v1377
    %1379 = vset.pattern.permute.xlu0 1
    %1380 = vperm.xlu0 %1379, %v1371
    %v1381 = vpop.permute.xlu0 %1380
    %v1383 = vmul.f32 %v1381, %v1001
    %v1384 = vadd.f32 %v1378, %v1383
    %1385 = vset.pattern.permute.xlu0 2
    %1386 = vperm.xlu0 %1385, %v1371
    %v1387 = vpop.permute.xlu0 %1386
    %v1389 = vmul.f32 %v1387, %v1011
    %v1390 = vadd.f32 %v1384, %v1389
    %1391 = vset.pattern.permute.xlu0 3
    %1392 = vperm.xlu0 %1391, %v1371
    %v1393 = vpop.permute.xlu0 %1392
    %v1395 = vmul.f32 %v1393, %v1021
    %v1396 = vadd.f32 %v1390, %v1395
    %vm1397 = vcmp.gt.f32.partialorder %v1396, 0.0
    %v1398 = vmin.f32 %v1396, 0.0
    %v1399 = vmul.f32 %v1398, 1.442695
    %v1400 = vpow.pop %v1399
    %v1401 = vsub.f32 %v1400, 1.0
    %v1402 = vsel %vm1397, %v1396, %v1401
    %v1404 = vsel %vm255, %v1402, 0
    %1406 = vmatprep.subr.mxu0 0.0
    %1407 = vmatpush1.msra.mxu0 %v951
    %1408 = vmatprep.subr.mxu0 0.0
    %1409 = vmatpush1.msra.mxu0 %v952
    %1410 = vmatprep.subr.mxu0 0.0
    %1411 = vmatpush1.msra.mxu0 %v953
    %1412 = vmatprep.subr.mxu0 0.0
    %1413 = vmatpush1.msra.mxu0 %v954
    %1414 = vmatprep.subr.mxu0 0.0
    %1415 = vmatpush1.msra.mxu0 0.0
    %1416 = vmatprep.subr.mxu0 0.0
    %1417 = vmatpush1.msra.mxu0 0.0
    %1418 = vmatprep.subr.mxu0 0.0
    %1419 = vmatpush1.msra.mxu0 0.0
    %1420 = vmatprep.subr.mxu0 0.0
    %1421 = vmatpush1.msra.mxu0 0.0
    %1422 = vmatprep.subr.mxu0 0.0
    %1423 = vmatpush1.msra.mxu0 0.0
    %1424 = vmatprep.subr.mxu0 0.0
    %1425 = vmatpush1.msra.mxu0 0.0
    %1426 = vmatprep.subr.mxu0 0.0
    %1427 = vmatpush1.msra.mxu0 0.0
    %1428 = vmatprep.subr.mxu0 0.0
    %1429 = vmatpush1.msra.mxu0 0.0
    %1430 = vmatprep.subr.mxu0 0.0
    %1431 = vmatpush1.msra.mxu0 0.0
    %1432 = vmatprep.subr.mxu0 0.0
    %1433 = vmatpush1.msra.mxu0 0.0
    %1434 = vmatprep.subr.mxu0 0.0
    %1435 = vmatpush1.msra.mxu0 0.0
    %1436 = vmatprep.subr.mxu0 0.0
    %1437 = vmatpush1.msra.mxu0 0.0
    %1438 = vmatprep.subr.mxu0 0.0
    %1439 = vmatpush1.msra.mxu0 0.0
    %1440 = vmatprep.subr.mxu0 0.0
    %1441 = vmatpush1.msra.mxu0 0.0
    %1442 = vmatprep.subr.mxu0 0.0
    %1443 = vmatpush1.msra.mxu0 0.0
    %1444 = vmatprep.subr.mxu0 0.0
    %1445 = vmatpush1.msra.mxu0 0.0
    %1446 = vmatprep.subr.mxu0 0.0
    %1447 = vmatpush1.msra.mxu0 0.0
    %1448 = vmatprep.subr.mxu0 0.0
    %1449 = vmatpush1.msra.mxu0 0.0
    %1450 = vmatprep.subr.mxu0 0.0
    %1451 = vmatpush1.msra.mxu0 0.0
    %1452 = vmatprep.subr.mxu0 0.0
    %1453 = vmatpush1.msra.mxu0 0.0
    %1454 = vmatprep.subr.mxu0 0.0
    %1455 = vmatpush1.msra.mxu0 0.0
    %1456 = vmatprep.subr.mxu0 0.0
    %1457 = vmatpush1.msra.mxu0 0.0
    %1458 = vmatprep.subr.mxu0 0.0
    %1459 = vmatpush1.msra.mxu0 0.0
    %1460 = vmatprep.subr.mxu0 0.0
    %1461 = vmatpush1.msra.mxu0 0.0
    %1462 = vmatprep.subr.mxu0 0.0
    %1463 = vmatpush1.msra.mxu0 0.0
    %1464 = vmatprep.subr.mxu0 0.0
    %1465 = vmatpush1.msra.mxu0 0.0
    %1466 = vmatprep.subr.mxu0 0.0
    %1467 = vmatpush1.msra.mxu0 0.0
    %1468 = vmatprep.subr.mxu0 0.0
    %1469 = vmatpush1.msra.mxu0 0.0
    %1470 = vmatprep.mubr.f32.mxu0 0.0
    %1471 = vmatmul.mubr.f32.gmra.mrb[0].mxu0 %v1404
    %v1472 = vpop.f32.mrb[0].mxu0
    %v1473 = vadd.f32 %v971, %v1472
    %v1474 = vpop.f32.mrb[0].mxu0
    %1475 = vdwg.mxu0
    %vm1476 = vcmp.gt.f32.partialorder %v1473, 0.0
    %v1477 = vmin.f32 %v1473, 0.0
    %v1478 = vmul.f32 %v1477, 1.442695
    %v1479 = vpow.pop %v1478
    %v1480 = vsub.f32 %v1479, 1.0
    %v1481 = vsel %vm1476, %v1473, %v1480
    %v1483 = vsel %vm255, %v1481, 0
    %1485 = vmatprep.subr.mxu0 0.0
    %1486 = vmatpush1.msra.mxu0 %v955
    %1487 = vmatprep.subr.mxu0 0.0
    %1488 = vmatpush1.msra.mxu0 %v956
    %1489 = vmatprep.subr.mxu0 0.0
    %1490 = vmatpush1.msra.mxu0 %v957
    %1491 = vmatprep.subr.mxu0 0.0
    %1492 = vmatpush1.msra.mxu0 %v958
    %1493 = vmatprep.subr.mxu0 0.0
    %1494 = vmatpush1.msra.mxu0 0.0
    %1495 = vmatprep.subr.mxu0 0.0
    %1496 = vmatpush1.msra.mxu0 0.0
    %1497 = vmatprep.subr.mxu0 0.0
    %1498 = vmatpush1.msra.mxu0 0.0
    %1499 = vmatprep.subr.mxu0 0.0
    %1500 = vmatpush1.msra.mxu0 0.0
    %1501 = vmatprep.subr.mxu0 0.0
    %1502 = vmatpush1.msra.mxu0 0.0
    %1503 = vmatprep.subr.mxu0 0.0
    %1504 = vmatpush1.msra.mxu0 0.0
    %1505 = vmatprep.subr.mxu0 0.0
    %1506 = vmatpush1.msra.mxu0 0.0
    %1507 = vmatprep.subr.mxu0 0.0
    %1508 = vmatpush1.msra.mxu0 0.0
    %1509 = vmatprep.subr.mxu0 0.0
    %1510 = vmatpush1.msra.mxu0 0.0
    %1511 = vmatprep.subr.mxu0 0.0
    %1512 = vmatpush1.msra.mxu0 0.0
    %1513 = vmatprep.subr.mxu0 0.0
    %1514 = vmatpush1.msra.mxu0 0.0
    %1515 = vmatprep.subr.mxu0 0.0
    %1516 = vmatpush1.msra.mxu0 0.0
    %1517 = vmatprep.subr.mxu0 0.0
    %1518 = vmatpush1.msra.mxu0 0.0
    %1519 = vmatprep.subr.mxu0 0.0
    %1520 = vmatpush1.msra.mxu0 0.0
    %1521 = vmatprep.subr.mxu0 0.0
    %1522 = vmatpush1.msra.mxu0 0.0
    %1523 = vmatprep.subr.mxu0 0.0
    %1524 = vmatpush1.msra.mxu0 0.0
    %1525 = vmatprep.subr.mxu0 0.0
    %1526 = vmatpush1.msra.mxu0 0.0
    %1527 = vmatprep.subr.mxu0 0.0
    %1528 = vmatpush1.msra.mxu0 0.0
    %1529 = vmatprep.subr.mxu0 0.0
    %1530 = vmatpush1.msra.mxu0 0.0
    %1531 = vmatprep.subr.mxu0 0.0
    %1532 = vmatpush1.msra.mxu0 0.0
    %1533 = vmatprep.subr.mxu0 0.0
    %1534 = vmatpush1.msra.mxu0 0.0
    %1535 = vmatprep.subr.mxu0 0.0
    %1536 = vmatpush1.msra.mxu0 0.0
    %1537 = vmatprep.subr.mxu0 0.0
    %1538 = vmatpush1.msra.mxu0 0.0
    %1539 = vmatprep.subr.mxu0 0.0
    %1540 = vmatpush1.msra.mxu0 0.0
    %1541 = vmatprep.subr.mxu0 0.0
    %1542 = vmatpush1.msra.mxu0 0.0
    %1543 = vmatprep.subr.mxu0 0.0
    %1544 = vmatpush1.msra.mxu0 0.0
    %1545 = vmatprep.subr.mxu0 0.0
    %1546 = vmatpush1.msra.mxu0 0.0
    %1547 = vmatprep.subr.mxu0 0.0
    %1548 = vmatpush1.msra.mxu0 0.0
    %1549 = vmatprep.mubr.f32.mxu0 0.0
    %1550 = vmatmul.mubr.f32.gmra.mrb[0].mxu0 %v1483
    %v1551 = vpop.f32.mrb[0].mxu0
    %v1552 = vadd.f32 %v978, %v1551
    %v1553 = vpop.f32.mrb[0].mxu0
    %1554 = vdwg.mxu0
    %v1555 = vsub.f32 %v1179, %v1365
    %v1556 = vadd.f32 %v1555, %v1552
    %v1557 = vmul.f32 %v1368, %v1556
    %v1558 = vadd.f32 %v949, %v1557
    %1560 = vset.pattern.permute.xlu0 0
    %1561 = vperm.xlu0 %1560, %v1558
    %v1562 = vpop.permute.xlu0 %1561
    %v1564 = vmul.f32 %v1562, %v991
    %v1565 = vadd.f32 %v964, %v1564
    %1566 = vset.pattern.permute.xlu0 1
    %1567 = vperm.xlu0 %1566, %v1558
    %v1568 = vpop.permute.xlu0 %1567
    %v1570 = vmul.f32 %v1568, %v1001
    %v1571 = vadd.f32 %v1565, %v1570
    %1572 = vset.pattern.permute.xlu0 2
    %1573 = vperm.xlu0 %1572, %v1558
    %v1574 = vpop.permute.xlu0 %1573
    %v1576 = vmul.f32 %v1574, %v1011
    %v1577 = vadd.f32 %v1571, %v1576
    %1578 = vset.pattern.permute.xlu0 3
    %1579 = vperm.xlu0 %1578, %v1558
    %v1580 = vpop.permute.xlu0 %1579
    %v1582 = vmul.f32 %v1580, %v1021
    %v1583 = vadd.f32 %v1577, %v1582
    %vm1584 = vcmp.gt.f32.partialorder %v1583, 0.0
    %v1585 = vmin.f32 %v1583, 0.0
    %v1586 = vmul.f32 %v1585, 1.442695
    %v1587 = vpow.pop %v1586
    %v1588 = vsub.f32 %v1587, 1.0
    %v1589 = vsel %vm1584, %v1583, %v1588
    %v1591 = vsel %vm255, %v1589, 0
    %1593 = vmatprep.subr.mxu0 0.0
    %1594 = vmatpush1.msra.mxu0 %v951
    %1595 = vmatprep.subr.mxu0 0.0
    %1596 = vmatpush1.msra.mxu0 %v952
    %1597 = vmatprep.subr.mxu0 0.0
    %1598 = vmatpush1.msra.mxu0 %v953
    %1599 = vmatprep.subr.mxu0 0.0
    %1600 = vmatpush1.msra.mxu0 %v954
    %1601 = vmatprep.subr.mxu0 0.0
    %1602 = vmatpush1.msra.mxu0 0.0
    %1603 = vmatprep.subr.mxu0 0.0
    %1604 = vmatpush1.msra.mxu0 0.0
    %1605 = vmatprep.subr.mxu0 0.0
    %1606 = vmatpush1.msra.mxu0 0.0
    %1607 = vmatprep.subr.mxu0 0.0
    %1608 = vmatpush1.msra.mxu0 0.0
    %1609 = vmatprep.subr.mxu0 0.0
    %1610 = vmatpush1.msra.mxu0 0.0
    %1611 = vmatprep.subr.mxu0 0.0
    %1612 = vmatpush1.msra.mxu0 0.0
    %1613 = vmatprep.subr.mxu0 0.0
    %1614 = vmatpush1.msra.mxu0 0.0
    %1615 = vmatprep.subr.mxu0 0.0
    %1616 = vmatpush1.msra.mxu0 0.0
    %1617 = vmatprep.subr.mxu0 0.0
    %1618 = vmatpush1.msra.mxu0 0.0
    %1619 = vmatprep.subr.mxu0 0.0
    %1620 = vmatpush1.msra.mxu0 0.0
    %1621 = vmatprep.subr.mxu0 0.0
    %1622 = vmatpush1.msra.mxu0 0.0
    %1623 = vmatprep.subr.mxu0 0.0
    %1624 = vmatpush1.msra.mxu0 0.0
    %1625 = vmatprep.subr.mxu0 0.0
    %1626 = vmatpush1.msra.mxu0 0.0
    %1627 = vmatprep.subr.mxu0 0.0
    %1628 = vmatpush1.msra.mxu0 0.0
    %1629 = vmatprep.subr.mxu0 0.0
    %1630 = vmatpush1.msra.mxu0 0.0
    %1631 = vmatprep.subr.mxu0 0.0
    %1632 = vmatpush1.msra.mxu0 0.0
    %1633 = vmatprep.subr.mxu0 0.0
    %1634 = vmatpush1.msra.mxu0 0.0
    %1635 = vmatprep.subr.mxu0 0.0
    %1636 = vmatpush1.msra.mxu0 0.0
    %1637 = vmatprep.subr.mxu0 0.0
    %1638 = vmatpush1.msra.mxu0 0.0
    %1639 = vmatprep.subr.mxu0 0.0
    %1640 = vmatpush1.msra.mxu0 0.0
    %1641 = vmatprep.subr.mxu0 0.0
    %1642 = vmatpush1.msra.mxu0 0.0
    %1643 = vmatprep.subr.mxu0 0.0
    %1644 = vmatpush1.msra.mxu0 0.0
    %1645 = vmatprep.subr.mxu0 0.0
    %1646 = vmatpush1.msra.mxu0 0.0
    %1647 = vmatprep.subr.mxu0 0.0
    %1648 = vmatpush1.msra.mxu0 0.0
    %1649 = vmatprep.subr.mxu0 0.0
    %1650 = vmatpush1.msra.mxu0 0.0
    %1651 = vmatprep.subr.mxu0 0.0
    %1652 = vmatpush1.msra.mxu0 0.0
    %1653 = vmatprep.subr.mxu0 0.0
    %1654 = vmatpush1.msra.mxu0 0.0
    %1655 = vmatprep.subr.mxu0 0.0
    %1656 = vmatpush1.msra.mxu0 0.0
    %1657 = vmatprep.mubr.f32.mxu0 0.0
    %1658 = vmatmul.mubr.f32.gmra.mrb[0].mxu0 %v1591
    %v1659 = vpop.f32.mrb[0].mxu0
    %v1660 = vadd.f32 %v971, %v1659
    %v1661 = vpop.f32.mrb[0].mxu0
    %1662 = vdwg.mxu0
    %vm1663 = vcmp.gt.f32.partialorder %v1660, 0.0
    %v1664 = vmin.f32 %v1660, 0.0
    %v1665 = vmul.f32 %v1664, 1.442695
    %v1666 = vpow.pop %v1665
    %v1667 = vsub.f32 %v1666, 1.0
    %v1668 = vsel %vm1663, %v1660, %v1667
    %v1670 = vsel %vm255, %v1668, 0
    %1672 = vmatprep.subr.mxu0 0.0
    %1673 = vmatpush1.msra.mxu0 %v955
    %1674 = vmatprep.subr.mxu0 0.0
    %1675 = vmatpush1.msra.mxu0 %v956
    %1676 = vmatprep.subr.mxu0 0.0
    %1677 = vmatpush1.msra.mxu0 %v957
    %1678 = vmatprep.subr.mxu0 0.0
    %1679 = vmatpush1.msra.mxu0 %v958
    %1680 = vmatprep.subr.mxu0 0.0
    %1681 = vmatpush1.msra.mxu0 0.0
    %1682 = vmatprep.subr.mxu0 0.0
    %1683 = vmatpush1.msra.mxu0 0.0
    %1684 = vmatprep.subr.mxu0 0.0
    %1685 = vmatpush1.msra.mxu0 0.0
    %1686 = vmatprep.subr.mxu0 0.0
    %1687 = vmatpush1.msra.mxu0 0.0
    %1688 = vmatprep.subr.mxu0 0.0
    %1689 = vmatpush1.msra.mxu0 0.0
    %1690 = vmatprep.subr.mxu0 0.0
    %1691 = vmatpush1.msra.mxu0 0.0
    %1692 = vmatprep.subr.mxu0 0.0
    %1693 = vmatpush1.msra.mxu0 0.0
    %1694 = vmatprep.subr.mxu0 0.0
    %1695 = vmatpush1.msra.mxu0 0.0
    %1696 = vmatprep.subr.mxu0 0.0
    %1697 = vmatpush1.msra.mxu0 0.0
    %1698 = vmatprep.subr.mxu0 0.0
    %1699 = vmatpush1.msra.mxu0 0.0
    %1700 = vmatprep.subr.mxu0 0.0
    %1701 = vmatpush1.msra.mxu0 0.0
    %1702 = vmatprep.subr.mxu0 0.0
    %1703 = vmatpush1.msra.mxu0 0.0
    %1704 = vmatprep.subr.mxu0 0.0
    %1705 = vmatpush1.msra.mxu0 0.0
    %1706 = vmatprep.subr.mxu0 0.0
    %1707 = vmatpush1.msra.mxu0 0.0
    %1708 = vmatprep.subr.mxu0 0.0
    %1709 = vmatpush1.msra.mxu0 0.0
    %1710 = vmatprep.subr.mxu0 0.0
    %1711 = vmatpush1.msra.mxu0 0.0
    %1712 = vmatprep.subr.mxu0 0.0
    %1713 = vmatpush1.msra.mxu0 0.0
    %1714 = vmatprep.subr.mxu0 0.0
    %1715 = vmatpush1.msra.mxu0 0.0
    %1716 = vmatprep.subr.mxu0 0.0
    %1717 = vmatpush1.msra.mxu0 0.0
    %1718 = vmatprep.subr.mxu0 0.0
    %1719 = vmatpush1.msra.mxu0 0.0
    %1720 = vmatprep.subr.mxu0 0.0
    %1721 = vmatpush1.msra.mxu0 0.0
    %1722 = vmatprep.subr.mxu0 0.0
    %1723 = vmatpush1.msra.mxu0 0.0
    %1724 = vmatprep.subr.mxu0 0.0
    %1725 = vmatpush1.msra.mxu0 0.0
    %1726 = vmatprep.subr.mxu0 0.0
    %1727 = vmatpush1.msra.mxu0 0.0
    %1728 = vmatprep.subr.mxu0 0.0
    %1729 = vmatpush1.msra.mxu0 0.0
    %1730 = vmatprep.subr.mxu0 0.0
    %1731 = vmatpush1.msra.mxu0 0.0
    %1732 = vmatprep.subr.mxu0 0.0
    %1733 = vmatpush1.msra.mxu0 0.0
    %1734 = vmatprep.subr.mxu0 0.0
    %1735 = vmatpush1.msra.mxu0 0.0
    %1736 = vmatprep.mubr.f32.mxu0 0.0
    %1737 = vmatmul.mubr.f32.gmra.mrb[0].mxu0 %v1670
    %v1738 = vpop.f32.mrb[0].mxu0
    %v1739 = vadd.f32 %v978, %v1738
    %v1740 = vpop.f32.mrb[0].mxu0
    %1741 = vdwg.mxu0
    %v1742 = vadd.f32 %v1365, %v1552
    %v1743 = vmul.f32 %v1742, 3.0
    %v1744 = vadd.f32 %v1179, %v1743
    %v1745 = vadd.f32 %v1744, %v1739
    %v1746 = vstv %s982
    %v1747 = vmul.f32 %v1746, %v1745
    %v1748 = vadd.f32 %v949, %v1747
    %s1749 = sld [smem:[#allocation2 + $0x1]]
    %s1750 = sld [smem:[#allocation4 + $0x1]]
    %s1751 = sld [smem:[#allocation6 + $0x1]]
    %1753 = vset.pattern.permute.xlu0 0
    %1754 = vperm.xlu0 %1753, %v1748
    %v1755 = vpop.permute.xlu0 %1754
    %v1757 = vmul.f32 %v1755, %v991
    %v1758 = vadd.f32 %v964, %v1757
    %1759 = vset.pattern.permute.xlu0 1
    %1760 = vperm.xlu0 %1759, %v1748
    %v1761 = vpop.permute.xlu0 %1760
    %v1763 = vmul.f32 %v1761, %v1001
    %v1764 = vadd.f32 %v1758, %v1763
    %1765 = vset.pattern.permute.xlu0 2
    %1766 = vperm.xlu0 %1765, %v1748
    %v1767 = vpop.permute.xlu0 %1766
    %v1769 = vmul.f32 %v1767, %v1011
    %v1770 = vadd.f32 %v1764, %v1769
    %1771 = vset.pattern.permute.xlu0 3
    %1772 = vperm.xlu0 %1771, %v1748
    %v1773 = vpop.permute.xlu0 %1772
    %v1775 = vmul.f32 %v1773, %v1021
    %v1776 = vadd.f32 %v1770, %v1775
    %vm1777 = vcmp.gt.f32.partialorder %v1776, 0.0
    %v1778 = vmin.f32 %v1776, 0.0
    %v1779 = vmul.f32 %v1778, 1.442695
    %v1780 = vpow.pop %v1779
    %v1781 = vsub.f32 %v1780, 1.0
    %v1782 = vsel %vm1777, %v1776, %v1781
    %v1784 = vsel %vm255, %v1782, 0
    %1786 = vmatprep.subr.mxu0 0.0
    %1787 = vmatpush1.msra.mxu0 %v951
    %1788 = vmatprep.subr.mxu0 0.0
    %1789 = vmatpush1.msra.mxu0 %v952
    %1790 = vmatprep.subr.mxu0 0.0
    %1791 = vmatpush1.msra.mxu0 %v953
    %1792 = vmatprep.subr.mxu0 0.0
    %1793 = vmatpush1.msra.mxu0 %v954
    %1794 = vmatprep.subr.mxu0 0.0
    %1795 = vmatpush1.msra.mxu0 0.0
    %1796 = vmatprep.subr.mxu0 0.0
    %1797 = vmatpush1.msra.mxu0 0.0
    %1798 = vmatprep.subr.mxu0 0.0
    %1799 = vmatpush1.msra.mxu0 0.0
    %1800 = vmatprep.subr.mxu0 0.0
    %1801 = vmatpush1.msra.mxu0 0.0
    %1802 = vmatprep.subr.mxu0 0.0
    %1803 = vmatpush1.msra.mxu0 0.0
    %1804 = vmatprep.subr.mxu0 0.0
    %1805 = vmatpush1.msra.mxu0 0.0
    %1806 = vmatprep.subr.mxu0 0.0
    %1807 = vmatpush1.msra.mxu0 0.0
    %1808 = vmatprep.subr.mxu0 0.0
    %1809 = vmatpush1.msra.mxu0 0.0
    %1810 = vmatprep.subr.mxu0 0.0
    %1811 = vmatpush1.msra.mxu0 0.0
    %1812 = vmatprep.subr.mxu0 0.0
    %1813 = vmatpush1.msra.mxu0 0.0
    %1814 = vmatprep.subr.mxu0 0.0
    %1815 = vmatpush1.msra.mxu0 0.0
    %1816 = vmatprep.subr.mxu0 0.0
    %1817 = vmatpush1.msra.mxu0 0.0
    %1818 = vmatprep.subr.mxu0 0.0
    %1819 = vmatpush1.msra.mxu0 0.0
    %1820 = vmatprep.subr.mxu0 0.0
    %1821 = vmatpush1.msra.mxu0 0.0
    %1822 = vmatprep.subr.mxu0 0.0
    %1823 = vmatpush1.msra.mxu0 0.0
    %1824 = vmatprep.subr.mxu0 0.0
    %1825 = vmatpush1.msra.mxu0 0.0
    %1826 = vmatprep.subr.mxu0 0.0
    %1827 = vmatpush1.msra.mxu0 0.0
    %1828 = vmatprep.subr.mxu0 0.0
    %1829 = vmatpush1.msra.mxu0 0.0
    %1830 = vmatprep.subr.mxu0 0.0
    %1831 = vmatpush1.msra.mxu0 0.0
    %1832 = vmatprep.subr.mxu0 0.0
    %1833 = vmatpush1.msra.mxu0 0.0
    %1834 = vmatprep.subr.mxu0 0.0
    %1835 = vmatpush1.msra.mxu0 0.0
    %1836 = vmatprep.subr.mxu0 0.0
    %1837 = vmatpush1.msra.mxu0 0.0
    %1838 = vmatprep.subr.mxu0 0.0
    %1839 = vmatpush1.msra.mxu0 0.0
    %1840 = vmatprep.subr.mxu0 0.0
    %1841 = vmatpush1.msra.mxu0 0.0
    %1842 = vmatprep.subr.mxu0 0.0
    %1843 = vmatpush1.msra.mxu0 0.0
    %1844 = vmatprep.subr.mxu0 0.0
    %1845 = vmatpush1.msra.mxu0 0.0
    %1846 = vmatprep.subr.mxu0 0.0
    %1847 = vmatpush1.msra.mxu0 0.0
    %1848 = vmatprep.subr.mxu0 0.0
    %1849 = vmatpush1.msra.mxu0 0.0
    %1850 = vmatprep.mubr.f32.mxu0 0.0
    %1851 = vmatmul.mubr.f32.gmra.mrb[0].mxu0 %v1784
    %v1852 = vpop.f32.mrb[0].mxu0
    %v1853 = vadd.f32 %v971, %v1852
    %v1854 = vpop.f32.mrb[0].mxu0
    %1855 = vdwg.mxu0
    %vm1856 = vcmp.gt.f32.partialorder %v1853, 0.0
    %v1857 = vmin.f32 %v1853, 0.0
    %v1858 = vmul.f32 %v1857, 1.442695
    %v1859 = vpow.pop %v1858
    %v1860 = vsub.f32 %v1859, 1.0
    %v1861 = vsel %vm1856, %v1853, %v1860
    %v1863 = vsel %vm255, %v1861, 0
    %1865 = vmatprep.subr.mxu0 0.0
    %1866 = vmatpush1.msra.mxu0 %v955
    %1867 = vmatprep.subr.mxu0 0.0
    %1868 = vmatpush1.msra.mxu0 %v956
    %1869 = vmatprep.subr.mxu0 0.0
    %1870 = vmatpush1.msra.mxu0 %v957
    %1871 = vmatprep.subr.mxu0 0.0
    %1872 = vmatpush1.msra.mxu0 %v958
    %1873 = vmatprep.subr.mxu0 0.0
    %1874 = vmatpush1.msra.mxu0 0.0
    %1875 = vmatprep.subr.mxu0 0.0
    %1876 = vmatpush1.msra.mxu0 0.0
    %1877 = vmatprep.subr.mxu0 0.0
    %1878 = vmatpush1.msra.mxu0 0.0
    %1879 = vmatprep.subr.mxu0 0.0
    %1880 = vmatpush1.msra.mxu0 0.0
    %1881 = vmatprep.subr.mxu0 0.0
    %1882 = vmatpush1.msra.mxu0 0.0
    %1883 = vmatprep.subr.mxu0 0.0
    %1884 = vmatpush1.msra.mxu0 0.0
    %1885 = vmatprep.subr.mxu0 0.0
    %1886 = vmatpush1.msra.mxu0 0.0
    %1887 = vmatprep.subr.mxu0 0.0
    %1888 = vmatpush1.msra.mxu0 0.0
    %1889 = vmatprep.subr.mxu0 0.0
    %1890 = vmatpush1.msra.mxu0 0.0
    %1891 = vmatprep.subr.mxu0 0.0
    %1892 = vmatpush1.msra.mxu0 0.0
    %1893 = vmatprep.subr.mxu0 0.0
    %1894 = vmatpush1.msra.mxu0 0.0
    %1895 = vmatprep.subr.mxu0 0.0
    %1896 = vmatpush1.msra.mxu0 0.0
    %1897 = vmatprep.subr.mxu0 0.0
    %1898 = vmatpush1.msra.mxu0 0.0
    %1899 = vmatprep.subr.mxu0 0.0
    %1900 = vmatpush1.msra.mxu0 0.0
    %1901 = vmatprep.subr.mxu0 0.0
    %1902 = vmatpush1.msra.mxu0 0.0
    %1903 = vmatprep.subr.mxu0 0.0
    %1904 = vmatpush1.msra.mxu0 0.0
    %1905 = vmatprep.subr.mxu0 0.0
    %1906 = vmatpush1.msra.mxu0 0.0
    %1907 = vmatprep.subr.mxu0 0.0
    %1908 = vmatpush1.msra.mxu0 0.0
    %1909 = vmatprep.subr.mxu0 0.0
    %1910 = vmatpush1.msra.mxu0 0.0
    %1911 = vmatprep.subr.mxu0 0.0
    %1912 = vmatpush1.msra.mxu0 0.0
    %1913 = vmatprep.subr.mxu0 0.0
    %1914 = vmatpush1.msra.mxu0 0.0
    %1915 = vmatprep.subr.mxu0 0.0
    %1916 = vmatpush1.msra.mxu0 0.0
    %1917 = vmatprep.subr.mxu0 0.0
    %1918 = vmatpush1.msra.mxu0 0.0
    %1919 = vmatprep.subr.mxu0 0.0
    %1920 = vmatpush1.msra.mxu0 0.0
    %1921 = vmatprep.subr.mxu0 0.0
    %1922 = vmatpush1.msra.mxu0 0.0
    %1923 = vmatprep.subr.mxu0 0.0
    %1924 = vmatpush1.msra.mxu0 0.0
    %1925 = vmatprep.subr.mxu0 0.0
    %1926 = vmatpush1.msra.mxu0 0.0
    %1927 = vmatprep.subr.mxu0 0.0
    %1928 = vmatpush1.msra.mxu0 0.0
    %1929 = vmatprep.mubr.f32.mxu0 0.0
    %1930 = vmatmul.mubr.f32.gmra.mrb[0].mxu0 %v1863
    %v1931 = vpop.f32.mrb[0].mxu0
    %v1932 = vadd.f32 %v978, %v1931
    %v1933 = vpop.f32.mrb[0].mxu0
    %1934 = vdwg.mxu0
    %v1935 = vstv %s1750
    %v1936 = vmul.f32 %v1935, %v1932
    %v1937 = vadd.f32 %v1748, %v1936
    %1939 = vset.pattern.permute.xlu0 0
    %1940 = vperm.xlu0 %1939, %v1937
    %v1941 = vpop.permute.xlu0 %1940
    %v1943 = vmul.f32 %v1941, %v991
    %v1944 = vadd.f32 %v964, %v1943
    %1945 = vset.pattern.permute.xlu0 1
    %1946 = vperm.xlu0 %1945, %v1937
    %v1947 = vpop.permute.xlu0 %1946
    %v1949 = vmul.f32 %v1947, %v1001
    %v1950 = vadd.f32 %v1944, %v1949
    %1951 = vset.pattern.permute.xlu0 2
    %1952 = vperm.xlu0 %1951, %v1937
    %v1953 = vpop.permute.xlu0 %1952
    %v1955 = vmul.f32 %v1953, %v1011
    %v1956 = vadd.f32 %v1950, %v1955
    %1957 = vset.pattern.permute.xlu0 3
    %1958 = vperm.xlu0 %1957, %v1937
    %v1959 = vpop.permute.xlu0 %1958
    %v1961 = vmul.f32 %v1959, %v1021
    %v1962 = vadd.f32 %v1956, %v1961
    %vm1963 = vcmp.gt.f32.partialorder %v1962, 0.0
    %v1964 = vmin.f32 %v1962, 0.0
    %v1965 = vmul.f32 %v1964, 1.442695
    %v1966 = vpow.pop %v1965
    %v1967 = vsub.f32 %v1966, 1.0
    %v1968 = vsel %vm1963, %v1962, %v1967
    %v1970 = vsel %vm255, %v1968, 0
    %1972 = vmatprep.subr.mxu0 0.0
    %1973 = vmatpush1.msra.mxu0 %v951
    %1974 = vmatprep.subr.mxu0 0.0
    %1975 = vmatpush1.msra.mxu0 %v952
    %1976 = vmatprep.subr.mxu0 0.0
    %1977 = vmatpush1.msra.mxu0 %v953
    %1978 = vmatprep.subr.mxu0 0.0
    %1979 = vmatpush1.msra.mxu0 %v954
    %1980 = vmatprep.subr.mxu0 0.0
    %1981 = vmatpush1.msra.mxu0 0.0
    %1982 = vmatprep.subr.mxu0 0.0
    %1983 = vmatpush1.msra.mxu0 0.0
    %1984 = vmatprep.subr.mxu0 0.0
    %1985 = vmatpush1.msra.mxu0 0.0
    %1986 = vmatprep.subr.mxu0 0.0
    %1987 = vmatpush1.msra.mxu0 0.0
    %1988 = vmatprep.subr.mxu0 0.0
    %1989 = vmatpush1.msra.mxu0 0.0
    %1990 = vmatprep.subr.mxu0 0.0
    %1991 = vmatpush1.msra.mxu0 0.0
    %1992 = vmatprep.subr.mxu0 0.0
    %1993 = vmatpush1.msra.mxu0 0.0
    %1994 = vmatprep.subr.mxu0 0.0
    %1995 = vmatpush1.msra.mxu0 0.0
    %1996 = vmatprep.subr.mxu0 0.0
    %1997 = vmatpush1.msra.mxu0 0.0
    %1998 = vmatprep.subr.mxu0 0.0
    %1999 = vmatpush1.msra.mxu0 0.0
    %2000 = vmatprep.subr.mxu0 0.0
    %2001 = vmatpush1.msra.mxu0 0.0
    %2002 = vmatprep.subr.mxu0 0.0
    %2003 = vmatpush1.msra.mxu0 0.0
    %2004 = vmatprep.subr.mxu0 0.0
    %2005 = vmatpush1.msra.mxu0 0.0
    %2006 = vmatprep.subr.mxu0 0.0
    %2007 = vmatpush1.msra.mxu0 0.0
    %2008 = vmatprep.subr.mxu0 0.0
    %2009 = vmatpush1.msra.mxu0 0.0
    %2010 = vmatprep.subr.mxu0 0.0
    %2011 = vmatpush1.msra.mxu0 0.0
    %2012 = vmatprep.subr.mxu0 0.0
    %2013 = vmatpush1.msra.mxu0 0.0
    %2014 = vmatprep.subr.mxu0 0.0
    %2015 = vmatpush1.msra.mxu0 0.0
    %2016 = vmatprep.subr.mxu0 0.0
    %2017 = vmatpush1.msra.mxu0 0.0
    %2018 = vmatprep.subr.mxu0 0.0
    %2019 = vmatpush1.msra.mxu0 0.0
    %2020 = vmatprep.subr.mxu0 0.0
    %2021 = vmatpush1.msra.mxu0 0.0
    %2022 = vmatprep.subr.mxu0 0.0
    %2023 = vmatpush1.msra.mxu0 0.0
    %2024 = vmatprep.subr.mxu0 0.0
    %2025 = vmatpush1.msra.mxu0 0.0
    %2026 = vmatprep.subr.mxu0 0.0
    %2027 = vmatpush1.msra.mxu0 0.0
    %2028 = vmatprep.subr.mxu0 0.0
    %2029 = vmatpush1.msra.mxu0 0.0
    %2030 = vmatprep.subr.mxu0 0.0
    %2031 = vmatpush1.msra.mxu0 0.0
    %2032 = vmatprep.subr.mxu0 0.0
    %2033 = vmatpush1.msra.mxu0 0.0
    %2034 = vmatprep.subr.mxu0 0.0
    %2035 = vmatpush1.msra.mxu0 0.0
    %2036 = vmatprep.mubr.f32.mxu0 0.0
    %2037 = vmatmul.mubr.f32.gmra.mrb[0].mxu0 %v1970
    %v2038 = vpop.f32.mrb[0].mxu0
    %v2039 = vadd.f32 %v971, %v2038
    %v2040 = vpop.f32.mrb[0].mxu0
    %2041 = vdwg.mxu0
    %vm2042 = vcmp.gt.f32.partialorder %v2039, 0.0
    %v2043 = vmin.f32 %v2039, 0.0
    %v2044 = vmul.f32 %v2043, 1.442695
    %v2045 = vpow.pop %v2044
    %v2046 = vsub.f32 %v2045, 1.0
    %v2047 = vsel %vm2042, %v2039, %v2046
    %v2049 = vsel %vm255, %v2047, 0
    %2051 = vmatprep.subr.mxu0 0.0
    %2052 = vmatpush1.msra.mxu0 %v955
    %2053 = vmatprep.subr.mxu0 0.0
    %2054 = vmatpush1.msra.mxu0 %v956
    %2055 = vmatprep.subr.mxu0 0.0
    %2056 = vmatpush1.msra.mxu0 %v957
    %2057 = vmatprep.subr.mxu0 0.0
    %2058 = vmatpush1.msra.mxu0 %v958
    %2059 = vmatprep.subr.mxu0 0.0
    %2060 = vmatpush1.msra.mxu0 0.0
    %2061 = vmatprep.subr.mxu0 0.0
    %2062 = vmatpush1.msra.mxu0 0.0
    %2063 = vmatprep.subr.mxu0 0.0
    %2064 = vmatpush1.msra.mxu0 0.0
    %2065 = vmatprep.subr.mxu0 0.0
    %2066 = vmatpush1.msra.mxu0 0.0
    %2067 = vmatprep.subr.mxu0 0.0
    %2068 = vmatpush1.msra.mxu0 0.0
    %2069 = vmatprep.subr.mxu0 0.0
    %2070 = vmatpush1.msra.mxu0 0.0
    %2071 = vmatprep.subr.mxu0 0.0
    %2072 = vmatpush1.msra.mxu0 0.0
    %2073 = vmatprep.subr.mxu0 0.0
    %2074 = vmatpush1.msra.mxu0 0.0
    %2075 = vmatprep.subr.mxu0 0.0
    %2076 = vmatpush1.msra.mxu0 0.0
    %2077 = vmatprep.subr.mxu0 0.0
    %2078 = vmatpush1.msra.mxu0 0.0
    %2079 = vmatprep.subr.mxu0 0.0
    %2080 = vmatpush1.msra.mxu0 0.0
    %2081 = vmatprep.subr.mxu0 0.0
    %2082 = vmatpush1.msra.mxu0 0.0
    %2083 = vmatprep.subr.mxu0 0.0
    %2084 = vmatpush1.msra.mxu0 0.0
    %2085 = vmatprep.subr.mxu0 0.0
    %2086 = vmatpush1.msra.mxu0 0.0
    %2087 = vmatprep.subr.mxu0 0.0
    %2088 = vmatpush1.msra.mxu0 0.0
    %2089 = vmatprep.subr.mxu0 0.0
    %2090 = vmatpush1.msra.mxu0 0.0
    %2091 = vmatprep.subr.mxu0 0.0
    %2092 = vmatpush1.msra.mxu0 0.0
    %2093 = vmatprep.subr.mxu0 0.0
    %2094 = vmatpush1.msra.mxu0 0.0
    %2095 = vmatprep.subr.mxu0 0.0
    %2096 = vmatpush1.msra.mxu0 0.0
    %2097 = vmatprep.subr.mxu0 0.0
    %2098 = vmatpush1.msra.mxu0 0.0
    %2099 = vmatprep.subr.mxu0 0.0
    %2100 = vmatpush1.msra.mxu0 0.0
    %2101 = vmatprep.subr.mxu0 0.0
    %2102 = vmatpush1.msra.mxu0 0.0
    %2103 = vmatprep.subr.mxu0 0.0
    %2104 = vmatpush1.msra.mxu0 0.0
    %2105 = vmatprep.subr.mxu0 0.0
    %2106 = vmatpush1.msra.mxu0 0.0
    %2107 = vmatprep.subr.mxu0 0.0
    %2108 = vmatpush1.msra.mxu0 0.0
    %2109 = vmatprep.subr.mxu0 0.0
    %2110 = vmatpush1.msra.mxu0 0.0
    %2111 = vmatprep.subr.mxu0 0.0
    %2112 = vmatpush1.msra.mxu0 0.0
    %2113 = vmatprep.subr.mxu0 0.0
    %2114 = vmatpush1.msra.mxu0 0.0
    %2115 = vmatprep.mubr.f32.mxu0 0.0
    %2116 = vmatmul.mubr.f32.gmra.mrb[0].mxu0 %v2049
    %v2117 = vpop.f32.mrb[0].mxu0
    %v2118 = vadd.f32 %v978, %v2117
    %v2119 = vpop.f32.mrb[0].mxu0
    %2120 = vdwg.mxu0
    %v2121 = vstv %s1749
    %v2122 = vmul.f32 %v2121, %v2118
    %v2123 = vadd.f32 %v1748, %v2122
    %v2124 = vsub.f32 %v2123, %v1936
    %2126 = vset.pattern.permute.xlu0 0
    %2127 = vperm.xlu0 %2126, %v2124
    %v2128 = vpop.permute.xlu0 %2127
    %v2130 = vmul.f32 %v2128, %v991
    %v2131 = vadd.f32 %v964, %v2130
    %2132 = vset.pattern.permute.xlu0 1
    %2133 = vperm.xlu0 %2132, %v2124
    %v2134 = vpop.permute.xlu0 %2133
    %v2136 = vmul.f32 %v2134, %v1001
    %v2137 = vadd.f32 %v2131, %v2136
    %2138 = vset.pattern.permute.xlu0 2
    %2139 = vperm.xlu0 %2138, %v2124
    %v2140 = vpop.permute.xlu0 %2139
    %v2142 = vmul.f32 %v2140, %v1011
    %v2143 = vadd.f32 %v2137, %v2142
    %2144 = vset.pattern.permute.xlu0 3
    %2145 = vperm.xlu0 %2144, %v2124
    %v2146 = vpop.permute.xlu0 %2145
    %v2148 = vmul.f32 %v2146, %v1021
    %v2149 = vadd.f32 %v2143, %v2148
    %vm2150 = vcmp.gt.f32.partialorder %v2149, 0.0
    %v2151 = vmin.f32 %v2149, 0.0
    %v2152 = vmul.f32 %v2151, 1.442695
    %v2153 = vpow.pop %v2152
    %v2154 = vsub.f32 %v2153, 1.0
    %v2155 = vsel %vm2150, %v2149, %v2154
    %v2157 = vsel %vm255, %v2155, 0
    %2159 = vmatprep.subr.mxu0 0.0
    %2160 = vmatpush1.msra.mxu0 %v951
    %2161 = vmatprep.subr.mxu0 0.0
    %2162 = vmatpush1.msra.mxu0 %v952
    %2163 = vmatprep.subr.mxu0 0.0
    %2164 = vmatpush1.msra.mxu0 %v953
    %2165 = vmatprep.subr.mxu0 0.0
    %2166 = vmatpush1.msra.mxu0 %v954
    %2167 = vmatprep.subr.mxu0 0.0
    %2168 = vmatpush1.msra.mxu0 0.0
    %2169 = vmatprep.subr.mxu0 0.0
    %2170 = vmatpush1.msra.mxu0 0.0
    %2171 = vmatprep.subr.mxu0 0.0
    %2172 = vmatpush1.msra.mxu0 0.0
    %2173 = vmatprep.subr.mxu0 0.0
    %2174 = vmatpush1.msra.mxu0 0.0
    %2175 = vmatprep.subr.mxu0 0.0
    %2176 = vmatpush1.msra.mxu0 0.0
    %2177 = vmatprep.subr.mxu0 0.0
    %2178 = vmatpush1.msra.mxu0 0.0
    %2179 = vmatprep.subr.mxu0 0.0
    %2180 = vmatpush1.msra.mxu0 0.0
    %2181 = vmatprep.subr.mxu0 0.0
    %2182 = vmatpush1.msra.mxu0 0.0
    %2183 = vmatprep.subr.mxu0 0.0
    %2184 = vmatpush1.msra.mxu0 0.0
    %2185 = vmatprep.subr.mxu0 0.0
    %2186 = vmatpush1.msra.mxu0 0.0
    %2187 = vmatprep.subr.mxu0 0.0
    %2188 = vmatpush1.msra.mxu0 0.0
    %2189 = vmatprep.subr.mxu0 0.0
    %2190 = vmatpush1.msra.mxu0 0.0
    %2191 = vmatprep.subr.mxu0 0.0
    %2192 = vmatpush1.msra.mxu0 0.0
    %2193 = vmatprep.subr.mxu0 0.0
    %2194 = vmatpush1.msra.mxu0 0.0
    %2195 = vmatprep.subr.mxu0 0.0
    %2196 = vmatpush1.msra.mxu0 0.0
    %2197 = vmatprep.subr.mxu0 0.0
    %2198 = vmatpush1.msra.mxu0 0.0
    %2199 = vmatprep.subr.mxu0 0.0
    %2200 = vmatpush1.msra.mxu0 0.0
    %2201 = vmatprep.subr.mxu0 0.0
    %2202 = vmatpush1.msra.mxu0 0.0
    %2203 = vmatprep.subr.mxu0 0.0
    %2204 = vmatpush1.msra.mxu0 0.0
    %2205 = vmatprep.subr.mxu0 0.0
    %2206 = vmatpush1.msra.mxu0 0.0
    %2207 = vmatprep.subr.mxu0 0.0
    %2208 = vmatpush1.msra.mxu0 0.0
    %2209 = vmatprep.subr.mxu0 0.0
    %2210 = vmatpush1.msra.mxu0 0.0
    %2211 = vmatprep.subr.mxu0 0.0
    %2212 = vmatpush1.msra.mxu0 0.0
    %2213 = vmatprep.subr.mxu0 0.0
    %2214 = vmatpush1.msra.mxu0 0.0
    %2215 = vmatprep.subr.mxu0 0.0
    %2216 = vmatpush1.msra.mxu0 0.0
    %2217 = vmatprep.subr.mxu0 0.0
    %2218 = vmatpush1.msra.mxu0 0.0
    %2219 = vmatprep.subr.mxu0 0.0
    %2220 = vmatpush1.msra.mxu0 0.0
    %2221 = vmatprep.subr.mxu0 0.0
    %2222 = vmatpush1.msra.mxu0 0.0
    %2223 = vmatprep.mubr.f32.mxu0 0.0
    %2224 = vmatmul.mubr.f32.gmra.mrb[0].mxu0 %v2157
    %v2225 = vpop.f32.mrb[0].mxu0
    %v2226 = vadd.f32 %v971, %v2225
    %v2227 = vpop.f32.mrb[0].mxu0
    %2228 = vdwg.mxu0
    %vm2229 = vcmp.gt.f32.partialorder %v2226, 0.0
    %v2230 = vmin.f32 %v2226, 0.0
    %v2231 = vmul.f32 %v2230, 1.442695
    %v2232 = vpow.pop %v2231
    %v2233 = vsub.f32 %v2232, 1.0
    %v2234 = vsel %vm2229, %v2226, %v2233
    %v2236 = vsel %vm255, %v2234, 0
    %2238 = vmatprep.subr.mxu0 0.0
    %2239 = vmatpush1.msra.mxu0 %v955
    %2240 = vmatprep.subr.mxu0 0.0
    %2241 = vmatpush1.msra.mxu0 %v956
    %2242 = vmatprep.subr.mxu0 0.0
    %2243 = vmatpush1.msra.mxu0 %v957
    %2244 = vmatprep.subr.mxu0 0.0
    %2245 = vmatpush1.msra.mxu0 %v958
    %2246 = vmatprep.subr.mxu0 0.0
    %2247 = vmatpush1.msra.mxu0 0.0
    %2248 = vmatprep.subr.mxu0 0.0
    %2249 = vmatpush1.msra.mxu0 0.0
    %2250 = vmatprep.subr.mxu0 0.0
    %2251 = vmatpush1.msra.mxu0 0.0
    %2252 = vmatprep.subr.mxu0 0.0
    %2253 = vmatpush1.msra.mxu0 0.0
    %2254 = vmatprep.subr.mxu0 0.0
    %2255 = vmatpush1.msra.mxu0 0.0
    %2256 = vmatprep.subr.mxu0 0.0
    %2257 = vmatpush1.msra.mxu0 0.0
    %2258 = vmatprep.subr.mxu0 0.0
    %2259 = vmatpush1.msra.mxu0 0.0
    %2260 = vmatprep.subr.mxu0 0.0
    %2261 = vmatpush1.msra.mxu0 0.0
    %2262 = vmatprep.subr.mxu0 0.0
    %2263 = vmatpush1.msra.mxu0 0.0
    %2264 = vmatprep.subr.mxu0 0.0
    %2265 = vmatpush1.msra.mxu0 0.0
    %2266 = vmatprep.subr.mxu0 0.0
    %2267 = vmatpush1.msra.mxu0 0.0
    %2268 = vmatprep.subr.mxu0 0.0
    %2269 = vmatpush1.msra.mxu0 0.0
    %2270 = vmatprep.subr.mxu0 0.0
    %2271 = vmatpush1.msra.mxu0 0.0
    %2272 = vmatprep.subr.mxu0 0.0
    %2273 = vmatpush1.msra.mxu0 0.0
    %2274 = vmatprep.subr.mxu0 0.0
    %2275 = vmatpush1.msra.mxu0 0.0
    %2276 = vmatprep.subr.mxu0 0.0
    %2277 = vmatpush1.msra.mxu0 0.0
    %2278 = vmatprep.subr.mxu0 0.0
    %2279 = vmatpush1.msra.mxu0 0.0
    %2280 = vmatprep.subr.mxu0 0.0
    %2281 = vmatpush1.msra.mxu0 0.0
    %2282 = vmatprep.subr.mxu0 0.0
    %2283 = vmatpush1.msra.mxu0 0.0
    %2284 = vmatprep.subr.mxu0 0.0
    %2285 = vmatpush1.msra.mxu0 0.0
    %2286 = vmatprep.subr.mxu0 0.0
    %2287 = vmatpush1.msra.mxu0 0.0
    %2288 = vmatprep.subr.mxu0 0.0
    %2289 = vmatpush1.msra.mxu0 0.0
    %2290 = vmatprep.subr.mxu0 0.0
    %2291 = vmatpush1.msra.mxu0 0.0
    %2292 = vmatprep.subr.mxu0 0.0
    %2293 = vmatpush1.msra.mxu0 0.0
    %2294 = vmatprep.subr.mxu0 0.0
    %2295 = vmatpush1.msra.mxu0 0.0
    %2296 = vmatprep.subr.mxu0 0.0
    %2297 = vmatpush1.msra.mxu0 0.0
    %2298 = vmatprep.subr.mxu0 0.0
    %2299 = vmatpush1.msra.mxu0 0.0
    %2300 = vmatprep.subr.mxu0 0.0
    %2301 = vmatpush1.msra.mxu0 0.0
    %2302 = vmatprep.mubr.f32.mxu0 0.0
    %2303 = vmatmul.mubr.f32.gmra.mrb[0].mxu0 %v2236
    %v2304 = vpop.f32.mrb[0].mxu0
    %v2305 = vadd.f32 %v978, %v2304
    %v2306 = vpop.f32.mrb[0].mxu0
    %2307 = vdwg.mxu0
    %v2308 = vsub.f32 %v1932, %v2118
    %v2309 = vadd.f32 %v2308, %v2305
    %v2310 = vmul.f32 %v2121, %v2309
    %v2311 = vadd.f32 %v1748, %v2310
    %2313 = vset.pattern.permute.xlu0 0
    %2314 = vperm.xlu0 %2313, %v2311
    %v2315 = vpop.permute.xlu0 %2314
    %v2317 = vmul.f32 %v2315, %v991
    %v2318 = vadd.f32 %v964, %v2317
    %2319 = vset.pattern.permute.xlu0 1
    %2320 = vperm.xlu0 %2319, %v2311
    %v2321 = vpop.permute.xlu0 %2320
    %v2323 = vmul.f32 %v2321, %v1001
    %v2324 = vadd.f32 %v2318, %v2323
    %2325 = vset.pattern.permute.xlu0 2
    %2326 = vperm.xlu0 %2325, %v2311
    %v2327 = vpop.permute.xlu0 %2326
    %v2329 = vmul.f32 %v2327, %v1011
    %v2330 = vadd.f32 %v2324, %v2329
    %2331 = vset.pattern.permute.xlu0 3
    %2332 = vperm.xlu0 %2331, %v2311
    %v2333 = vpop.permute.xlu0 %2332
    %v2335 = vmul.f32 %v2333, %v1021
    %v2336 = vadd.f32 %v2330, %v2335
    %vm2337 = vcmp.gt.f32.partialorder %v2336, 0.0
    %v2338 = vmin.f32 %v2336, 0.0
    %v2339 = vmul.f32 %v2338, 1.442695
    %v2340 = vpow.pop %v2339
    %v2341 = vsub.f32 %v2340, 1.0
    %v2342 = vsel %vm2337, %v2336, %v2341
    %v2344 = vsel %vm255, %v2342, 0
    %2346 = vmatprep.subr.mxu0 0.0
    %2347 = vmatpush1.msra.mxu0 %v951
    %2348 = vmatprep.subr.mxu0 0.0
    %2349 = vmatpush1.msra.mxu0 %v952
    %2350 = vmatprep.subr.mxu0 0.0
    %2351 = vmatpush1.msra.mxu0 %v953
    %2352 = vmatprep.subr.mxu0 0.0
    %2353 = vmatpush1.msra.mxu0 %v954
    %2354 = vmatprep.subr.mxu0 0.0
    %2355 = vmatpush1.msra.mxu0 0.0
    %2356 = vmatprep.subr.mxu0 0.0
    %2357 = vmatpush1.msra.mxu0 0.0
    %2358 = vmatprep.subr.mxu0 0.0
    %2359 = vmatpush1.msra.mxu0 0.0
    %2360 = vmatprep.subr.mxu0 0.0
    %2361 = vmatpush1.msra.mxu0 0.0
    %2362 = vmatprep.subr.mxu0 0.0
    %2363 = vmatpush1.msra.mxu0 0.0
    %2364 = vmatprep.subr.mxu0 0.0
    %2365 = vmatpush1.msra.mxu0 0.0
    %2366 = vmatprep.subr.mxu0 0.0
    %2367 = vmatpush1.msra.mxu0 0.0
    %2368 = vmatprep.subr.mxu0 0.0
    %2369 = vmatpush1.msra.mxu0 0.0
    %2370 = vmatprep.subr.mxu0 0.0
    %2371 = vmatpush1.msra.mxu0 0.0
    %2372 = vmatprep.subr.mxu0 0.0
    %2373 = vmatpush1.msra.mxu0 0.0
    %2374 = vmatprep.subr.mxu0 0.0
    %2375 = vmatpush1.msra.mxu0 0.0
    %2376 = vmatprep.subr.mxu0 0.0
    %2377 = vmatpush1.msra.mxu0 0.0
    %2378 = vmatprep.subr.mxu0 0.0
    %2379 = vmatpush1.msra.mxu0 0.0
    %2380 = vmatprep.subr.mxu0 0.0
    %2381 = vmatpush1.msra.mxu0 0.0
    %2382 = vmatprep.subr.mxu0 0.0
    %2383 = vmatpush1.msra.mxu0 0.0
    %2384 = vmatprep.subr.mxu0 0.0
    %2385 = vmatpush1.msra.mxu0 0.0
    %2386 = vmatprep.subr.mxu0 0.0
    %2387 = vmatpush1.msra.mxu0 0.0
    %2388 = vmatprep.subr.mxu0 0.0
    %2389 = vmatpush1.msra.mxu0 0.0
    %2390 = vmatprep.subr.mxu0 0.0
    %2391 = vmatpush1.msra.mxu0 0.0
    %2392 = vmatprep.subr.mxu0 0.0
    %2393 = vmatpush1.msra.mxu0 0.0
    %2394 = vmatprep.subr.mxu0 0.0
    %2395 = vmatpush1.msra.mxu0 0.0
    %2396 = vmatprep.subr.mxu0 0.0
    %2397 = vmatpush1.msra.mxu0 0.0
    %2398 = vmatprep.subr.mxu0 0.0
    %2399 = vmatpush1.msra.mxu0 0.0
    %2400 = vmatprep.subr.mxu0 0.0
    %2401 = vmatpush1.msra.mxu0 0.0
    %2402 = vmatprep.subr.mxu0 0.0
    %2403 = vmatpush1.msra.mxu0 0.0
    %2404 = vmatprep.subr.mxu0 0.0
    %2405 = vmatpush1.msra.mxu0 0.0
    %2406 = vmatprep.subr.mxu0 0.0
    %2407 = vmatpush1.msra.mxu0 0.0
    %2408 = vmatprep.subr.mxu0 0.0
    %2409 = vmatpush1.msra.mxu0 0.0
    %2410 = vmatprep.mubr.f32.mxu0 0.0
    %2411 = vmatmul.mubr.f32.gmra.mrb[0].mxu0 %v2344
    %v2412 = vpop.f32.mrb[0].mxu0
    %v2413 = vadd.f32 %v971, %v2412
    %v2414 = vpop.f32.mrb[0].mxu0
    %2415 = vdwg.mxu0
    %vm2416 = vcmp.gt.f32.partialorder %v2413, 0.0
    %v2417 = vmin.f32 %v2413, 0.0
    %v2418 = vmul.f32 %v2417, 1.442695
    %v2419 = vpow.pop %v2418
    %v2420 = vsub.f32 %v2419, 1.0
    %v2421 = vsel %vm2416, %v2413, %v2420
    %v2423 = vsel %vm255, %v2421, 0
    %2425 = vmatprep.subr.mxu0 0.0
    %2426 = vmatpush1.msra.mxu0 %v955
    %2427 = vmatprep.subr.mxu0 0.0
    %2428 = vmatpush1.msra.mxu0 %v956
    %2429 = vmatprep.subr.mxu0 0.0
    %2430 = vmatpush1.msra.mxu0 %v957
    %2431 = vmatprep.subr.mxu0 0.0
    %2432 = vmatpush1.msra.mxu0 %v958
    %2433 = vmatprep.subr.mxu0 0.0
    %2434 = vmatpush1.msra.mxu0 0.0
    %2435 = vmatprep.subr.mxu0 0.0
    %2436 = vmatpush1.msra.mxu0 0.0
    %2437 = vmatprep.subr.mxu0 0.0
    %2438 = vmatpush1.msra.mxu0 0.0
    %2439 = vmatprep.subr.mxu0 0.0
    %2440 = vmatpush1.msra.mxu0 0.0
    %2441 = vmatprep.subr.mxu0 0.0
    %2442 = vmatpush1.msra.mxu0 0.0
    %2443 = vmatprep.subr.mxu0 0.0
    %2444 = vmatpush1.msra.mxu0 0.0
    %2445 = vmatprep.subr.mxu0 0.0
    %2446 = vmatpush1.msra.mxu0 0.0
    %2447 = vmatprep.subr.mxu0 0.0
    %2448 = vmatpush1.msra.mxu0 0.0
    %2449 = vmatprep.subr.mxu0 0.0
    %2450 = vmatpush1.msra.mxu0 0.0
    %2451 = vmatprep.subr.mxu0 0.0
    %2452 = vmatpush1.msra.mxu0 0.0
    %2453 = vmatprep.subr.mxu0 0.0
    %2454 = vmatpush1.msra.mxu0 0.0
    %2455 = vmatprep.subr.mxu0 0.0
    %2456 = vmatpush1.msra.mxu0 0.0
    %2457 = vmatprep.subr.mxu0 0.0
    %2458 = vmatpush1.msra.mxu0 0.0
    %2459 = vmatprep.subr.mxu0 0.0
    %2460 = vmatpush1.msra.mxu0 0.0
    %2461 = vmatprep.subr.mxu0 0.0
    %2462 = vmatpush1.msra.mxu0 0.0
    %2463 = vmatprep.subr.mxu0 0.0
    %2464 = vmatpush1.msra.mxu0 0.0
    %2465 = vmatprep.subr.mxu0 0.0
    %2466 = vmatpush1.msra.mxu0 0.0
    %2467 = vmatprep.subr.mxu0 0.0
    %2468 = vmatpush1.msra.mxu0 0.0
    %2469 = vmatprep.subr.mxu0 0.0
    %2470 = vmatpush1.msra.mxu0 0.0
    %2471 = vmatprep.subr.mxu0 0.0
    %2472 = vmatpush1.msra.mxu0 0.0
    %2473 = vmatprep.subr.mxu0 0.0
    %2474 = vmatpush1.msra.mxu0 0.0
    %2475 = vmatprep.subr.mxu0 0.0
    %2476 = vmatpush1.msra.mxu0 0.0
    %2477 = vmatprep.subr.mxu0 0.0
    %2478 = vmatpush1.msra.mxu0 0.0
    %2479 = vmatprep.subr.mxu0 0.0
    %2480 = vmatpush1.msra.mxu0 0.0
    %2481 = vmatprep.subr.mxu0 0.0
    %2482 = vmatpush1.msra.mxu0 0.0
    %2483 = vmatprep.subr.mxu0 0.0
    %2484 = vmatpush1.msra.mxu0 0.0
    %2485 = vmatprep.subr.mxu0 0.0
    %2486 = vmatpush1.msra.mxu0 0.0
    %2487 = vmatprep.subr.mxu0 0.0
    %2488 = vmatpush1.msra.mxu0 0.0
    %2489 = vmatprep.mubr.f32.mxu0 0.0
    %2490 = vmatmul.mubr.f32.gmra.mrb[0].mxu0 %v2423
    %v2491 = vpop.f32.mrb[0].mxu0
    %v2492 = vadd.f32 %v978, %v2491
    %v2493 = vpop.f32.mrb[0].mxu0
    %2494 = vdwg.mxu0
    %v2495 = vadd.f32 %v2118, %v2305
    %v2496 = vmul.f32 %v2495, 3.0
    %v2497 = vadd.f32 %v1932, %v2496
    %v2498 = vadd.f32 %v2497, %v2492
    %v2499 = vstv %s1751
    %v2500 = vmul.f32 %v2499, %v2498
    %v2501 = vadd.f32 %v1748, %v2500
    %s2502 = sld [smem:[#allocation2 + $0x2]]
    %s2503 = sld [smem:[#allocation4 + $0x2]]
    %s2504 = sld [smem:[#allocation6 + $0x2]]
    %2506 = vset.pattern.permute.xlu0 0
    %2507 = vperm.xlu0 %2506, %v2501
    %v2508 = vpop.permute.xlu0 %2507
    %v2510 = vmul.f32 %v2508, %v991
    %v2511 = vadd.f32 %v964, %v2510
    %2512 = vset.pattern.permute.xlu0 1
    %2513 = vperm.xlu0 %2512, %v2501
    %v2514 = vpop.permute.xlu0 %2513
    %v2516 = vmul.f32 %v2514, %v1001
    %v2517 = vadd.f32 %v2511, %v2516
    %2518 = vset.pattern.permute.xlu0 2
    %2519 = vperm.xlu0 %2518, %v2501
    %v2520 = vpop.permute.xlu0 %2519
    %v2522 = vmul.f32 %v2520, %v1011
    %v2523 = vadd.f32 %v2517, %v2522
    %2524 = vset.pattern.permute.xlu0 3
    %2525 = vperm.xlu0 %2524, %v2501
    %v2526 = vpop.permute.xlu0 %2525
    %v2528 = vmul.f32 %v2526, %v1021
    %v2529 = vadd.f32 %v2523, %v2528
    %vm2530 = vcmp.gt.f32.partialorder %v2529, 0.0
    %v2531 = vmin.f32 %v2529, 0.0
    %v2532 = vmul.f32 %v2531, 1.442695
    %v2533 = vpow.pop %v2532
    %v2534 = vsub.f32 %v2533, 1.0
    %v2535 = vsel %vm2530, %v2529, %v2534
    %v2537 = vsel %vm255, %v2535, 0
    %2539 = vmatprep.subr.mxu0 0.0
    %2540 = vmatpush1.msra.mxu0 %v951
    %2541 = vmatprep.subr.mxu0 0.0
    %2542 = vmatpush1.msra.mxu0 %v952
    %2543 = vmatprep.subr.mxu0 0.0
    %2544 = vmatpush1.msra.mxu0 %v953
    %2545 = vmatprep.subr.mxu0 0.0
    %2546 = vmatpush1.msra.mxu0 %v954
    %2547 = vmatprep.subr.mxu0 0.0
    %2548 = vmatpush1.msra.mxu0 0.0
    %2549 = vmatprep.subr.mxu0 0.0
    %2550 = vmatpush1.msra.mxu0 0.0
    %2551 = vmatprep.subr.mxu0 0.0
    %2552 = vmatpush1.msra.mxu0 0.0
    %2553 = vmatprep.subr.mxu0 0.0
    %2554 = vmatpush1.msra.mxu0 0.0
    %2555 = vmatprep.subr.mxu0 0.0
    %2556 = vmatpush1.msra.mxu0 0.0
    %2557 = vmatprep.subr.mxu0 0.0
    %2558 = vmatpush1.msra.mxu0 0.0
    %2559 = vmatprep.subr.mxu0 0.0
    %2560 = vmatpush1.msra.mxu0 0.0
    %2561 = vmatprep.subr.mxu0 0.0
    %2562 = vmatpush1.msra.mxu0 0.0
    %2563 = vmatprep.subr.mxu0 0.0
    %2564 = vmatpush1.msra.mxu0 0.0
    %2565 = vmatprep.subr.mxu0 0.0
    %2566 = vmatpush1.msra.mxu0 0.0
    %2567 = vmatprep.subr.mxu0 0.0
    %2568 = vmatpush1.msra.mxu0 0.0
    %2569 = vmatprep.subr.mxu0 0.0
    %2570 = vmatpush1.msra.mxu0 0.0
    %2571 = vmatprep.subr.mxu0 0.0
    %2572 = vmatpush1.msra.mxu0 0.0
    %2573 = vmatprep.subr.mxu0 0.0
    %2574 = vmatpush1.msra.mxu0 0.0
    %2575 = vmatprep.subr.mxu0 0.0
    %2576 = vmatpush1.msra.mxu0 0.0
    %2577 = vmatprep.subr.mxu0 0.0
    %2578 = vmatpush1.msra.mxu0 0.0
    %2579 = vmatprep.subr.mxu0 0.0
    %2580 = vmatpush1.msra.mxu0 0.0
    %2581 = vmatprep.subr.mxu0 0.0
    %2582 = vmatpush1.msra.mxu0 0.0
    %2583 = vmatprep.subr.mxu0 0.0
    %2584 = vmatpush1.msra.mxu0 0.0
    %2585 = vmatprep.subr.mxu0 0.0
    %2586 = vmatpush1.msra.mxu0 0.0
    %2587 = vmatprep.subr.mxu0 0.0
    %2588 = vmatpush1.msra.mxu0 0.0
    %2589 = vmatprep.subr.mxu0 0.0
    %2590 = vmatpush1.msra.mxu0 0.0
    %2591 = vmatprep.subr.mxu0 0.0
    %2592 = vmatpush1.msra.mxu0 0.0
    %2593 = vmatprep.subr.mxu0 0.0
    %2594 = vmatpush1.msra.mxu0 0.0
    %2595 = vmatprep.subr.mxu0 0.0
    %2596 = vmatpush1.msra.mxu0 0.0
    %2597 = vmatprep.subr.mxu0 0.0
    %2598 = vmatpush1.msra.mxu0 0.0
    %2599 = vmatprep.subr.mxu0 0.0
    %2600 = vmatpush1.msra.mxu0 0.0
    %2601 = vmatprep.subr.mxu0 0.0
    %2602 = vmatpush1.msra.mxu0 0.0
    %2603 = vmatprep.mubr.f32.mxu0 0.0
    %2604 = vmatmul.mubr.f32.gmra.mrb[0].mxu0 %v2537
    %v2605 = vpop.f32.mrb[0].mxu0
    %v2606 = vadd.f32 %v971, %v2605
    %v2607 = vpop.f32.mrb[0].mxu0
    %2608 = vdwg.mxu0
    %vm2609 = vcmp.gt.f32.partialorder %v2606, 0.0
    %v2610 = vmin.f32 %v2606, 0.0
    %v2611 = vmul.f32 %v2610, 1.442695
    %v2612 = vpow.pop %v2611
    %v2613 = vsub.f32 %v2612, 1.0
    %v2614 = vsel %vm2609, %v2606, %v2613
    %v2616 = vsel %vm255, %v2614, 0
    %2618 = vmatprep.subr.mxu0 0.0
    %2619 = vmatpush1.msra.mxu0 %v955
    %2620 = vmatprep.subr.mxu0 0.0
    %2621 = vmatpush1.msra.mxu0 %v956
    %2622 = vmatprep.subr.mxu0 0.0
    %2623 = vmatpush1.msra.mxu0 %v957
    %2624 = vmatprep.subr.mxu0 0.0
    %2625 = vmatpush1.msra.mxu0 %v958
    %2626 = vmatprep.subr.mxu0 0.0
    %2627 = vmatpush1.msra.mxu0 0.0
    %2628 = vmatprep.subr.mxu0 0.0
    %2629 = vmatpush1.msra.mxu0 0.0
    %2630 = vmatprep.subr.mxu0 0.0
    %2631 = vmatpush1.msra.mxu0 0.0
    %2632 = vmatprep.subr.mxu0 0.0
    %2633 = vmatpush1.msra.mxu0 0.0
    %2634 = vmatprep.subr.mxu0 0.0
    %2635 = vmatpush1.msra.mxu0 0.0
    %2636 = vmatprep.subr.mxu0 0.0
    %2637 = vmatpush1.msra.mxu0 0.0
    %2638 = vmatprep.subr.mxu0 0.0
    %2639 = vmatpush1.msra.mxu0 0.0
    %2640 = vmatprep.subr.mxu0 0.0
    %2641 = vmatpush1.msra.mxu0 0.0
    %2642 = vmatprep.subr.mxu0 0.0
    %2643 = vmatpush1.msra.mxu0 0.0
    %2644 = vmatprep.subr.mxu0 0.0
    %2645 = vmatpush1.msra.mxu0 0.0
    %2646 = vmatprep.subr.mxu0 0.0
    %2647 = vmatpush1.msra.mxu0 0.0
    %2648 = vmatprep.subr.mxu0 0.0
    %2649 = vmatpush1.msra.mxu0 0.0
    %2650 = vmatprep.subr.mxu0 0.0
    %2651 = vmatpush1.msra.mxu0 0.0
    %2652 = vmatprep.subr.mxu0 0.0
    %2653 = vmatpush1.msra.mxu0 0.0
    %2654 = vmatprep.subr.mxu0 0.0
    %2655 = vmatpush1.msra.mxu0 0.0
    %2656 = vmatprep.subr.mxu0 0.0
    %2657 = vmatpush1.msra.mxu0 0.0
    %2658 = vmatprep.subr.mxu0 0.0
    %2659 = vmatpush1.msra.mxu0 0.0
    %2660 = vmatprep.subr.mxu0 0.0
    %2661 = vmatpush1.msra.mxu0 0.0
    %2662 = vmatprep.subr.mxu0 0.0
    %2663 = vmatpush1.msra.mxu0 0.0
    %2664 = vmatprep.subr.mxu0 0.0
    %2665 = vmatpush1.msra.mxu0 0.0
    %2666 = vmatprep.subr.mxu0 0.0
    %2667 = vmatpush1.msra.mxu0 0.0
    %2668 = vmatprep.subr.mxu0 0.0
    %2669 = vmatpush1.msra.mxu0 0.0
    %2670 = vmatprep.subr.mxu0 0.0
    %2671 = vmatpush1.msra.mxu0 0.0
    %2672 = vmatprep.subr.mxu0 0.0
    %2673 = vmatpush1.msra.mxu0 0.0
    %2674 = vmatprep.subr.mxu0 0.0
    %2675 = vmatpush1.msra.mxu0 0.0
    %2676 = vmatprep.subr.mxu0 0.0
    %2677 = vmatpush1.msra.mxu0 0.0
    %2678 = vmatprep.subr.mxu0 0.0
    %2679 = vmatpush1.msra.mxu0 0.0
    %2680 = vmatprep.subr.mxu0 0.0
    %2681 = vmatpush1.msra.mxu0 0.0
    %2682 = vmatprep.mubr.f32.mxu0 0.0
    %2683 = vmatmul.mubr.f32.gmra.mrb[0].mxu0 %v2616
    %v2684 = vpop.f32.mrb[0].mxu0
    %v2685 = vadd.f32 %v978, %v2684
    %v2686 = vpop.f32.mrb[0].mxu0
    %2687 = vdwg.mxu0
    %v2688 = vstv %s2503
    %v2689 = vmul.f32 %v2688, %v2685
    %v2690 = vadd.f32 %v2501, %v2689
    %2692 = vset.pattern.permute.xlu0 0
    %2693 = vperm.xlu0 %2692, %v2690
    %v2694 = vpop.permute.xlu0 %2693
    %v2696 = vmul.f32 %v2694, %v991
    %v2697 = vadd.f32 %v964, %v2696
    %2698 = vset.pattern.permute.xlu0 1
    %2699 = vperm.xlu0 %2698, %v2690
    %v2700 = vpop.permute.xlu0 %2699
    %v2702 = vmul.f32 %v2700, %v1001
    %v2703 = vadd.f32 %v2697, %v2702
    %2704 = vset.pattern.permute.xlu0 2
    %2705 = vperm.xlu0 %2704, %v2690
    %v2706 = vpop.permute.xlu0 %2705
    %v2708 = vmul.f32 %v2706, %v1011
    %v2709 = vadd.f32 %v2703, %v2708
    %2710 = vset.pattern.permute.xlu0 3
    %2711 = vperm.xlu0 %2710, %v2690
    %v2712 = vpop.permute.xlu0 %2711
    %v2714 = vmul.f32 %v2712, %v1021
    %v2715 = vadd.f32 %v2709, %v2714
    %vm2716 = vcmp.gt.f32.partialorder %v2715, 0.0
    %v2717 = vmin.f32 %v2715, 0.0
    %v2718 = vmul.f32 %v2717, 1.442695
    %v2719 = vpow.pop %v2718
    %v2720 = vsub.f32 %v2719, 1.0
    %v2721 = vsel %vm2716, %v2715, %v2720
    %v2723 = vsel %vm255, %v2721, 0
    %2725 = vmatprep.subr.mxu0 0.0
    %2726 = vmatpush1.msra.mxu0 %v951
    %2727 = vmatprep.subr.mxu0 0.0
    %2728 = vmatpush1.msra.mxu0 %v952
    %2729 = vmatprep.subr.mxu0 0.0
    %2730 = vmatpush1.msra.mxu0 %v953
    %2731 = vmatprep.subr.mxu0 0.0
    %2732 = vmatpush1.msra.mxu0 %v954
    %2733 = vmatprep.subr.mxu0 0.0
    %2734 = vmatpush1.msra.mxu0 0.0
    %2735 = vmatprep.subr.mxu0 0.0
    %2736 = vmatpush1.msra.mxu0 0.0
    %2737 = vmatprep.subr.mxu0 0.0
    %2738 = vmatpush1.msra.mxu0 0.0
    %2739 = vmatprep.subr.mxu0 0.0
    %2740 = vmatpush1.msra.mxu0 0.0
    %2741 = vmatprep.subr.mxu0 0.0
    %2742 = vmatpush1.msra.mxu0 0.0
    %2743 = vmatprep.subr.mxu0 0.0
    %2744 = vmatpush1.msra.mxu0 0.0
    %2745 = vmatprep.subr.mxu0 0.0
    %2746 = vmatpush1.msra.mxu0 0.0
    %2747 = vmatprep.subr.mxu0 0.0
    %2748 = vmatpush1.msra.mxu0 0.0
    %2749 = vmatprep.subr.mxu0 0.0
    %2750 = vmatpush1.msra.mxu0 0.0
    %2751 = vmatprep.subr.mxu0 0.0
    %2752 = vmatpush1.msra.mxu0 0.0
    %2753 = vmatprep.subr.mxu0 0.0
    %2754 = vmatpush1.msra.mxu0 0.0
    %2755 = vmatprep.subr.mxu0 0.0
    %2756 = vmatpush1.msra.mxu0 0.0
    %2757 = vmatprep.subr.mxu0 0.0
    %2758 = vmatpush1.msra.mxu0 0.0
    %2759 = vmatprep.subr.mxu0 0.0
    %2760 = vmatpush1.msra.mxu0 0.0
    %2761 = vmatprep.subr.mxu0 0.0
    %2762 = vmatpush1.msra.mxu0 0.0
    %2763 = vmatprep.subr.mxu0 0.0
    %2764 = vmatpush1.msra.mxu0 0.0
    %2765 = vmatprep.subr.mxu0 0.0
    %2766 = vmatpush1.msra.mxu0 0.0
    %2767 = vmatprep.subr.mxu0 0.0
    %2768 = vmatpush1.msra.mxu0 0.0
    %2769 = vmatprep.subr.mxu0 0.0
    %2770 = vmatpush1.msra.mxu0 0.0
    %2771 = vmatprep.subr.mxu0 0.0
    %2772 = vmatpush1.msra.mxu0 0.0
    %2773 = vmatprep.subr.mxu0 0.0
    %2774 = vmatpush1.msra.mxu0 0.0
    %2775 = vmatprep.subr.mxu0 0.0
    %2776 = vmatpush1.msra.mxu0 0.0
    %2777 = vmatprep.subr.mxu0 0.0
    %2778 = vmatpush1.msra.mxu0 0.0
    %2779 = vmatprep.subr.mxu0 0.0
    %2780 = vmatpush1.msra.mxu0 0.0
    %2781 = vmatprep.subr.mxu0 0.0
    %2782 = vmatpush1.msra.mxu0 0.0
    %2783 = vmatprep.subr.mxu0 0.0
    %2784 = vmatpush1.msra.mxu0 0.0
    %2785 = vmatprep.subr.mxu0 0.0
    %2786 = vmatpush1.msra.mxu0 0.0
    %2787 = vmatprep.subr.mxu0 0.0
    %2788 = vmatpush1.msra.mxu0 0.0
    %2789 = vmatprep.mubr.f32.mxu0 0.0
    %2790 = vmatmul.mubr.f32.gmra.mrb[0].mxu0 %v2723
    %v2791 = vpop.f32.mrb[0].mxu0
    %v2792 = vadd.f32 %v971, %v2791
    %v2793 = vpop.f32.mrb[0].mxu0
    %2794 = vdwg.mxu0
    %vm2795 = vcmp.gt.f32.partialorder %v2792, 0.0
    %v2796 = vmin.f32 %v2792, 0.0
    %v2797 = vmul.f32 %v2796, 1.442695
    %v2798 = vpow.pop %v2797
    %v2799 = vsub.f32 %v2798, 1.0
    %v2800 = vsel %vm2795, %v2792, %v2799
    %v2802 = vsel %vm255, %v2800, 0
    %2804 = vmatprep.subr.mxu0 0.0
    %2805 = vmatpush1.msra.mxu0 %v955
    %2806 = vmatprep.subr.mxu0 0.0
    %2807 = vmatpush1.msra.mxu0 %v956
    %2808 = vmatprep.subr.mxu0 0.0
    %2809 = vmatpush1.msra.mxu0 %v957
    %2810 = vmatprep.subr.mxu0 0.0
    %2811 = vmatpush1.msra.mxu0 %v958
    %2812 = vmatprep.subr.mxu0 0.0
    %2813 = vmatpush1.msra.mxu0 0.0
    %2814 = vmatprep.subr.mxu0 0.0
    %2815 = vmatpush1.msra.mxu0 0.0
    %2816 = vmatprep.subr.mxu0 0.0
    %2817 = vmatpush1.msra.mxu0 0.0
    %2818 = vmatprep.subr.mxu0 0.0
    %2819 = vmatpush1.msra.mxu0 0.0
    %2820 = vmatprep.subr.mxu0 0.0
    %2821 = vmatpush1.msra.mxu0 0.0
    %2822 = vmatprep.subr.mxu0 0.0
    %2823 = vmatpush1.msra.mxu0 0.0
    %2824 = vmatprep.subr.mxu0 0.0
    %2825 = vmatpush1.msra.mxu0 0.0
    %2826 = vmatprep.subr.mxu0 0.0
    %2827 = vmatpush1.msra.mxu0 0.0
    %2828 = vmatprep.subr.mxu0 0.0
    %2829 = vmatpush1.msra.mxu0 0.0
    %2830 = vmatprep.subr.mxu0 0.0
    %2831 = vmatpush1.msra.mxu0 0.0
    %2832 = vmatprep.subr.mxu0 0.0
    %2833 = vmatpush1.msra.mxu0 0.0
    %2834 = vmatprep.subr.mxu0 0.0
    %2835 = vmatpush1.msra.mxu0 0.0
    %2836 = vmatprep.subr.mxu0 0.0
    %2837 = vmatpush1.msra.mxu0 0.0
    %2838 = vmatprep.subr.mxu0 0.0
    %2839 = vmatpush1.msra.mxu0 0.0
    %2840 = vmatprep.subr.mxu0 0.0
    %2841 = vmatpush1.msra.mxu0 0.0
    %2842 = vmatprep.subr.mxu0 0.0
    %2843 = vmatpush1.msra.mxu0 0.0
    %2844 = vmatprep.subr.mxu0 0.0
    %2845 = vmatpush1.msra.mxu0 0.0
    %2846 = vmatprep.subr.mxu0 0.0
    %2847 = vmatpush1.msra.mxu0 0.0
    %2848 = vmatprep.subr.mxu0 0.0
    %2849 = vmatpush1.msra.mxu0 0.0
    %2850 = vmatprep.subr.mxu0 0.0
    %2851 = vmatpush1.msra.mxu0 0.0
    %2852 = vmatprep.subr.mxu0 0.0
    %2853 = vmatpush1.msra.mxu0 0.0
    %2854 = vmatprep.subr.mxu0 0.0
    %2855 = vmatpush1.msra.mxu0 0.0
    %2856 = vmatprep.subr.mxu0 0.0
    %2857 = vmatpush1.msra.mxu0 0.0
    %2858 = vmatprep.subr.mxu0 0.0
    %2859 = vmatpush1.msra.mxu0 0.0
    %2860 = vmatprep.subr.mxu0 0.0
    %2861 = vmatpush1.msra.mxu0 0.0
    %2862 = vmatprep.subr.mxu0 0.0
    %2863 = vmatpush1.msra.mxu0 0.0
    %2864 = vmatprep.subr.mxu0 0.0
    %2865 = vmatpush1.msra.mxu0 0.0
    %2866 = vmatprep.subr.mxu0 0.0
    %2867 = vmatpush1.msra.mxu0 0.0
    %2868 = vmatprep.mubr.f32.mxu0 0.0
    %2869 = vmatmul.mubr.f32.gmra.mrb[0].mxu0 %v2802
    %v2870 = vpop.f32.mrb[0].mxu0
    %v2871 = vadd.f32 %v978, %v2870
    %v2872 = vpop.f32.mrb[0].mxu0
    %2873 = vdwg.mxu0
    %v2874 = vstv %s2502
    %v2875 = vmul.f32 %v2874, %v2871
    %v2876 = vadd.f32 %v2501, %v2875
    %v2877 = vsub.f32 %v2876, %v2689
    %2879 = vset.pattern.permute.xlu0 0
    %2880 = vperm.xlu0 %2879, %v2877
    %v2881 = vpop.permute.xlu0 %2880
    %v2883 = vmul.f32 %v2881, %v991
    %v2884 = vadd.f32 %v964, %v2883
    %2885 = vset.pattern.permute.xlu0 1
    %2886 = vperm.xlu0 %2885, %v2877
    %v2887 = vpop.permute.xlu0 %2886
    %v2889 = vmul.f32 %v2887, %v1001
    %v2890 = vadd.f32 %v2884, %v2889
    %2891 = vset.pattern.permute.xlu0 2
    %2892 = vperm.xlu0 %2891, %v2877
    %v2893 = vpop.permute.xlu0 %2892
    %v2895 = vmul.f32 %v2893, %v1011
    %v2896 = vadd.f32 %v2890, %v2895
    %2897 = vset.pattern.permute.xlu0 3
    %2898 = vperm.xlu0 %2897, %v2877
    %v2899 = vpop.permute.xlu0 %2898
    %v2901 = vmul.f32 %v2899, %v1021
    %v2902 = vadd.f32 %v2896, %v2901
    %vm2903 = vcmp.gt.f32.partialorder %v2902, 0.0
    %v2904 = vmin.f32 %v2902, 0.0
    %v2905 = vmul.f32 %v2904, 1.442695
    %v2906 = vpow.pop %v2905
    %v2907 = vsub.f32 %v2906, 1.0
    %v2908 = vsel %vm2903, %v2902, %v2907
    %v2910 = vsel %vm255, %v2908, 0
    %2912 = vmatprep.subr.mxu0 0.0
    %2913 = vmatpush1.msra.mxu0 %v951
    %2914 = vmatprep.subr.mxu0 0.0
    %2915 = vmatpush1.msra.mxu0 %v952
    %2916 = vmatprep.subr.mxu0 0.0
    %2917 = vmatpush1.msra.mxu0 %v953
    %2918 = vmatprep.subr.mxu0 0.0
    %2919 = vmatpush1.msra.mxu0 %v954
    %2920 = vmatprep.subr.mxu0 0.0
    %2921 = vmatpush1.msra.mxu0 0.0
    %2922 = vmatprep.subr.mxu0 0.0
    %2923 = vmatpush1.msra.mxu0 0.0
    %2924 = vmatprep.subr.mxu0 0.0
    %2925 = vmatpush1.msra.mxu0 0.0
    %2926 = vmatprep.subr.mxu0 0.0
    %2927 = vmatpush1.msra.mxu0 0.0
    %2928 = vmatprep.subr.mxu0 0.0
    %2929 = vmatpush1.msra.mxu0 0.0
    %2930 = vmatprep.subr.mxu0 0.0
    %2931 = vmatpush1.msra.mxu0 0.0
    %2932 = vmatprep.subr.mxu0 0.0
    %2933 = vmatpush1.msra.mxu0 0.0
    %2934 = vmatprep.subr.mxu0 0.0
    %2935 = vmatpush1.msra.mxu0 0.0
    %2936 = vmatprep.subr.mxu0 0.0
    %2937 = vmatpush1.msra.mxu0 0.0
    %2938 = vmatprep.subr.mxu0 0.0
    %2939 = vmatpush1.msra.mxu0 0.0
    %2940 = vmatprep.subr.mxu0 0.0
    %2941 = vmatpush1.msra.mxu0 0.0
    %2942 = vmatprep.subr.mxu0 0.0
    %2943 = vmatpush1.msra.mxu0 0.0
    %2944 = vmatprep.subr.mxu0 0.0
    %2945 = vmatpush1.msra.mxu0 0.0
    %2946 = vmatprep.subr.mxu0 0.0
    %2947 = vmatpush1.msra.mxu0 0.0
    %2948 = vmatprep.subr.mxu0 0.0
    %2949 = vmatpush1.msra.mxu0 0.0
    %2950 = vmatprep.subr.mxu0 0.0
    %2951 = vmatpush1.msra.mxu0 0.0
    %2952 = vmatprep.subr.mxu0 0.0
    %2953 = vmatpush1.msra.mxu0 0.0
    %2954 = vmatprep.subr.mxu0 0.0
    %2955 = vmatpush1.msra.mxu0 0.0
    %2956 = vmatprep.subr.mxu0 0.0
    %2957 = vmatpush1.msra.mxu0 0.0
    %2958 = vmatprep.subr.mxu0 0.0
    %2959 = vmatpush1.msra.mxu0 0.0
    %2960 = vmatprep.subr.mxu0 0.0
    %2961 = vmatpush1.msra.mxu0 0.0
    %2962 = vmatprep.subr.mxu0 0.0
    %2963 = vmatpush1.msra.mxu0 0.0
    %2964 = vmatprep.subr.mxu0 0.0
    %2965 = vmatpush1.msra.mxu0 0.0
    %2966 = vmatprep.subr.mxu0 0.0
    %2967 = vmatpush1.msra.mxu0 0.0
    %2968 = vmatprep.subr.mxu0 0.0
    %2969 = vmatpush1.msra.mxu0 0.0
    %2970 = vmatprep.subr.mxu0 0.0
    %2971 = vmatpush1.msra.mxu0 0.0
    %2972 = vmatprep.subr.mxu0 0.0
    %2973 = vmatpush1.msra.mxu0 0.0
    %2974 = vmatprep.subr.mxu0 0.0
    %2975 = vmatpush1.msra.mxu0 0.0
    %2976 = vmatprep.mubr.f32.mxu0 0.0
    %2977 = vmatmul.mubr.f32.gmra.mrb[0].mxu0 %v2910
    %v2978 = vpop.f32.mrb[0].mxu0
    %v2979 = vadd.f32 %v971, %v2978
    %v2980 = vpop.f32.mrb[0].mxu0
    %2981 = vdwg.mxu0
    %vm2982 = vcmp.gt.f32.partialorder %v2979, 0.0
    %v2983 = vmin.f32 %v2979, 0.0
    %v2984 = vmul.f32 %v2983, 1.442695
    %v2985 = vpow.pop %v2984
    %v2986 = vsub.f32 %v2985, 1.0
    %v2987 = vsel %vm2982, %v2979, %v2986
    %v2989 = vsel %vm255, %v2987, 0
    %2991 = vmatprep.subr.mxu0 0.0
    %2992 = vmatpush1.msra.mxu0 %v955
    %2993 = vmatprep.subr.mxu0 0.0
    %2994 = vmatpush1.msra.mxu0 %v956
    %2995 = vmatprep.subr.mxu0 0.0
    %2996 = vmatpush1.msra.mxu0 %v957
    %2997 = vmatprep.subr.mxu0 0.0
    %2998 = vmatpush1.msra.mxu0 %v958
    %2999 = vmatprep.subr.mxu0 0.0
    %3000 = vmatpush1.msra.mxu0 0.0
    %3001 = vmatprep.subr.mxu0 0.0
    %3002 = vmatpush1.msra.mxu0 0.0
    %3003 = vmatprep.subr.mxu0 0.0
    %3004 = vmatpush1.msra.mxu0 0.0
    %3005 = vmatprep.subr.mxu0 0.0
    %3006 = vmatpush1.msra.mxu0 0.0
    %3007 = vmatprep.subr.mxu0 0.0
    %3008 = vmatpush1.msra.mxu0 0.0
    %3009 = vmatprep.subr.mxu0 0.0
    %3010 = vmatpush1.msra.mxu0 0.0
    %3011 = vmatprep.subr.mxu0 0.0
    %3012 = vmatpush1.msra.mxu0 0.0
    %3013 = vmatprep.subr.mxu0 0.0
    %3014 = vmatpush1.msra.mxu0 0.0
    %3015 = vmatprep.subr.mxu0 0.0
    %3016 = vmatpush1.msra.mxu0 0.0
    %3017 = vmatprep.subr.mxu0 0.0
    %3018 = vmatpush1.msra.mxu0 0.0
    %3019 = vmatprep.subr.mxu0 0.0
    %3020 = vmatpush1.msra.mxu0 0.0
    %3021 = vmatprep.subr.mxu0 0.0
    %3022 = vmatpush1.msra.mxu0 0.0
    %3023 = vmatprep.subr.mxu0 0.0
    %3024 = vmatpush1.msra.mxu0 0.0
    %3025 = vmatprep.subr.mxu0 0.0
    %3026 = vmatpush1.msra.mxu0 0.0
    %3027 = vmatprep.subr.mxu0 0.0
    %3028 = vmatpush1.msra.mxu0 0.0
    %3029 = vmatprep.subr.mxu0 0.0
    %3030 = vmatpush1.msra.mxu0 0.0
    %3031 = vmatprep.subr.mxu0 0.0
    %3032 = vmatpush1.msra.mxu0 0.0
    %3033 = vmatprep.subr.mxu0 0.0
    %3034 = vmatpush1.msra.mxu0 0.0
    %3035 = vmatprep.subr.mxu0 0.0
    %3036 = vmatpush1.msra.mxu0 0.0
    %3037 = vmatprep.subr.mxu0 0.0
    %3038 = vmatpush1.msra.mxu0 0.0
    %3039 = vmatprep.subr.mxu0 0.0
    %3040 = vmatpush1.msra.mxu0 0.0
    %3041 = vmatprep.subr.mxu0 0.0
    %3042 = vmatpush1.msra.mxu0 0.0
    %3043 = vmatprep.subr.mxu0 0.0
    %3044 = vmatpush1.msra.mxu0 0.0
    %3045 = vmatprep.subr.mxu0 0.0
    %3046 = vmatpush1.msra.mxu0 0.0
    %3047 = vmatprep.subr.mxu0 0.0
    %3048 = vmatpush1.msra.mxu0 0.0
    %3049 = vmatprep.subr.mxu0 0.0
    %3050 = vmatpush1.msra.mxu0 0.0
    %3051 = vmatprep.subr.mxu0 0.0
    %3052 = vmatpush1.msra.mxu0 0.0
    %3053 = vmatprep.subr.mxu0 0.0
    %3054 = vmatpush1.msra.mxu0 0.0
    %3055 = vmatprep.mubr.f32.mxu0 0.0
    %3056 = vmatmul.mubr.f32.gmra.mrb[0].mxu0 %v2989
    %v3057 = vpop.f32.mrb[0].mxu0
    %v3058 = vadd.f32 %v978, %v3057
    %v3059 = vpop.f32.mrb[0].mxu0
    %3060 = vdwg.mxu0
    %v3061 = vsub.f32 %v2685, %v2871
    %v3062 = vadd.f32 %v3061, %v3058
    %v3063 = vmul.f32 %v2874, %v3062
    %v3064 = vadd.f32 %v2501, %v3063
    %3066 = vset.pattern.permute.xlu0 0
    %3067 = vperm.xlu0 %3066, %v3064
    %v3068 = vpop.permute.xlu0 %3067
    %v3070 = vmul.f32 %v3068, %v991
    %v3071 = vadd.f32 %v964, %v3070
    %3072 = vset.pattern.permute.xlu0 1
    %3073 = vperm.xlu0 %3072, %v3064
    %v3074 = vpop.permute.xlu0 %3073
    %v3076 = vmul.f32 %v3074, %v1001
    %v3077 = vadd.f32 %v3071, %v3076
    %3078 = vset.pattern.permute.xlu0 2
    %3079 = vperm.xlu0 %3078, %v3064
    %v3080 = vpop.permute.xlu0 %3079
    %v3082 = vmul.f32 %v3080, %v1011
    %v3083 = vadd.f32 %v3077, %v3082
    %3084 = vset.pattern.permute.xlu0 3
    %3085 = vperm.xlu0 %3084, %v3064
    %v3086 = vpop.permute.xlu0 %3085
    %v3088 = vmul.f32 %v3086, %v1021
    %v3089 = vadd.f32 %v3083, %v3088
    %vm3090 = vcmp.gt.f32.partialorder %v3089, 0.0
    %v3091 = vmin.f32 %v3089, 0.0
    %v3092 = vmul.f32 %v3091, 1.442695
    %v3093 = vpow.pop %v3092
    %v3094 = vsub.f32 %v3093, 1.0
    %v3095 = vsel %vm3090, %v3089, %v3094
    %v3097 = vsel %vm255, %v3095, 0
    %3099 = vmatprep.subr.mxu0 0.0
    %3100 = vmatpush1.msra.mxu0 %v951
    %3101 = vmatprep.subr.mxu0 0.0
    %3102 = vmatpush1.msra.mxu0 %v952
    %3103 = vmatprep.subr.mxu0 0.0
    %3104 = vmatpush1.msra.mxu0 %v953
    %3105 = vmatprep.subr.mxu0 0.0
    %3106 = vmatpush1.msra.mxu0 %v954
    %3107 = vmatprep.subr.mxu0 0.0
    %3108 = vmatpush1.msra.mxu0 0.0
    %3109 = vmatprep.subr.mxu0 0.0
    %3110 = vmatpush1.msra.mxu0 0.0
    %3111 = vmatprep.subr.mxu0 0.0
    %3112 = vmatpush1.msra.mxu0 0.0
    %3113 = vmatprep.subr.mxu0 0.0
    %3114 = vmatpush1.msra.mxu0 0.0
    %3115 = vmatprep.subr.mxu0 0.0
    %3116 = vmatpush1.msra.mxu0 0.0
    %3117 = vmatprep.subr.mxu0 0.0
    %3118 = vmatpush1.msra.mxu0 0.0
    %3119 = vmatprep.subr.mxu0 0.0
    %3120 = vmatpush1.msra.mxu0 0.0
    %3121 = vmatprep.subr.mxu0 0.0
    %3122 = vmatpush1.msra.mxu0 0.0
    %3123 = vmatprep.subr.mxu0 0.0
    %3124 = vmatpush1.msra.mxu0 0.0
    %3125 = vmatprep.subr.mxu0 0.0
    %3126 = vmatpush1.msra.mxu0 0.0
    %3127 = vmatprep.subr.mxu0 0.0
    %3128 = vmatpush1.msra.mxu0 0.0
    %3129 = vmatprep.subr.mxu0 0.0
    %3130 = vmatpush1.msra.mxu0 0.0
    %3131 = vmatprep.subr.mxu0 0.0
    %3132 = vmatpush1.msra.mxu0 0.0
    %3133 = vmatprep.subr.mxu0 0.0
    %3134 = vmatpush1.msra.mxu0 0.0
    %3135 = vmatprep.subr.mxu0 0.0
    %3136 = vmatpush1.msra.mxu0 0.0
    %3137 = vmatprep.subr.mxu0 0.0
    %3138 = vmatpush1.msra.mxu0 0.0
    %3139 = vmatprep.subr.mxu0 0.0
    %3140 = vmatpush1.msra.mxu0 0.0
    %3141 = vmatprep.subr.mxu0 0.0
    %3142 = vmatpush1.msra.mxu0 0.0
    %3143 = vmatprep.subr.mxu0 0.0
    %3144 = vmatpush1.msra.mxu0 0.0
    %3145 = vmatprep.subr.mxu0 0.0
    %3146 = vmatpush1.msra.mxu0 0.0
    %3147 = vmatprep.subr.mxu0 0.0
    %3148 = vmatpush1.msra.mxu0 0.0
    %3149 = vmatprep.subr.mxu0 0.0
    %3150 = vmatpush1.msra.mxu0 0.0
    %3151 = vmatprep.subr.mxu0 0.0
    %3152 = vmatpush1.msra.mxu0 0.0
    %3153 = vmatprep.subr.mxu0 0.0
    %3154 = vmatpush1.msra.mxu0 0.0
    %3155 = vmatprep.subr.mxu0 0.0
    %3156 = vmatpush1.msra.mxu0 0.0
    %3157 = vmatprep.subr.mxu0 0.0
    %3158 = vmatpush1.msra.mxu0 0.0
    %3159 = vmatprep.subr.mxu0 0.0
    %3160 = vmatpush1.msra.mxu0 0.0
    %3161 = vmatprep.subr.mxu0 0.0
    %3162 = vmatpush1.msra.mxu0 0.0
    %3163 = vmatprep.mubr.f32.mxu0 0.0
    %3164 = vmatmul.mubr.f32.gmra.mrb[0].mxu0 %v3097
    %v3165 = vpop.f32.mrb[0].mxu0
    %v3166 = vadd.f32 %v971, %v3165
    %v3167 = vpop.f32.mrb[0].mxu0
    %3168 = vdwg.mxu0
    %vm3169 = vcmp.gt.f32.partialorder %v3166, 0.0
    %v3170 = vmin.f32 %v3166, 0.0
    %v3171 = vmul.f32 %v3170, 1.442695
    %v3172 = vpow.pop %v3171
    %v3173 = vsub.f32 %v3172, 1.0
    %v3174 = vsel %vm3169, %v3166, %v3173
    %v3176 = vsel %vm255, %v3174, 0
    %3178 = vmatprep.subr.mxu0 0.0
    %3179 = vmatpush1.msra.mxu0 %v955
    %3180 = vmatprep.subr.mxu0 0.0
    %3181 = vmatpush1.msra.mxu0 %v956
    %3182 = vmatprep.subr.mxu0 0.0
    %3183 = vmatpush1.msra.mxu0 %v957
    %3184 = vmatprep.subr.mxu0 0.0
    %3185 = vmatpush1.msra.mxu0 %v958
    %3186 = vmatprep.subr.mxu0 0.0
    %3187 = vmatpush1.msra.mxu0 0.0
    %3188 = vmatprep.subr.mxu0 0.0
    %3189 = vmatpush1.msra.mxu0 0.0
    %3190 = vmatprep.subr.mxu0 0.0
    %3191 = vmatpush1.msra.mxu0 0.0
    %3192 = vmatprep.subr.mxu0 0.0
    %3193 = vmatpush1.msra.mxu0 0.0
    %3194 = vmatprep.subr.mxu0 0.0
    %3195 = vmatpush1.msra.mxu0 0.0
    %3196 = vmatprep.subr.mxu0 0.0
    %3197 = vmatpush1.msra.mxu0 0.0
    %3198 = vmatprep.subr.mxu0 0.0
    %3199 = vmatpush1.msra.mxu0 0.0
    %3200 = vmatprep.subr.mxu0 0.0
    %3201 = vmatpush1.msra.mxu0 0.0
    %3202 = vmatprep.subr.mxu0 0.0
    %3203 = vmatpush1.msra.mxu0 0.0
    %3204 = vmatprep.subr.mxu0 0.0
    %3205 = vmatpush1.msra.mxu0 0.0
    %3206 = vmatprep.subr.mxu0 0.0
    %3207 = vmatpush1.msra.mxu0 0.0
    %3208 = vmatprep.subr.mxu0 0.0
    %3209 = vmatpush1.msra.mxu0 0.0
    %3210 = vmatprep.subr.mxu0 0.0
    %3211 = vmatpush1.msra.mxu0 0.0
    %3212 = vmatprep.subr.mxu0 0.0
    %3213 = vmatpush1.msra.mxu0 0.0
    %3214 = vmatprep.subr.mxu0 0.0
    %3215 = vmatpush1.msra.mxu0 0.0
    %3216 = vmatprep.subr.mxu0 0.0
    %3217 = vmatpush1.msra.mxu0 0.0
    %3218 = vmatprep.subr.mxu0 0.0
    %3219 = vmatpush1.msra.mxu0 0.0
    %3220 = vmatprep.subr.mxu0 0.0
    %3221 = vmatpush1.msra.mxu0 0.0
    %3222 = vmatprep.subr.mxu0 0.0
    %3223 = vmatpush1.msra.mxu0 0.0
    %3224 = vmatprep.subr.mxu0 0.0
    %3225 = vmatpush1.msra.mxu0 0.0
    %3226 = vmatprep.subr.mxu0 0.0
    %3227 = vmatpush1.msra.mxu0 0.0
    %3228 = vmatprep.subr.mxu0 0.0
    %3229 = vmatpush1.msra.mxu0 0.0
    %3230 = vmatprep.subr.mxu0 0.0
    %3231 = vmatpush1.msra.mxu0 0.0
    %3232 = vmatprep.subr.mxu0 0.0
    %3233 = vmatpush1.msra.mxu0 0.0
    %3234 = vmatprep.subr.mxu0 0.0
    %3235 = vmatpush1.msra.mxu0 0.0
    %3236 = vmatprep.subr.mxu0 0.0
    %3237 = vmatpush1.msra.mxu0 0.0
    %3238 = vmatprep.subr.mxu0 0.0
    %3239 = vmatpush1.msra.mxu0 0.0
    %3240 = vmatprep.subr.mxu0 0.0
    %3241 = vmatpush1.msra.mxu0 0.0
    %3242 = vmatprep.mubr.f32.mxu0 0.0
    %3243 = vmatmul.mubr.f32.gmra.mrb[0].mxu0 %v3176
    %v3244 = vpop.f32.mrb[0].mxu0
    %v3245 = vadd.f32 %v978, %v3244
    %v3246 = vpop.f32.mrb[0].mxu0
    %3247 = vdwg.mxu0
    %v3248 = vadd.f32 %v2871, %v3058
    %v3249 = vmul.f32 %v3248, 3.0
    %v3250 = vadd.f32 %v2685, %v3249
    %v3251 = vadd.f32 %v3250, %v3245
    %v3252 = vstv %s2504
    %v3253 = vmul.f32 %v3252, %v3251
    %v3254 = vadd.f32 %v2501, %v3253
    %s3255 = sld [smem:[#allocation2 + $0x3]]
    %s3256 = sld [smem:[#allocation4 + $0x3]]
    %s3257 = sld [smem:[#allocation6 + $0x3]]
    %3259 = vset.pattern.permute.xlu0 0
    %3260 = vperm.xlu0 %3259, %v3254
    %v3261 = vpop.permute.xlu0 %3260
    %v3263 = vmul.f32 %v3261, %v991
    %v3264 = vadd.f32 %v964, %v3263
    %3265 = vset.pattern.permute.xlu0 1
    %3266 = vperm.xlu0 %3265, %v3254
    %v3267 = vpop.permute.xlu0 %3266
    %v3269 = vmul.f32 %v3267, %v1001
    %v3270 = vadd.f32 %v3264, %v3269
    %3271 = vset.pattern.permute.xlu0 2
    %3272 = vperm.xlu0 %3271, %v3254
    %v3273 = vpop.permute.xlu0 %3272
    %v3275 = vmul.f32 %v3273, %v1011
    %v3276 = vadd.f32 %v3270, %v3275
    %3277 = vset.pattern.permute.xlu0 3
    %3278 = vperm.xlu0 %3277, %v3254
    %v3279 = vpop.permute.xlu0 %3278
    %v3281 = vmul.f32 %v3279, %v1021
    %v3282 = vadd.f32 %v3276, %v3281
    %vm3283 = vcmp.gt.f32.partialorder %v3282, 0.0
    %v3284 = vmin.f32 %v3282, 0.0
    %v3285 = vmul.f32 %v3284, 1.442695
    %v3286 = vpow.pop %v3285
    %v3287 = vsub.f32 %v3286, 1.0
    %v3288 = vsel %vm3283, %v3282, %v3287
    %v3290 = vsel %vm255, %v3288, 0
    %3292 = vmatprep.subr.mxu0 0.0
    %3293 = vmatpush1.msra.mxu0 %v951
    %3294 = vmatprep.subr.mxu0 0.0
    %3295 = vmatpush1.msra.mxu0 %v952
    %3296 = vmatprep.subr.mxu0 0.0
    %3297 = vmatpush1.msra.mxu0 %v953
    %3298 = vmatprep.subr.mxu0 0.0
    %3299 = vmatpush1.msra.mxu0 %v954
    %3300 = vmatprep.subr.mxu0 0.0
    %3301 = vmatpush1.msra.mxu0 0.0
    %3302 = vmatprep.subr.mxu0 0.0
    %3303 = vmatpush1.msra.mxu0 0.0
    %3304 = vmatprep.subr.mxu0 0.0
    %3305 = vmatpush1.msra.mxu0 0.0
    %3306 = vmatprep.subr.mxu0 0.0
    %3307 = vmatpush1.msra.mxu0 0.0
    %3308 = vmatprep.subr.mxu0 0.0
    %3309 = vmatpush1.msra.mxu0 0.0
    %3310 = vmatprep.subr.mxu0 0.0
    %3311 = vmatpush1.msra.mxu0 0.0
    %3312 = vmatprep.subr.mxu0 0.0
    %3313 = vmatpush1.msra.mxu0 0.0
    %3314 = vmatprep.subr.mxu0 0.0
    %3315 = vmatpush1.msra.mxu0 0.0
    %3316 = vmatprep.subr.mxu0 0.0
    %3317 = vmatpush1.msra.mxu0 0.0
    %3318 = vmatprep.subr.mxu0 0.0
    %3319 = vmatpush1.msra.mxu0 0.0
    %3320 = vmatprep.subr.mxu0 0.0
    %3321 = vmatpush1.msra.mxu0 0.0
    %3322 = vmatprep.subr.mxu0 0.0
    %3323 = vmatpush1.msra.mxu0 0.0
    %3324 = vmatprep.subr.mxu0 0.0
    %3325 = vmatpush1.msra.mxu0 0.0
    %3326 = vmatprep.subr.mxu0 0.0
    %3327 = vmatpush1.msra.mxu0 0.0
    %3328 = vmatprep.subr.mxu0 0.0
    %3329 = vmatpush1.msra.mxu0 0.0
    %3330 = vmatprep.subr.mxu0 0.0
    %3331 = vmatpush1.msra.mxu0 0.0
    %3332 = vmatprep.subr.mxu0 0.0
    %3333 = vmatpush1.msra.mxu0 0.0
    %3334 = vmatprep.subr.mxu0 0.0
    %3335 = vmatpush1.msra.mxu0 0.0
    %3336 = vmatprep.subr.mxu0 0.0
    %3337 = vmatpush1.msra.mxu0 0.0
    %3338 = vmatprep.subr.mxu0 0.0
    %3339 = vmatpush1.msra.mxu0 0.0
    %3340 = vmatprep.subr.mxu0 0.0
    %3341 = vmatpush1.msra.mxu0 0.0
    %3342 = vmatprep.subr.mxu0 0.0
    %3343 = vmatpush1.msra.mxu0 0.0
    %3344 = vmatprep.subr.mxu0 0.0
    %3345 = vmatpush1.msra.mxu0 0.0
    %3346 = vmatprep.subr.mxu0 0.0
    %3347 = vmatpush1.msra.mxu0 0.0
    %3348 = vmatprep.subr.mxu0 0.0
    %3349 = vmatpush1.msra.mxu0 0.0
    %3350 = vmatprep.subr.mxu0 0.0
    %3351 = vmatpush1.msra.mxu0 0.0
    %3352 = vmatprep.subr.mxu0 0.0
    %3353 = vmatpush1.msra.mxu0 0.0
    %3354 = vmatprep.subr.mxu0 0.0
    %3355 = vmatpush1.msra.mxu0 0.0
    %3356 = vmatprep.mubr.f32.mxu0 0.0
    %3357 = vmatmul.mubr.f32.gmra.mrb[0].mxu0 %v3290
    %v3358 = vpop.f32.mrb[0].mxu0
    %v3359 = vadd.f32 %v971, %v3358
    %v3360 = vpop.f32.mrb[0].mxu0
    %3361 = vdwg.mxu0
    %vm3362 = vcmp.gt.f32.partialorder %v3359, 0.0
    %v3363 = vmin.f32 %v3359, 0.0
    %v3364 = vmul.f32 %v3363, 1.442695
    %v3365 = vpow.pop %v3364
    %v3366 = vsub.f32 %v3365, 1.0
    %v3367 = vsel %vm3362, %v3359, %v3366
    %v3369 = vsel %vm255, %v3367, 0
    %3371 = vmatprep.subr.mxu0 0.0
    %3372 = vmatpush1.msra.mxu0 %v955
    %3373 = vmatprep.subr.mxu0 0.0
    %3374 = vmatpush1.msra.mxu0 %v956
    %3375 = vmatprep.subr.mxu0 0.0
    %3376 = vmatpush1.msra.mxu0 %v957
    %3377 = vmatprep.subr.mxu0 0.0
    %3378 = vmatpush1.msra.mxu0 %v958
    %3379 = vmatprep.subr.mxu0 0.0
    %3380 = vmatpush1.msra.mxu0 0.0
    %3381 = vmatprep.subr.mxu0 0.0
    %3382 = vmatpush1.msra.mxu0 0.0
    %3383 = vmatprep.subr.mxu0 0.0
    %3384 = vmatpush1.msra.mxu0 0.0
    %3385 = vmatprep.subr.mxu0 0.0
    %3386 = vmatpush1.msra.mxu0 0.0
    %3387 = vmatprep.subr.mxu0 0.0
    %3388 = vmatpush1.msra.mxu0 0.0
    %3389 = vmatprep.subr.mxu0 0.0
    %3390 = vmatpush1.msra.mxu0 0.0
    %3391 = vmatprep.subr.mxu0 0.0
    %3392 = vmatpush1.msra.mxu0 0.0
    %3393 = vmatprep.subr.mxu0 0.0
    %3394 = vmatpush1.msra.mxu0 0.0
    %3395 = vmatprep.subr.mxu0 0.0
    %3396 = vmatpush1.msra.mxu0 0.0
    %3397 = vmatprep.subr.mxu0 0.0
    %3398 = vmatpush1.msra.mxu0 0.0
    %3399 = vmatprep.subr.mxu0 0.0
    %3400 = vmatpush1.msra.mxu0 0.0
    %3401 = vmatprep.subr.mxu0 0.0
    %3402 = vmatpush1.msra.mxu0 0.0
    %3403 = vmatprep.subr.mxu0 0.0
    %3404 = vmatpush1.msra.mxu0 0.0
    %3405 = vmatprep.subr.mxu0 0.0
    %3406 = vmatpush1.msra.mxu0 0.0
    %3407 = vmatprep.subr.mxu0 0.0
    %3408 = vmatpush1.msra.mxu0 0.0
    %3409 = vmatprep.subr.mxu0 0.0
    %3410 = vmatpush1.msra.mxu0 0.0
    %3411 = vmatprep.subr.mxu0 0.0
    %3412 = vmatpush1.msra.mxu0 0.0
    %3413 = vmatprep.subr.mxu0 0.0
    %3414 = vmatpush1.msra.mxu0 0.0
    %3415 = vmatprep.subr.mxu0 0.0
    %3416 = vmatpush1.msra.mxu0 0.0
    %3417 = vmatprep.subr.mxu0 0.0
    %3418 = vmatpush1.msra.mxu0 0.0
    %3419 = vmatprep.subr.mxu0 0.0
    %3420 = vmatpush1.msra.mxu0 0.0
    %3421 = vmatprep.subr.mxu0 0.0
    %3422 = vmatpush1.msra.mxu0 0.0
    %3423 = vmatprep.subr.mxu0 0.0
    %3424 = vmatpush1.msra.mxu0 0.0
    %3425 = vmatprep.subr.mxu0 0.0
    %3426 = vmatpush1.msra.mxu0 0.0
    %3427 = vmatprep.subr.mxu0 0.0
    %3428 = vmatpush1.msra.mxu0 0.0
    %3429 = vmatprep.subr.mxu0 0.0
    %3430 = vmatpush1.msra.mxu0 0.0
    %3431 = vmatprep.subr.mxu0 0.0
    %3432 = vmatpush1.msra.mxu0 0.0
    %3433 = vmatprep.subr.mxu0 0.0
    %3434 = vmatpush1.msra.mxu0 0.0
    %3435 = vmatprep.mubr.f32.mxu0 0.0
    %3436 = vmatmul.mubr.f32.gmra.mrb[0].mxu0 %v3369
    %v3437 = vpop.f32.mrb[0].mxu0
    %v3438 = vadd.f32 %v978, %v3437
    %v3439 = vpop.f32.mrb[0].mxu0
    %3440 = vdwg.mxu0
    %v3441 = vstv %s3256
    %v3442 = vmul.f32 %v3441, %v3438
    %v3443 = vadd.f32 %v3254, %v3442
    %3445 = vset.pattern.permute.xlu0 0
    %3446 = vperm.xlu0 %3445, %v3443
    %v3447 = vpop.permute.xlu0 %3446
    %v3449 = vmul.f32 %v3447, %v991
    %v3450 = vadd.f32 %v964, %v3449
    %3451 = vset.pattern.permute.xlu0 1
    %3452 = vperm.xlu0 %3451, %v3443
    %v3453 = vpop.permute.xlu0 %3452
    %v3455 = vmul.f32 %v3453, %v1001
    %v3456 = vadd.f32 %v3450, %v3455
    %3457 = vset.pattern.permute.xlu0 2
    %3458 = vperm.xlu0 %3457, %v3443
    %v3459 = vpop.permute.xlu0 %3458
    %v3461 = vmul.f32 %v3459, %v1011
    %v3462 = vadd.f32 %v3456, %v3461
    %3463 = vset.pattern.permute.xlu0 3
    %3464 = vperm.xlu0 %3463, %v3443
    %v3465 = vpop.permute.xlu0 %3464
    %v3467 = vmul.f32 %v3465, %v1021
    %v3468 = vadd.f32 %v3462, %v3467
    %vm3469 = vcmp.gt.f32.partialorder %v3468, 0.0
    %v3470 = vmin.f32 %v3468, 0.0
    %v3471 = vmul.f32 %v3470, 1.442695
    %v3472 = vpow.pop %v3471
    %v3473 = vsub.f32 %v3472, 1.0
    %v3474 = vsel %vm3469, %v3468, %v3473
    %v3476 = vsel %vm255, %v3474, 0
    %3478 = vmatprep.subr.mxu0 0.0
    %3479 = vmatpush1.msra.mxu0 %v951
    %3480 = vmatprep.subr.mxu0 0.0
    %3481 = vmatpush1.msra.mxu0 %v952
    %3482 = vmatprep.subr.mxu0 0.0
    %3483 = vmatpush1.msra.mxu0 %v953
    %3484 = vmatprep.subr.mxu0 0.0
    %3485 = vmatpush1.msra.mxu0 %v954
    %3486 = vmatprep.subr.mxu0 0.0
    %3487 = vmatpush1.msra.mxu0 0.0
    %3488 = vmatprep.subr.mxu0 0.0
    %3489 = vmatpush1.msra.mxu0 0.0
    %3490 = vmatprep.subr.mxu0 0.0
    %3491 = vmatpush1.msra.mxu0 0.0
    %3492 = vmatprep.subr.mxu0 0.0
    %3493 = vmatpush1.msra.mxu0 0.0
    %3494 = vmatprep.subr.mxu0 0.0
    %3495 = vmatpush1.msra.mxu0 0.0
    %3496 = vmatprep.subr.mxu0 0.0
    %3497 = vmatpush1.msra.mxu0 0.0
    %3498 = vmatprep.subr.mxu0 0.0
    %3499 = vmatpush1.msra.mxu0 0.0
    %3500 = vmatprep.subr.mxu0 0.0
    %3501 = vmatpush1.msra.mxu0 0.0
    %3502 = vmatprep.subr.mxu0 0.0
    %3503 = vmatpush1.msra.mxu0 0.0
    %3504 = vmatprep.subr.mxu0 0.0
    %3505 = vmatpush1.msra.mxu0 0.0
    %3506 = vmatprep.subr.mxu0 0.0
    %3507 = vmatpush1.msra.mxu0 0.0
    %3508 = vmatprep.subr.mxu0 0.0
    %3509 = vmatpush1.msra.mxu0 0.0
    %3510 = vmatprep.subr.mxu0 0.0
    %3511 = vmatpush1.msra.mxu0 0.0
    %3512 = vmatprep.subr.mxu0 0.0
    %3513 = vmatpush1.msra.mxu0 0.0
    %3514 = vmatprep.subr.mxu0 0.0
    %3515 = vmatpush1.msra.mxu0 0.0
    %3516 = vmatprep.subr.mxu0 0.0
    %3517 = vmatpush1.msra.mxu0 0.0
    %3518 = vmatprep.subr.mxu0 0.0
    %3519 = vmatpush1.msra.mxu0 0.0
    %3520 = vmatprep.subr.mxu0 0.0
    %3521 = vmatpush1.msra.mxu0 0.0
    %3522 = vmatprep.subr.mxu0 0.0
    %3523 = vmatpush1.msra.mxu0 0.0
    %3524 = vmatprep.subr.mxu0 0.0
    %3525 = vmatpush1.msra.mxu0 0.0
    %3526 = vmatprep.subr.mxu0 0.0
    %3527 = vmatpush1.msra.mxu0 0.0
    %3528 = vmatprep.subr.mxu0 0.0
    %3529 = vmatpush1.msra.mxu0 0.0
    %3530 = vmatprep.subr.mxu0 0.0
    %3531 = vmatpush1.msra.mxu0 0.0
    %3532 = vmatprep.subr.mxu0 0.0
    %3533 = vmatpush1.msra.mxu0 0.0
    %3534 = vmatprep.subr.mxu0 0.0
    %3535 = vmatpush1.msra.mxu0 0.0
    %3536 = vmatprep.subr.mxu0 0.0
    %3537 = vmatpush1.msra.mxu0 0.0
    %3538 = vmatprep.subr.mxu0 0.0
    %3539 = vmatpush1.msra.mxu0 0.0
    %3540 = vmatprep.subr.mxu0 0.0
    %3541 = vmatpush1.msra.mxu0 0.0
    %3542 = vmatprep.mubr.f32.mxu0 0.0
    %3543 = vmatmul.mubr.f32.gmra.mrb[0].mxu0 %v3476
    %v3544 = vpop.f32.mrb[0].mxu0
    %v3545 = vadd.f32 %v971, %v3544
    %v3546 = vpop.f32.mrb[0].mxu0
    %3547 = vdwg.mxu0
    %vm3548 = vcmp.gt.f32.partialorder %v3545, 0.0
    %v3549 = vmin.f32 %v3545, 0.0
    %v3550 = vmul.f32 %v3549, 1.442695
    %v3551 = vpow.pop %v3550
    %v3552 = vsub.f32 %v3551, 1.0
    %v3553 = vsel %vm3548, %v3545, %v3552
    %v3555 = vsel %vm255, %v3553, 0
    %3557 = vmatprep.subr.mxu0 0.0
    %3558 = vmatpush1.msra.mxu0 %v955
    %3559 = vmatprep.subr.mxu0 0.0
    %3560 = vmatpush1.msra.mxu0 %v956
    %3561 = vmatprep.subr.mxu0 0.0
    %3562 = vmatpush1.msra.mxu0 %v957
    %3563 = vmatprep.subr.mxu0 0.0
    %3564 = vmatpush1.msra.mxu0 %v958
    %3565 = vmatprep.subr.mxu0 0.0
    %3566 = vmatpush1.msra.mxu0 0.0
    %3567 = vmatprep.subr.mxu0 0.0
    %3568 = vmatpush1.msra.mxu0 0.0
    %3569 = vmatprep.subr.mxu0 0.0
    %3570 = vmatpush1.msra.mxu0 0.0
    %3571 = vmatprep.subr.mxu0 0.0
    %3572 = vmatpush1.msra.mxu0 0.0
    %3573 = vmatprep.subr.mxu0 0.0
    %3574 = vmatpush1.msra.mxu0 0.0
    %3575 = vmatprep.subr.mxu0 0.0
    %3576 = vmatpush1.msra.mxu0 0.0
    %3577 = vmatprep.subr.mxu0 0.0
    %3578 = vmatpush1.msra.mxu0 0.0
    %3579 = vmatprep.subr.mxu0 0.0
    %3580 = vmatpush1.msra.mxu0 0.0
    %3581 = vmatprep.subr.mxu0 0.0
    %3582 = vmatpush1.msra.mxu0 0.0
    %3583 = vmatprep.subr.mxu0 0.0
    %3584 = vmatpush1.msra.mxu0 0.0
    %3585 = vmatprep.subr.mxu0 0.0
    %3586 = vmatpush1.msra.mxu0 0.0
    %3587 = vmatprep.subr.mxu0 0.0
    %3588 = vmatpush1.msra.mxu0 0.0
    %3589 = vmatprep.subr.mxu0 0.0
    %3590 = vmatpush1.msra.mxu0 0.0
    %3591 = vmatprep.subr.mxu0 0.0
    %3592 = vmatpush1.msra.mxu0 0.0
    %3593 = vmatprep.subr.mxu0 0.0
    %3594 = vmatpush1.msra.mxu0 0.0
    %3595 = vmatprep.subr.mxu0 0.0
    %3596 = vmatpush1.msra.mxu0 0.0
    %3597 = vmatprep.subr.mxu0 0.0
    %3598 = vmatpush1.msra.mxu0 0.0
    %3599 = vmatprep.subr.mxu0 0.0
    %3600 = vmatpush1.msra.mxu0 0.0
    %3601 = vmatprep.subr.mxu0 0.0
    %3602 = vmatpush1.msra.mxu0 0.0
    %3603 = vmatprep.subr.mxu0 0.0
    %3604 = vmatpush1.msra.mxu0 0.0
    %3605 = vmatprep.subr.mxu0 0.0
    %3606 = vmatpush1.msra.mxu0 0.0
    %3607 = vmatprep.subr.mxu0 0.0
    %3608 = vmatpush1.msra.mxu0 0.0
    %3609 = vmatprep.subr.mxu0 0.0
    %3610 = vmatpush1.msra.mxu0 0.0
    %3611 = vmatprep.subr.mxu0 0.0
    %3612 = vmatpush1.msra.mxu0 0.0
    %3613 = vmatprep.subr.mxu0 0.0
    %3614 = vmatpush1.msra.mxu0 0.0
    %3615 = vmatprep.subr.mxu0 0.0
    %3616 = vmatpush1.msra.mxu0 0.0
    %3617 = vmatprep.subr.mxu0 0.0
    %3618 = vmatpush1.msra.mxu0 0.0
    %3619 = vmatprep.subr.mxu0 0.0
    %3620 = vmatpush1.msra.mxu0 0.0
    %3621 = vmatprep.mubr.f32.mxu0 0.0
    %3622 = vmatmul.mubr.f32.gmra.mrb[0].mxu0 %v3555
    %v3623 = vpop.f32.mrb[0].mxu0
    %v3624 = vadd.f32 %v978, %v3623
    %v3625 = vpop.f32.mrb[0].mxu0
    %3626 = vdwg.mxu0
    %v3627 = vstv %s3255
    %v3628 = vmul.f32 %v3627, %v3624
    %v3629 = vadd.f32 %v3254, %v3628
    %v3630 = vsub.f32 %v3629, %v3442
    %3632 = vset.pattern.permute.xlu0 0
    %3633 = vperm.xlu0 %3632, %v3630
    %v3634 = vpop.permute.xlu0 %3633
    %v3636 = vmul.f32 %v3634, %v991
    %v3637 = vadd.f32 %v964, %v3636
    %3638 = vset.pattern.permute.xlu0 1
    %3639 = vperm.xlu0 %3638, %v3630
    %v3640 = vpop.permute.xlu0 %3639
    %v3642 = vmul.f32 %v3640, %v1001
    %v3643 = vadd.f32 %v3637, %v3642
    %3644 = vset.pattern.permute.xlu0 2
    %3645 = vperm.xlu0 %3644, %v3630
    %v3646 = vpop.permute.xlu0 %3645
    %v3648 = vmul.f32 %v3646, %v1011
    %v3649 = vadd.f32 %v3643, %v3648
    %3650 = vset.pattern.permute.xlu0 3
    %3651 = vperm.xlu0 %3650, %v3630
    %v3652 = vpop.permute.xlu0 %3651
    %v3654 = vmul.f32 %v3652, %v1021
    %v3655 = vadd.f32 %v3649, %v3654
    %vm3656 = vcmp.gt.f32.partialorder %v3655, 0.0
    %v3657 = vmin.f32 %v3655, 0.0
    %v3658 = vmul.f32 %v3657, 1.442695
    %v3659 = vpow.pop %v3658
    %v3660 = vsub.f32 %v3659, 1.0
    %v3661 = vsel %vm3656, %v3655, %v3660
    %v3663 = vsel %vm255, %v3661, 0
    %3665 = vmatprep.subr.mxu0 0.0
    %3666 = vmatpush1.msra.mxu0 %v951
    %3667 = vmatprep.subr.mxu0 0.0
    %3668 = vmatpush1.msra.mxu0 %v952
    %3669 = vmatprep.subr.mxu0 0.0
    %3670 = vmatpush1.msra.mxu0 %v953
    %3671 = vmatprep.subr.mxu0 0.0
    %3672 = vmatpush1.msra.mxu0 %v954
    %3673 = vmatprep.subr.mxu0 0.0
    %3674 = vmatpush1.msra.mxu0 0.0
    %3675 = vmatprep.subr.mxu0 0.0
    %3676 = vmatpush1.msra.mxu0 0.0
    %3677 = vmatprep.subr.mxu0 0.0
    %3678 = vmatpush1.msra.mxu0 0.0
    %3679 = vmatprep.subr.mxu0 0.0
    %3680 = vmatpush1.msra.mxu0 0.0
    %3681 = vmatprep.subr.mxu0 0.0
    %3682 = vmatpush1.msra.mxu0 0.0
    %3683 = vmatprep.subr.mxu0 0.0
    %3684 = vmatpush1.msra.mxu0 0.0
    %3685 = vmatprep.subr.mxu0 0.0
    %3686 = vmatpush1.msra.mxu0 0.0
    %3687 = vmatprep.subr.mxu0 0.0
    %3688 = vmatpush1.msra.mxu0 0.0
    %3689 = vmatprep.subr.mxu0 0.0
    %3690 = vmatpush1.msra.mxu0 0.0
    %3691 = vmatprep.subr.mxu0 0.0
    %3692 = vmatpush1.msra.mxu0 0.0
    %3693 = vmatprep.subr.mxu0 0.0
    %3694 = vmatpush1.msra.mxu0 0.0
    %3695 = vmatprep.subr.mxu0 0.0
    %3696 = vmatpush1.msra.mxu0 0.0
    %3697 = vmatprep.subr.mxu0 0.0
    %3698 = vmatpush1.msra.mxu0 0.0
    %3699 = vmatprep.subr.mxu0 0.0
    %3700 = vmatpush1.msra.mxu0 0.0
    %3701 = vmatprep.subr.mxu0 0.0
    %3702 = vmatpush1.msra.mxu0 0.0
    %3703 = vmatprep.subr.mxu0 0.0
    %3704 = vmatpush1.msra.mxu0 0.0
    %3705 = vmatprep.subr.mxu0 0.0
    %3706 = vmatpush1.msra.mxu0 0.0
    %3707 = vmatprep.subr.mxu0 0.0
    %3708 = vmatpush1.msra.mxu0 0.0
    %3709 = vmatprep.subr.mxu0 0.0
    %3710 = vmatpush1.msra.mxu0 0.0
    %3711 = vmatprep.subr.mxu0 0.0
    %3712 = vmatpush1.msra.mxu0 0.0
    %3713 = vmatprep.subr.mxu0 0.0
    %3714 = vmatpush1.msra.mxu0 0.0
    %3715 = vmatprep.subr.mxu0 0.0
    %3716 = vmatpush1.msra.mxu0 0.0
    %3717 = vmatprep.subr.mxu0 0.0
    %3718 = vmatpush1.msra.mxu0 0.0
    %3719 = vmatprep.subr.mxu0 0.0
    %3720 = vmatpush1.msra.mxu0 0.0
    %3721 = vmatprep.subr.mxu0 0.0
    %3722 = vmatpush1.msra.mxu0 0.0
    %3723 = vmatprep.subr.mxu0 0.0
    %3724 = vmatpush1.msra.mxu0 0.0
    %3725 = vmatprep.subr.mxu0 0.0
    %3726 = vmatpush1.msra.mxu0 0.0
    %3727 = vmatprep.subr.mxu0 0.0
    %3728 = vmatpush1.msra.mxu0 0.0
    %3729 = vmatprep.mubr.f32.mxu0 0.0
    %3730 = vmatmul.mubr.f32.gmra.mrb[0].mxu0 %v3663
    %v3731 = vpop.f32.mrb[0].mxu0
    %v3732 = vadd.f32 %v971, %v3731
    %v3733 = vpop.f32.mrb[0].mxu0
    %3734 = vdwg.mxu0
    %vm3735 = vcmp.gt.f32.partialorder %v3732, 0.0
    %v3736 = vmin.f32 %v3732, 0.0
    %v3737 = vmul.f32 %v3736, 1.442695
    %v3738 = vpow.pop %v3737
    %v3739 = vsub.f32 %v3738, 1.0
    %v3740 = vsel %vm3735, %v3732, %v3739
    %v3742 = vsel %vm255, %v3740, 0
    %3744 = vmatprep.subr.mxu0 0.0
    %3745 = vmatpush1.msra.mxu0 %v955
    %3746 = vmatprep.subr.mxu0 0.0
    %3747 = vmatpush1.msra.mxu0 %v956
    %3748 = vmatprep.subr.mxu0 0.0
    %3749 = vmatpush1.msra.mxu0 %v957
    %3750 = vmatprep.subr.mxu0 0.0
    %3751 = vmatpush1.msra.mxu0 %v958
    %3752 = vmatprep.subr.mxu0 0.0
    %3753 = vmatpush1.msra.mxu0 0.0
    %3754 = vmatprep.subr.mxu0 0.0
    %3755 = vmatpush1.msra.mxu0 0.0
    %3756 = vmatprep.subr.mxu0 0.0
    %3757 = vmatpush1.msra.mxu0 0.0
    %3758 = vmatprep.subr.mxu0 0.0
    %3759 = vmatpush1.msra.mxu0 0.0
    %3760 = vmatprep.subr.mxu0 0.0
    %3761 = vmatpush1.msra.mxu0 0.0
    %3762 = vmatprep.subr.mxu0 0.0
    %3763 = vmatpush1.msra.mxu0 0.0
    %3764 = vmatprep.subr.mxu0 0.0
    %3765 = vmatpush1.msra.mxu0 0.0
    %3766 = vmatprep.subr.mxu0 0.0
    %3767 = vmatpush1.msra.mxu0 0.0
    %3768 = vmatprep.subr.mxu0 0.0
    %3769 = vmatpush1.msra.mxu0 0.0
    %3770 = vmatprep.subr.mxu0 0.0
    %3771 = vmatpush1.msra.mxu0 0.0
    %3772 = vmatprep.subr.mxu0 0.0
    %3773 = vmatpush1.msra.mxu0 0.0
    %3774 = vmatprep.subr.mxu0 0.0
    %3775 = vmatpush1.msra.mxu0 0.0
    %3776 = vmatprep.subr.mxu0 0.0
    %3777 = vmatpush1.msra.mxu0 0.0
    %3778 = vmatprep.subr.mxu0 0.0
    %3779 = vmatpush1.msra.mxu0 0.0
    %3780 = vmatprep.subr.mxu0 0.0
    %3781 = vmatpush1.msra.mxu0 0.0
    %3782 = vmatprep.subr.mxu0 0.0
    %3783 = vmatpush1.msra.mxu0 0.0
    %3784 = vmatprep.subr.mxu0 0.0
    %3785 = vmatpush1.msra.mxu0 0.0
    %3786 = vmatprep.subr.mxu0 0.0
    %3787 = vmatpush1.msra.mxu0 0.0
    %3788 = vmatprep.subr.mxu0 0.0
    %3789 = vmatpush1.msra.mxu0 0.0
    %3790 = vmatprep.subr.mxu0 0.0
    %3791 = vmatpush1.msra.mxu0 0.0
    %3792 = vmatprep.subr.mxu0 0.0
    %3793 = vmatpush1.msra.mxu0 0.0
    %3794 = vmatprep.subr.mxu0 0.0
    %3795 = vmatpush1.msra.mxu0 0.0
    %3796 = vmatprep.subr.mxu0 0.0
    %3797 = vmatpush1.msra.mxu0 0.0
    %3798 = vmatprep.subr.mxu0 0.0
    %3799 = vmatpush1.msra.mxu0 0.0
    %3800 = vmatprep.subr.mxu0 0.0
    %3801 = vmatpush1.msra.mxu0 0.0
    %3802 = vmatprep.subr.mxu0 0.0
    %3803 = vmatpush1.msra.mxu0 0.0
    %3804 = vmatprep.subr.mxu0 0.0
    %3805 = vmatpush1.msra.mxu0 0.0
    %3806 = vmatprep.subr.mxu0 0.0
    %3807 = vmatpush1.msra.mxu0 0.0
    %3808 = vmatprep.mubr.f32.mxu0 0.0
    %3809 = vmatmul.mubr.f32.gmra.mrb[0].mxu0 %v3742
    %v3810 = vpop.f32.mrb[0].mxu0
    %v3811 = vadd.f32 %v978, %v3810
    %v3812 = vpop.f32.mrb[0].mxu0
    %3813 = vdwg.mxu0
    %v3814 = vsub.f32 %v3438, %v3624
    %v3815 = vadd.f32 %v3814, %v3811
    %v3816 = vmul.f32 %v3627, %v3815
    %v3817 = vadd.f32 %v3254, %v3816
    %3819 = vset.pattern.permute.xlu0 0
    %3820 = vperm.xlu0 %3819, %v3817
    %v3821 = vpop.permute.xlu0 %3820
    %v3823 = vmul.f32 %v3821, %v991
    %v3824 = vadd.f32 %v964, %v3823
    %3825 = vset.pattern.permute.xlu0 1
    %3826 = vperm.xlu0 %3825, %v3817
    %v3827 = vpop.permute.xlu0 %3826
    %v3829 = vmul.f32 %v3827, %v1001
    %v3830 = vadd.f32 %v3824, %v3829
    %3831 = vset.pattern.permute.xlu0 2
    %3832 = vperm.xlu0 %3831, %v3817
    %v3833 = vpop.permute.xlu0 %3832
    %v3835 = vmul.f32 %v3833, %v1011
    %v3836 = vadd.f32 %v3830, %v3835
    %3837 = vset.pattern.permute.xlu0 3
    %3838 = vperm.xlu0 %3837, %v3817
    %v3839 = vpop.permute.xlu0 %3838
    %v3841 = vmul.f32 %v3839, %v1021
    %v3842 = vadd.f32 %v3836, %v3841
    %vm3843 = vcmp.gt.f32.partialorder %v3842, 0.0
    %v3844 = vmin.f32 %v3842, 0.0
    %v3845 = vmul.f32 %v3844, 1.442695
    %v3846 = vpow.pop %v3845
    %v3847 = vsub.f32 %v3846, 1.0
    %v3848 = vsel %vm3843, %v3842, %v3847
    %v3850 = vsel %vm255, %v3848, 0
    %3852 = vmatprep.subr.mxu0 0.0
    %3853 = vmatpush1.msra.mxu0 %v951
    %3854 = vmatprep.subr.mxu0 0.0
    %3855 = vmatpush1.msra.mxu0 %v952
    %3856 = vmatprep.subr.mxu0 0.0
    %3857 = vmatpush1.msra.mxu0 %v953
    %3858 = vmatprep.subr.mxu0 0.0
    %3859 = vmatpush1.msra.mxu0 %v954
    %3860 = vmatprep.subr.mxu0 0.0
    %3861 = vmatpush1.msra.mxu0 0.0
    %3862 = vmatprep.subr.mxu0 0.0
    %3863 = vmatpush1.msra.mxu0 0.0
    %3864 = vmatprep.subr.mxu0 0.0
    %3865 = vmatpush1.msra.mxu0 0.0
    %3866 = vmatprep.subr.mxu0 0.0
    %3867 = vmatpush1.msra.mxu0 0.0
    %3868 = vmatprep.subr.mxu0 0.0
    %3869 = vmatpush1.msra.mxu0 0.0
    %3870 = vmatprep.subr.mxu0 0.0
    %3871 = vmatpush1.msra.mxu0 0.0
    %3872 = vmatprep.subr.mxu0 0.0
    %3873 = vmatpush1.msra.mxu0 0.0
    %3874 = vmatprep.subr.mxu0 0.0
    %3875 = vmatpush1.msra.mxu0 0.0
    %3876 = vmatprep.subr.mxu0 0.0
    %3877 = vmatpush1.msra.mxu0 0.0
    %3878 = vmatprep.subr.mxu0 0.0
    %3879 = vmatpush1.msra.mxu0 0.0
    %3880 = vmatprep.subr.mxu0 0.0
    %3881 = vmatpush1.msra.mxu0 0.0
    %3882 = vmatprep.subr.mxu0 0.0
    %3883 = vmatpush1.msra.mxu0 0.0
    %3884 = vmatprep.subr.mxu0 0.0
    %3885 = vmatpush1.msra.mxu0 0.0
    %3886 = vmatprep.subr.mxu0 0.0
    %3887 = vmatpush1.msra.mxu0 0.0
    %3888 = vmatprep.subr.mxu0 0.0
    %3889 = vmatpush1.msra.mxu0 0.0
    %3890 = vmatprep.subr.mxu0 0.0
    %3891 = vmatpush1.msra.mxu0 0.0
    %3892 = vmatprep.subr.mxu0 0.0
    %3893 = vmatpush1.msra.mxu0 0.0
    %3894 = vmatprep.subr.mxu0 0.0
    %3895 = vmatpush1.msra.mxu0 0.0
    %3896 = vmatprep.subr.mxu0 0.0
    %3897 = vmatpush1.msra.mxu0 0.0
    %3898 = vmatprep.subr.mxu0 0.0
    %3899 = vmatpush1.msra.mxu0 0.0
    %3900 = vmatprep.subr.mxu0 0.0
    %3901 = vmatpush1.msra.mxu0 0.0
    %3902 = vmatprep.subr.mxu0 0.0
    %3903 = vmatpush1.msra.mxu0 0.0
    %3904 = vmatprep.subr.mxu0 0.0
    %3905 = vmatpush1.msra.mxu0 0.0
    %3906 = vmatprep.subr.mxu0 0.0
    %3907 = vmatpush1.msra.mxu0 0.0
    %3908 = vmatprep.subr.mxu0 0.0
    %3909 = vmatpush1.msra.mxu0 0.0
    %3910 = vmatprep.subr.mxu0 0.0
    %3911 = vmatpush1.msra.mxu0 0.0
    %3912 = vmatprep.subr.mxu0 0.0
    %3913 = vmatpush1.msra.mxu0 0.0
    %3914 = vmatprep.subr.mxu0 0.0
    %3915 = vmatpush1.msra.mxu0 0.0
    %3916 = vmatprep.mubr.f32.mxu0 0.0
    %3917 = vmatmul.mubr.f32.gmra.mrb[0].mxu0 %v3850
    %v3918 = vpop.f32.mrb[0].mxu0
    %v3919 = vadd.f32 %v971, %v3918
    %v3920 = vpop.f32.mrb[0].mxu0
    %3921 = vdwg.mxu0
    %vm3922 = vcmp.gt.f32.partialorder %v3919, 0.0
    %v3923 = vmin.f32 %v3919, 0.0
    %v3924 = vmul.f32 %v3923, 1.442695
    %v3925 = vpow.pop %v3924
    %v3926 = vsub.f32 %v3925, 1.0
    %v3927 = vsel %vm3922, %v3919, %v3926
    %v3929 = vsel %vm255, %v3927, 0
    %3931 = vmatprep.subr.mxu0 0.0
    %3932 = vmatpush1.msra.mxu0 %v955
    %3933 = vmatprep.subr.mxu0 0.0
    %3934 = vmatpush1.msra.mxu0 %v956
    %3935 = vmatprep.subr.mxu0 0.0
    %3936 = vmatpush1.msra.mxu0 %v957
    %3937 = vmatprep.subr.mxu0 0.0
    %3938 = vmatpush1.msra.mxu0 %v958
    %3939 = vmatprep.subr.mxu0 0.0
    %3940 = vmatpush1.msra.mxu0 0.0
    %3941 = vmatprep.subr.mxu0 0.0
    %3942 = vmatpush1.msra.mxu0 0.0
    %3943 = vmatprep.subr.mxu0 0.0
    %3944 = vmatpush1.msra.mxu0 0.0
    %3945 = vmatprep.subr.mxu0 0.0
    %3946 = vmatpush1.msra.mxu0 0.0
    %3947 = vmatprep.subr.mxu0 0.0
    %3948 = vmatpush1.msra.mxu0 0.0
    %3949 = vmatprep.subr.mxu0 0.0
    %3950 = vmatpush1.msra.mxu0 0.0
    %3951 = vmatprep.subr.mxu0 0.0
    %3952 = vmatpush1.msra.mxu0 0.0
    %3953 = vmatprep.subr.mxu0 0.0
    %3954 = vmatpush1.msra.mxu0 0.0
    %3955 = vmatprep.subr.mxu0 0.0
    %3956 = vmatpush1.msra.mxu0 0.0
    %3957 = vmatprep.subr.mxu0 0.0
    %3958 = vmatpush1.msra.mxu0 0.0
    %3959 = vmatprep.subr.mxu0 0.0
    %3960 = vmatpush1.msra.mxu0 0.0
    %3961 = vmatprep.subr.mxu0 0.0
    %3962 = vmatpush1.msra.mxu0 0.0
    %3963 = vmatprep.subr.mxu0 0.0
    %3964 = vmatpush1.msra.mxu0 0.0
    %3965 = vmatprep.subr.mxu0 0.0
    %3966 = vmatpush1.msra.mxu0 0.0
    %3967 = vmatprep.subr.mxu0 0.0
    %3968 = vmatpush1.msra.mxu0 0.0
    %3969 = vmatprep.subr.mxu0 0.0
    %3970 = vmatpush1.msra.mxu0 0.0
    %3971 = vmatprep.subr.mxu0 0.0
    %3972 = vmatpush1.msra.mxu0 0.0
    %3973 = vmatprep.subr.mxu0 0.0
    %3974 = vmatpush1.msra.mxu0 0.0
    %3975 = vmatprep.subr.mxu0 0.0
    %3976 = vmatpush1.msra.mxu0 0.0
    %3977 = vmatprep.subr.mxu0 0.0
    %3978 = vmatpush1.msra.mxu0 0.0
    %3979 = vmatprep.subr.mxu0 0.0
    %3980 = vmatpush1.msra.mxu0 0.0
    %3981 = vmatprep.subr.mxu0 0.0
    %3982 = vmatpush1.msra.mxu0 0.0
    %3983 = vmatprep.subr.mxu0 0.0
    %3984 = vmatpush1.msra.mxu0 0.0
    %3985 = vmatprep.subr.mxu0 0.0
    %3986 = vmatpush1.msra.mxu0 0.0
    %3987 = vmatprep.subr.mxu0 0.0
    %3988 = vmatpush1.msra.mxu0 0.0
    %3989 = vmatprep.subr.mxu0 0.0
    %3990 = vmatpush1.msra.mxu0 0.0
    %3991 = vmatprep.subr.mxu0 0.0
    %3992 = vmatpush1.msra.mxu0 0.0
    %3993 = vmatprep.subr.mxu0 0.0
    %3994 = vmatpush1.msra.mxu0 0.0
    %3995 = vmatprep.mubr.f32.mxu0 0.0
    %3996 = vmatmul.mubr.f32.gmra.mrb[0].mxu0 %v3929
    %v3997 = vpop.f32.mrb[0].mxu0
    %v3998 = vadd.f32 %v978, %v3997
    %v3999 = vpop.f32.mrb[0].mxu0
    %4000 = vdwg.mxu0
    %v4001 = vadd.f32 %v3624, %v3811
    %v4002 = vmul.f32 %v4001, 3.0
    %v4003 = vadd.f32 %v3438, %v4002
    %v4004 = vadd.f32 %v4003, %v3998
    %v4005 = vstv %s3257
    %v4006 = vmul.f32 %v4005, %v4004
    %v4007 = vadd.f32 %v3254, %v4006
    %s4008 = sld [smem:[#allocation2 + $0x4]]
    %s4009 = sld [smem:[#allocation4 + $0x4]]
    %s4010 = sld [smem:[#allocation6 + $0x4]]
    %4012 = vset.pattern.permute.xlu0 0
    %4013 = vperm.xlu0 %4012, %v4007
    %v4014 = vpop.permute.xlu0 %4013
    %v4016 = vmul.f32 %v4014, %v991
    %v4017 = vadd.f32 %v964, %v4016
    %4018 = vset.pattern.permute.xlu0 1
    %4019 = vperm.xlu0 %4018, %v4007
    %v4020 = vpop.permute.xlu0 %4019
    %v4022 = vmul.f32 %v4020, %v1001
    %v4023 = vadd.f32 %v4017, %v4022
    %4024 = vset.pattern.permute.xlu0 2
    %4025 = vperm.xlu0 %4024, %v4007
    %v4026 = vpop.permute.xlu0 %4025
    %v4028 = vmul.f32 %v4026, %v1011
    %v4029 = vadd.f32 %v4023, %v4028
    %4030 = vset.pattern.permute.xlu0 3
    %4031 = vperm.xlu0 %4030, %v4007
    %v4032 = vpop.permute.xlu0 %4031
    %v4034 = vmul.f32 %v4032, %v1021
    %v4035 = vadd.f32 %v4029, %v4034
    %vm4036 = vcmp.gt.f32.partialorder %v4035, 0.0
    %v4037 = vmin.f32 %v4035, 0.0
    %v4038 = vmul.f32 %v4037, 1.442695
    %v4039 = vpow.pop %v4038
    %v4040 = vsub.f32 %v4039, 1.0
    %v4041 = vsel %vm4036, %v4035, %v4040
    %v4043 = vsel %vm255, %v4041, 0
    %4045 = vmatprep.subr.mxu0 0.0
    %4046 = vmatpush1.msra.mxu0 %v951
    %4047 = vmatprep.subr.mxu0 0.0
    %4048 = vmatpush1.msra.mxu0 %v952
    %4049 = vmatprep.subr.mxu0 0.0
    %4050 = vmatpush1.msra.mxu0 %v953
    %4051 = vmatprep.subr.mxu0 0.0
    %4052 = vmatpush1.msra.mxu0 %v954
    %4053 = vmatprep.subr.mxu0 0.0
    %4054 = vmatpush1.msra.mxu0 0.0
    %4055 = vmatprep.subr.mxu0 0.0
    %4056 = vmatpush1.msra.mxu0 0.0
    %4057 = vmatprep.subr.mxu0 0.0
    %4058 = vmatpush1.msra.mxu0 0.0
    %4059 = vmatprep.subr.mxu0 0.0
    %4060 = vmatpush1.msra.mxu0 0.0
    %4061 = vmatprep.subr.mxu0 0.0
    %4062 = vmatpush1.msra.mxu0 0.0
    %4063 = vmatprep.subr.mxu0 0.0
    %4064 = vmatpush1.msra.mxu0 0.0
    %4065 = vmatprep.subr.mxu0 0.0
    %4066 = vmatpush1.msra.mxu0 0.0
    %4067 = vmatprep.subr.mxu0 0.0
    %4068 = vmatpush1.msra.mxu0 0.0
    %4069 = vmatprep.subr.mxu0 0.0
    %4070 = vmatpush1.msra.mxu0 0.0
    %4071 = vmatprep.subr.mxu0 0.0
    %4072 = vmatpush1.msra.mxu0 0.0
    %4073 = vmatprep.subr.mxu0 0.0
    %4074 = vmatpush1.msra.mxu0 0.0
    %4075 = vmatprep.subr.mxu0 0.0
    %4076 = vmatpush1.msra.mxu0 0.0
    %4077 = vmatprep.subr.mxu0 0.0
    %4078 = vmatpush1.msra.mxu0 0.0
    %4079 = vmatprep.subr.mxu0 0.0
    %4080 = vmatpush1.msra.mxu0 0.0
    %4081 = vmatprep.subr.mxu0 0.0
    %4082 = vmatpush1.msra.mxu0 0.0
    %4083 = vmatprep.subr.mxu0 0.0
    %4084 = vmatpush1.msra.mxu0 0.0
    %4085 = vmatprep.subr.mxu0 0.0
    %4086 = vmatpush1.msra.mxu0 0.0
    %4087 = vmatprep.subr.mxu0 0.0
    %4088 = vmatpush1.msra.mxu0 0.0
    %4089 = vmatprep.subr.mxu0 0.0
    %4090 = vmatpush1.msra.mxu0 0.0
    %4091 = vmatprep.subr.mxu0 0.0
    %4092 = vmatpush1.msra.mxu0 0.0
    %4093 = vmatprep.subr.mxu0 0.0
    %4094 = vmatpush1.msra.mxu0 0.0
    %4095 = vmatprep.subr.mxu0 0.0
    %4096 = vmatpush1.msra.mxu0 0.0
    %4097 = vmatprep.subr.mxu0 0.0
    %4098 = vmatpush1.msra.mxu0 0.0
    %4099 = vmatprep.subr.mxu0 0.0
    %4100 = vmatpush1.msra.mxu0 0.0
    %4101 = vmatprep.subr.mxu0 0.0
    %4102 = vmatpush1.msra.mxu0 0.0
    %4103 = vmatprep.subr.mxu0 0.0
    %4104 = vmatpush1.msra.mxu0 0.0
    %4105 = vmatprep.subr.mxu0 0.0
    %4106 = vmatpush1.msra.mxu0 0.0
    %4107 = vmatprep.subr.mxu0 0.0
    %4108 = vmatpush1.msra.mxu0 0.0
    %4109 = vmatprep.mubr.f32.mxu0 0.0
    %4110 = vmatmul.mubr.f32.gmra.mrb[0].mxu0 %v4043
    %v4111 = vpop.f32.mrb[0].mxu0
    %v4112 = vadd.f32 %v971, %v4111
    %v4113 = vpop.f32.mrb[0].mxu0
    %4114 = vdwg.mxu0
    %vm4115 = vcmp.gt.f32.partialorder %v4112, 0.0
    %v4116 = vmin.f32 %v4112, 0.0
    %v4117 = vmul.f32 %v4116, 1.442695
    %v4118 = vpow.pop %v4117
    %v4119 = vsub.f32 %v4118, 1.0
    %v4120 = vsel %vm4115, %v4112, %v4119
    %v4122 = vsel %vm255, %v4120, 0
    %4124 = vmatprep.subr.mxu0 0.0
    %4125 = vmatpush1.msra.mxu0 %v955
    %4126 = vmatprep.subr.mxu0 0.0
    %4127 = vmatpush1.msra.mxu0 %v956
    %4128 = vmatprep.subr.mxu0 0.0
    %4129 = vmatpush1.msra.mxu0 %v957
    %4130 = vmatprep.subr.mxu0 0.0
    %4131 = vmatpush1.msra.mxu0 %v958
    %4132 = vmatprep.subr.mxu0 0.0
    %4133 = vmatpush1.msra.mxu0 0.0
    %4134 = vmatprep.subr.mxu0 0.0
    %4135 = vmatpush1.msra.mxu0 0.0
    %4136 = vmatprep.subr.mxu0 0.0
    %4137 = vmatpush1.msra.mxu0 0.0
    %4138 = vmatprep.subr.mxu0 0.0
    %4139 = vmatpush1.msra.mxu0 0.0
    %4140 = vmatprep.subr.mxu0 0.0
    %4141 = vmatpush1.msra.mxu0 0.0
    %4142 = vmatprep.subr.mxu0 0.0
    %4143 = vmatpush1.msra.mxu0 0.0
    %4144 = vmatprep.subr.mxu0 0.0
    %4145 = vmatpush1.msra.mxu0 0.0
    %4146 = vmatprep.subr.mxu0 0.0
    %4147 = vmatpush1.msra.mxu0 0.0
    %4148 = vmatprep.subr.mxu0 0.0
    %4149 = vmatpush1.msra.mxu0 0.0
    %4150 = vmatprep.subr.mxu0 0.0
    %4151 = vmatpush1.msra.mxu0 0.0
    %4152 = vmatprep.subr.mxu0 0.0
    %4153 = vmatpush1.msra.mxu0 0.0
    %4154 = vmatprep.subr.mxu0 0.0
    %4155 = vmatpush1.msra.mxu0 0.0
    %4156 = vmatprep.subr.mxu0 0.0
    %4157 = vmatpush1.msra.mxu0 0.0
    %4158 = vmatprep.subr.mxu0 0.0
    %4159 = vmatpush1.msra.mxu0 0.0
    %4160 = vmatprep.subr.mxu0 0.0
    %4161 = vmatpush1.msra.mxu0 0.0
    %4162 = vmatprep.subr.mxu0 0.0
    %4163 = vmatpush1.msra.mxu0 0.0
    %4164 = vmatprep.subr.mxu0 0.0
    %4165 = vmatpush1.msra.mxu0 0.0
    %4166 = vmatprep.subr.mxu0 0.0
    %4167 = vmatpush1.msra.mxu0 0.0
    %4168 = vmatprep.subr.mxu0 0.0
    %4169 = vmatpush1.msra.mxu0 0.0
    %4170 = vmatprep.subr.mxu0 0.0
    %4171 = vmatpush1.msra.mxu0 0.0
    %4172 = vmatprep.subr.mxu0 0.0
    %4173 = vmatpush1.msra.mxu0 0.0
    %4174 = vmatprep.subr.mxu0 0.0
    %4175 = vmatpush1.msra.mxu0 0.0
    %4176 = vmatprep.subr.mxu0 0.0
    %4177 = vmatpush1.msra.mxu0 0.0
    %4178 = vmatprep.subr.mxu0 0.0
    %4179 = vmatpush1.msra.mxu0 0.0
    %4180 = vmatprep.subr.mxu0 0.0
    %4181 = vmatpush1.msra.mxu0 0.0
    %4182 = vmatprep.subr.mxu0 0.0
    %4183 = vmatpush1.msra.mxu0 0.0
    %4184 = vmatprep.subr.mxu0 0.0
    %4185 = vmatpush1.msra.mxu0 0.0
    %4186 = vmatprep.subr.mxu0 0.0
    %4187 = vmatpush1.msra.mxu0 0.0
    %4188 = vmatprep.mubr.f32.mxu0 0.0
    %4189 = vmatmul.mubr.f32.gmra.mrb[0].mxu0 %v4122
    %v4190 = vpop.f32.mrb[0].mxu0
    %v4191 = vadd.f32 %v978, %v4190
    %v4192 = vpop.f32.mrb[0].mxu0
    %4193 = vdwg.mxu0
    %v4194 = vstv %s4009
    %v4195 = vmul.f32 %v4194, %v4191
    %v4196 = vadd.f32 %v4007, %v4195
    %4198 = vset.pattern.permute.xlu0 0
    %4199 = vperm.xlu0 %4198, %v4196
    %v4200 = vpop.permute.xlu0 %4199
    %v4202 = vmul.f32 %v4200, %v991
    %v4203 = vadd.f32 %v964, %v4202
    %4204 = vset.pattern.permute.xlu0 1
    %4205 = vperm.xlu0 %4204, %v4196
    %v4206 = vpop.permute.xlu0 %4205
    %v4208 = vmul.f32 %v4206, %v1001
    %v4209 = vadd.f32 %v4203, %v4208
    %4210 = vset.pattern.permute.xlu0 2
    %4211 = vperm.xlu0 %4210, %v4196
    %v4212 = vpop.permute.xlu0 %4211
    %v4214 = vmul.f32 %v4212, %v1011
    %v4215 = vadd.f32 %v4209, %v4214
    %4216 = vset.pattern.permute.xlu0 3
    %4217 = vperm.xlu0 %4216, %v4196
    %v4218 = vpop.permute.xlu0 %4217
    %v4220 = vmul.f32 %v4218, %v1021
    %v4221 = vadd.f32 %v4215, %v4220
    %vm4222 = vcmp.gt.f32.partialorder %v4221, 0.0
    %v4223 = vmin.f32 %v4221, 0.0
    %v4224 = vmul.f32 %v4223, 1.442695
    %v4225 = vpow.pop %v4224
    %v4226 = vsub.f32 %v4225, 1.0
    %v4227 = vsel %vm4222, %v4221, %v4226
    %v4229 = vsel %vm255, %v4227, 0
    %4231 = vmatprep.subr.mxu0 0.0
    %4232 = vmatpush1.msra.mxu0 %v951
    %4233 = vmatprep.subr.mxu0 0.0
    %4234 = vmatpush1.msra.mxu0 %v952
    %4235 = vmatprep.subr.mxu0 0.0
    %4236 = vmatpush1.msra.mxu0 %v953
    %4237 = vmatprep.subr.mxu0 0.0
    %4238 = vmatpush1.msra.mxu0 %v954
    %4239 = vmatprep.subr.mxu0 0.0
    %4240 = vmatpush1.msra.mxu0 0.0
    %4241 = vmatprep.subr.mxu0 0.0
    %4242 = vmatpush1.msra.mxu0 0.0
    %4243 = vmatprep.subr.mxu0 0.0
    %4244 = vmatpush1.msra.mxu0 0.0
    %4245 = vmatprep.subr.mxu0 0.0
    %4246 = vmatpush1.msra.mxu0 0.0
    %4247 = vmatprep.subr.mxu0 0.0
    %4248 = vmatpush1.msra.mxu0 0.0
    %4249 = vmatprep.subr.mxu0 0.0
    %4250 = vmatpush1.msra.mxu0 0.0
    %4251 = vmatprep.subr.mxu0 0.0
    %4252 = vmatpush1.msra.mxu0 0.0
    %4253 = vmatprep.subr.mxu0 0.0
    %4254 = vmatpush1.msra.mxu0 0.0
    %4255 = vmatprep.subr.mxu0 0.0
    %4256 = vmatpush1.msra.mxu0 0.0
    %4257 = vmatprep.subr.mxu0 0.0
    %4258 = vmatpush1.msra.mxu0 0.0
    %4259 = vmatprep.subr.mxu0 0.0
    %4260 = vmatpush1.msra.mxu0 0.0
    %4261 = vmatprep.subr.mxu0 0.0
    %4262 = vmatpush1.msra.mxu0 0.0
    %4263 = vmatprep.subr.mxu0 0.0
    %4264 = vmatpush1.msra.mxu0 0.0
    %4265 = vmatprep.subr.mxu0 0.0
    %4266 = vmatpush1.msra.mxu0 0.0
    %4267 = vmatprep.subr.mxu0 0.0
    %4268 = vmatpush1.msra.mxu0 0.0
    %4269 = vmatprep.subr.mxu0 0.0
    %4270 = vmatpush1.msra.mxu0 0.0
    %4271 = vmatprep.subr.mxu0 0.0
    %4272 = vmatpush1.msra.mxu0 0.0
    %4273 = vmatprep.subr.mxu0 0.0
    %4274 = vmatpush1.msra.mxu0 0.0
    %4275 = vmatprep.subr.mxu0 0.0
    %4276 = vmatpush1.msra.mxu0 0.0
    %4277 = vmatprep.subr.mxu0 0.0
    %4278 = vmatpush1.msra.mxu0 0.0
    %4279 = vmatprep.subr.mxu0 0.0
    %4280 = vmatpush1.msra.mxu0 0.0
    %4281 = vmatprep.subr.mxu0 0.0
    %4282 = vmatpush1.msra.mxu0 0.0
    %4283 = vmatprep.subr.mxu0 0.0
    %4284 = vmatpush1.msra.mxu0 0.0
    %4285 = vmatprep.subr.mxu0 0.0
    %4286 = vmatpush1.msra.mxu0 0.0
    %4287 = vmatprep.subr.mxu0 0.0
    %4288 = vmatpush1.msra.mxu0 0.0
    %4289 = vmatprep.subr.mxu0 0.0
    %4290 = vmatpush1.msra.mxu0 0.0
    %4291 = vmatprep.subr.mxu0 0.0
    %4292 = vmatpush1.msra.mxu0 0.0
    %4293 = vmatprep.subr.mxu0 0.0
    %4294 = vmatpush1.msra.mxu0 0.0
    %4295 = vmatprep.mubr.f32.mxu0 0.0
    %4296 = vmatmul.mubr.f32.gmra.mrb[0].mxu0 %v4229
    %v4297 = vpop.f32.mrb[0].mxu0
    %v4298 = vadd.f32 %v971, %v4297
    %v4299 = vpop.f32.mrb[0].mxu0
    %4300 = vdwg.mxu0
    %vm4301 = vcmp.gt.f32.partialorder %v4298, 0.0
    %v4302 = vmin.f32 %v4298, 0.0
    %v4303 = vmul.f32 %v4302, 1.442695
    %v4304 = vpow.pop %v4303
    %v4305 = vsub.f32 %v4304, 1.0
    %v4306 = vsel %vm4301, %v4298, %v4305
    %v4308 = vsel %vm255, %v4306, 0
    %4310 = vmatprep.subr.mxu0 0.0
    %4311 = vmatpush1.msra.mxu0 %v955
    %4312 = vmatprep.subr.mxu0 0.0
    %4313 = vmatpush1.msra.mxu0 %v956
    %4314 = vmatprep.subr.mxu0 0.0
    %4315 = vmatpush1.msra.mxu0 %v957
    %4316 = vmatprep.subr.mxu0 0.0
    %4317 = vmatpush1.msra.mxu0 %v958
    %4318 = vmatprep.subr.mxu0 0.0
    %4319 = vmatpush1.msra.mxu0 0.0
    %4320 = vmatprep.subr.mxu0 0.0
    %4321 = vmatpush1.msra.mxu0 0.0
    %4322 = vmatprep.subr.mxu0 0.0
    %4323 = vmatpush1.msra.mxu0 0.0
    %4324 = vmatprep.subr.mxu0 0.0
    %4325 = vmatpush1.msra.mxu0 0.0
    %4326 = vmatprep.subr.mxu0 0.0
    %4327 = vmatpush1.msra.mxu0 0.0
    %4328 = vmatprep.subr.mxu0 0.0
    %4329 = vmatpush1.msra.mxu0 0.0
    %4330 = vmatprep.subr.mxu0 0.0
    %4331 = vmatpush1.msra.mxu0 0.0
    %4332 = vmatprep.subr.mxu0 0.0
    %4333 = vmatpush1.msra.mxu0 0.0
    %4334 = vmatprep.subr.mxu0 0.0
    %4335 = vmatpush1.msra.mxu0 0.0
    %4336 = vmatprep.subr.mxu0 0.0
    %4337 = vmatpush1.msra.mxu0 0.0
    %4338 = vmatprep.subr.mxu0 0.0
    %4339 = vmatpush1.msra.mxu0 0.0
    %4340 = vmatprep.subr.mxu0 0.0
    %4341 = vmatpush1.msra.mxu0 0.0
    %4342 = vmatprep.subr.mxu0 0.0
    %4343 = vmatpush1.msra.mxu0 0.0
    %4344 = vmatprep.subr.mxu0 0.0
    %4345 = vmatpush1.msra.mxu0 0.0
    %4346 = vmatprep.subr.mxu0 0.0
    %4347 = vmatpush1.msra.mxu0 0.0
    %4348 = vmatprep.subr.mxu0 0.0
    %4349 = vmatpush1.msra.mxu0 0.0
    %4350 = vmatprep.subr.mxu0 0.0
    %4351 = vmatpush1.msra.mxu0 0.0
    %4352 = vmatprep.subr.mxu0 0.0
    %4353 = vmatpush1.msra.mxu0 0.0
    %4354 = vmatprep.subr.mxu0 0.0
    %4355 = vmatpush1.msra.mxu0 0.0
    %4356 = vmatprep.subr.mxu0 0.0
    %4357 = vmatpush1.msra.mxu0 0.0
    %4358 = vmatprep.subr.mxu0 0.0
    %4359 = vmatpush1.msra.mxu0 0.0
    %4360 = vmatprep.subr.mxu0 0.0
    %4361 = vmatpush1.msra.mxu0 0.0
    %4362 = vmatprep.subr.mxu0 0.0
    %4363 = vmatpush1.msra.mxu0 0.0
    %4364 = vmatprep.subr.mxu0 0.0
    %4365 = vmatpush1.msra.mxu0 0.0
    %4366 = vmatprep.subr.mxu0 0.0
    %4367 = vmatpush1.msra.mxu0 0.0
    %4368 = vmatprep.subr.mxu0 0.0
    %4369 = vmatpush1.msra.mxu0 0.0
    %4370 = vmatprep.subr.mxu0 0.0
    %4371 = vmatpush1.msra.mxu0 0.0
    %4372 = vmatprep.subr.mxu0 0.0
    %4373 = vmatpush1.msra.mxu0 0.0
    %4374 = vmatprep.mubr.f32.mxu0 0.0
    %4375 = vmatmul.mubr.f32.gmra.mrb[0].mxu0 %v4308
    %v4376 = vpop.f32.mrb[0].mxu0
    %v4377 = vadd.f32 %v978, %v4376
    %v4378 = vpop.f32.mrb[0].mxu0
    %4379 = vdwg.mxu0
    %v4380 = vstv %s4008
    %v4381 = vmul.f32 %v4380, %v4377
    %v4382 = vadd.f32 %v4007, %v4381
    %v4383 = vsub.f32 %v4382, %v4195
    %4385 = vset.pattern.permute.xlu0 0
    %4386 = vperm.xlu0 %4385, %v4383
    %v4387 = vpop.permute.xlu0 %4386
    %v4389 = vmul.f32 %v4387, %v991
    %v4390 = vadd.f32 %v964, %v4389
    %4391 = vset.pattern.permute.xlu0 1
    %4392 = vperm.xlu0 %4391, %v4383
    %v4393 = vpop.permute.xlu0 %4392
    %v4395 = vmul.f32 %v4393, %v1001
    %v4396 = vadd.f32 %v4390, %v4395
    %4397 = vset.pattern.permute.xlu0 2
    %4398 = vperm.xlu0 %4397, %v4383
    %v4399 = vpop.permute.xlu0 %4398
    %v4401 = vmul.f32 %v4399, %v1011
    %v4402 = vadd.f32 %v4396, %v4401
    %4403 = vset.pattern.permute.xlu0 3
    %4404 = vperm.xlu0 %4403, %v4383
    %v4405 = vpop.permute.xlu0 %4404
    %v4407 = vmul.f32 %v4405, %v1021
    %v4408 = vadd.f32 %v4402, %v4407
    %vm4409 = vcmp.gt.f32.partialorder %v4408, 0.0
    %v4410 = vmin.f32 %v4408, 0.0
    %v4411 = vmul.f32 %v4410, 1.442695
    %v4412 = vpow.pop %v4411
    %v4413 = vsub.f32 %v4412, 1.0
    %v4414 = vsel %vm4409, %v4408, %v4413
    %v4416 = vsel %vm255, %v4414, 0
    %4418 = vmatprep.subr.mxu0 0.0
    %4419 = vmatpush1.msra.mxu0 %v951
    %4420 = vmatprep.subr.mxu0 0.0
    %4421 = vmatpush1.msra.mxu0 %v952
    %4422 = vmatprep.subr.mxu0 0.0
    %4423 = vmatpush1.msra.mxu0 %v953
    %4424 = vmatprep.subr.mxu0 0.0
    %4425 = vmatpush1.msra.mxu0 %v954
    %4426 = vmatprep.subr.mxu0 0.0
    %4427 = vmatpush1.msra.mxu0 0.0
    %4428 = vmatprep.subr.mxu0 0.0
    %4429 = vmatpush1.msra.mxu0 0.0
    %4430 = vmatprep.subr.mxu0 0.0
    %4431 = vmatpush1.msra.mxu0 0.0
    %4432 = vmatprep.subr.mxu0 0.0
    %4433 = vmatpush1.msra.mxu0 0.0
    %4434 = vmatprep.subr.mxu0 0.0
    %4435 = vmatpush1.msra.mxu0 0.0
    %4436 = vmatprep.subr.mxu0 0.0
    %4437 = vmatpush1.msra.mxu0 0.0
    %4438 = vmatprep.subr.mxu0 0.0
    %4439 = vmatpush1.msra.mxu0 0.0
    %4440 = vmatprep.subr.mxu0 0.0
    %4441 = vmatpush1.msra.mxu0 0.0
    %4442 = vmatprep.subr.mxu0 0.0
    %4443 = vmatpush1.msra.mxu0 0.0
    %4444 = vmatprep.subr.mxu0 0.0
    %4445 = vmatpush1.msra.mxu0 0.0
    %4446 = vmatprep.subr.mxu0 0.0
    %4447 = vmatpush1.msra.mxu0 0.0
    %4448 = vmatprep.subr.mxu0 0.0
    %4449 = vmatpush1.msra.mxu0 0.0
    %4450 = vmatprep.subr.mxu0 0.0
    %4451 = vmatpush1.msra.mxu0 0.0
    %4452 = vmatprep.subr.mxu0 0.0
    %4453 = vmatpush1.msra.mxu0 0.0
    %4454 = vmatprep.subr.mxu0 0.0
    %4455 = vmatpush1.msra.mxu0 0.0
    %4456 = vmatprep.subr.mxu0 0.0
    %4457 = vmatpush1.msra.mxu0 0.0
    %4458 = vmatprep.subr.mxu0 0.0
    %4459 = vmatpush1.msra.mxu0 0.0
    %4460 = vmatprep.subr.mxu0 0.0
    %4461 = vmatpush1.msra.mxu0 0.0
    %4462 = vmatprep.subr.mxu0 0.0
    %4463 = vmatpush1.msra.mxu0 0.0
    %4464 = vmatprep.subr.mxu0 0.0
    %4465 = vmatpush1.msra.mxu0 0.0
    %4466 = vmatprep.subr.mxu0 0.0
    %4467 = vmatpush1.msra.mxu0 0.0
    %4468 = vmatprep.subr.mxu0 0.0
    %4469 = vmatpush1.msra.mxu0 0.0
    %4470 = vmatprep.subr.mxu0 0.0
    %4471 = vmatpush1.msra.mxu0 0.0
    %4472 = vmatprep.subr.mxu0 0.0
    %4473 = vmatpush1.msra.mxu0 0.0
    %4474 = vmatprep.subr.mxu0 0.0
    %4475 = vmatpush1.msra.mxu0 0.0
    %4476 = vmatprep.subr.mxu0 0.0
    %4477 = vmatpush1.msra.mxu0 0.0
    %4478 = vmatprep.subr.mxu0 0.0
    %4479 = vmatpush1.msra.mxu0 0.0
    %4480 = vmatprep.subr.mxu0 0.0
    %4481 = vmatpush1.msra.mxu0 0.0
    %4482 = vmatprep.mubr.f32.mxu0 0.0
    %4483 = vmatmul.mubr.f32.gmra.mrb[0].mxu0 %v4416
    %v4484 = vpop.f32.mrb[0].mxu0
    %v4485 = vadd.f32 %v971, %v4484
    %v4486 = vpop.f32.mrb[0].mxu0
    %4487 = vdwg.mxu0
    %vm4488 = vcmp.gt.f32.partialorder %v4485, 0.0
    %v4489 = vmin.f32 %v4485, 0.0
    %v4490 = vmul.f32 %v4489, 1.442695
    %v4491 = vpow.pop %v4490
    %v4492 = vsub.f32 %v4491, 1.0
    %v4493 = vsel %vm4488, %v4485, %v4492
    %v4495 = vsel %vm255, %v4493, 0
    %4497 = vmatprep.subr.mxu0 0.0
    %4498 = vmatpush1.msra.mxu0 %v955
    %4499 = vmatprep.subr.mxu0 0.0
    %4500 = vmatpush1.msra.mxu0 %v956
    %4501 = vmatprep.subr.mxu0 0.0
    %4502 = vmatpush1.msra.mxu0 %v957
    %4503 = vmatprep.subr.mxu0 0.0
    %4504 = vmatpush1.msra.mxu0 %v958
    %4505 = vmatprep.subr.mxu0 0.0
    %4506 = vmatpush1.msra.mxu0 0.0
    %4507 = vmatprep.subr.mxu0 0.0
    %4508 = vmatpush1.msra.mxu0 0.0
    %4509 = vmatprep.subr.mxu0 0.0
    %4510 = vmatpush1.msra.mxu0 0.0
    %4511 = vmatprep.subr.mxu0 0.0
    %4512 = vmatpush1.msra.mxu0 0.0
    %4513 = vmatprep.subr.mxu0 0.0
    %4514 = vmatpush1.msra.mxu0 0.0
    %4515 = vmatprep.subr.mxu0 0.0
    %4516 = vmatpush1.msra.mxu0 0.0
    %4517 = vmatprep.subr.mxu0 0.0
    %4518 = vmatpush1.msra.mxu0 0.0
    %4519 = vmatprep.subr.mxu0 0.0
    %4520 = vmatpush1.msra.mxu0 0.0
    %4521 = vmatprep.subr.mxu0 0.0
    %4522 = vmatpush1.msra.mxu0 0.0
    %4523 = vmatprep.subr.mxu0 0.0
    %4524 = vmatpush1.msra.mxu0 0.0
    %4525 = vmatprep.subr.mxu0 0.0
    %4526 = vmatpush1.msra.mxu0 0.0
    %4527 = vmatprep.subr.mxu0 0.0
    %4528 = vmatpush1.msra.mxu0 0.0
    %4529 = vmatprep.subr.mxu0 0.0
    %4530 = vmatpush1.msra.mxu0 0.0
    %4531 = vmatprep.subr.mxu0 0.0
    %4532 = vmatpush1.msra.mxu0 0.0
    %4533 = vmatprep.subr.mxu0 0.0
    %4534 = vmatpush1.msra.mxu0 0.0
    %4535 = vmatprep.subr.mxu0 0.0
    %4536 = vmatpush1.msra.mxu0 0.0
    %4537 = vmatprep.subr.mxu0 0.0
    %4538 = vmatpush1.msra.mxu0 0.0
    %4539 = vmatprep.subr.mxu0 0.0
    %4540 = vmatpush1.msra.mxu0 0.0
    %4541 = vmatprep.subr.mxu0 0.0
    %4542 = vmatpush1.msra.mxu0 0.0
    %4543 = vmatprep.subr.mxu0 0.0
    %4544 = vmatpush1.msra.mxu0 0.0
    %4545 = vmatprep.subr.mxu0 0.0
    %4546 = vmatpush1.msra.mxu0 0.0
    %4547 = vmatprep.subr.mxu0 0.0
    %4548 = vmatpush1.msra.mxu0 0.0
    %4549 = vmatprep.subr.mxu0 0.0
    %4550 = vmatpush1.msra.mxu0 0.0
    %4551 = vmatprep.subr.mxu0 0.0
    %4552 = vmatpush1.msra.mxu0 0.0
    %4553 = vmatprep.subr.mxu0 0.0
    %4554 = vmatpush1.msra.mxu0 0.0
    %4555 = vmatprep.subr.mxu0 0.0
    %4556 = vmatpush1.msra.mxu0 0.0
    %4557 = vmatprep.subr.mxu0 0.0
    %4558 = vmatpush1.msra.mxu0 0.0
    %4559 = vmatprep.subr.mxu0 0.0
    %4560 = vmatpush1.msra.mxu0 0.0
    %4561 = vmatprep.mubr.f32.mxu0 0.0
    %4562 = vmatmul.mubr.f32.gmra.mrb[0].mxu0 %v4495
    %v4563 = vpop.f32.mrb[0].mxu0
    %v4564 = vadd.f32 %v978, %v4563
    %v4565 = vpop.f32.mrb[0].mxu0
    %4566 = vdwg.mxu0
    %v4567 = vsub.f32 %v4191, %v4377
    %v4568 = vadd.f32 %v4567, %v4564
    %v4569 = vmul.f32 %v4380, %v4568
    %v4570 = vadd.f32 %v4007, %v4569
    %4572 = vset.pattern.permute.xlu0 0
    %4573 = vperm.xlu0 %4572, %v4570
    %v4574 = vpop.permute.xlu0 %4573
    %v4576 = vmul.f32 %v4574, %v991
    %v4577 = vadd.f32 %v964, %v4576
    %4578 = vset.pattern.permute.xlu0 1
    %4579 = vperm.xlu0 %4578, %v4570
    %v4580 = vpop.permute.xlu0 %4579
    %v4582 = vmul.f32 %v4580, %v1001
    %v4583 = vadd.f32 %v4577, %v4582
    %4584 = vset.pattern.permute.xlu0 2
    %4585 = vperm.xlu0 %4584, %v4570
    %v4586 = vpop.permute.xlu0 %4585
    %v4588 = vmul.f32 %v4586, %v1011
    %v4589 = vadd.f32 %v4583, %v4588
    %4590 = vset.pattern.permute.xlu0 3
    %4591 = vperm.xlu0 %4590, %v4570
    %v4592 = vpop.permute.xlu0 %4591
    %v4594 = vmul.f32 %v4592, %v1021
    %v4595 = vadd.f32 %v4589, %v4594
    %vm4596 = vcmp.gt.f32.partialorder %v4595, 0.0
    %v4597 = vmin.f32 %v4595, 0.0
    %v4598 = vmul.f32 %v4597, 1.442695
    %v4599 = vpow.pop %v4598
    %v4600 = vsub.f32 %v4599, 1.0
    %v4601 = vsel %vm4596, %v4595, %v4600
    %v4603 = vsel %vm255, %v4601, 0
    %4605 = vmatprep.subr.mxu0 0.0
    %4606 = vmatpush1.msra.mxu0 %v951
    %4607 = vmatprep.subr.mxu0 0.0
    %4608 = vmatpush1.msra.mxu0 %v952
    %4609 = vmatprep.subr.mxu0 0.0
    %4610 = vmatpush1.msra.mxu0 %v953
    %4611 = vmatprep.subr.mxu0 0.0
    %4612 = vmatpush1.msra.mxu0 %v954
    %4613 = vmatprep.subr.mxu0 0.0
    %4614 = vmatpush1.msra.mxu0 0.0
    %4615 = vmatprep.subr.mxu0 0.0
    %4616 = vmatpush1.msra.mxu0 0.0
    %4617 = vmatprep.subr.mxu0 0.0
    %4618 = vmatpush1.msra.mxu0 0.0
    %4619 = vmatprep.subr.mxu0 0.0
    %4620 = vmatpush1.msra.mxu0 0.0
    %4621 = vmatprep.subr.mxu0 0.0
    %4622 = vmatpush1.msra.mxu0 0.0
    %4623 = vmatprep.subr.mxu0 0.0
    %4624 = vmatpush1.msra.mxu0 0.0
    %4625 = vmatprep.subr.mxu0 0.0
    %4626 = vmatpush1.msra.mxu0 0.0
    %4627 = vmatprep.subr.mxu0 0.0
    %4628 = vmatpush1.msra.mxu0 0.0
    %4629 = vmatprep.subr.mxu0 0.0
    %4630 = vmatpush1.msra.mxu0 0.0
    %4631 = vmatprep.subr.mxu0 0.0
    %4632 = vmatpush1.msra.mxu0 0.0
    %4633 = vmatprep.subr.mxu0 0.0
    %4634 = vmatpush1.msra.mxu0 0.0
    %4635 = vmatprep.subr.mxu0 0.0
    %4636 = vmatpush1.msra.mxu0 0.0
    %4637 = vmatprep.subr.mxu0 0.0
    %4638 = vmatpush1.msra.mxu0 0.0
    %4639 = vmatprep.subr.mxu0 0.0
    %4640 = vmatpush1.msra.mxu0 0.0
    %4641 = vmatprep.subr.mxu0 0.0
    %4642 = vmatpush1.msra.mxu0 0.0
    %4643 = vmatprep.subr.mxu0 0.0
    %4644 = vmatpush1.msra.mxu0 0.0
    %4645 = vmatprep.subr.mxu0 0.0
    %4646 = vmatpush1.msra.mxu0 0.0
    %4647 = vmatprep.subr.mxu0 0.0
    %4648 = vmatpush1.msra.mxu0 0.0
    %4649 = vmatprep.subr.mxu0 0.0
    %4650 = vmatpush1.msra.mxu0 0.0
    %4651 = vmatprep.subr.mxu0 0.0
    %4652 = vmatpush1.msra.mxu0 0.0
    %4653 = vmatprep.subr.mxu0 0.0
    %4654 = vmatpush1.msra.mxu0 0.0
    %4655 = vmatprep.subr.mxu0 0.0
    %4656 = vmatpush1.msra.mxu0 0.0
    %4657 = vmatprep.subr.mxu0 0.0
    %4658 = vmatpush1.msra.mxu0 0.0
    %4659 = vmatprep.subr.mxu0 0.0
    %4660 = vmatpush1.msra.mxu0 0.0
    %4661 = vmatprep.subr.mxu0 0.0
    %4662 = vmatpush1.msra.mxu0 0.0
    %4663 = vmatprep.subr.mxu0 0.0
    %4664 = vmatpush1.msra.mxu0 0.0
    %4665 = vmatprep.subr.mxu0 0.0
    %4666 = vmatpush1.msra.mxu0 0.0
    %4667 = vmatprep.subr.mxu0 0.0
    %4668 = vmatpush1.msra.mxu0 0.0
    %4669 = vmatprep.mubr.f32.mxu0 0.0
    %4670 = vmatmul.mubr.f32.gmra.mrb[0].mxu0 %v4603
    %v4671 = vpop.f32.mrb[0].mxu0
    %v4672 = vadd.f32 %v971, %v4671
    %v4673 = vpop.f32.mrb[0].mxu0
    %4674 = vdwg.mxu0
    %vm4675 = vcmp.gt.f32.partialorder %v4672, 0.0
    %v4676 = vmin.f32 %v4672, 0.0
    %v4677 = vmul.f32 %v4676, 1.442695
    %v4678 = vpow.pop %v4677
    %v4679 = vsub.f32 %v4678, 1.0
    %v4680 = vsel %vm4675, %v4672, %v4679
    %v4682 = vsel %vm255, %v4680, 0
    %4684 = vmatprep.subr.mxu0 0.0
    %4685 = vmatpush1.msra.mxu0 %v955
    %4686 = vmatprep.subr.mxu0 0.0
    %4687 = vmatpush1.msra.mxu0 %v956
    %4688 = vmatprep.subr.mxu0 0.0
    %4689 = vmatpush1.msra.mxu0 %v957
    %4690 = vmatprep.subr.mxu0 0.0
    %4691 = vmatpush1.msra.mxu0 %v958
    %4692 = vmatprep.subr.mxu0 0.0
    %4693 = vmatpush1.msra.mxu0 0.0
    %4694 = vmatprep.subr.mxu0 0.0
    %4695 = vmatpush1.msra.mxu0 0.0
    %4696 = vmatprep.subr.mxu0 0.0
    %4697 = vmatpush1.msra.mxu0 0.0
    %4698 = vmatprep.subr.mxu0 0.0
    %4699 = vmatpush1.msra.mxu0 0.0
    %4700 = vmatprep.subr.mxu0 0.0
    %4701 = vmatpush1.msra.mxu0 0.0
    %4702 = vmatprep.subr.mxu0 0.0
    %4703 = vmatpush1.msra.mxu0 0.0
    %4704 = vmatprep.subr.mxu0 0.0
    %4705 = vmatpush1.msra.mxu0 0.0
    %4706 = vmatprep.subr.mxu0 0.0
    %4707 = vmatpush1.msra.mxu0 0.0
    %4708 = vmatprep.subr.mxu0 0.0
    %4709 = vmatpush1.msra.mxu0 0.0
    %4710 = vmatprep.subr.mxu0 0.0
    %4711 = vmatpush1.msra.mxu0 0.0
    %4712 = vmatprep.subr.mxu0 0.0
    %4713 = vmatpush1.msra.mxu0 0.0
    %4714 = vmatprep.subr.mxu0 0.0
    %4715 = vmatpush1.msra.mxu0 0.0
    %4716 = vmatprep.subr.mxu0 0.0
    %4717 = vmatpush1.msra.mxu0 0.0
    %4718 = vmatprep.subr.mxu0 0.0
    %4719 = vmatpush1.msra.mxu0 0.0
    %4720 = vmatprep.subr.mxu0 0.0
    %4721 = vmatpush1.msra.mxu0 0.0
    %4722 = vmatprep.subr.mxu0 0.0
    %4723 = vmatpush1.msra.mxu0 0.0
    %4724 = vmatprep.subr.mxu0 0.0
    %4725 = vmatpush1.msra.mxu0 0.0
    %4726 = vmatprep.subr.mxu0 0.0
    %4727 = vmatpush1.msra.mxu0 0.0
    %4728 = vmatprep.subr.mxu0 0.0
    %4729 = vmatpush1.msra.mxu0 0.0
    %4730 = vmatprep.subr.mxu0 0.0
    %4731 = vmatpush1.msra.mxu0 0.0
    %4732 = vmatprep.subr.mxu0 0.0
    %4733 = vmatpush1.msra.mxu0 0.0
    %4734 = vmatprep.subr.mxu0 0.0
    %4735 = vmatpush1.msra.mxu0 0.0
    %4736 = vmatprep.subr.mxu0 0.0
    %4737 = vmatpush1.msra.mxu0 0.0
    %4738 = vmatprep.subr.mxu0 0.0
    %4739 = vmatpush1.msra.mxu0 0.0
    %4740 = vmatprep.subr.mxu0 0.0
    %4741 = vmatpush1.msra.mxu0 0.0
    %4742 = vmatprep.subr.mxu0 0.0
    %4743 = vmatpush1.msra.mxu0 0.0
    %4744 = vmatprep.subr.mxu0 0.0
    %4745 = vmatpush1.msra.mxu0 0.0
    %4746 = vmatprep.subr.mxu0 0.0
    %4747 = vmatpush1.msra.mxu0 0.0
    %4748 = vmatprep.mubr.f32.mxu0 0.0
    %4749 = vmatmul.mubr.f32.gmra.mrb[0].mxu0 %v4682
    %v4750 = vpop.f32.mrb[0].mxu0
    %v4751 = vadd.f32 %v978, %v4750
    %v4752 = vpop.f32.mrb[0].mxu0
    %4753 = vdwg.mxu0
    %v4754 = vadd.f32 %v4377, %v4564
    %v4755 = vmul.f32 %v4754, 3.0
    %v4756 = vadd.f32 %v4191, %v4755
    %v4757 = vadd.f32 %v4756, %v4751
    %v4758 = vstv %s4010
    %v4759 = vmul.f32 %v4758, %v4757
    %v4760 = vadd.f32 %v4007, %v4759
    %s4761 = sld [smem:[#allocation2 + $0x5]]
    %s4762 = sld [smem:[#allocation4 + $0x5]]
    %s4763 = sld [smem:[#allocation6 + $0x5]]
    %4765 = vset.pattern.permute.xlu0 0
    %4766 = vperm.xlu0 %4765, %v4760
    %v4767 = vpop.permute.xlu0 %4766
    %v4769 = vmul.f32 %v4767, %v991
    %v4770 = vadd.f32 %v964, %v4769
    %4771 = vset.pattern.permute.xlu0 1
    %4772 = vperm.xlu0 %4771, %v4760
    %v4773 = vpop.permute.xlu0 %4772
    %v4775 = vmul.f32 %v4773, %v1001
    %v4776 = vadd.f32 %v4770, %v4775
    %4777 = vset.pattern.permute.xlu0 2
    %4778 = vperm.xlu0 %4777, %v4760
    %v4779 = vpop.permute.xlu0 %4778
    %v4781 = vmul.f32 %v4779, %v1011
    %v4782 = vadd.f32 %v4776, %v4781
    %4783 = vset.pattern.permute.xlu0 3
    %4784 = vperm.xlu0 %4783, %v4760
    %v4785 = vpop.permute.xlu0 %4784
    %v4787 = vmul.f32 %v4785, %v1021
    %v4788 = vadd.f32 %v4782, %v4787
    %vm4789 = vcmp.gt.f32.partialorder %v4788, 0.0
    %v4790 = vmin.f32 %v4788, 0.0
    %v4791 = vmul.f32 %v4790, 1.442695
    %v4792 = vpow.pop %v4791
    %v4793 = vsub.f32 %v4792, 1.0
    %v4794 = vsel %vm4789, %v4788, %v4793
    %v4796 = vsel %vm255, %v4794, 0
    %4798 = vmatprep.subr.mxu0 0.0
    %4799 = vmatpush1.msra.mxu0 %v951
    %4800 = vmatprep.subr.mxu0 0.0
    %4801 = vmatpush1.msra.mxu0 %v952
    %4802 = vmatprep.subr.mxu0 0.0
    %4803 = vmatpush1.msra.mxu0 %v953
    %4804 = vmatprep.subr.mxu0 0.0
    %4805 = vmatpush1.msra.mxu0 %v954
    %4806 = vmatprep.subr.mxu0 0.0
    %4807 = vmatpush1.msra.mxu0 0.0
    %4808 = vmatprep.subr.mxu0 0.0
    %4809 = vmatpush1.msra.mxu0 0.0
    %4810 = vmatprep.subr.mxu0 0.0
    %4811 = vmatpush1.msra.mxu0 0.0
    %4812 = vmatprep.subr.mxu0 0.0
    %4813 = vmatpush1.msra.mxu0 0.0
    %4814 = vmatprep.subr.mxu0 0.0
    %4815 = vmatpush1.msra.mxu0 0.0
    %4816 = vmatprep.subr.mxu0 0.0
    %4817 = vmatpush1.msra.mxu0 0.0
    %4818 = vmatprep.subr.mxu0 0.0
    %4819 = vmatpush1.msra.mxu0 0.0
    %4820 = vmatprep.subr.mxu0 0.0
    %4821 = vmatpush1.msra.mxu0 0.0
    %4822 = vmatprep.subr.mxu0 0.0
    %4823 = vmatpush1.msra.mxu0 0.0
    %4824 = vmatprep.subr.mxu0 0.0
    %4825 = vmatpush1.msra.mxu0 0.0
    %4826 = vmatprep.subr.mxu0 0.0
    %4827 = vmatpush1.msra.mxu0 0.0
    %4828 = vmatprep.subr.mxu0 0.0
    %4829 = vmatpush1.msra.mxu0 0.0
    %4830 = vmatprep.subr.mxu0 0.0
    %4831 = vmatpush1.msra.mxu0 0.0
    %4832 = vmatprep.subr.mxu0 0.0
    %4833 = vmatpush1.msra.mxu0 0.0
    %4834 = vmatprep.subr.mxu0 0.0
    %4835 = vmatpush1.msra.mxu0 0.0
    %4836 = vmatprep.subr.mxu0 0.0
    %4837 = vmatpush1.msra.mxu0 0.0
    %4838 = vmatprep.subr.mxu0 0.0
    %4839 = vmatpush1.msra.mxu0 0.0
    %4840 = vmatprep.subr.mxu0 0.0
    %4841 = vmatpush1.msra.mxu0 0.0
    %4842 = vmatprep.subr.mxu0 0.0
    %4843 = vmatpush1.msra.mxu0 0.0
    %4844 = vmatprep.subr.mxu0 0.0
    %4845 = vmatpush1.msra.mxu0 0.0
    %4846 = vmatprep.subr.mxu0 0.0
    %4847 = vmatpush1.msra.mxu0 0.0
    %4848 = vmatprep.subr.mxu0 0.0
    %4849 = vmatpush1.msra.mxu0 0.0
    %4850 = vmatprep.subr.mxu0 0.0
    %4851 = vmatpush1.msra.mxu0 0.0
    %4852 = vmatprep.subr.mxu0 0.0
    %4853 = vmatpush1.msra.mxu0 0.0
    %4854 = vmatprep.subr.mxu0 0.0
    %4855 = vmatpush1.msra.mxu0 0.0
    %4856 = vmatprep.subr.mxu0 0.0
    %4857 = vmatpush1.msra.mxu0 0.0
    %4858 = vmatprep.subr.mxu0 0.0
    %4859 = vmatpush1.msra.mxu0 0.0
    %4860 = vmatprep.subr.mxu0 0.0
    %4861 = vmatpush1.msra.mxu0 0.0
    %4862 = vmatprep.mubr.f32.mxu0 0.0
    %4863 = vmatmul.mubr.f32.gmra.mrb[0].mxu0 %v4796
    %v4864 = vpop.f32.mrb[0].mxu0
    %v4865 = vadd.f32 %v971, %v4864
    %v4866 = vpop.f32.mrb[0].mxu0
    %4867 = vdwg.mxu0
    %vm4868 = vcmp.gt.f32.partialorder %v4865, 0.0
    %v4869 = vmin.f32 %v4865, 0.0
    %v4870 = vmul.f32 %v4869, 1.442695
    %v4871 = vpow.pop %v4870
    %v4872 = vsub.f32 %v4871, 1.0
    %v4873 = vsel %vm4868, %v4865, %v4872
    %v4875 = vsel %vm255, %v4873, 0
    %4877 = vmatprep.subr.mxu0 0.0
    %4878 = vmatpush1.msra.mxu0 %v955
    %4879 = vmatprep.subr.mxu0 0.0
    %4880 = vmatpush1.msra.mxu0 %v956
    %4881 = vmatprep.subr.mxu0 0.0
    %4882 = vmatpush1.msra.mxu0 %v957
    %4883 = vmatprep.subr.mxu0 0.0
    %4884 = vmatpush1.msra.mxu0 %v958
    %4885 = vmatprep.subr.mxu0 0.0
    %4886 = vmatpush1.msra.mxu0 0.0
    %4887 = vmatprep.subr.mxu0 0.0
    %4888 = vmatpush1.msra.mxu0 0.0
    %4889 = vmatprep.subr.mxu0 0.0
    %4890 = vmatpush1.msra.mxu0 0.0
    %4891 = vmatprep.subr.mxu0 0.0
    %4892 = vmatpush1.msra.mxu0 0.0
    %4893 = vmatprep.subr.mxu0 0.0
    %4894 = vmatpush1.msra.mxu0 0.0
    %4895 = vmatprep.subr.mxu0 0.0
    %4896 = vmatpush1.msra.mxu0 0.0
    %4897 = vmatprep.subr.mxu0 0.0
    %4898 = vmatpush1.msra.mxu0 0.0
    %4899 = vmatprep.subr.mxu0 0.0
    %4900 = vmatpush1.msra.mxu0 0.0
    %4901 = vmatprep.subr.mxu0 0.0
    %4902 = vmatpush1.msra.mxu0 0.0
    %4903 = vmatprep.subr.mxu0 0.0
    %4904 = vmatpush1.msra.mxu0 0.0
    %4905 = vmatprep.subr.mxu0 0.0
    %4906 = vmatpush1.msra.mxu0 0.0
    %4907 = vmatprep.subr.mxu0 0.0
    %4908 = vmatpush1.msra.mxu0 0.0
    %4909 = vmatprep.subr.mxu0 0.0
    %4910 = vmatpush1.msra.mxu0 0.0
    %4911 = vmatprep.subr.mxu0 0.0
    %4912 = vmatpush1.msra.mxu0 0.0
    %4913 = vmatprep.subr.mxu0 0.0
    %4914 = vmatpush1.msra.mxu0 0.0
    %4915 = vmatprep.subr.mxu0 0.0
    %4916 = vmatpush1.msra.mxu0 0.0
    %4917 = vmatprep.subr.mxu0 0.0
    %4918 = vmatpush1.msra.mxu0 0.0
    %4919 = vmatprep.subr.mxu0 0.0
    %4920 = vmatpush1.msra.mxu0 0.0
    %4921 = vmatprep.subr.mxu0 0.0
    %4922 = vmatpush1.msra.mxu0 0.0
    %4923 = vmatprep.subr.mxu0 0.0
    %4924 = vmatpush1.msra.mxu0 0.0
    %4925 = vmatprep.subr.mxu0 0.0
    %4926 = vmatpush1.msra.mxu0 0.0
    %4927 = vmatprep.subr.mxu0 0.0
    %4928 = vmatpush1.msra.mxu0 0.0
    %4929 = vmatprep.subr.mxu0 0.0
    %4930 = vmatpush1.msra.mxu0 0.0
    %4931 = vmatprep.subr.mxu0 0.0
    %4932 = vmatpush1.msra.mxu0 0.0
    %4933 = vmatprep.subr.mxu0 0.0
    %4934 = vmatpush1.msra.mxu0 0.0
    %4935 = vmatprep.subr.mxu0 0.0
    %4936 = vmatpush1.msra.mxu0 0.0
    %4937 = vmatprep.subr.mxu0 0.0
    %4938 = vmatpush1.msra.mxu0 0.0
    %4939 = vmatprep.subr.mxu0 0.0
    %4940 = vmatpush1.msra.mxu0 0.0
    %4941 = vmatprep.mubr.f32.mxu0 0.0
    %4942 = vmatmul.mubr.f32.gmra.mrb[0].mxu0 %v4875
    %v4943 = vpop.f32.mrb[0].mxu0
    %v4944 = vadd.f32 %v978, %v4943
    %v4945 = vpop.f32.mrb[0].mxu0
    %4946 = vdwg.mxu0
    %v4947 = vstv %s4762
    %v4948 = vmul.f32 %v4947, %v4944
    %v4949 = vadd.f32 %v4760, %v4948
    %4951 = vset.pattern.permute.xlu0 0
    %4952 = vperm.xlu0 %4951, %v4949
    %v4953 = vpop.permute.xlu0 %4952
    %v4955 = vmul.f32 %v4953, %v991
    %v4956 = vadd.f32 %v964, %v4955
    %4957 = vset.pattern.permute.xlu0 1
    %4958 = vperm.xlu0 %4957, %v4949
    %v4959 = vpop.permute.xlu0 %4958
    %v4961 = vmul.f32 %v4959, %v1001
    %v4962 = vadd.f32 %v4956, %v4961
    %4963 = vset.pattern.permute.xlu0 2
    %4964 = vperm.xlu0 %4963, %v4949
    %v4965 = vpop.permute.xlu0 %4964
    %v4967 = vmul.f32 %v4965, %v1011
    %v4968 = vadd.f32 %v4962, %v4967
    %4969 = vset.pattern.permute.xlu0 3
    %4970 = vperm.xlu0 %4969, %v4949
    %v4971 = vpop.permute.xlu0 %4970
    %v4973 = vmul.f32 %v4971, %v1021
    %v4974 = vadd.f32 %v4968, %v4973
    %vm4975 = vcmp.gt.f32.partialorder %v4974, 0.0
    %v4976 = vmin.f32 %v4974, 0.0
    %v4977 = vmul.f32 %v4976, 1.442695
    %v4978 = vpow.pop %v4977
    %v4979 = vsub.f32 %v4978, 1.0
    %v4980 = vsel %vm4975, %v4974, %v4979
    %v4982 = vsel %vm255, %v4980, 0
    %4984 = vmatprep.subr.mxu0 0.0
    %4985 = vmatpush1.msra.mxu0 %v951
    %4986 = vmatprep.subr.mxu0 0.0
    %4987 = vmatpush1.msra.mxu0 %v952
    %4988 = vmatprep.subr.mxu0 0.0
    %4989 = vmatpush1.msra.mxu0 %v953
    %4990 = vmatprep.subr.mxu0 0.0
    %4991 = vmatpush1.msra.mxu0 %v954
    %4992 = vmatprep.subr.mxu0 0.0
    %4993 = vmatpush1.msra.mxu0 0.0
    %4994 = vmatprep.subr.mxu0 0.0
    %4995 = vmatpush1.msra.mxu0 0.0
    %4996 = vmatprep.subr.mxu0 0.0
    %4997 = vmatpush1.msra.mxu0 0.0
    %4998 = vmatprep.subr.mxu0 0.0
    %4999 = vmatpush1.msra.mxu0 0.0
    %5000 = vmatprep.subr.mxu0 0.0
    %5001 = vmatpush1.msra.mxu0 0.0
    %5002 = vmatprep.subr.mxu0 0.0
    %5003 = vmatpush1.msra.mxu0 0.0
    %5004 = vmatprep.subr.mxu0 0.0
    %5005 = vmatpush1.msra.mxu0 0.0
    %5006 = vmatprep.subr.mxu0 0.0
    %5007 = vmatpush1.msra.mxu0 0.0
    %5008 = vmatprep.subr.mxu0 0.0
    %5009 = vmatpush1.msra.mxu0 0.0
    %5010 = vmatprep.subr.mxu0 0.0
    %5011 = vmatpush1.msra.mxu0 0.0
    %5012 = vmatprep.subr.mxu0 0.0
    %5013 = vmatpush1.msra.mxu0 0.0
    %5014 = vmatprep.subr.mxu0 0.0
    %5015 = vmatpush1.msra.mxu0 0.0
    %5016 = vmatprep.subr.mxu0 0.0
    %5017 = vmatpush1.msra.mxu0 0.0
    %5018 = vmatprep.subr.mxu0 0.0
    %5019 = vmatpush1.msra.mxu0 0.0
    %5020 = vmatprep.subr.mxu0 0.0
    %5021 = vmatpush1.msra.mxu0 0.0
    %5022 = vmatprep.subr.mxu0 0.0
    %5023 = vmatpush1.msra.mxu0 0.0
    %5024 = vmatprep.subr.mxu0 0.0
    %5025 = vmatpush1.msra.mxu0 0.0
    %5026 = vmatprep.subr.mxu0 0.0
    %5027 = vmatpush1.msra.mxu0 0.0
    %5028 = vmatprep.subr.mxu0 0.0
    %5029 = vmatpush1.msra.mxu0 0.0
    %5030 = vmatprep.subr.mxu0 0.0
    %5031 = vmatpush1.msra.mxu0 0.0
    %5032 = vmatprep.subr.mxu0 0.0
    %5033 = vmatpush1.msra.mxu0 0.0
    %5034 = vmatprep.subr.mxu0 0.0
    %5035 = vmatpush1.msra.mxu0 0.0
    %5036 = vmatprep.subr.mxu0 0.0
    %5037 = vmatpush1.msra.mxu0 0.0
    %5038 = vmatprep.subr.mxu0 0.0
    %5039 = vmatpush1.msra.mxu0 0.0
    %5040 = vmatprep.subr.mxu0 0.0
    %5041 = vmatpush1.msra.mxu0 0.0
    %5042 = vmatprep.subr.mxu0 0.0
    %5043 = vmatpush1.msra.mxu0 0.0
    %5044 = vmatprep.subr.mxu0 0.0
    %5045 = vmatpush1.msra.mxu0 0.0
    %5046 = vmatprep.subr.mxu0 0.0
    %5047 = vmatpush1.msra.mxu0 0.0
    %5048 = vmatprep.mubr.f32.mxu0 0.0
    %5049 = vmatmul.mubr.f32.gmra.mrb[0].mxu0 %v4982
    %v5050 = vpop.f32.mrb[0].mxu0
    %v5051 = vadd.f32 %v971, %v5050
    %v5052 = vpop.f32.mrb[0].mxu0
    %5053 = vdwg.mxu0
    %vm5054 = vcmp.gt.f32.partialorder %v5051, 0.0
    %v5055 = vmin.f32 %v5051, 0.0
    %v5056 = vmul.f32 %v5055, 1.442695
    %v5057 = vpow.pop %v5056
    %v5058 = vsub.f32 %v5057, 1.0
    %v5059 = vsel %vm5054, %v5051, %v5058
    %v5061 = vsel %vm255, %v5059, 0
    %5063 = vmatprep.subr.mxu0 0.0
    %5064 = vmatpush1.msra.mxu0 %v955
    %5065 = vmatprep.subr.mxu0 0.0
    %5066 = vmatpush1.msra.mxu0 %v956
    %5067 = vmatprep.subr.mxu0 0.0
    %5068 = vmatpush1.msra.mxu0 %v957
    %5069 = vmatprep.subr.mxu0 0.0
    %5070 = vmatpush1.msra.mxu0 %v958
    %5071 = vmatprep.subr.mxu0 0.0
    %5072 = vmatpush1.msra.mxu0 0.0
    %5073 = vmatprep.subr.mxu0 0.0
    %5074 = vmatpush1.msra.mxu0 0.0
    %5075 = vmatprep.subr.mxu0 0.0
    %5076 = vmatpush1.msra.mxu0 0.0
    %5077 = vmatprep.subr.mxu0 0.0
    %5078 = vmatpush1.msra.mxu0 0.0
    %5079 = vmatprep.subr.mxu0 0.0
    %5080 = vmatpush1.msra.mxu0 0.0
    %5081 = vmatprep.subr.mxu0 0.0
    %5082 = vmatpush1.msra.mxu0 0.0
    %5083 = vmatprep.subr.mxu0 0.0
    %5084 = vmatpush1.msra.mxu0 0.0
    %5085 = vmatprep.subr.mxu0 0.0
    %5086 = vmatpush1.msra.mxu0 0.0
    %5087 = vmatprep.subr.mxu0 0.0
    %5088 = vmatpush1.msra.mxu0 0.0
    %5089 = vmatprep.subr.mxu0 0.0
    %5090 = vmatpush1.msra.mxu0 0.0
    %5091 = vmatprep.subr.mxu0 0.0
    %5092 = vmatpush1.msra.mxu0 0.0
    %5093 = vmatprep.subr.mxu0 0.0
    %5094 = vmatpush1.msra.mxu0 0.0
    %5095 = vmatprep.subr.mxu0 0.0
    %5096 = vmatpush1.msra.mxu0 0.0
    %5097 = vmatprep.subr.mxu0 0.0
    %5098 = vmatpush1.msra.mxu0 0.0
    %5099 = vmatprep.subr.mxu0 0.0
    %5100 = vmatpush1.msra.mxu0 0.0
    %5101 = vmatprep.subr.mxu0 0.0
    %5102 = vmatpush1.msra.mxu0 0.0
    %5103 = vmatprep.subr.mxu0 0.0
    %5104 = vmatpush1.msra.mxu0 0.0
    %5105 = vmatprep.subr.mxu0 0.0
    %5106 = vmatpush1.msra.mxu0 0.0
    %5107 = vmatprep.subr.mxu0 0.0
    %5108 = vmatpush1.msra.mxu0 0.0
    %5109 = vmatprep.subr.mxu0 0.0
    %5110 = vmatpush1.msra.mxu0 0.0
    %5111 = vmatprep.subr.mxu0 0.0
    %5112 = vmatpush1.msra.mxu0 0.0
    %5113 = vmatprep.subr.mxu0 0.0
    %5114 = vmatpush1.msra.mxu0 0.0
    %5115 = vmatprep.subr.mxu0 0.0
    %5116 = vmatpush1.msra.mxu0 0.0
    %5117 = vmatprep.subr.mxu0 0.0
    %5118 = vmatpush1.msra.mxu0 0.0
    %5119 = vmatprep.subr.mxu0 0.0
    %5120 = vmatpush1.msra.mxu0 0.0
    %5121 = vmatprep.subr.mxu0 0.0
    %5122 = vmatpush1.msra.mxu0 0.0
    %5123 = vmatprep.subr.mxu0 0.0
    %5124 = vmatpush1.msra.mxu0 0.0
    %5125 = vmatprep.subr.mxu0 0.0
    %5126 = vmatpush1.msra.mxu0 0.0
    %5127 = vmatprep.mubr.f32.mxu0 0.0
    %5128 = vmatmul.mubr.f32.gmra.mrb[0].mxu0 %v5061
    %v5129 = vpop.f32.mrb[0].mxu0
    %v5130 = vadd.f32 %v978, %v5129
    %v5131 = vpop.f32.mrb[0].mxu0
    %5132 = vdwg.mxu0
    %v5133 = vstv %s4761
    %v5134 = vmul.f32 %v5133, %v5130
    %v5135 = vadd.f32 %v4760, %v5134
    %v5136 = vsub.f32 %v5135, %v4948
    %5138 = vset.pattern.permute.xlu0 0
    %5139 = vperm.xlu0 %5138, %v5136
    %v5140 = vpop.permute.xlu0 %5139
    %v5142 = vmul.f32 %v5140, %v991
    %v5143 = vadd.f32 %v964, %v5142
    %5144 = vset.pattern.permute.xlu0 1
    %5145 = vperm.xlu0 %5144, %v5136
    %v5146 = vpop.permute.xlu0 %5145
    %v5148 = vmul.f32 %v5146, %v1001
    %v5149 = vadd.f32 %v5143, %v5148
    %5150 = vset.pattern.permute.xlu0 2
    %5151 = vperm.xlu0 %5150, %v5136
    %v5152 = vpop.permute.xlu0 %5151
    %v5154 = vmul.f32 %v5152, %v1011
    %v5155 = vadd.f32 %v5149, %v5154
    %5156 = vset.pattern.permute.xlu0 3
    %5157 = vperm.xlu0 %5156, %v5136
    %v5158 = vpop.permute.xlu0 %5157
    %v5160 = vmul.f32 %v5158, %v1021
    %v5161 = vadd.f32 %v5155, %v5160
    %vm5162 = vcmp.gt.f32.partialorder %v5161, 0.0
    %v5163 = vmin.f32 %v5161, 0.0
    %v5164 = vmul.f32 %v5163, 1.442695
    %v5165 = vpow.pop %v5164
    %v5166 = vsub.f32 %v5165, 1.0
    %v5167 = vsel %vm5162, %v5161, %v5166
    %v5169 = vsel %vm255, %v5167, 0
    %5171 = vmatprep.subr.mxu0 0.0
    %5172 = vmatpush1.msra.mxu0 %v951
    %5173 = vmatprep.subr.mxu0 0.0
    %5174 = vmatpush1.msra.mxu0 %v952
    %5175 = vmatprep.subr.mxu0 0.0
    %5176 = vmatpush1.msra.mxu0 %v953
    %5177 = vmatprep.subr.mxu0 0.0
    %5178 = vmatpush1.msra.mxu0 %v954
    %5179 = vmatprep.subr.mxu0 0.0
    %5180 = vmatpush1.msra.mxu0 0.0
    %5181 = vmatprep.subr.mxu0 0.0
    %5182 = vmatpush1.msra.mxu0 0.0
    %5183 = vmatprep.subr.mxu0 0.0
    %5184 = vmatpush1.msra.mxu0 0.0
    %5185 = vmatprep.subr.mxu0 0.0
    %5186 = vmatpush1.msra.mxu0 0.0
    %5187 = vmatprep.subr.mxu0 0.0
    %5188 = vmatpush1.msra.mxu0 0.0
    %5189 = vmatprep.subr.mxu0 0.0
    %5190 = vmatpush1.msra.mxu0 0.0
    %5191 = vmatprep.subr.mxu0 0.0
    %5192 = vmatpush1.msra.mxu0 0.0
    %5193 = vmatprep.subr.mxu0 0.0
    %5194 = vmatpush1.msra.mxu0 0.0
    %5195 = vmatprep.subr.mxu0 0.0
    %5196 = vmatpush1.msra.mxu0 0.0
    %5197 = vmatprep.subr.mxu0 0.0
    %5198 = vmatpush1.msra.mxu0 0.0
    %5199 = vmatprep.subr.mxu0 0.0
    %5200 = vmatpush1.msra.mxu0 0.0
    %5201 = vmatprep.subr.mxu0 0.0
    %5202 = vmatpush1.msra.mxu0 0.0
    %5203 = vmatprep.subr.mxu0 0.0
    %5204 = vmatpush1.msra.mxu0 0.0
    %5205 = vmatprep.subr.mxu0 0.0
    %5206 = vmatpush1.msra.mxu0 0.0
    %5207 = vmatprep.subr.mxu0 0.0
    %5208 = vmatpush1.msra.mxu0 0.0
    %5209 = vmatprep.subr.mxu0 0.0
    %5210 = vmatpush1.msra.mxu0 0.0
    %5211 = vmatprep.subr.mxu0 0.0
    %5212 = vmatpush1.msra.mxu0 0.0
    %5213 = vmatprep.subr.mxu0 0.0
    %5214 = vmatpush1.msra.mxu0 0.0
    %5215 = vmatprep.subr.mxu0 0.0
    %5216 = vmatpush1.msra.mxu0 0.0
    %5217 = vmatprep.subr.mxu0 0.0
    %5218 = vmatpush1.msra.mxu0 0.0
    %5219 = vmatprep.subr.mxu0 0.0
    %5220 = vmatpush1.msra.mxu0 0.0
    %5221 = vmatprep.subr.mxu0 0.0
    %5222 = vmatpush1.msra.mxu0 0.0
    %5223 = vmatprep.subr.mxu0 0.0
    %5224 = vmatpush1.msra.mxu0 0.0
    %5225 = vmatprep.subr.mxu0 0.0
    %5226 = vmatpush1.msra.mxu0 0.0
    %5227 = vmatprep.subr.mxu0 0.0
    %5228 = vmatpush1.msra.mxu0 0.0
    %5229 = vmatprep.subr.mxu0 0.0
    %5230 = vmatpush1.msra.mxu0 0.0
    %5231 = vmatprep.subr.mxu0 0.0
    %5232 = vmatpush1.msra.mxu0 0.0
    %5233 = vmatprep.subr.mxu0 0.0
    %5234 = vmatpush1.msra.mxu0 0.0
    %5235 = vmatprep.mubr.f32.mxu0 0.0
    %5236 = vmatmul.mubr.f32.gmra.mrb[0].mxu0 %v5169
    %v5237 = vpop.f32.mrb[0].mxu0
    %v5238 = vadd.f32 %v971, %v5237
    %v5239 = vpop.f32.mrb[0].mxu0
    %5240 = vdwg.mxu0
    %vm5241 = vcmp.gt.f32.partialorder %v5238, 0.0
    %v5242 = vmin.f32 %v5238, 0.0
    %v5243 = vmul.f32 %v5242, 1.442695
    %v5244 = vpow.pop %v5243
    %v5245 = vsub.f32 %v5244, 1.0
    %v5246 = vsel %vm5241, %v5238, %v5245
    %v5248 = vsel %vm255, %v5246, 0
    %5250 = vmatprep.subr.mxu0 0.0
    %5251 = vmatpush1.msra.mxu0 %v955
    %5252 = vmatprep.subr.mxu0 0.0
    %5253 = vmatpush1.msra.mxu0 %v956
    %5254 = vmatprep.subr.mxu0 0.0
    %5255 = vmatpush1.msra.mxu0 %v957
    %5256 = vmatprep.subr.mxu0 0.0
    %5257 = vmatpush1.msra.mxu0 %v958
    %5258 = vmatprep.subr.mxu0 0.0
    %5259 = vmatpush1.msra.mxu0 0.0
    %5260 = vmatprep.subr.mxu0 0.0
    %5261 = vmatpush1.msra.mxu0 0.0
    %5262 = vmatprep.subr.mxu0 0.0
    %5263 = vmatpush1.msra.mxu0 0.0
    %5264 = vmatprep.subr.mxu0 0.0
    %5265 = vmatpush1.msra.mxu0 0.0
    %5266 = vmatprep.subr.mxu0 0.0
    %5267 = vmatpush1.msra.mxu0 0.0
    %5268 = vmatprep.subr.mxu0 0.0
    %5269 = vmatpush1.msra.mxu0 0.0
    %5270 = vmatprep.subr.mxu0 0.0
    %5271 = vmatpush1.msra.mxu0 0.0
    %5272 = vmatprep.subr.mxu0 0.0
    %5273 = vmatpush1.msra.mxu0 0.0
    %5274 = vmatprep.subr.mxu0 0.0
    %5275 = vmatpush1.msra.mxu0 0.0
    %5276 = vmatprep.subr.mxu0 0.0
    %5277 = vmatpush1.msra.mxu0 0.0
    %5278 = vmatprep.subr.mxu0 0.0
    %5279 = vmatpush1.msra.mxu0 0.0
    %5280 = vmatprep.subr.mxu0 0.0
    %5281 = vmatpush1.msra.mxu0 0.0
    %5282 = vmatprep.subr.mxu0 0.0
    %5283 = vmatpush1.msra.mxu0 0.0
    %5284 = vmatprep.subr.mxu0 0.0
    %5285 = vmatpush1.msra.mxu0 0.0
    %5286 = vmatprep.subr.mxu0 0.0
    %5287 = vmatpush1.msra.mxu0 0.0
    %5288 = vmatprep.subr.mxu0 0.0
    %5289 = vmatpush1.msra.mxu0 0.0
    %5290 = vmatprep.subr.mxu0 0.0
    %5291 = vmatpush1.msra.mxu0 0.0
    %5292 = vmatprep.subr.mxu0 0.0
    %5293 = vmatpush1.msra.mxu0 0.0
    %5294 = vmatprep.subr.mxu0 0.0
    %5295 = vmatpush1.msra.mxu0 0.0
    %5296 = vmatprep.subr.mxu0 0.0
    %5297 = vmatpush1.msra.mxu0 0.0
    %5298 = vmatprep.subr.mxu0 0.0
    %5299 = vmatpush1.msra.mxu0 0.0
    %5300 = vmatprep.subr.mxu0 0.0
    %5301 = vmatpush1.msra.mxu0 0.0
    %5302 = vmatprep.subr.mxu0 0.0
    %5303 = vmatpush1.msra.mxu0 0.0
    %5304 = vmatprep.subr.mxu0 0.0
    %5305 = vmatpush1.msra.mxu0 0.0
    %5306 = vmatprep.subr.mxu0 0.0
    %5307 = vmatpush1.msra.mxu0 0.0
    %5308 = vmatprep.subr.mxu0 0.0
    %5309 = vmatpush1.msra.mxu0 0.0
    %5310 = vmatprep.subr.mxu0 0.0
    %5311 = vmatpush1.msra.mxu0 0.0
    %5312 = vmatprep.subr.mxu0 0.0
    %5313 = vmatpush1.msra.mxu0 0.0
    %5314 = vmatprep.mubr.f32.mxu0 0.0
    %5315 = vmatmul.mubr.f32.gmra.mrb[0].mxu0 %v5248
    %v5316 = vpop.f32.mrb[0].mxu0
    %v5317 = vadd.f32 %v978, %v5316
    %v5318 = vpop.f32.mrb[0].mxu0
    %5319 = vdwg.mxu0
    %v5320 = vsub.f32 %v4944, %v5130
    %v5321 = vadd.f32 %v5320, %v5317
    %v5322 = vmul.f32 %v5133, %v5321
    %v5323 = vadd.f32 %v4760, %v5322
    %5325 = vset.pattern.permute.xlu0 0
    %5326 = vperm.xlu0 %5325, %v5323
    %v5327 = vpop.permute.xlu0 %5326
    %v5329 = vmul.f32 %v5327, %v991
    %v5330 = vadd.f32 %v964, %v5329
    %5331 = vset.pattern.permute.xlu0 1
    %5332 = vperm.xlu0 %5331, %v5323
    %v5333 = vpop.permute.xlu0 %5332
    %v5335 = vmul.f32 %v5333, %v1001
    %v5336 = vadd.f32 %v5330, %v5335
    %5337 = vset.pattern.permute.xlu0 2
    %5338 = vperm.xlu0 %5337, %v5323
    %v5339 = vpop.permute.xlu0 %5338
    %v5341 = vmul.f32 %v5339, %v1011
    %v5342 = vadd.f32 %v5336, %v5341
    %5343 = vset.pattern.permute.xlu0 3
    %5344 = vperm.xlu0 %5343, %v5323
    %v5345 = vpop.permute.xlu0 %5344
    %v5347 = vmul.f32 %v5345, %v1021
    %v5348 = vadd.f32 %v5342, %v5347
    %vm5349 = vcmp.gt.f32.partialorder %v5348, 0.0
    %v5350 = vmin.f32 %v5348, 0.0
    %v5351 = vmul.f32 %v5350, 1.442695
    %v5352 = vpow.pop %v5351
    %v5353 = vsub.f32 %v5352, 1.0
    %v5354 = vsel %vm5349, %v5348, %v5353
    %v5356 = vsel %vm255, %v5354, 0
    %5358 = vmatprep.subr.mxu0 0.0
    %5359 = vmatpush1.msra.mxu0 %v951
    %5360 = vmatprep.subr.mxu0 0.0
    %5361 = vmatpush1.msra.mxu0 %v952
    %5362 = vmatprep.subr.mxu0 0.0
    %5363 = vmatpush1.msra.mxu0 %v953
    %5364 = vmatprep.subr.mxu0 0.0
    %5365 = vmatpush1.msra.mxu0 %v954
    %5366 = vmatprep.subr.mxu0 0.0
    %5367 = vmatpush1.msra.mxu0 0.0
    %5368 = vmatprep.subr.mxu0 0.0
    %5369 = vmatpush1.msra.mxu0 0.0
    %5370 = vmatprep.subr.mxu0 0.0
    %5371 = vmatpush1.msra.mxu0 0.0
    %5372 = vmatprep.subr.mxu0 0.0
    %5373 = vmatpush1.msra.mxu0 0.0
    %5374 = vmatprep.subr.mxu0 0.0
    %5375 = vmatpush1.msra.mxu0 0.0
    %5376 = vmatprep.subr.mxu0 0.0
    %5377 = vmatpush1.msra.mxu0 0.0
    %5378 = vmatprep.subr.mxu0 0.0
    %5379 = vmatpush1.msra.mxu0 0.0
    %5380 = vmatprep.subr.mxu0 0.0
    %5381 = vmatpush1.msra.mxu0 0.0
    %5382 = vmatprep.subr.mxu0 0.0
    %5383 = vmatpush1.msra.mxu0 0.0
    %5384 = vmatprep.subr.mxu0 0.0
    %5385 = vmatpush1.msra.mxu0 0.0
    %5386 = vmatprep.subr.mxu0 0.0
    %5387 = vmatpush1.msra.mxu0 0.0
    %5388 = vmatprep.subr.mxu0 0.0
    %5389 = vmatpush1.msra.mxu0 0.0
    %5390 = vmatprep.subr.mxu0 0.0
    %5391 = vmatpush1.msra.mxu0 0.0
    %5392 = vmatprep.subr.mxu0 0.0
    %5393 = vmatpush1.msra.mxu0 0.0
    %5394 = vmatprep.subr.mxu0 0.0
    %5395 = vmatpush1.msra.mxu0 0.0
    %5396 = vmatprep.subr.mxu0 0.0
    %5397 = vmatpush1.msra.mxu0 0.0
    %5398 = vmatprep.subr.mxu0 0.0
    %5399 = vmatpush1.msra.mxu0 0.0
    %5400 = vmatprep.subr.mxu0 0.0
    %5401 = vmatpush1.msra.mxu0 0.0
    %5402 = vmatprep.subr.mxu0 0.0
    %5403 = vmatpush1.msra.mxu0 0.0
    %5404 = vmatprep.subr.mxu0 0.0
    %5405 = vmatpush1.msra.mxu0 0.0
    %5406 = vmatprep.subr.mxu0 0.0
    %5407 = vmatpush1.msra.mxu0 0.0
    %5408 = vmatprep.subr.mxu0 0.0
    %5409 = vmatpush1.msra.mxu0 0.0
    %5410 = vmatprep.subr.mxu0 0.0
    %5411 = vmatpush1.msra.mxu0 0.0
    %5412 = vmatprep.subr.mxu0 0.0
    %5413 = vmatpush1.msra.mxu0 0.0
    %5414 = vmatprep.subr.mxu0 0.0
    %5415 = vmatpush1.msra.mxu0 0.0
    %5416 = vmatprep.subr.mxu0 0.0
    %5417 = vmatpush1.msra.mxu0 0.0
    %5418 = vmatprep.subr.mxu0 0.0
    %5419 = vmatpush1.msra.mxu0 0.0
    %5420 = vmatprep.subr.mxu0 0.0
    %5421 = vmatpush1.msra.mxu0 0.0
    %5422 = vmatprep.mubr.f32.mxu0 0.0
    %5423 = vmatmul.mubr.f32.gmra.mrb[0].mxu0 %v5356
    %v5424 = vpop.f32.mrb[0].mxu0
    %v5425 = vadd.f32 %v971, %v5424
    %v5426 = vpop.f32.mrb[0].mxu0
    %5427 = vdwg.mxu0
    %vm5428 = vcmp.gt.f32.partialorder %v5425, 0.0
    %v5429 = vmin.f32 %v5425, 0.0
    %v5430 = vmul.f32 %v5429, 1.442695
    %v5431 = vpow.pop %v5430
    %v5432 = vsub.f32 %v5431, 1.0
    %v5433 = vsel %vm5428, %v5425, %v5432
    %v5435 = vsel %vm255, %v5433, 0
    %5437 = vmatprep.subr.mxu0 0.0
    %5438 = vmatpush1.msra.mxu0 %v955
    %5439 = vmatprep.subr.mxu0 0.0
    %5440 = vmatpush1.msra.mxu0 %v956
    %5441 = vmatprep.subr.mxu0 0.0
    %5442 = vmatpush1.msra.mxu0 %v957
    %5443 = vmatprep.subr.mxu0 0.0
    %5444 = vmatpush1.msra.mxu0 %v958
    %5445 = vmatprep.subr.mxu0 0.0
    %5446 = vmatpush1.msra.mxu0 0.0
    %5447 = vmatprep.subr.mxu0 0.0
    %5448 = vmatpush1.msra.mxu0 0.0
    %5449 = vmatprep.subr.mxu0 0.0
    %5450 = vmatpush1.msra.mxu0 0.0
    %5451 = vmatprep.subr.mxu0 0.0
    %5452 = vmatpush1.msra.mxu0 0.0
    %5453 = vmatprep.subr.mxu0 0.0
    %5454 = vmatpush1.msra.mxu0 0.0
    %5455 = vmatprep.subr.mxu0 0.0
    %5456 = vmatpush1.msra.mxu0 0.0
    %5457 = vmatprep.subr.mxu0 0.0
    %5458 = vmatpush1.msra.mxu0 0.0
    %5459 = vmatprep.subr.mxu0 0.0
    %5460 = vmatpush1.msra.mxu0 0.0
    %5461 = vmatprep.subr.mxu0 0.0
    %5462 = vmatpush1.msra.mxu0 0.0
    %5463 = vmatprep.subr.mxu0 0.0
    %5464 = vmatpush1.msra.mxu0 0.0
    %5465 = vmatprep.subr.mxu0 0.0
    %5466 = vmatpush1.msra.mxu0 0.0
    %5467 = vmatprep.subr.mxu0 0.0
    %5468 = vmatpush1.msra.mxu0 0.0
    %5469 = vmatprep.subr.mxu0 0.0
    %5470 = vmatpush1.msra.mxu0 0.0
    %5471 = vmatprep.subr.mxu0 0.0
    %5472 = vmatpush1.msra.mxu0 0.0
    %5473 = vmatprep.subr.mxu0 0.0
    %5474 = vmatpush1.msra.mxu0 0.0
    %5475 = vmatprep.subr.mxu0 0.0
    %5476 = vmatpush1.msra.mxu0 0.0
    %5477 = vmatprep.subr.mxu0 0.0
    %5478 = vmatpush1.msra.mxu0 0.0
    %5479 = vmatprep.subr.mxu0 0.0
    %5480 = vmatpush1.msra.mxu0 0.0
    %5481 = vmatprep.subr.mxu0 0.0
    %5482 = vmatpush1.msra.mxu0 0.0
    %5483 = vmatprep.subr.mxu0 0.0
    %5484 = vmatpush1.msra.mxu0 0.0
    %5485 = vmatprep.subr.mxu0 0.0
    %5486 = vmatpush1.msra.mxu0 0.0
    %5487 = vmatprep.subr.mxu0 0.0
    %5488 = vmatpush1.msra.mxu0 0.0
    %5489 = vmatprep.subr.mxu0 0.0
    %5490 = vmatpush1.msra.mxu0 0.0
    %5491 = vmatprep.subr.mxu0 0.0
    %5492 = vmatpush1.msra.mxu0 0.0
    %5493 = vmatprep.subr.mxu0 0.0
    %5494 = vmatpush1.msra.mxu0 0.0
    %5495 = vmatprep.subr.mxu0 0.0
    %5496 = vmatpush1.msra.mxu0 0.0
    %5497 = vmatprep.subr.mxu0 0.0
    %5498 = vmatpush1.msra.mxu0 0.0
    %5499 = vmatprep.subr.mxu0 0.0
    %5500 = vmatpush1.msra.mxu0 0.0
    %5501 = vmatprep.mubr.f32.mxu0 0.0
    %5502 = vmatmul.mubr.f32.gmra.mrb[0].mxu0 %v5435
    %v5503 = vpop.f32.mrb[0].mxu0
    %v5504 = vadd.f32 %v978, %v5503
    %v5505 = vpop.f32.mrb[0].mxu0
    %5506 = vdwg.mxu0
    %v5507 = vadd.f32 %v5130, %v5317
    %v5508 = vmul.f32 %v5507, 3.0
    %v5509 = vadd.f32 %v4944, %v5508
    %v5510 = vadd.f32 %v5509, %v5504
    %v5511 = vstv %s4763
    %v5512 = vmul.f32 %v5511, %v5510
    %v5513 = vadd.f32 %v4760, %v5512
    %s5514 = sld [smem:[#allocation2 + $0x6]]
    %s5515 = sld [smem:[#allocation4 + $0x6]]
    %s5516 = sld [smem:[#allocation6 + $0x6]]
    %5518 = vset.pattern.permute.xlu0 0
    %5519 = vperm.xlu0 %5518, %v5513
    %v5520 = vpop.permute.xlu0 %5519
    %v5522 = vmul.f32 %v5520, %v991
    %v5523 = vadd.f32 %v964, %v5522
    %5524 = vset.pattern.permute.xlu0 1
    %5525 = vperm.xlu0 %5524, %v5513
    %v5526 = vpop.permute.xlu0 %5525
    %v5528 = vmul.f32 %v5526, %v1001
    %v5529 = vadd.f32 %v5523, %v5528
    %5530 = vset.pattern.permute.xlu0 2
    %5531 = vperm.xlu0 %5530, %v5513
    %v5532 = vpop.permute.xlu0 %5531
    %v5534 = vmul.f32 %v5532, %v1011
    %v5535 = vadd.f32 %v5529, %v5534
    %5536 = vset.pattern.permute.xlu0 3
    %5537 = vperm.xlu0 %5536, %v5513
    %v5538 = vpop.permute.xlu0 %5537
    %v5540 = vmul.f32 %v5538, %v1021
    %v5541 = vadd.f32 %v5535, %v5540
    %vm5542 = vcmp.gt.f32.partialorder %v5541, 0.0
    %v5543 = vmin.f32 %v5541, 0.0
    %v5544 = vmul.f32 %v5543, 1.442695
    %v5545 = vpow.pop %v5544
    %v5546 = vsub.f32 %v5545, 1.0
    %v5547 = vsel %vm5542, %v5541, %v5546
    %v5549 = vsel %vm255, %v5547, 0
    %5551 = vmatprep.subr.mxu0 0.0
    %5552 = vmatpush1.msra.mxu0 %v951
    %5553 = vmatprep.subr.mxu0 0.0
    %5554 = vmatpush1.msra.mxu0 %v952
    %5555 = vmatprep.subr.mxu0 0.0
    %5556 = vmatpush1.msra.mxu0 %v953
    %5557 = vmatprep.subr.mxu0 0.0
    %5558 = vmatpush1.msra.mxu0 %v954
    %5559 = vmatprep.subr.mxu0 0.0
    %5560 = vmatpush1.msra.mxu0 0.0
    %5561 = vmatprep.subr.mxu0 0.0
    %5562 = vmatpush1.msra.mxu0 0.0
    %5563 = vmatprep.subr.mxu0 0.0
    %5564 = vmatpush1.msra.mxu0 0.0
    %5565 = vmatprep.subr.mxu0 0.0
    %5566 = vmatpush1.msra.mxu0 0.0
    %5567 = vmatprep.subr.mxu0 0.0
    %5568 = vmatpush1.msra.mxu0 0.0
    %5569 = vmatprep.subr.mxu0 0.0
    %5570 = vmatpush1.msra.mxu0 0.0
    %5571 = vmatprep.subr.mxu0 0.0
    %5572 = vmatpush1.msra.mxu0 0.0
    %5573 = vmatprep.subr.mxu0 0.0
    %5574 = vmatpush1.msra.mxu0 0.0
    %5575 = vmatprep.subr.mxu0 0.0
    %5576 = vmatpush1.msra.mxu0 0.0
    %5577 = vmatprep.subr.mxu0 0.0
    %5578 = vmatpush1.msra.mxu0 0.0
    %5579 = vmatprep.subr.mxu0 0.0
    %5580 = vmatpush1.msra.mxu0 0.0
    %5581 = vmatprep.subr.mxu0 0.0
    %5582 = vmatpush1.msra.mxu0 0.0
    %5583 = vmatprep.subr.mxu0 0.0
    %5584 = vmatpush1.msra.mxu0 0.0
    %5585 = vmatprep.subr.mxu0 0.0
    %5586 = vmatpush1.msra.mxu0 0.0
    %5587 = vmatprep.subr.mxu0 0.0
    %5588 = vmatpush1.msra.mxu0 0.0
    %5589 = vmatprep.subr.mxu0 0.0
    %5590 = vmatpush1.msra.mxu0 0.0
    %5591 = vmatprep.subr.mxu0 0.0
    %5592 = vmatpush1.msra.mxu0 0.0
    %5593 = vmatprep.subr.mxu0 0.0
    %5594 = vmatpush1.msra.mxu0 0.0
    %5595 = vmatprep.subr.mxu0 0.0
    %5596 = vmatpush1.msra.mxu0 0.0
    %5597 = vmatprep.subr.mxu0 0.0
    %5598 = vmatpush1.msra.mxu0 0.0
    %5599 = vmatprep.subr.mxu0 0.0
    %5600 = vmatpush1.msra.mxu0 0.0
    %5601 = vmatprep.subr.mxu0 0.0
    %5602 = vmatpush1.msra.mxu0 0.0
    %5603 = vmatprep.subr.mxu0 0.0
    %5604 = vmatpush1.msra.mxu0 0.0
    %5605 = vmatprep.subr.mxu0 0.0
    %5606 = vmatpush1.msra.mxu0 0.0
    %5607 = vmatprep.subr.mxu0 0.0
    %5608 = vmatpush1.msra.mxu0 0.0
    %5609 = vmatprep.subr.mxu0 0.0
    %5610 = vmatpush1.msra.mxu0 0.0
    %5611 = vmatprep.subr.mxu0 0.0
    %5612 = vmatpush1.msra.mxu0 0.0
    %5613 = vmatprep.subr.mxu0 0.0
    %5614 = vmatpush1.msra.mxu0 0.0
    %5615 = vmatprep.mubr.f32.mxu0 0.0
    %5616 = vmatmul.mubr.f32.gmra.mrb[0].mxu0 %v5549
    %v5617 = vpop.f32.mrb[0].mxu0
    %v5618 = vadd.f32 %v971, %v5617
    %v5619 = vpop.f32.mrb[0].mxu0
    %5620 = vdwg.mxu0
    %vm5621 = vcmp.gt.f32.partialorder %v5618, 0.0
    %v5622 = vmin.f32 %v5618, 0.0
    %v5623 = vmul.f32 %v5622, 1.442695
    %v5624 = vpow.pop %v5623
    %v5625 = vsub.f32 %v5624, 1.0
    %v5626 = vsel %vm5621, %v5618, %v5625
    %v5628 = vsel %vm255, %v5626, 0
    %5630 = vmatprep.subr.mxu0 0.0
    %5631 = vmatpush1.msra.mxu0 %v955
    %5632 = vmatprep.subr.mxu0 0.0
    %5633 = vmatpush1.msra.mxu0 %v956
    %5634 = vmatprep.subr.mxu0 0.0
    %5635 = vmatpush1.msra.mxu0 %v957
    %5636 = vmatprep.subr.mxu0 0.0
    %5637 = vmatpush1.msra.mxu0 %v958
    %5638 = vmatprep.subr.mxu0 0.0
    %5639 = vmatpush1.msra.mxu0 0.0
    %5640 = vmatprep.subr.mxu0 0.0
    %5641 = vmatpush1.msra.mxu0 0.0
    %5642 = vmatprep.subr.mxu0 0.0
    %5643 = vmatpush1.msra.mxu0 0.0
    %5644 = vmatprep.subr.mxu0 0.0
    %5645 = vmatpush1.msra.mxu0 0.0
    %5646 = vmatprep.subr.mxu0 0.0
    %5647 = vmatpush1.msra.mxu0 0.0
    %5648 = vmatprep.subr.mxu0 0.0
    %5649 = vmatpush1.msra.mxu0 0.0
    %5650 = vmatprep.subr.mxu0 0.0
    %5651 = vmatpush1.msra.mxu0 0.0
    %5652 = vmatprep.subr.mxu0 0.0
    %5653 = vmatpush1.msra.mxu0 0.0
    %5654 = vmatprep.subr.mxu0 0.0
    %5655 = vmatpush1.msra.mxu0 0.0
    %5656 = vmatprep.subr.mxu0 0.0
    %5657 = vmatpush1.msra.mxu0 0.0
    %5658 = vmatprep.subr.mxu0 0.0
    %5659 = vmatpush1.msra.mxu0 0.0
    %5660 = vmatprep.subr.mxu0 0.0
    %5661 = vmatpush1.msra.mxu0 0.0
    %5662 = vmatprep.subr.mxu0 0.0
    %5663 = vmatpush1.msra.mxu0 0.0
    %5664 = vmatprep.subr.mxu0 0.0
    %5665 = vmatpush1.msra.mxu0 0.0
    %5666 = vmatprep.subr.mxu0 0.0
    %5667 = vmatpush1.msra.mxu0 0.0
    %5668 = vmatprep.subr.mxu0 0.0
    %5669 = vmatpush1.msra.mxu0 0.0
    %5670 = vmatprep.subr.mxu0 0.0
    %5671 = vmatpush1.msra.mxu0 0.0
    %5672 = vmatprep.subr.mxu0 0.0
    %5673 = vmatpush1.msra.mxu0 0.0
    %5674 = vmatprep.subr.mxu0 0.0
    %5675 = vmatpush1.msra.mxu0 0.0
    %5676 = vmatprep.subr.mxu0 0.0
    %5677 = vmatpush1.msra.mxu0 0.0
    %5678 = vmatprep.subr.mxu0 0.0
    %5679 = vmatpush1.msra.mxu0 0.0
    %5680 = vmatprep.subr.mxu0 0.0
    %5681 = vmatpush1.msra.mxu0 0.0
    %5682 = vmatprep.subr.mxu0 0.0
    %5683 = vmatpush1.msra.mxu0 0.0
    %5684 = vmatprep.subr.mxu0 0.0
    %5685 = vmatpush1.msra.mxu0 0.0
    %5686 = vmatprep.subr.mxu0 0.0
    %5687 = vmatpush1.msra.mxu0 0.0
    %5688 = vmatprep.subr.mxu0 0.0
    %5689 = vmatpush1.msra.mxu0 0.0
    %5690 = vmatprep.subr.mxu0 0.0
    %5691 = vmatpush1.msra.mxu0 0.0
    %5692 = vmatprep.subr.mxu0 0.0
    %5693 = vmatpush1.msra.mxu0 0.0
    %5694 = vmatprep.mubr.f32.mxu0 0.0
    %5695 = vmatmul.mubr.f32.gmra.mrb[0].mxu0 %v5628
    %v5696 = vpop.f32.mrb[0].mxu0
    %v5697 = vadd.f32 %v978, %v5696
    %v5698 = vpop.f32.mrb[0].mxu0
    %5699 = vdwg.mxu0
    %v5700 = vstv %s5515
    %v5701 = vmul.f32 %v5700, %v5697
    %v5702 = vadd.f32 %v5513, %v5701
    %5704 = vset.pattern.permute.xlu0 0
    %5705 = vperm.xlu0 %5704, %v5702
    %v5706 = vpop.permute.xlu0 %5705
    %v5708 = vmul.f32 %v5706, %v991
    %v5709 = vadd.f32 %v964, %v5708
    %5710 = vset.pattern.permute.xlu0 1
    %5711 = vperm.xlu0 %5710, %v5702
    %v5712 = vpop.permute.xlu0 %5711
    %v5714 = vmul.f32 %v5712, %v1001
    %v5715 = vadd.f32 %v5709, %v5714
    %5716 = vset.pattern.permute.xlu0 2
    %5717 = vperm.xlu0 %5716, %v5702
    %v5718 = vpop.permute.xlu0 %5717
    %v5720 = vmul.f32 %v5718, %v1011
    %v5721 = vadd.f32 %v5715, %v5720
    %5722 = vset.pattern.permute.xlu0 3
    %5723 = vperm.xlu0 %5722, %v5702
    %v5724 = vpop.permute.xlu0 %5723
    %v5726 = vmul.f32 %v5724, %v1021
    %v5727 = vadd.f32 %v5721, %v5726
    %vm5728 = vcmp.gt.f32.partialorder %v5727, 0.0
    %v5729 = vmin.f32 %v5727, 0.0
    %v5730 = vmul.f32 %v5729, 1.442695
    %v5731 = vpow.pop %v5730
    %v5732 = vsub.f32 %v5731, 1.0
    %v5733 = vsel %vm5728, %v5727, %v5732
    %v5735 = vsel %vm255, %v5733, 0
    %5737 = vmatprep.subr.mxu0 0.0
    %5738 = vmatpush1.msra.mxu0 %v951
    %5739 = vmatprep.subr.mxu0 0.0
    %5740 = vmatpush1.msra.mxu0 %v952
    %5741 = vmatprep.subr.mxu0 0.0
    %5742 = vmatpush1.msra.mxu0 %v953
    %5743 = vmatprep.subr.mxu0 0.0
    %5744 = vmatpush1.msra.mxu0 %v954
    %5745 = vmatprep.subr.mxu0 0.0
    %5746 = vmatpush1.msra.mxu0 0.0
    %5747 = vmatprep.subr.mxu0 0.0
    %5748 = vmatpush1.msra.mxu0 0.0
    %5749 = vmatprep.subr.mxu0 0.0
    %5750 = vmatpush1.msra.mxu0 0.0
    %5751 = vmatprep.subr.mxu0 0.0
    %5752 = vmatpush1.msra.mxu0 0.0
    %5753 = vmatprep.subr.mxu0 0.0
    %5754 = vmatpush1.msra.mxu0 0.0
    %5755 = vmatprep.subr.mxu0 0.0
    %5756 = vmatpush1.msra.mxu0 0.0
    %5757 = vmatprep.subr.mxu0 0.0
    %5758 = vmatpush1.msra.mxu0 0.0
    %5759 = vmatprep.subr.mxu0 0.0
    %5760 = vmatpush1.msra.mxu0 0.0
    %5761 = vmatprep.subr.mxu0 0.0
    %5762 = vmatpush1.msra.mxu0 0.0
    %5763 = vmatprep.subr.mxu0 0.0
    %5764 = vmatpush1.msra.mxu0 0.0
    %5765 = vmatprep.subr.mxu0 0.0
    %5766 = vmatpush1.msra.mxu0 0.0
    %5767 = vmatprep.subr.mxu0 0.0
    %5768 = vmatpush1.msra.mxu0 0.0
    %5769 = vmatprep.subr.mxu0 0.0
    %5770 = vmatpush1.msra.mxu0 0.0
    %5771 = vmatprep.subr.mxu0 0.0
    %5772 = vmatpush1.msra.mxu0 0.0
    %5773 = vmatprep.subr.mxu0 0.0
    %5774 = vmatpush1.msra.mxu0 0.0
    %5775 = vmatprep.subr.mxu0 0.0
    %5776 = vmatpush1.msra.mxu0 0.0
    %5777 = vmatprep.subr.mxu0 0.0
    %5778 = vmatpush1.msra.mxu0 0.0
    %5779 = vmatprep.subr.mxu0 0.0
    %5780 = vmatpush1.msra.mxu0 0.0
    %5781 = vmatprep.subr.mxu0 0.0
    %5782 = vmatpush1.msra.mxu0 0.0
    %5783 = vmatprep.subr.mxu0 0.0
    %5784 = vmatpush1.msra.mxu0 0.0
    %5785 = vmatprep.subr.mxu0 0.0
    %5786 = vmatpush1.msra.mxu0 0.0
    %5787 = vmatprep.subr.mxu0 0.0
    %5788 = vmatpush1.msra.mxu0 0.0
    %5789 = vmatprep.subr.mxu0 0.0
    %5790 = vmatpush1.msra.mxu0 0.0
    %5791 = vmatprep.subr.mxu0 0.0
    %5792 = vmatpush1.msra.mxu0 0.0
    %5793 = vmatprep.subr.mxu0 0.0
    %5794 = vmatpush1.msra.mxu0 0.0
    %5795 = vmatprep.subr.mxu0 0.0
    %5796 = vmatpush1.msra.mxu0 0.0
    %5797 = vmatprep.subr.mxu0 0.0
    %5798 = vmatpush1.msra.mxu0 0.0
    %5799 = vmatprep.subr.mxu0 0.0
    %5800 = vmatpush1.msra.mxu0 0.0
    %5801 = vmatprep.mubr.f32.mxu0 0.0
    %5802 = vmatmul.mubr.f32.gmra.mrb[0].mxu0 %v5735
    %v5803 = vpop.f32.mrb[0].mxu0
    %v5804 = vadd.f32 %v971, %v5803
    %v5805 = vpop.f32.mrb[0].mxu0
    %5806 = vdwg.mxu0
    %vm5807 = vcmp.gt.f32.partialorder %v5804, 0.0
    %v5808 = vmin.f32 %v5804, 0.0
    %v5809 = vmul.f32 %v5808, 1.442695
    %v5810 = vpow.pop %v5809
    %v5811 = vsub.f32 %v5810, 1.0
    %v5812 = vsel %vm5807, %v5804, %v5811
    %v5814 = vsel %vm255, %v5812, 0
    %5816 = vmatprep.subr.mxu0 0.0
    %5817 = vmatpush1.msra.mxu0 %v955
    %5818 = vmatprep.subr.mxu0 0.0
    %5819 = vmatpush1.msra.mxu0 %v956
    %5820 = vmatprep.subr.mxu0 0.0
    %5821 = vmatpush1.msra.mxu0 %v957
    %5822 = vmatprep.subr.mxu0 0.0
    %5823 = vmatpush1.msra.mxu0 %v958
    %5824 = vmatprep.subr.mxu0 0.0
    %5825 = vmatpush1.msra.mxu0 0.0
    %5826 = vmatprep.subr.mxu0 0.0
    %5827 = vmatpush1.msra.mxu0 0.0
    %5828 = vmatprep.subr.mxu0 0.0
    %5829 = vmatpush1.msra.mxu0 0.0
    %5830 = vmatprep.subr.mxu0 0.0
    %5831 = vmatpush1.msra.mxu0 0.0
    %5832 = vmatprep.subr.mxu0 0.0
    %5833 = vmatpush1.msra.mxu0 0.0
    %5834 = vmatprep.subr.mxu0 0.0
    %5835 = vmatpush1.msra.mxu0 0.0
    %5836 = vmatprep.subr.mxu0 0.0
    %5837 = vmatpush1.msra.mxu0 0.0
    %5838 = vmatprep.subr.mxu0 0.0
    %5839 = vmatpush1.msra.mxu0 0.0
    %5840 = vmatprep.subr.mxu0 0.0
    %5841 = vmatpush1.msra.mxu0 0.0
    %5842 = vmatprep.subr.mxu0 0.0
    %5843 = vmatpush1.msra.mxu0 0.0
    %5844 = vmatprep.subr.mxu0 0.0
    %5845 = vmatpush1.msra.mxu0 0.0
    %5846 = vmatprep.subr.mxu0 0.0
    %5847 = vmatpush1.msra.mxu0 0.0
    %5848 = vmatprep.subr.mxu0 0.0
    %5849 = vmatpush1.msra.mxu0 0.0
    %5850 = vmatprep.subr.mxu0 0.0
    %5851 = vmatpush1.msra.mxu0 0.0
    %5852 = vmatprep.subr.mxu0 0.0
    %5853 = vmatpush1.msra.mxu0 0.0
    %5854 = vmatprep.subr.mxu0 0.0
    %5855 = vmatpush1.msra.mxu0 0.0
    %5856 = vmatprep.subr.mxu0 0.0
    %5857 = vmatpush1.msra.mxu0 0.0
    %5858 = vmatprep.subr.mxu0 0.0
    %5859 = vmatpush1.msra.mxu0 0.0
    %5860 = vmatprep.subr.mxu0 0.0
    %5861 = vmatpush1.msra.mxu0 0.0
    %5862 = vmatprep.subr.mxu0 0.0
    %5863 = vmatpush1.msra.mxu0 0.0
    %5864 = vmatprep.subr.mxu0 0.0
    %5865 = vmatpush1.msra.mxu0 0.0
    %5866 = vmatprep.subr.mxu0 0.0
    %5867 = vmatpush1.msra.mxu0 0.0
    %5868 = vmatprep.subr.mxu0 0.0
    %5869 = vmatpush1.msra.mxu0 0.0
    %5870 = vmatprep.subr.mxu0 0.0
    %5871 = vmatpush1.msra.mxu0 0.0
    %5872 = vmatprep.subr.mxu0 0.0
    %5873 = vmatpush1.msra.mxu0 0.0
    %5874 = vmatprep.subr.mxu0 0.0
    %5875 = vmatpush1.msra.mxu0 0.0
    %5876 = vmatprep.subr.mxu0 0.0
    %5877 = vmatpush1.msra.mxu0 0.0
    %5878 = vmatprep.subr.mxu0 0.0
    %5879 = vmatpush1.msra.mxu0 0.0
    %5880 = vmatprep.mubr.f32.mxu0 0.0
    %5881 = vmatmul.mubr.f32.gmra.mrb[0].mxu0 %v5814
    %v5882 = vpop.f32.mrb[0].mxu0
    %v5883 = vadd.f32 %v978, %v5882
    %v5884 = vpop.f32.mrb[0].mxu0
    %5885 = vdwg.mxu0
    %v5886 = vstv %s5514
    %v5887 = vmul.f32 %v5886, %v5883
    %v5888 = vadd.f32 %v5513, %v5887
    %v5889 = vsub.f32 %v5888, %v5701
    %5891 = vset.pattern.permute.xlu0 0
    %5892 = vperm.xlu0 %5891, %v5889
    %v5893 = vpop.permute.xlu0 %5892
    %v5895 = vmul.f32 %v5893, %v991
    %v5896 = vadd.f32 %v964, %v5895
    %5897 = vset.pattern.permute.xlu0 1
    %5898 = vperm.xlu0 %5897, %v5889
    %v5899 = vpop.permute.xlu0 %5898
    %v5901 = vmul.f32 %v5899, %v1001
    %v5902 = vadd.f32 %v5896, %v5901
    %5903 = vset.pattern.permute.xlu0 2
    %5904 = vperm.xlu0 %5903, %v5889
    %v5905 = vpop.permute.xlu0 %5904
    %v5907 = vmul.f32 %v5905, %v1011
    %v5908 = vadd.f32 %v5902, %v5907
    %5909 = vset.pattern.permute.xlu0 3
    %5910 = vperm.xlu0 %5909, %v5889
    %v5911 = vpop.permute.xlu0 %5910
    %v5913 = vmul.f32 %v5911, %v1021
    %v5914 = vadd.f32 %v5908, %v5913
    %vm5915 = vcmp.gt.f32.partialorder %v5914, 0.0
    %v5916 = vmin.f32 %v5914, 0.0
    %v5917 = vmul.f32 %v5916, 1.442695
    %v5918 = vpow.pop %v5917
    %v5919 = vsub.f32 %v5918, 1.0
    %v5920 = vsel %vm5915, %v5914, %v5919
    %v5922 = vsel %vm255, %v5920, 0
    %5924 = vmatprep.subr.mxu0 0.0
    %5925 = vmatpush1.msra.mxu0 %v951
    %5926 = vmatprep.subr.mxu0 0.0
    %5927 = vmatpush1.msra.mxu0 %v952
    %5928 = vmatprep.subr.mxu0 0.0
    %5929 = vmatpush1.msra.mxu0 %v953
    %5930 = vmatprep.subr.mxu0 0.0
    %5931 = vmatpush1.msra.mxu0 %v954
    %5932 = vmatprep.subr.mxu0 0.0
    %5933 = vmatpush1.msra.mxu0 0.0
    %5934 = vmatprep.subr.mxu0 0.0
    %5935 = vmatpush1.msra.mxu0 0.0
    %5936 = vmatprep.subr.mxu0 0.0
    %5937 = vmatpush1.msra.mxu0 0.0
    %5938 = vmatprep.subr.mxu0 0.0
    %5939 = vmatpush1.msra.mxu0 0.0
    %5940 = vmatprep.subr.mxu0 0.0
    %5941 = vmatpush1.msra.mxu0 0.0
    %5942 = vmatprep.subr.mxu0 0.0
    %5943 = vmatpush1.msra.mxu0 0.0
    %5944 = vmatprep.subr.mxu0 0.0
    %5945 = vmatpush1.msra.mxu0 0.0
    %5946 = vmatprep.subr.mxu0 0.0
    %5947 = vmatpush1.msra.mxu0 0.0
    %5948 = vmatprep.subr.mxu0 0.0
    %5949 = vmatpush1.msra.mxu0 0.0
    %5950 = vmatprep.subr.mxu0 0.0
    %5951 = vmatpush1.msra.mxu0 0.0
    %5952 = vmatprep.subr.mxu0 0.0
    %5953 = vmatpush1.msra.mxu0 0.0
    %5954 = vmatprep.subr.mxu0 0.0
    %5955 = vmatpush1.msra.mxu0 0.0
    %5956 = vmatprep.subr.mxu0 0.0
    %5957 = vmatpush1.msra.mxu0 0.0
    %5958 = vmatprep.subr.mxu0 0.0
    %5959 = vmatpush1.msra.mxu0 0.0
    %5960 = vmatprep.subr.mxu0 0.0
    %5961 = vmatpush1.msra.mxu0 0.0
    %5962 = vmatprep.subr.mxu0 0.0
    %5963 = vmatpush1.msra.mxu0 0.0
    %5964 = vmatprep.subr.mxu0 0.0
    %5965 = vmatpush1.msra.mxu0 0.0
    %5966 = vmatprep.subr.mxu0 0.0
    %5967 = vmatpush1.msra.mxu0 0.0
    %5968 = vmatprep.subr.mxu0 0.0
    %5969 = vmatpush1.msra.mxu0 0.0
    %5970 = vmatprep.subr.mxu0 0.0
    %5971 = vmatpush1.msra.mxu0 0.0
    %5972 = vmatprep.subr.mxu0 0.0
    %5973 = vmatpush1.msra.mxu0 0.0
    %5974 = vmatprep.subr.mxu0 0.0
    %5975 = vmatpush1.msra.mxu0 0.0
    %5976 = vmatprep.subr.mxu0 0.0
    %5977 = vmatpush1.msra.mxu0 0.0
    %5978 = vmatprep.subr.mxu0 0.0
    %5979 = vmatpush1.msra.mxu0 0.0
    %5980 = vmatprep.subr.mxu0 0.0
    %5981 = vmatpush1.msra.mxu0 0.0
    %5982 = vmatprep.subr.mxu0 0.0
    %5983 = vmatpush1.msra.mxu0 0.0
    %5984 = vmatprep.subr.mxu0 0.0
    %5985 = vmatpush1.msra.mxu0 0.0
    %5986 = vmatprep.subr.mxu0 0.0
    %5987 = vmatpush1.msra.mxu0 0.0
    %5988 = vmatprep.mubr.f32.mxu0 0.0
    %5989 = vmatmul.mubr.f32.gmra.mrb[0].mxu0 %v5922
    %v5990 = vpop.f32.mrb[0].mxu0
    %v5991 = vadd.f32 %v971, %v5990
    %v5992 = vpop.f32.mrb[0].mxu0
    %5993 = vdwg.mxu0
    %vm5994 = vcmp.gt.f32.partialorder %v5991, 0.0
    %v5995 = vmin.f32 %v5991, 0.0
    %v5996 = vmul.f32 %v5995, 1.442695
    %v5997 = vpow.pop %v5996
    %v5998 = vsub.f32 %v5997, 1.0
    %v5999 = vsel %vm5994, %v5991, %v5998
    %v6001 = vsel %vm255, %v5999, 0
    %6003 = vmatprep.subr.mxu0 0.0
    %6004 = vmatpush1.msra.mxu0 %v955
    %6005 = vmatprep.subr.mxu0 0.0
    %6006 = vmatpush1.msra.mxu0 %v956
    %6007 = vmatprep.subr.mxu0 0.0
    %6008 = vmatpush1.msra.mxu0 %v957
    %6009 = vmatprep.subr.mxu0 0.0
    %6010 = vmatpush1.msra.mxu0 %v958
    %6011 = vmatprep.subr.mxu0 0.0
    %6012 = vmatpush1.msra.mxu0 0.0
    %6013 = vmatprep.subr.mxu0 0.0
    %6014 = vmatpush1.msra.mxu0 0.0
    %6015 = vmatprep.subr.mxu0 0.0
    %6016 = vmatpush1.msra.mxu0 0.0
    %6017 = vmatprep.subr.mxu0 0.0
    %6018 = vmatpush1.msra.mxu0 0.0
    %6019 = vmatprep.subr.mxu0 0.0
    %6020 = vmatpush1.msra.mxu0 0.0
    %6021 = vmatprep.subr.mxu0 0.0
    %6022 = vmatpush1.msra.mxu0 0.0
    %6023 = vmatprep.subr.mxu0 0.0
    %6024 = vmatpush1.msra.mxu0 0.0
    %6025 = vmatprep.subr.mxu0 0.0
    %6026 = vmatpush1.msra.mxu0 0.0
    %6027 = vmatprep.subr.mxu0 0.0
    %6028 = vmatpush1.msra.mxu0 0.0
    %6029 = vmatprep.subr.mxu0 0.0
    %6030 = vmatpush1.msra.mxu0 0.0
    %6031 = vmatprep.subr.mxu0 0.0
    %6032 = vmatpush1.msra.mxu0 0.0
    %6033 = vmatprep.subr.mxu0 0.0
    %6034 = vmatpush1.msra.mxu0 0.0
    %6035 = vmatprep.subr.mxu0 0.0
    %6036 = vmatpush1.msra.mxu0 0.0
    %6037 = vmatprep.subr.mxu0 0.0
    %6038 = vmatpush1.msra.mxu0 0.0
    %6039 = vmatprep.subr.mxu0 0.0
    %6040 = vmatpush1.msra.mxu0 0.0
    %6041 = vmatprep.subr.mxu0 0.0
    %6042 = vmatpush1.msra.mxu0 0.0
    %6043 = vmatprep.subr.mxu0 0.0
    %6044 = vmatpush1.msra.mxu0 0.0
    %6045 = vmatprep.subr.mxu0 0.0
    %6046 = vmatpush1.msra.mxu0 0.0
    %6047 = vmatprep.subr.mxu0 0.0
    %6048 = vmatpush1.msra.mxu0 0.0
    %6049 = vmatprep.subr.mxu0 0.0
    %6050 = vmatpush1.msra.mxu0 0.0
    %6051 = vmatprep.subr.mxu0 0.0
    %6052 = vmatpush1.msra.mxu0 0.0
    %6053 = vmatprep.subr.mxu0 0.0
    %6054 = vmatpush1.msra.mxu0 0.0
    %6055 = vmatprep.subr.mxu0 0.0
    %6056 = vmatpush1.msra.mxu0 0.0
    %6057 = vmatprep.subr.mxu0 0.0
    %6058 = vmatpush1.msra.mxu0 0.0
    %6059 = vmatprep.subr.mxu0 0.0
    %6060 = vmatpush1.msra.mxu0 0.0
    %6061 = vmatprep.subr.mxu0 0.0
    %6062 = vmatpush1.msra.mxu0 0.0
    %6063 = vmatprep.subr.mxu0 0.0
    %6064 = vmatpush1.msra.mxu0 0.0
    %6065 = vmatprep.subr.mxu0 0.0
    %6066 = vmatpush1.msra.mxu0 0.0
    %6067 = vmatprep.mubr.f32.mxu0 0.0
    %6068 = vmatmul.mubr.f32.gmra.mrb[0].mxu0 %v6001
    %v6069 = vpop.f32.mrb[0].mxu0
    %v6070 = vadd.f32 %v978, %v6069
    %v6071 = vpop.f32.mrb[0].mxu0
    %6072 = vdwg.mxu0
    %v6073 = vsub.f32 %v5697, %v5883
    %v6074 = vadd.f32 %v6073, %v6070
    %v6075 = vmul.f32 %v5886, %v6074
    %v6076 = vadd.f32 %v5513, %v6075
    %6078 = vset.pattern.permute.xlu0 0
    %6079 = vperm.xlu0 %6078, %v6076
    %v6080 = vpop.permute.xlu0 %6079
    %v6082 = vmul.f32 %v6080, %v991
    %v6083 = vadd.f32 %v964, %v6082
    %6084 = vset.pattern.permute.xlu0 1
    %6085 = vperm.xlu0 %6084, %v6076
    %v6086 = vpop.permute.xlu0 %6085
    %v6088 = vmul.f32 %v6086, %v1001
    %v6089 = vadd.f32 %v6083, %v6088
    %6090 = vset.pattern.permute.xlu0 2
    %6091 = vperm.xlu0 %6090, %v6076
    %v6092 = vpop.permute.xlu0 %6091
    %v6094 = vmul.f32 %v6092, %v1011
    %v6095 = vadd.f32 %v6089, %v6094
    %6096 = vset.pattern.permute.xlu0 3
    %6097 = vperm.xlu0 %6096, %v6076
    %v6098 = vpop.permute.xlu0 %6097
    %v6100 = vmul.f32 %v6098, %v1021
    %v6101 = vadd.f32 %v6095, %v6100
    %vm6102 = vcmp.gt.f32.partialorder %v6101, 0.0
    %v6103 = vmin.f32 %v6101, 0.0
    %v6104 = vmul.f32 %v6103, 1.442695
    %v6105 = vpow.pop %v6104
    %v6106 = vsub.f32 %v6105, 1.0
    %v6107 = vsel %vm6102, %v6101, %v6106
    %v6109 = vsel %vm255, %v6107, 0
    %6111 = vmatprep.subr.mxu0 0.0
    %6112 = vmatpush1.msra.mxu0 %v951
    %6113 = vmatprep.subr.mxu0 0.0
    %6114 = vmatpush1.msra.mxu0 %v952
    %6115 = vmatprep.subr.mxu0 0.0
    %6116 = vmatpush1.msra.mxu0 %v953
    %6117 = vmatprep.subr.mxu0 0.0
    %6118 = vmatpush1.msra.mxu0 %v954
    %6119 = vmatprep.subr.mxu0 0.0
    %6120 = vmatpush1.msra.mxu0 0.0
    %6121 = vmatprep.subr.mxu0 0.0
    %6122 = vmatpush1.msra.mxu0 0.0
    %6123 = vmatprep.subr.mxu0 0.0
    %6124 = vmatpush1.msra.mxu0 0.0
    %6125 = vmatprep.subr.mxu0 0.0
    %6126 = vmatpush1.msra.mxu0 0.0
    %6127 = vmatprep.subr.mxu0 0.0
    %6128 = vmatpush1.msra.mxu0 0.0
    %6129 = vmatprep.subr.mxu0 0.0
    %6130 = vmatpush1.msra.mxu0 0.0
    %6131 = vmatprep.subr.mxu0 0.0
    %6132 = vmatpush1.msra.mxu0 0.0
    %6133 = vmatprep.subr.mxu0 0.0
    %6134 = vmatpush1.msra.mxu0 0.0
    %6135 = vmatprep.subr.mxu0 0.0
    %6136 = vmatpush1.msra.mxu0 0.0
    %6137 = vmatprep.subr.mxu0 0.0
    %6138 = vmatpush1.msra.mxu0 0.0
    %6139 = vmatprep.subr.mxu0 0.0
    %6140 = vmatpush1.msra.mxu0 0.0
    %6141 = vmatprep.subr.mxu0 0.0
    %6142 = vmatpush1.msra.mxu0 0.0
    %6143 = vmatprep.subr.mxu0 0.0
    %6144 = vmatpush1.msra.mxu0 0.0
    %6145 = vmatprep.subr.mxu0 0.0
    %6146 = vmatpush1.msra.mxu0 0.0
    %6147 = vmatprep.subr.mxu0 0.0
    %6148 = vmatpush1.msra.mxu0 0.0
    %6149 = vmatprep.subr.mxu0 0.0
    %6150 = vmatpush1.msra.mxu0 0.0
    %6151 = vmatprep.subr.mxu0 0.0
    %6152 = vmatpush1.msra.mxu0 0.0
    %6153 = vmatprep.subr.mxu0 0.0
    %6154 = vmatpush1.msra.mxu0 0.0
    %6155 = vmatprep.subr.mxu0 0.0
    %6156 = vmatpush1.msra.mxu0 0.0
    %6157 = vmatprep.subr.mxu0 0.0
    %6158 = vmatpush1.msra.mxu0 0.0
    %6159 = vmatprep.subr.mxu0 0.0
    %6160 = vmatpush1.msra.mxu0 0.0
    %6161 = vmatprep.subr.mxu0 0.0
    %6162 = vmatpush1.msra.mxu0 0.0
    %6163 = vmatprep.subr.mxu0 0.0
    %6164 = vmatpush1.msra.mxu0 0.0
    %6165 = vmatprep.subr.mxu0 0.0
    %6166 = vmatpush1.msra.mxu0 0.0
    %6167 = vmatprep.subr.mxu0 0.0
    %6168 = vmatpush1.msra.mxu0 0.0
    %6169 = vmatprep.subr.mxu0 0.0
    %6170 = vmatpush1.msra.mxu0 0.0
    %6171 = vmatprep.subr.mxu0 0.0
    %6172 = vmatpush1.msra.mxu0 0.0
    %6173 = vmatprep.subr.mxu0 0.0
    %6174 = vmatpush1.msra.mxu0 0.0
    %6175 = vmatprep.mubr.f32.mxu0 0.0
    %6176 = vmatmul.mubr.f32.gmra.mrb[0].mxu0 %v6109
    %v6177 = vpop.f32.mrb[0].mxu0
    %v6178 = vadd.f32 %v971, %v6177
    %v6179 = vpop.f32.mrb[0].mxu0
    %6180 = vdwg.mxu0
    %vm6181 = vcmp.gt.f32.partialorder %v6178, 0.0
    %v6182 = vmin.f32 %v6178, 0.0
    %v6183 = vmul.f32 %v6182, 1.442695
    %v6184 = vpow.pop %v6183
    %v6185 = vsub.f32 %v6184, 1.0
    %v6186 = vsel %vm6181, %v6178, %v6185
    %v6188 = vsel %vm255, %v6186, 0
    %6190 = vmatprep.subr.mxu0 0.0
    %6191 = vmatpush1.msra.mxu0 %v955
    %6192 = vmatprep.subr.mxu0 0.0
    %6193 = vmatpush1.msra.mxu0 %v956
    %6194 = vmatprep.subr.mxu0 0.0
    %6195 = vmatpush1.msra.mxu0 %v957
    %6196 = vmatprep.subr.mxu0 0.0
    %6197 = vmatpush1.msra.mxu0 %v958
    %6198 = vmatprep.subr.mxu0 0.0
    %6199 = vmatpush1.msra.mxu0 0.0
    %6200 = vmatprep.subr.mxu0 0.0
    %6201 = vmatpush1.msra.mxu0 0.0
    %6202 = vmatprep.subr.mxu0 0.0
    %6203 = vmatpush1.msra.mxu0 0.0
    %6204 = vmatprep.subr.mxu0 0.0
    %6205 = vmatpush1.msra.mxu0 0.0
    %6206 = vmatprep.subr.mxu0 0.0
    %6207 = vmatpush1.msra.mxu0 0.0
    %6208 = vmatprep.subr.mxu0 0.0
    %6209 = vmatpush1.msra.mxu0 0.0
    %6210 = vmatprep.subr.mxu0 0.0
    %6211 = vmatpush1.msra.mxu0 0.0
    %6212 = vmatprep.subr.mxu0 0.0
    %6213 = vmatpush1.msra.mxu0 0.0
    %6214 = vmatprep.subr.mxu0 0.0
    %6215 = vmatpush1.msra.mxu0 0.0
    %6216 = vmatprep.subr.mxu0 0.0
    %6217 = vmatpush1.msra.mxu0 0.0
    %6218 = vmatprep.subr.mxu0 0.0
    %6219 = vmatpush1.msra.mxu0 0.0
    %6220 = vmatprep.subr.mxu0 0.0
    %6221 = vmatpush1.msra.mxu0 0.0
    %6222 = vmatprep.subr.mxu0 0.0
    %6223 = vmatpush1.msra.mxu0 0.0
    %6224 = vmatprep.subr.mxu0 0.0
    %6225 = vmatpush1.msra.mxu0 0.0
    %6226 = vmatprep.subr.mxu0 0.0
    %6227 = vmatpush1.msra.mxu0 0.0
    %6228 = vmatprep.subr.mxu0 0.0
    %6229 = vmatpush1.msra.mxu0 0.0
    %6230 = vmatprep.subr.mxu0 0.0
    %6231 = vmatpush1.msra.mxu0 0.0
    %6232 = vmatprep.subr.mxu0 0.0
    %6233 = vmatpush1.msra.mxu0 0.0
    %6234 = vmatprep.subr.mxu0 0.0
    %6235 = vmatpush1.msra.mxu0 0.0
    %6236 = vmatprep.subr.mxu0 0.0
    %6237 = vmatpush1.msra.mxu0 0.0
    %6238 = vmatprep.subr.mxu0 0.0
    %6239 = vmatpush1.msra.mxu0 0.0
    %6240 = vmatprep.subr.mxu0 0.0
    %6241 = vmatpush1.msra.mxu0 0.0
    %6242 = vmatprep.subr.mxu0 0.0
    %6243 = vmatpush1.msra.mxu0 0.0
    %6244 = vmatprep.subr.mxu0 0.0
    %6245 = vmatpush1.msra.mxu0 0.0
    %6246 = vmatprep.subr.mxu0 0.0
    %6247 = vmatpush1.msra.mxu0 0.0
    %6248 = vmatprep.subr.mxu0 0.0
    %6249 = vmatpush1.msra.mxu0 0.0
    %6250 = vmatprep.subr.mxu0 0.0
    %6251 = vmatpush1.msra.mxu0 0.0
    %6252 = vmatprep.subr.mxu0 0.0
    %6253 = vmatpush1.msra.mxu0 0.0
    %6254 = vmatprep.mubr.f32.mxu0 0.0
    %6255 = vmatmul.mubr.f32.gmra.mrb[0].mxu0 %v6188
    %v6256 = vpop.f32.mrb[0].mxu0
    %v6257 = vadd.f32 %v978, %v6256
    %v6258 = vpop.f32.mrb[0].mxu0
    %6259 = vdwg.mxu0
    %v6260 = vadd.f32 %v5883, %v6070
    %v6261 = vmul.f32 %v6260, 3.0
    %v6262 = vadd.f32 %v5697, %v6261
    %v6263 = vadd.f32 %v6262, %v6257
    %v6264 = vstv %s5516
    %v6265 = vmul.f32 %v6264, %v6263
    %v6266 = vadd.f32 %v5513, %v6265
    %v6267 = vld [vmem:[%s16] sm:$0xf]
    %v6268 = vld [vmem:[%s17] sm:$0x1]
    %v6270 = vlaneseq
    %v6271 = vshrl.u32 %v6270, 7
    %v6272 = vsub.s32 0, %v6271
    %v6273 = vrot.slane %v6268, %v6272
    %6276 = vset.pattern.permute.xlu0 0
    %6277 = vperm.xlu0 %6276, %v6266
    %v6278 = vpop.permute.xlu0 %6277
    %v6280 = vlaneseq
    %v6281 = vshrl.u32 %v6280, 7
    %v6282 = vsub.s32 0, %v6281
    %v6283 = vrot.slane %v6267, %v6282
    %v6284 = vmul.f32 %v986, %v6283
    %v6285 = vmul.f32 %v1755, %v6283
    %v6286 = vmul.f32 %v2508, %v6283
    %v6287 = vmul.f32 %v3261, %v6283
    %v6288 = vmul.f32 %v4014, %v6283
    %v6289 = vmul.f32 %v4767, %v6283
    %v6290 = vmul.f32 %v5520, %v6283
    %v6291 = vmul.f32 %v6278, %v6283
    %v6292 = vadd.f32 %v6273, %v6284
    %v6293 = vadd.f32 %v6273, %v6285
    %v6294 = vadd.f32 %v6273, %v6286
    %v6295 = vadd.f32 %v6273, %v6287
    %v6296 = vadd.f32 %v6273, %v6288
    %v6297 = vadd.f32 %v6273, %v6289
    %v6298 = vadd.f32 %v6273, %v6290
    %v6299 = vadd.f32 %v6273, %v6291
    %6300 = vset.pattern.permute.xlu0 1
    %6301 = vperm.xlu0 %6300, %v6266
    %v6302 = vpop.permute.xlu0 %6301
    %v6304 = vlaneseq
    %v6305 = vshrl.u32 %v6304, 7
    %v6306 = vsub.s32 1, %v6305
    %v6307 = vrot.slane %v6267, %v6306
    %v6308 = vmul.f32 %v996, %v6307
    %v6309 = vmul.f32 %v1761, %v6307
    %v6310 = vmul.f32 %v2514, %v6307
    %v6311 = vmul.f32 %v3267, %v6307
    %v6312 = vmul.f32 %v4020, %v6307
    %v6313 = vmul.f32 %v4773, %v6307
    %v6314 = vmul.f32 %v5526, %v6307
    %v6315 = vmul.f32 %v6302, %v6307
    %v6316 = vadd.f32 %v6292, %v6308
    %v6317 = vadd.f32 %v6293, %v6309
    %v6318 = vadd.f32 %v6294, %v6310
    %v6319 = vadd.f32 %v6295, %v6311
    %v6320 = vadd.f32 %v6296, %v6312
    %v6321 = vadd.f32 %v6297, %v6313
    %v6322 = vadd.f32 %v6298, %v6314
    %v6323 = vadd.f32 %v6299, %v6315
    %6324 = vset.pattern.permute.xlu0 2
    %6325 = vperm.xlu0 %6324, %v6266
    %v6326 = vpop.permute.xlu0 %6325
    %v6328 = vlaneseq
    %v6329 = vshrl.u32 %v6328, 7
    %v6330 = vsub.s32 2, %v6329
    %v6331 = vrot.slane %v6267, %v6330
    %v6332 = vmul.f32 %v1006, %v6331
    %v6333 = vmul.f32 %v1767, %v6331
    %v6334 = vmul.f32 %v2520, %v6331
    %v6335 = vmul.f32 %v3273, %v6331
    %v6336 = vmul.f32 %v4026, %v6331
    %v6337 = vmul.f32 %v4779, %v6331
    %v6338 = vmul.f32 %v5532, %v6331
    %v6339 = vmul.f32 %v6326, %v6331
    %v6340 = vadd.f32 %v6316, %v6332
    %v6341 = vadd.f32 %v6317, %v6333
    %v6342 = vadd.f32 %v6318, %v6334
    %v6343 = vadd.f32 %v6319, %v6335
    %v6344 = vadd.f32 %v6320, %v6336
    %v6345 = vadd.f32 %v6321, %v6337
    %v6346 = vadd.f32 %v6322, %v6338
    %v6347 = vadd.f32 %v6323, %v6339
    %6348 = vset.pattern.permute.xlu0 3
    %6349 = vperm.xlu0 %6348, %v6266
    %v6350 = vpop.permute.xlu0 %6349
    %v6352 = vlaneseq
    %v6353 = vshrl.u32 %v6352, 7
    %v6354 = vsub.s32 3, %v6353
    %v6355 = vrot.slane %v6267, %v6354
    %v6356 = vmul.f32 %v1016, %v6355
    %v6357 = vmul.f32 %v1773, %v6355
    %v6358 = vmul.f32 %v2526, %v6355
    %v6359 = vmul.f32 %v3279, %v6355
    %v6360 = vmul.f32 %v4032, %v6355
    %v6361 = vmul.f32 %v4785, %v6355
    %v6362 = vmul.f32 %v5538, %v6355
    %v6363 = vmul.f32 %v6350, %v6355
    %v6364 = vadd.f32 %v6340, %v6356
    %v6365 = vadd.f32 %v6341, %v6357
    %v6366 = vadd.f32 %v6342, %v6358
    %v6367 = vadd.f32 %v6343, %v6359
    %v6368 = vadd.f32 %v6344, %v6360
    %v6369 = vadd.f32 %v6345, %v6361
    %v6370 = vadd.f32 %v6346, %v6362
    %v6371 = vadd.f32 %v6347, %v6363
    %v6372 = vmax.f32 %v6364, 0.0
    %v6373 = vmax.f32 %v6365, 0.0
    %v6374 = vmax.f32 %v6366, 0.0
    %v6375 = vmax.f32 %v6367, 0.0
    %v6376 = vmax.f32 %v6368, 0.0
    %v6377 = vmax.f32 %v6369, 0.0
    %v6378 = vmax.f32 %v6370, 0.0
    %v6379 = vmax.f32 %v6371, 0.0
    %v6380 = vld [vmem:[%s18] sm:$0xff]
    %v6381 = vld [vmem:[%s18 + $0x8] sm:$0xff]
    %v6382 = vld [vmem:[%s18 + $0x10] sm:$0xff]
    %v6383 = vld [vmem:[%s18 + $0x18] sm:$0xff]
    %v6384 = vld [vmem:[%s19] sm:$0x1]
    %v6386 = vlaneseq
    %v6387 = vshrl.u32 %v6386, 7
    %v6388 = vsub.s32 0, %v6387
    %v6389 = vrot.slane %v6384, %v6388
    %v6392 = vsel %vm255, %v6372, 0
    %v6395 = vsel %vm255, %v6373, 0
    %v6398 = vsel %vm255, %v6374, 0
    %v6401 = vsel %vm255, %v6375, 0
    %v6404 = vsel %vm255, %v6376, 0
    %v6407 = vsel %vm255, %v6377, 0
    %v6410 = vsel %vm255, %v6378, 0
    %v6413 = vsel %vm255, %v6379, 0
    %6415 = vmatprep.subr.mxu0 0.0
    %6416 = vmatpush1.msra.mxu0 %v6380
    %6417 = vmatprep.subr.mxu0 0.0
    %6418 = vmatpush1.msra.mxu0 %v6381
    %6419 = vmatprep.subr.mxu0 0.0
    %6420 = vmatpush1.msra.mxu0 %v6382
    %6421 = vmatprep.subr.mxu0 0.0
    %6422 = vmatpush1.msra.mxu0 %v6383
    %6423 = vmatprep.subr.mxu0 0.0
    %6424 = vmatpush1.msra.mxu0 0.0
    %6425 = vmatprep.subr.mxu0 0.0
    %6426 = vmatpush1.msra.mxu0 0.0
    %6427 = vmatprep.subr.mxu0 0.0
    %6428 = vmatpush1.msra.mxu0 0.0
    %6429 = vmatprep.subr.mxu0 0.0
    %6430 = vmatpush1.msra.mxu0 0.0
    %6431 = vmatprep.subr.mxu0 0.0
    %6432 = vmatpush1.msra.mxu0 0.0
    %6433 = vmatprep.subr.mxu0 0.0
    %6434 = vmatpush1.msra.mxu0 0.0
    %6435 = vmatprep.subr.mxu0 0.0
    %6436 = vmatpush1.msra.mxu0 0.0
    %6437 = vmatprep.subr.mxu0 0.0
    %6438 = vmatpush1.msra.mxu0 0.0
    %6439 = vmatprep.subr.mxu0 0.0
    %6440 = vmatpush1.msra.mxu0 0.0
    %6441 = vmatprep.subr.mxu0 0.0
    %6442 = vmatpush1.msra.mxu0 0.0
    %6443 = vmatprep.subr.mxu0 0.0
    %6444 = vmatpush1.msra.mxu0 0.0
    %6445 = vmatprep.subr.mxu0 0.0
    %6446 = vmatpush1.msra.mxu0 0.0
    %6447 = vmatprep.subr.mxu0 0.0
    %6448 = vmatpush1.msra.mxu0 0.0
    %6449 = vmatprep.subr.mxu0 0.0
    %6450 = vmatpush1.msra.mxu0 0.0
    %6451 = vmatprep.subr.mxu0 0.0
    %6452 = vmatpush1.msra.mxu0 0.0
    %6453 = vmatprep.subr.mxu0 0.0
    %6454 = vmatpush1.msra.mxu0 0.0
    %6455 = vmatprep.subr.mxu0 0.0
    %6456 = vmatpush1.msra.mxu0 0.0
    %6457 = vmatprep.subr.mxu0 0.0
    %6458 = vmatpush1.msra.mxu0 0.0
    %6459 = vmatprep.subr.mxu0 0.0
    %6460 = vmatpush1.msra.mxu0 0.0
    %6461 = vmatprep.subr.mxu0 0.0
    %6462 = vmatpush1.msra.mxu0 0.0
    %6463 = vmatprep.subr.mxu0 0.0
    %6464 = vmatpush1.msra.mxu0 0.0
    %6465 = vmatprep.subr.mxu0 0.0
    %6466 = vmatpush1.msra.mxu0 0.0
    %6467 = vmatprep.subr.mxu0 0.0
    %6468 = vmatpush1.msra.mxu0 0.0
    %6469 = vmatprep.subr.mxu0 0.0
    %6470 = vmatpush1.msra.mxu0 0.0
    %6471 = vmatprep.subr.mxu0 0.0
    %6472 = vmatpush1.msra.mxu0 0.0
    %6473 = vmatprep.subr.mxu0 0.0
    %6474 = vmatpush1.msra.mxu0 0.0
    %6475 = vmatprep.subr.mxu0 0.0
    %6476 = vmatpush1.msra.mxu0 0.0
    %6477 = vmatprep.subr.mxu0 0.0
    %6478 = vmatpush1.msra.mxu0 0.0
    %6479 = vmatprep.mubr.f32.mxu0 0.0
    %6480 = vmatmul.mubr.f32.gmra.mrb[0].mxu0 %v6392
    %v6481 = vpop.f32.mrb[0].mxu0
    %v6482 = vadd.f32 %v6389, %v6481
    %v6483 = vpop.f32.mrb[0].mxu0
    %6484 = vmatprep.mubr.f32.mxu0 0.0
    %6485 = vmatmul.mubr.f32.gmra.mrb[0].mxu0 %v6395
    %v6486 = vpop.f32.mrb[0].mxu0
    %v6487 = vadd.f32 %v6389, %v6486
    %v6488 = vpop.f32.mrb[0].mxu0
    %6489 = vmatprep.mubr.f32.mxu0 0.0
    %6490 = vmatmul.mubr.f32.gmra.mrb[0].mxu0 %v6398
    %v6491 = vpop.f32.mrb[0].mxu0
    %v6492 = vadd.f32 %v6389, %v6491
    %v6493 = vpop.f32.mrb[0].mxu0
    %6494 = vmatprep.mubr.f32.mxu0 0.0
    %6495 = vmatmul.mubr.f32.gmra.mrb[0].mxu0 %v6401
    %v6496 = vpop.f32.mrb[0].mxu0
    %v6497 = vadd.f32 %v6389, %v6496
    %v6498 = vpop.f32.mrb[0].mxu0
    %6499 = vmatprep.mubr.f32.mxu0 0.0
    %6500 = vmatmul.mubr.f32.gmra.mrb[0].mxu0 %v6404
    %v6501 = vpop.f32.mrb[0].mxu0
    %v6502 = vadd.f32 %v6389, %v6501
    %v6503 = vpop.f32.mrb[0].mxu0
    %6504 = vmatprep.mubr.f32.mxu0 0.0
    %6505 = vmatmul.mubr.f32.gmra.mrb[0].mxu0 %v6407
    %v6506 = vpop.f32.mrb[0].mxu0
    %v6507 = vadd.f32 %v6389, %v6506
    %v6508 = vpop.f32.mrb[0].mxu0
    %6509 = vmatprep.mubr.f32.mxu0 0.0
    %6510 = vmatmul.mubr.f32.gmra.mrb[0].mxu0 %v6410
    %v6511 = vpop.f32.mrb[0].mxu0
    %v6512 = vadd.f32 %v6389, %v6511
    %v6513 = vpop.f32.mrb[0].mxu0
    %6514 = vmatprep.mubr.f32.mxu0 0.0
    %6515 = vmatmul.mubr.f32.gmra.mrb[0].mxu0 %v6413
    %v6516 = vpop.f32.mrb[0].mxu0
    %v6517 = vadd.f32 %v6389, %v6516
    %v6518 = vpop.f32.mrb[0].mxu0
    %6519 = vdwg.mxu0
    %6520 = vst.msk [vmem:[%s20] sm:$0xff] %vm117, %v6482
    %6521 = vst.msk [vmem:[%s20 + $0x8] sm:$0xff] %vm117, %v6487
    %6522 = vst.msk [vmem:[%s20 + $0x10] sm:$0xff] %vm117, %v6492
    %6523 = vst.msk [vmem:[%s20 + $0x18] sm:$0xff] %vm117, %v6497
    %6524 = vst.msk [vmem:[%s20 + $0x20] sm:$0xff] %vm117, %v6502
    %6525 = vst.msk [vmem:[%s20 + $0x28] sm:$0xff] %vm117, %v6507
    %6526 = vst.msk [vmem:[%s20 + $0x30] sm:$0xff] %vm117, %v6512
    %6527 = vst.msk [vmem:[%s20 + $0x38] sm:$0xff] %vm117, %v6517
    // Predicated region
    $region94: #{tpu_custom_call.1} parent=1 // pred_check
      _
    $region95: #{tpu_custom_call.1} parent=1 // pred_check_branch
      %6529 = sbr.rel (0) target = $region97
    $region96: #{tpu_custom_call.1} parent=1 // pred_region
      _
    $region97: #{tpu_custom_call.1} parent=1 // pred_fallthru
      _
    // Predicated region
    $region98: #{tpu_custom_call.1} parent=1 // pred_check
      _
    $region99: #{tpu_custom_call.1} parent=1 // pred_check_branch
      %6531 = sbr.rel (0) target = $region101
    $region100: #{tpu_custom_call.1} parent=1 // pred_region
      _
    $region101: #{tpu_custom_call.1} parent=1 // pred_fallthru
      _
    %6532 = vsyncpa [#allocation3], 1
    %6533 = vsyncpa [#allocation5], 1

</llo_original>
